<compile_context>
chip_gen: v7x
topology: tpu7x:2x2x1
jax: 0.10.0
libtpu: 0.0.40
codegen_flags: <defaults>
</compile_context>

<pallas_src>
import jax
import jax.numpy as jnp
from jax.experimental import pallas as pl
from jax.experimental.pallas import tpu as pltpu

LANE = 128


def _cpad(c):
    return ((c + LANE - 1) // LANE) * LANE


def _pad_lanes(x):
    c = x.shape[-1]
    cp = _cpad(c)
    if cp == c:
        return x
    pad = [(0, 0)] * (x.ndim - 1) + [(0, cp - c)]
    return jnp.pad(x, pad)


# ----------------------------------------------------------------------------
# Fused UNetModule kernel.
# One grid step == one batch element; block == the full (H, W, Cpad) feature map.
# ----------------------------------------------------------------------------
def _make_module_kernel(H, W, cpis, cpo, act):
    n_in = len(cpis)
    Ho, Wo = H - 2, W - 2

    def activate(a):
        if act == "leaky":
            return jnp.where(a > 0.0, a, 0.2 * a)
        return jnp.maximum(a, 0.0)  # relu

    def kernel(*args):
        x_refs = args[:n_in]                       # each (H, W, cpi)   bf16
        w1_refs = args[n_in:2 * n_in]              # each (9, cpi, cpo) bf16
        w2_ref, s1_ref, s2_ref, out_ref, b32_ref, bbf_ref = args[2 * n_in:]

        # ---- conv1 + folded bias/BN + act, reflect-padded into b32 (f32 scratch) ----
        @pl.loop(0, Ho)
        def _(y):
            acc = jnp.zeros((Wo, cpo), jnp.float32)
            for dy in range(3):
                for dx in range(3):
                    for xr, wr in zip(x_refs, w1_refs):      # split-K over the inputs
                        xs = xr[y + dy, dx:dx + Wo, :]       # (Wo, cpi) bf16
                        acc = acc + jnp.dot(xs, wr[dy * 3 + dx],
                                            preferred_element_type=jnp.float32)
            row = activate(acc + s1_ref[...])                # (Wo, cpo) f32 epilogue
            b32_ref[y + 1, 1:W - 1, :] = row                 # interior columns
            b32_ref[y + 1, 0:1, :] = row[1:2, :]             # left reflect column
            b32_ref[y + 1, W - 1:W, :] = row[Wo - 2:Wo - 1, :]  # right reflect column

        b32_ref[0:1, :, :] = b32_ref[2:3, :, :]              # top reflect row
        b32_ref[H - 1:H, :, :] = b32_ref[H - 3:H - 2, :, :]  # bottom reflect row
        bbf_ref[...] = b32_ref[...].astype(jnp.bfloat16)     # one full-block bf16 copy

        # ---- conv2 + folded bias/BN + act, reflect-padded into b32 (buffer reused) ----
        @pl.loop(0, Ho)
        def _(y):
            acc = jnp.zeros((Wo, cpo), jnp.float32)
            for dy in range(3):
                for dx in range(3):
                    xs = bbf_ref[y + dy, dx:dx + Wo, :]
                    acc = acc + jnp.dot(xs, w2_ref[dy * 3 + dx],
                                        preferred_element_type=jnp.float32)
            row = activate(acc + s2_ref[...])
            b32_ref[y + 1, 1:W - 1, :] = row
            b32_ref[y + 1, 0:1, :] = row[1:2, :]
            b32_ref[y + 1, W - 1:W, :] = row[Wo - 2:Wo - 1, :]

        b32_ref[0:1, :, :] = b32_ref[2:3, :, :]
        b32_ref[H - 1:H, :, :] = b32_ref[H - 3:H - 2, :, :]
        out_ref[...] = b32_ref[...].astype(out_ref.dtype)    # single lane-dense store

    return kernel


def unet_module(xs, mp, act):
    N, H, W = int(xs[0].shape[0]), int(xs[0].shape[1]), int(xs[0].shape[2])
    cpis = [int(x.shape[-1]) for x in xs]
    cpo = int(mp["w2"].shape[-1])
    Ho, Wo = H - 2, W - 2

    in_specs = []
    for cpi in cpis:
        in_specs.append(pl.BlockSpec((None, H, W, cpi), lambda n: (n, 0, 0, 0)))
    for w in mp["w1"]:
        in_specs.append(pl.BlockSpec(w.shape, lambda n: (0, 0, 0)))
    in_specs += [pl.BlockSpec(mp["w2"].shape, lambda n: (0, 0, 0)),
                 pl.BlockSpec((1, cpo), lambda n: (0, 0)),
                 pl.BlockSpec((1, cpo), lambda n: (0, 0))]
    out_specs = pl.BlockSpec((None, H, W, cpo), lambda n: (n, 0, 0, 0))

    flops = 2 * N * Ho * Wo * 9 * (sum(cpis) * cpo + cpo * cpo)
    bytes_accessed = (sum(N * H * W * c * 2 for c in cpis)
                      + sum(int(w.size) * 2 for w in mp["w1"])
                      + int(mp["w2"].size) * 2 + 2 * cpo * 4
                      + N * H * W * cpo * 2)
    block_bytes = (sum(H * W * c * 2 for c in cpis)
                   + sum(int(w.size) * 2 for w in mp["w1"])
                   + int(mp["w2"].size) * 2 + 2 * cpo * 4
                   + H * W * cpo * 2)
    scratch_bytes = H * W * cpo * (4 + 2)
    vmem_limit = int(min(max(3 * block_bytes + 2 * scratch_bytes, 32 << 20), 48 << 20))

    return pl.pallas_call(
        _make_module_kernel(H, W, cpis, cpo, act),
        out_shape=jax.ShapeDtypeStruct((N, H, W, cpo), jnp.bfloat16),
        grid=(N,),
        in_specs=in_specs,
        out_specs=out_specs,
        scratch_shapes=[pltpu.VMEM((H, W, cpo), jnp.float32),    # f32 assembly buffer
                        pltpu.VMEM((H, W, cpo), jnp.bfloat16)],  # bf16 copy for conv2 MXU
        compiler_params=pltpu.CompilerParams(
            dimension_semantics=("parallel",),
            vmem_limit_bytes=vmem_limit),
        cost_estimate=pl.CostEstimate(flops=int(flops), transcendentals=0,
                                      bytes_accessed=int(bytes_accessed)),
    )(*xs, *mp["w1"], mp["w2"], mp["shift1"], mp["shift2"])


# ----------------------------------------------------------------------------
# Final 1x1 conv + bias + tanh kernel
# ----------------------------------------------------------------------------
def _make_final_kernel(H, W, cpi, cpo):
    def kernel(x_ref, w_ref, b_ref, o_ref):
        @pl.loop(0, H)
        def _(y):
            acc = jnp.dot(x_ref[y], w_ref[...], preferred_element_type=jnp.float32)
            o_ref[y] = jnp.tanh(acc + b_ref[...])
    return kernel


def final_conv_tanh(x, w, b):
    N, H, W, cpi = (int(s) for s in x.shape)
    cpo = int(w.shape[-1])
    flops = 2 * N * H * W * cpi * cpo
    bytes_accessed = int(x.size) * 2 + int(w.size) * 2 + cpo * 4 + N * H * W * cpo * 4
    block_bytes = H * W * cpi * 2 + int(w.size) * 2 + cpo * 4 + H * W * cpo * 4
    vmem_limit = int(min(max(3 * block_bytes, 32 << 20), 48 << 20))
    return pl.pallas_call(
        _make_final_kernel(H, W, cpi, cpo),
        out_shape=jax.ShapeDtypeStruct((N, H, W, cpo), jnp.float32),
        grid=(N,),
        in_specs=[pl.BlockSpec((None, H, W, cpi), lambda n: (n, 0, 0, 0)),
                  pl.BlockSpec((cpi, cpo), lambda n: (0, 0)),
                  pl.BlockSpec((1, cpo), lambda n: (0, 0))],
        out_specs=pl.BlockSpec((None, H, W, cpo), lambda n: (n, 0, 0, 0)),
        compiler_params=pltpu.CompilerParams(
            dimension_semantics=("parallel",),
            vmem_limit_bytes=vmem_limit),
        cost_estimate=pl.CostEstimate(flops=int(flops),
                                      transcendentals=int(N * H * W * cpo),
                                      bytes_accessed=int(bytes_accessed)),
    )(x, w, b)


# ----------------------------------------------------------------------------
# Pure data-movement glue (plain JAX)
# ----------------------------------------------------------------------------
def _max_pool2(x):                       # nn.MaxPool2d(2, 2) on NHWC
    N, H, W, C = x.shape
    return x.reshape(N, H // 2, 2, W // 2, 2, C).max(axis=(2, 4))


def _upsample_nearest2(x):               # nn.UpsamplingNearest2d(scale_factor=2) on NHWC
    return jnp.repeat(jnp.repeat(x, 2, axis=1), 2, axis=2)


# ----------------------------------------------------------------------------
# UNet forward (structure in JAX, all compute in the fused Pallas kernels)
# ----------------------------------------------------------------------------
def unet_forward(x_nchw, params, act="relu"):
    x = jnp.transpose(x_nchw, (0, 2, 3, 1))           # NCHW -> NHWC
    x = _pad_lanes(x).astype(jnp.bfloat16)            # lane-dense channels, bf16 MXU input

    down_feats = []
    for i, dp in enumerate(params["down"]):
        f = x if i == 0 else _max_pool2(down_feats[-1])
        down_feats.append(unet_module([f], dp, act))

    out = down_feats[-1]
    for i, up in enumerate(reversed(params["up"])):
        skip = down_feats[-(i + 2)]
        # concat-free decoder: upsampled + skip stay separate kernel inputs (split-K)
        out = unet_module([_upsample_nearest2(out), skip], up, act)

    y = final_conv_tanh(out, params["wf"], params["bf"])   # (N, H, W, cpad) f32
    y = y[..., :params["cout"]]
    return jnp.transpose(y, (0, 3, 1, 2))                  # NHWC -> NCHW


# ----------------------------------------------------------------------------
# Deterministic synthetic parameters (torch layout) + kernel-form preparation
# ----------------------------------------------------------------------------
def _init_conv_raw(key, cin, cout, k):
    kw, kb = jax.random.split(key)
    bound = (cin * k * k) ** -0.5
    w = jax.random.uniform(kw, (cout, cin, k, k), jnp.float32, -bound, bound)
    b = jax.random.uniform(kb, (cout,), jnp.float32, -bound, bound)
    return w, b


def _init_module_raw(key, cin, cout, k=3):
    k1, k2, k3, k4 = jax.random.split(key, 4)
    w1, b1 = _init_conv_raw(k1, cin, cout, k)
    w2, b2 = _init_conv_raw(k2, cout, cout, k)
    gamma = jax.random.uniform(k3, (cout,), jnp.float32, 0.5, 1.5)
    beta = jax.random.uniform(k4, (cout,), jnp.float32, -0.5, 0.5)
    return dict(w1=w1, b1=b1, w2=w2, b2=b2, gamma=gamma, beta=beta)


def _prep_conv3(w, b, scale, shift, cin_splits=None):
    """torch (Cout,Cin,3,3) -> list of (9, cpad(Cin_i), cpad(Cout)) bf16 weights with the
    BN scale folded in, plus the folded per-channel shift (1, cpad(Cout)) f32."""
    assert w.shape[2] == 3 and w.shape[3] == 3
    cout, cin = int(w.shape[0]), int(w.shape[1])
    cpo = _cpad(cout)
    wf = w * scale[:, None, None, None]                       # fold BN scale into weights
    wk = jnp.transpose(wf, (2, 3, 1, 0)).reshape(9, cin, cout)
    if cin_splits is None:
        cin_splits = (cin,)
    pieces, off = [], 0
    for c in cin_splits:
        piece = wk[:, off:off + c, :]
        piece = jnp.pad(piece, ((0, 0), (0, _cpad(c) - c), (0, cpo - cout)))
        pieces.append(piece.astype(jnp.bfloat16))
        off += c
    sh = jnp.pad(b * scale + shift, (0, cpo - cout)).reshape(1, cpo).astype(jnp.float32)
    return pieces, sh


def _prep_module(raw, cin_splits=None):
    eps = 1e-5
    # shared eval-mode BatchNorm (running_mean=0, running_var=1), applied after both convs
    scale = raw["gamma"] / jnp.sqrt(1.0 + eps)
    shift = raw["beta"]
    w1, s1 = _prep_conv3(raw["w1"], raw["b1"], scale, shift, cin_splits)
    w2, s2 = _prep_conv3(raw["w2"], raw["b2"], scale, shift, None)
    return dict(w1=w1, w2=w2[0], shift1=s1, shift2=s2)


def _prep_final(w, b):
    cout, cin = int(w.shape[0]), int(w.shape[1])
    cpo, cpi = _cpad(cout), _cpad(cin)
    wk = jnp.transpose(w[:, :, 0, 0], (1, 0))                 # (Cin, Cout)
    wk = jnp.pad(wk, ((0, cpi - cin), (0, cpo - cout))).astype(jnp.bfloat16)
    bk = jnp.pad(b, (0, cpo - cout)).reshape(1, cpo).astype(jnp.float32)
    return wk, bk


def init_unet_params(key, cin, cout, n_blocks, bottleneck_dim, kernel_size=3):
    assert kernel_size == 3
    factors = [2 ** i for i in range(n_blocks)]
    sizes = [bottleneck_dim * f for f in factors]
    keys = jax.random.split(key, 2 * n_blocks + 1)
    down_raw = [_init_module_raw(keys[0], cin, sizes[0], kernel_size)]
    up_raw, up_splits = [], []
    ki = 1
    for i in range(len(sizes) - 1):
        down_raw.append(_init_module_raw(keys[ki], sizes[i], sizes[i + 1], kernel_size)); ki += 1
        up_raw.append(_init_module_raw(keys[ki], sizes[i] + sizes[i + 1], sizes[i], kernel_size)); ki += 1
        # decoder input is cat([upsample(prev), skip]) -> channel split (sizes[i+1], sizes[i])
        up_splits.append((sizes[i + 1], sizes[i]))
    wf_raw, bf_raw = _init_conv_raw(keys[ki], sizes[0], cout, 1)

    down = [_prep_module(m) for m in down_raw]
    up = [_prep_module(m, sp) for m, sp in zip(up_raw, up_splits)]
    wf, bf = _prep_final(wf_raw, bf_raw)
    return dict(down=down, up=up, wf=wf, bf=bf, cout=cout)


# ----------------------------------------------------------------------------
if __name__ == "__main__":
    # Small config consistent with UNet(Cin=4, Cout=3, n_blocks=2, bottleneck_dim=8)
    Cin, Cout, n_blocks, bottleneck_dim = 4, 3, 2, 8
    N, H, W = 2, 16, 16

    key = jax.random.PRNGKey(0)
    kx, kp = jax.random.split(key)
    x = jax.random.normal(kx, (N, Cin, H, W), jnp.float32)       # NCHW like torch
    params = init_unet_params(kp, Cin, Cout, n_blocks, bottleneck_dim)

    # TODO(synk): dropout is treated as identity (eval mode); train-mode torch dropout RNG
    # and train-mode BatchNorm batch statistics are not reproducible here.
    fwd = jax.jit(lambda xv: unet_forward(xv, params, act="relu"))
    y = jax.block_until_ready(fwd(x))

    assert y.shape == (N, Cout, H, W), y.shape
    assert bool(jnp.all(jnp.isfinite(y)))
    assert bool(jnp.all(jnp.abs(y) <= 1.0))   # tanh output range
    print("KERNEL_OK")
</pallas_src>

<mosaic_0001>
module attributes {stable_mosaic.version = 11 : i64} {
  func.func @kernel(%arg0: i32, %arg1: memref<1x16x16x128xbf16, #tpu.memory_space<vmem>>, %arg2: memref<9x128x128xbf16, #tpu.memory_space<vmem>>, %arg3: memref<9x128x128xbf16, #tpu.memory_space<vmem>>, %arg4: memref<1x128xf32, #tpu.memory_space<vmem>>, %arg5: memref<1x128xf32, #tpu.memory_space<vmem>>, %arg6: memref<1x16x16x128xbf16, #tpu.memory_space<vmem>>, %arg7: memref<16x16x128xf32, #tpu.memory_space<vmem>>, %arg8: memref<16x16x128xbf16, #tpu.memory_space<vmem>>) attributes {dimension_semantics = [#tpu.dimension_semantics<parallel>], iteration_bounds = array<i64: 2>, scalar_prefetch = 0 : i64, scratch_operands = 2 : i64, tpu.core_type = #tpu.core_type<tc>, window_params = [{transform_indices = @transform_0, window_bounds = array<i64: 1, 16, 16, 128>}, {pipeline_mode = #tpu.pipeline_mode<synchronous>, transform_indices = @transform_1, window_bounds = array<i64: 9, 128, 128>}, {pipeline_mode = #tpu.pipeline_mode<synchronous>, transform_indices = @transform_2, window_bounds = array<i64: 9, 128, 128>}, {pipeline_mode = #tpu.pipeline_mode<synchronous>, transform_indices = @transform_3, window_bounds = array<i64: 1, 128>}, {pipeline_mode = #tpu.pipeline_mode<synchronous>, transform_indices = @transform_4, window_bounds = array<i64: 1, 128>}, {transform_indices = @transform_5, window_bounds = array<i64: 1, 16, 16, 128>}]} {
    %c0_i32 = arith.constant 0 : i32
    %c14_i32 = arith.constant 14 : i32
    %0 = arith.addi %c0_i32, %c14_i32 : i32
    %c1_i32 = arith.constant 1 : i32
    scf.for %arg9 = %c0_i32 to %0 step %c1_i32  : i32 {
      %c1_i32_38 = arith.constant 1 : i32
      %18 = arith.muli %arg9, %c1_i32_38 : i32
      %c0_i32_39 = arith.constant 0 : i32
      %19 = arith.addi %c0_i32_39, %18 : i32
      %cst = arith.constant 0.000000e+00 : f32
      %20 = vector.broadcast %cst : f32 to vector<14x128xf32>
      %c0_i32_40 = arith.constant 0 : i32
      %21 = arith.addi %19, %c0_i32_40 : i32
      %c0_41 = arith.constant 0 : index
      %22 = arith.index_cast %21 : i32 to index
      %c0_42 = arith.constant 0 : index
      %c0_43 = arith.constant 0 : index
      %23 = vector.load %arg1[%c0_41, %22, %c0_42, %c0_43] : memref<1x16x16x128xbf16, #tpu.memory_space<vmem>>, vector<1x1x14x128xbf16>
      %24 = vector.shape_cast %23 : vector<1x1x14x128xbf16> to vector<14x128xbf16>
      %c0_44 = arith.constant 0 : index
      %c0_45 = arith.constant 0 : index
      %c0_46 = arith.constant 0 : index
      %25 = vector.load %arg2[%c0_44, %c0_45, %c0_46] : memref<9x128x128xbf16, #tpu.memory_space<vmem>>, vector<1x128x128xbf16>
      %26 = vector.shape_cast %25 : vector<1x128x128xbf16> to vector<128x128xbf16>
      %cst_47 = arith.constant dense<0.000000e+00> : vector<14x128xf32>
      %27 = tpu.matmul %24, %26, %cst_47 {dimension_numbers = #tpu.dot_dimension_numbers<[1], [0], [0], [1], [0, 0, 1, 1], [], []>} : vector<14x128xbf16>, vector<128x128xbf16>, vector<14x128xf32> -> vector<14x128xf32>
      %28 = arith.addf %20, %27 : vector<14x128xf32>
      %c0_i32_48 = arith.constant 0 : i32
      %29 = arith.addi %19, %c0_i32_48 : i32
      %c0_49 = arith.constant 0 : index
      %30 = arith.index_cast %29 : i32 to index
      %c1 = arith.constant 1 : index
      %c0_50 = arith.constant 0 : index
      %31 = vector.load %arg1[%c0_49, %30, %c1, %c0_50] : memref<1x16x16x128xbf16, #tpu.memory_space<vmem>>, vector<1x1x14x128xbf16>
      %32 = vector.shape_cast %31 : vector<1x1x14x128xbf16> to vector<14x128xbf16>
      %c1_51 = arith.constant 1 : index
      %c0_52 = arith.constant 0 : index
      %c0_53 = arith.constant 0 : index
      %33 = vector.load %arg2[%c1_51, %c0_52, %c0_53] : memref<9x128x128xbf16, #tpu.memory_space<vmem>>, vector<1x128x128xbf16>
      %34 = vector.shape_cast %33 : vector<1x128x128xbf16> to vector<128x128xbf16>
      %cst_54 = arith.constant dense<0.000000e+00> : vector<14x128xf32>
      %35 = tpu.matmul %32, %34, %cst_54 {dimension_numbers = #tpu.dot_dimension_numbers<[1], [0], [0], [1], [0, 0, 1, 1], [], []>} : vector<14x128xbf16>, vector<128x128xbf16>, vector<14x128xf32> -> vector<14x128xf32>
      %36 = arith.addf %28, %35 : vector<14x128xf32>
      %c0_i32_55 = arith.constant 0 : i32
      %37 = arith.addi %19, %c0_i32_55 : i32
      %c0_56 = arith.constant 0 : index
      %38 = arith.index_cast %37 : i32 to index
      %c2_57 = arith.constant 2 : index
      %c0_58 = arith.constant 0 : index
      %39 = vector.load %arg1[%c0_56, %38, %c2_57, %c0_58] : memref<1x16x16x128xbf16, #tpu.memory_space<vmem>>, vector<1x1x14x128xbf16>
      %40 = vector.shape_cast %39 : vector<1x1x14x128xbf16> to vector<14x128xbf16>
      %c2_59 = arith.constant 2 : index
      %c0_60 = arith.constant 0 : index
      %c0_61 = arith.constant 0 : index
      %41 = vector.load %arg2[%c2_59, %c0_60, %c0_61] : memref<9x128x128xbf16, #tpu.memory_space<vmem>>, vector<1x128x128xbf16>
      %42 = vector.shape_cast %41 : vector<1x128x128xbf16> to vector<128x128xbf16>
      %cst_62 = arith.constant dense<0.000000e+00> : vector<14x128xf32>
      %43 = tpu.matmul %40, %42, %cst_62 {dimension_numbers = #tpu.dot_dimension_numbers<[1], [0], [0], [1], [0, 0, 1, 1], [], []>} : vector<14x128xbf16>, vector<128x128xbf16>, vector<14x128xf32> -> vector<14x128xf32>
      %44 = arith.addf %36, %43 : vector<14x128xf32>
      %c1_i32_63 = arith.constant 1 : i32
      %45 = arith.addi %19, %c1_i32_63 : i32
      %c0_64 = arith.constant 0 : index
      %46 = arith.index_cast %45 : i32 to index
      %c0_65 = arith.constant 0 : index
      %c0_66 = arith.constant 0 : index
      %47 = vector.load %arg1[%c0_64, %46, %c0_65, %c0_66] : memref<1x16x16x128xbf16, #tpu.memory_space<vmem>>, vector<1x1x14x128xbf16>
      %48 = vector.shape_cast %47 : vector<1x1x14x128xbf16> to vector<14x128xbf16>
      %c3 = arith.constant 3 : index
      %c0_67 = arith.constant 0 : index
      %c0_68 = arith.constant 0 : index
      %49 = vector.load %arg2[%c3, %c0_67, %c0_68] : memref<9x128x128xbf16, #tpu.memory_space<vmem>>, vector<1x128x128xbf16>
      %50 = vector.shape_cast %49 : vector<1x128x128xbf16> to vector<128x128xbf16>
      %cst_69 = arith.constant dense<0.000000e+00> : vector<14x128xf32>
      %51 = tpu.matmul %48, %50, %cst_69 {dimension_numbers = #tpu.dot_dimension_numbers<[1], [0], [0], [1], [0, 0, 1, 1], [], []>} : vector<14x128xbf16>, vector<128x128xbf16>, vector<14x128xf32> -> vector<14x128xf32>
      %52 = arith.addf %44, %51 : vector<14x128xf32>
      %c1_i32_70 = arith.constant 1 : i32
      %53 = arith.addi %19, %c1_i32_70 : i32
      %c0_71 = arith.constant 0 : index
      %54 = arith.index_cast %53 : i32 to index
      %c1_72 = arith.constant 1 : index
      %c0_73 = arith.constant 0 : index
      %55 = vector.load %arg1[%c0_71, %54, %c1_72, %c0_73] : memref<1x16x16x128xbf16, #tpu.memory_space<vmem>>, vector<1x1x14x128xbf16>
      %56 = vector.shape_cast %55 : vector<1x1x14x128xbf16> to vector<14x128xbf16>
      %c4 = arith.constant 4 : index
      %c0_74 = arith.constant 0 : index
      %c0_75 = arith.constant 0 : index
      %57 = vector.load %arg2[%c4, %c0_74, %c0_75] : memref<9x128x128xbf16, #tpu.memory_space<vmem>>, vector<1x128x128xbf16>
      %58 = vector.shape_cast %57 : vector<1x128x128xbf16> to vector<128x128xbf16>
      %cst_76 = arith.constant dense<0.000000e+00> : vector<14x128xf32>
      %59 = tpu.matmul %56, %58, %cst_76 {dimension_numbers = #tpu.dot_dimension_numbers<[1], [0], [0], [1], [0, 0, 1, 1], [], []>} : vector<14x128xbf16>, vector<128x128xbf16>, vector<14x128xf32> -> vector<14x128xf32>
      %60 = arith.addf %52, %59 : vector<14x128xf32>
      %c1_i32_77 = arith.constant 1 : i32
      %61 = arith.addi %19, %c1_i32_77 : i32
      %c0_78 = arith.constant 0 : index
      %62 = arith.index_cast %61 : i32 to index
      %c2_79 = arith.constant 2 : index
      %c0_80 = arith.constant 0 : index
      %63 = vector.load %arg1[%c0_78, %62, %c2_79, %c0_80] : memref<1x16x16x128xbf16, #tpu.memory_space<vmem>>, vector<1x1x14x128xbf16>
      %64 = vector.shape_cast %63 : vector<1x1x14x128xbf16> to vector<14x128xbf16>
      %c5 = arith.constant 5 : index
      %c0_81 = arith.constant 0 : index
      %c0_82 = arith.constant 0 : index
      %65 = vector.load %arg2[%c5, %c0_81, %c0_82] : memref<9x128x128xbf16, #tpu.memory_space<vmem>>, vector<1x128x128xbf16>
      %66 = vector.shape_cast %65 : vector<1x128x128xbf16> to vector<128x128xbf16>
      %cst_83 = arith.constant dense<0.000000e+00> : vector<14x128xf32>
      %67 = tpu.matmul %64, %66, %cst_83 {dimension_numbers = #tpu.dot_dimension_numbers<[1], [0], [0], [1], [0, 0, 1, 1], [], []>} : vector<14x128xbf16>, vector<128x128xbf16>, vector<14x128xf32> -> vector<14x128xf32>
      %68 = arith.addf %60, %67 : vector<14x128xf32>
      %c2_i32 = arith.constant 2 : i32
      %69 = arith.addi %19, %c2_i32 : i32
      %c0_84 = arith.constant 0 : index
      %70 = arith.index_cast %69 : i32 to index
      %c0_85 = arith.constant 0 : index
      %c0_86 = arith.constant 0 : index
      %71 = vector.load %arg1[%c0_84, %70, %c0_85, %c0_86] : memref<1x16x16x128xbf16, #tpu.memory_space<vmem>>, vector<1x1x14x128xbf16>
      %72 = vector.shape_cast %71 : vector<1x1x14x128xbf16> to vector<14x128xbf16>
      %c6 = arith.constant 6 : index
      %c0_87 = arith.constant 0 : index
      %c0_88 = arith.constant 0 : index
      %73 = vector.load %arg2[%c6, %c0_87, %c0_88] : memref<9x128x128xbf16, #tpu.memory_space<vmem>>, vector<1x128x128xbf16>
      %74 = vector.shape_cast %73 : vector<1x128x128xbf16> to vector<128x128xbf16>
      %cst_89 = arith.constant dense<0.000000e+00> : vector<14x128xf32>
      %75 = tpu.matmul %72, %74, %cst_89 {dimension_numbers = #tpu.dot_dimension_numbers<[1], [0], [0], [1], [0, 0, 1, 1], [], []>} : vector<14x128xbf16>, vector<128x128xbf16>, vector<14x128xf32> -> vector<14x128xf32>
      %76 = arith.addf %68, %75 : vector<14x128xf32>
      %c2_i32_90 = arith.constant 2 : i32
      %77 = arith.addi %19, %c2_i32_90 : i32
      %c0_91 = arith.constant 0 : index
      %78 = arith.index_cast %77 : i32 to index
      %c1_92 = arith.constant 1 : index
      %c0_93 = arith.constant 0 : index
      %79 = vector.load %arg1[%c0_91, %78, %c1_92, %c0_93] : memref<1x16x16x128xbf16, #tpu.memory_space<vmem>>, vector<1x1x14x128xbf16>
      %80 = vector.shape_cast %79 : vector<1x1x14x128xbf16> to vector<14x128xbf16>
      %c7 = arith.constant 7 : index
      %c0_94 = arith.constant 0 : index
      %c0_95 = arith.constant 0 : index
      %81 = vector.load %arg2[%c7, %c0_94, %c0_95] : memref<9x128x128xbf16, #tpu.memory_space<vmem>>, vector<1x128x128xbf16>
      %82 = vector.shape_cast %81 : vector<1x128x128xbf16> to vector<128x128xbf16>
      %cst_96 = arith.constant dense<0.000000e+00> : vector<14x128xf32>
      %83 = tpu.matmul %80, %82, %cst_96 {dimension_numbers = #tpu.dot_dimension_numbers<[1], [0], [0], [1], [0, 0, 1, 1], [], []>} : vector<14x128xbf16>, vector<128x128xbf16>, vector<14x128xf32> -> vector<14x128xf32>
      %84 = arith.addf %76, %83 : vector<14x128xf32>
      %c2_i32_97 = arith.constant 2 : i32
      %85 = arith.addi %19, %c2_i32_97 : i32
      %c0_98 = arith.constant 0 : index
      %86 = arith.index_cast %85 : i32 to index
      %c2_99 = arith.constant 2 : index
      %c0_100 = arith.constant 0 : index
      %87 = vector.load %arg1[%c0_98, %86, %c2_99, %c0_100] : memref<1x16x16x128xbf16, #tpu.memory_space<vmem>>, vector<1x1x14x128xbf16>
      %88 = vector.shape_cast %87 : vector<1x1x14x128xbf16> to vector<14x128xbf16>
      %c8 = arith.constant 8 : index
      %c0_101 = arith.constant 0 : index
      %c0_102 = arith.constant 0 : index
      %89 = vector.load %arg2[%c8, %c0_101, %c0_102] : memref<9x128x128xbf16, #tpu.memory_space<vmem>>, vector<1x128x128xbf16>
      %90 = vector.shape_cast %89 : vector<1x128x128xbf16> to vector<128x128xbf16>
      %cst_103 = arith.constant dense<0.000000e+00> : vector<14x128xf32>
      %91 = tpu.matmul %88, %90, %cst_103 {dimension_numbers = #tpu.dot_dimension_numbers<[1], [0], [0], [1], [0, 0, 1, 1], [], []>} : vector<14x128xbf16>, vector<128x128xbf16>, vector<14x128xf32> -> vector<14x128xf32>
      %92 = arith.addf %84, %91 : vector<14x128xf32>
      %c0_104 = arith.constant 0 : index
      %c0_105 = arith.constant 0 : index
      %93 = vector.load %arg4[%c0_104, %c0_105] : memref<1x128xf32, #tpu.memory_space<vmem>>, vector<1x128xf32>
      %94 = vector.broadcast %93 : vector<1x128xf32> to vector<14x128xf32>
      %95 = arith.addf %92, %94 : vector<14x128xf32>
      %cst_106 = arith.constant 0.000000e+00 : f32
      %96 = vector.broadcast %cst_106 : f32 to vector<14x128xf32>
      %97 = arith.maximumf %95, %96 : vector<14x128xf32>
      %c1_i32_107 = arith.constant 1 : i32
      %98 = arith.addi %19, %c1_i32_107 : i32
      %99 = arith.index_cast %98 : i32 to index
      %c1_108 = arith.constant 1 : index
      %c0_109 = arith.constant 0 : index
      %100 = vector.load %arg7[%99, %c1_108, %c0_109] : memref<16x16x128xf32, #tpu.memory_space<vmem>>, vector<1x14x128xf32>
      %101 = vector.shape_cast %100 : vector<1x14x128xf32> to vector<14x128xf32>
      %102 = vector.shape_cast %97 : vector<14x128xf32> to vector<1x14x128xf32>
      tpu.vector_store %arg7[%99, %c1_108, %c0_109], %102 {strides = array<i32>} : memref<16x16x128xf32, #tpu.memory_space<vmem>>, vector<1x14x128xf32>,
      %103 = vector.extract_strided_slice %97 {offsets = [1, 0], sizes = [1, 128], strides = [1, 1]} : vector<14x128xf32> to vector<1x128xf32>
      %c1_i32_110 = arith.constant 1 : i32
      %104 = arith.addi %19, %c1_i32_110 : i32
      %105 = arith.index_cast %104 : i32 to index
      %c0_111 = arith.constant 0 : index
      %c0_112 = arith.constant 0 : index
      %106 = vector.load %arg7[%105, %c0_111, %c0_112] : memref<16x16x128xf32, #tpu.memory_space<vmem>>, vector<1x1x128xf32>
      %107 = vector.shape_cast %106 : vector<1x1x128xf32> to vector<1x128xf32>
      %108 = vector.shape_cast %103 : vector<1x128xf32> to vector<1x1x128xf32>
      tpu.vector_store %arg7[%105, %c0_111, %c0_112], %108 {strides = array<i32>} : memref<16x16x128xf32, #tpu.memory_space<vmem>>, vector<1x1x128xf32>,
      %109 = vector.extract_strided_slice %97 {offsets = [12, 0], sizes = [1, 128], strides = [1, 1]} : vector<14x128xf32> to vector<1x128xf32>
      %c1_i32_113 = arith.constant 1 : i32
      %110 = arith.addi %19, %c1_i32_113 : i32
      %111 = arith.index_cast %110 : i32 to index
      %c15_114 = arith.constant 15 : index
      %c0_115 = arith.constant 0 : index
      %112 = vector.load %arg7[%111, %c15_114, %c0_115] : memref<16x16x128xf32, #tpu.memory_space<vmem>>, vector<1x1x128xf32>
      %113 = vector.shape_cast %112 : vector<1x1x128xf32> to vector<1x128xf32>
      %114 = vector.shape_cast %109 : vector<1x128xf32> to vector<1x1x128xf32>
      tpu.vector_store %arg7[%111, %c15_114, %c0_115], %114 {strides = array<i32>} : memref<16x16x128xf32, #tpu.memory_space<vmem>>, vector<1x1x128xf32>,
    }
    %c14_i32_0 = arith.constant 14 : i32
    %c2 = arith.constant 2 : index
    %c0 = arith.constant 0 : index
    %c0_1 = arith.constant 0 : index
    %1 = vector.load %arg7[%c2, %c0, %c0_1] : memref<16x16x128xf32, #tpu.memory_space<vmem>>, vector<1x16x128xf32>
    %c0_2 = arith.constant 0 : index
    %c0_3 = arith.constant 0 : index
    %c0_4 = arith.constant 0 : index
    %2 = vector.load %arg7[%c0_2, %c0_3, %c0_4] : memref<16x16x128xf32, #tpu.memory_space<vmem>>, vector<1x16x128xf32>
    tpu.vector_store %arg7[%c0_2, %c0_3, %c0_4], %1 {strides = array<i32>} : memref<16x16x128xf32, #tpu.memory_space<vmem>>, vector<1x16x128xf32>,
    %c13 = arith.constant 13 : index
    %c0_5 = arith.constant 0 : index
    %c0_6 = arith.constant 0 : index
    %3 = vector.load %arg7[%c13, %c0_5, %c0_6] : memref<16x16x128xf32, #tpu.memory_space<vmem>>, vector<1x16x128xf32>
    %c15 = arith.constant 15 : index
    %c0_7 = arith.constant 0 : index
    %c0_8 = arith.constant 0 : index
    %4 = vector.load %arg7[%c15, %c0_7, %c0_8] : memref<16x16x128xf32, #tpu.memory_space<vmem>>, vector<1x16x128xf32>
    tpu.vector_store %arg7[%c15, %c0_7, %c0_8], %3 {strides = array<i32>} : memref<16x16x128xf32, #tpu.memory_space<vmem>>, vector<1x16x128xf32>,
    %c0_9 = arith.constant 0 : index
    %c0_10 = arith.constant 0 : index
    %c0_11 = arith.constant 0 : index
    %5 = vector.load %arg7[%c0_9, %c0_10, %c0_11] : memref<16x16x128xf32, #tpu.memory_space<vmem>>, vector<16x16x128xf32>
    %6 = arith.truncf %5 : vector<16x16x128xf32> to vector<16x16x128xbf16>
    %c0_12 = arith.constant 0 : index
    %c0_13 = arith.constant 0 : index
    %c0_14 = arith.constant 0 : index
    %7 = vector.load %arg8[%c0_12, %c0_13, %c0_14] : memref<16x16x128xbf16, #tpu.memory_space<vmem>>, vector<16x16x128xbf16>
    tpu.vector_store %arg8[%c0_12, %c0_13, %c0_14], %6 {strides = array<i32>} : memref<16x16x128xbf16, #tpu.memory_space<vmem>>, vector<16x16x128xbf16>,
    %c0_i32_15 = arith.constant 0 : i32
    %c14_i32_16 = arith.constant 14 : i32
    %8 = arith.addi %c0_i32_15, %c14_i32_16 : i32
    %c1_i32_17 = arith.constant 1 : i32
    scf.for %arg9 = %c0_i32_15 to %8 step %c1_i32_17  : i32 {
      %c1_i32_38 = arith.constant 1 : i32
      %18 = arith.muli %arg9, %c1_i32_38 : i32
      %c0_i32_39 = arith.constant 0 : i32
      %19 = arith.addi %c0_i32_39, %18 : i32
      %cst = arith.constant 0.000000e+00 : f32
      %20 = vector.broadcast %cst : f32 to vector<14x128xf32>
      %c0_i32_40 = arith.constant 0 : i32
      %21 = arith.addi %19, %c0_i32_40 : i32
      %22 = arith.index_cast %21 : i32 to index
      %c0_41 = arith.constant 0 : index
      %c0_42 = arith.constant 0 : index
      %23 = vector.load %arg8[%22, %c0_41, %c0_42] : memref<16x16x128xbf16, #tpu.memory_space<vmem>>, vector<1x14x128xbf16>
      %24 = vector.shape_cast %23 : vector<1x14x128xbf16> to vector<14x128xbf16>
      %c0_43 = arith.constant 0 : index
      %c0_44 = arith.constant 0 : index
      %c0_45 = arith.constant 0 : index
      %25 = vector.load %arg3[%c0_43, %c0_44, %c0_45] : memref<9x128x128xbf16, #tpu.memory_space<vmem>>, vector<1x128x128xbf16>
      %26 = vector.shape_cast %25 : vector<1x128x128xbf16> to vector<128x128xbf16>
      %cst_46 = arith.constant dense<0.000000e+00> : vector<14x128xf32>
      %27 = tpu.matmul %24, %26, %cst_46 {dimension_numbers = #tpu.dot_dimension_numbers<[1], [0], [0], [1], [0, 0, 1, 1], [], []>} : vector<14x128xbf16>, vector<128x128xbf16>, vector<14x128xf32> -> vector<14x128xf32>
      %28 = arith.addf %20, %27 : vector<14x128xf32>
      %c0_i32_47 = arith.constant 0 : i32
      %29 = arith.addi %19, %c0_i32_47 : i32
      %30 = arith.index_cast %29 : i32 to index
      %c1 = arith.constant 1 : index
      %c0_48 = arith.constant 0 : index
      %31 = vector.load %arg8[%30, %c1, %c0_48] : memref<16x16x128xbf16, #tpu.memory_space<vmem>>, vector<1x14x128xbf16>
      %32 = vector.shape_cast %31 : vector<1x14x128xbf16> to vector<14x128xbf16>
      %c1_49 = arith.constant 1 : index
      %c0_50 = arith.constant 0 : index
      %c0_51 = arith.constant 0 : index
      %33 = vector.load %arg3[%c1_49, %c0_50, %c0_51] : memref<9x128x128xbf16, #tpu.memory_space<vmem>>, vector<1x128x128xbf16>
      %34 = vector.shape_cast %33 : vector<1x128x128xbf16> to vector<128x128xbf16>
      %cst_52 = arith.constant dense<0.000000e+00> : vector<14x128xf32>
      %35 = tpu.matmul %32, %34, %cst_52 {dimension_numbers = #tpu.dot_dimension_numbers<[1], [0], [0], [1], [0, 0, 1, 1], [], []>} : vector<14x128xbf16>, vector<128x128xbf16>, vector<14x128xf32> -> vector<14x128xf32>
      %36 = arith.addf %28, %35 : vector<14x128xf32>
      %c0_i32_53 = arith.constant 0 : i32
      %37 = arith.addi %19, %c0_i32_53 : i32
      %38 = arith.index_cast %37 : i32 to index
      %c2_54 = arith.constant 2 : index
      %c0_55 = arith.constant 0 : index
      %39 = vector.load %arg8[%38, %c2_54, %c0_55] : memref<16x16x128xbf16, #tpu.memory_space<vmem>>, vector<1x14x128xbf16>
      %40 = vector.shape_cast %39 : vector<1x14x128xbf16> to vector<14x128xbf16>
      %c2_56 = arith.constant 2 : index
      %c0_57 = arith.constant 0 : index
      %c0_58 = arith.constant 0 : index
      %41 = vector.load %arg3[%c2_56, %c0_57, %c0_58] : memref<9x128x128xbf16, #tpu.memory_space<vmem>>, vector<1x128x128xbf16>
      %42 = vector.shape_cast %41 : vector<1x128x128xbf16> to vector<128x128xbf16>
      %cst_59 = arith.constant dense<0.000000e+00> : vector<14x128xf32>
      %43 = tpu.matmul %40, %42, %cst_59 {dimension_numbers = #tpu.dot_dimension_numbers<[1], [0], [0], [1], [0, 0, 1, 1], [], []>} : vector<14x128xbf16>, vector<128x128xbf16>, vector<14x128xf32> -> vector<14x128xf32>
      %44 = arith.addf %36, %43 : vector<14x128xf32>
      %c1_i32_60 = arith.constant 1 : i32
      %45 = arith.addi %19, %c1_i32_60 : i32
      %46 = arith.index_cast %45 : i32 to index
      %c0_61 = arith.constant 0 : index
      %c0_62 = arith.constant 0 : index
      %47 = vector.load %arg8[%46, %c0_61, %c0_62] : memref<16x16x128xbf16, #tpu.memory_space<vmem>>, vector<1x14x128xbf16>
      %48 = vector.shape_cast %47 : vector<1x14x128xbf16> to vector<14x128xbf16>
      %c3 = arith.constant 3 : index
      %c0_63 = arith.constant 0 : index
      %c0_64 = arith.constant 0 : index
      %49 = vector.load %arg3[%c3, %c0_63, %c0_64] : memref<9x128x128xbf16, #tpu.memory_space<vmem>>, vector<1x128x128xbf16>
      %50 = vector.shape_cast %49 : vector<1x128x128xbf16> to vector<128x128xbf16>
      %cst_65 = arith.constant dense<0.000000e+00> : vector<14x128xf32>
      %51 = tpu.matmul %48, %50, %cst_65 {dimension_numbers = #tpu.dot_dimension_numbers<[1], [0], [0], [1], [0, 0, 1, 1], [], []>} : vector<14x128xbf16>, vector<128x128xbf16>, vector<14x128xf32> -> vector<14x128xf32>
      %52 = arith.addf %44, %51 : vector<14x128xf32>
      %c1_i32_66 = arith.constant 1 : i32
      %53 = arith.addi %19, %c1_i32_66 : i32
      %54 = arith.index_cast %53 : i32 to index
      %c1_67 = arith.constant 1 : index
      %c0_68 = arith.constant 0 : index
      %55 = vector.load %arg8[%54, %c1_67, %c0_68] : memref<16x16x128xbf16, #tpu.memory_space<vmem>>, vector<1x14x128xbf16>
      %56 = vector.shape_cast %55 : vector<1x14x128xbf16> to vector<14x128xbf16>
      %c4 = arith.constant 4 : index
      %c0_69 = arith.constant 0 : index
      %c0_70 = arith.constant 0 : index
      %57 = vector.load %arg3[%c4, %c0_69, %c0_70] : memref<9x128x128xbf16, #tpu.memory_space<vmem>>, vector<1x128x128xbf16>
      %58 = vector.shape_cast %57 : vector<1x128x128xbf16> to vector<128x128xbf16>
      %cst_71 = arith.constant dense<0.000000e+00> : vector<14x128xf32>
      %59 = tpu.matmul %56, %58, %cst_71 {dimension_numbers = #tpu.dot_dimension_numbers<[1], [0], [0], [1], [0, 0, 1, 1], [], []>} : vector<14x128xbf16>, vector<128x128xbf16>, vector<14x128xf32> -> vector<14x128xf32>
      %60 = arith.addf %52, %59 : vector<14x128xf32>
      %c1_i32_72 = arith.constant 1 : i32
      %61 = arith.addi %19, %c1_i32_72 : i32
      %62 = arith.index_cast %61 : i32 to index
      %c2_73 = arith.constant 2 : index
      %c0_74 = arith.constant 0 : index
      %63 = vector.load %arg8[%62, %c2_73, %c0_74] : memref<16x16x128xbf16, #tpu.memory_space<vmem>>, vector<1x14x128xbf16>
      %64 = vector.shape_cast %63 : vector<1x14x128xbf16> to vector<14x128xbf16>
      %c5 = arith.constant 5 : index
      %c0_75 = arith.constant 0 : index
      %c0_76 = arith.constant 0 : index
      %65 = vector.load %arg3[%c5, %c0_75, %c0_76] : memref<9x128x128xbf16, #tpu.memory_space<vmem>>, vector<1x128x128xbf16>
      %66 = vector.shape_cast %65 : vector<1x128x128xbf16> to vector<128x128xbf16>
      %cst_77 = arith.constant dense<0.000000e+00> : vector<14x128xf32>
      %67 = tpu.matmul %64, %66, %cst_77 {dimension_numbers = #tpu.dot_dimension_numbers<[1], [0], [0], [1], [0, 0, 1, 1], [], []>} : vector<14x128xbf16>, vector<128x128xbf16>, vector<14x128xf32> -> vector<14x128xf32>
      %68 = arith.addf %60, %67 : vector<14x128xf32>
      %c2_i32 = arith.constant 2 : i32
      %69 = arith.addi %19, %c2_i32 : i32
      %70 = arith.index_cast %69 : i32 to index
      %c0_78 = arith.constant 0 : index
      %c0_79 = arith.constant 0 : index
      %71 = vector.load %arg8[%70, %c0_78, %c0_79] : memref<16x16x128xbf16, #tpu.memory_space<vmem>>, vector<1x14x128xbf16>
      %72 = vector.shape_cast %71 : vector<1x14x128xbf16> to vector<14x128xbf16>
      %c6 = arith.constant 6 : index
      %c0_80 = arith.constant 0 : index
      %c0_81 = arith.constant 0 : index
      %73 = vector.load %arg3[%c6, %c0_80, %c0_81] : memref<9x128x128xbf16, #tpu.memory_space<vmem>>, vector<1x128x128xbf16>
      %74 = vector.shape_cast %73 : vector<1x128x128xbf16> to vector<128x128xbf16>
      %cst_82 = arith.constant dense<0.000000e+00> : vector<14x128xf32>
      %75 = tpu.matmul %72, %74, %cst_82 {dimension_numbers = #tpu.dot_dimension_numbers<[1], [0], [0], [1], [0, 0, 1, 1], [], []>} : vector<14x128xbf16>, vector<128x128xbf16>, vector<14x128xf32> -> vector<14x128xf32>
      %76 = arith.addf %68, %75 : vector<14x128xf32>
      %c2_i32_83 = arith.constant 2 : i32
      %77 = arith.addi %19, %c2_i32_83 : i32
      %78 = arith.index_cast %77 : i32 to index
      %c1_84 = arith.constant 1 : index
      %c0_85 = arith.constant 0 : index
      %79 = vector.load %arg8[%78, %c1_84, %c0_85] : memref<16x16x128xbf16, #tpu.memory_space<vmem>>, vector<1x14x128xbf16>
      %80 = vector.shape_cast %79 : vector<1x14x128xbf16> to vector<14x128xbf16>
      %c7 = arith.constant 7 : index
      %c0_86 = arith.constant 0 : index
      %c0_87 = arith.constant 0 : index
      %81 = vector.load %arg3[%c7, %c0_86, %c0_87] : memref<9x128x128xbf16, #tpu.memory_space<vmem>>, vector<1x128x128xbf16>
      %82 = vector.shape_cast %81 : vector<1x128x128xbf16> to vector<128x128xbf16>
      %cst_88 = arith.constant dense<0.000000e+00> : vector<14x128xf32>
      %83 = tpu.matmul %80, %82, %cst_88 {dimension_numbers = #tpu.dot_dimension_numbers<[1], [0], [0], [1], [0, 0, 1, 1], [], []>} : vector<14x128xbf16>, vector<128x128xbf16>, vector<14x128xf32> -> vector<14x128xf32>
      %84 = arith.addf %76, %83 : vector<14x128xf32>
      %c2_i32_89 = arith.constant 2 : i32
      %85 = arith.addi %19, %c2_i32_89 : i32
      %86 = arith.index_cast %85 : i32 to index
      %c2_90 = arith.constant 2 : index
      %c0_91 = arith.constant 0 : index
      %87 = vector.load %arg8[%86, %c2_90, %c0_91] : memref<16x16x128xbf16, #tpu.memory_space<vmem>>, vector<1x14x128xbf16>
      %88 = vector.shape_cast %87 : vector<1x14x128xbf16> to vector<14x128xbf16>
      %c8 = arith.constant 8 : index
      %c0_92 = arith.constant 0 : index
      %c0_93 = arith.constant 0 : index
      %89 = vector.load %arg3[%c8, %c0_92, %c0_93] : memref<9x128x128xbf16, #tpu.memory_space<vmem>>, vector<1x128x128xbf16>
      %90 = vector.shape_cast %89 : vector<1x128x128xbf16> to vector<128x128xbf16>
      %cst_94 = arith.constant dense<0.000000e+00> : vector<14x128xf32>
      %91 = tpu.matmul %88, %90, %cst_94 {dimension_numbers = #tpu.dot_dimension_numbers<[1], [0], [0], [1], [0, 0, 1, 1], [], []>} : vector<14x128xbf16>, vector<128x128xbf16>, vector<14x128xf32> -> vector<14x128xf32>
      %92 = arith.addf %84, %91 : vector<14x128xf32>
      %c0_95 = arith.constant 0 : index
      %c0_96 = arith.constant 0 : index
      %93 = vector.load %arg5[%c0_95, %c0_96] : memref<1x128xf32, #tpu.memory_space<vmem>>, vector<1x128xf32>
      %94 = vector.broadcast %93 : vector<1x128xf32> to vector<14x128xf32>
      %95 = arith.addf %92, %94 : vector<14x128xf32>
      %cst_97 = arith.constant 0.000000e+00 : f32
      %96 = vector.broadcast %cst_97 : f32 to vector<14x128xf32>
      %97 = arith.maximumf %95, %96 : vector<14x128xf32>
      %c1_i32_98 = arith.constant 1 : i32
      %98 = arith.addi %19, %c1_i32_98 : i32
      %99 = arith.index_cast %98 : i32 to index
      %c1_99 = arith.constant 1 : index
      %c0_100 = arith.constant 0 : index
      %100 = vector.load %arg7[%99, %c1_99, %c0_100] : memref<16x16x128xf32, #tpu.memory_space<vmem>>, vector<1x14x128xf32>
      %101 = vector.shape_cast %100 : vector<1x14x128xf32> to vector<14x128xf32>
      %102 = vector.shape_cast %97 : vector<14x128xf32> to vector<1x14x128xf32>
      tpu.vector_store %arg7[%99, %c1_99, %c0_100], %102 {strides = array<i32>} : memref<16x16x128xf32, #tpu.memory_space<vmem>>, vector<1x14x128xf32>,
      %103 = vector.extract_strided_slice %97 {offsets = [1, 0], sizes = [1, 128], strides = [1, 1]} : vector<14x128xf32> to vector<1x128xf32>
      %c1_i32_101 = arith.constant 1 : i32
      %104 = arith.addi %19, %c1_i32_101 : i32
      %105 = arith.index_cast %104 : i32 to index
      %c0_102 = arith.constant 0 : index
      %c0_103 = arith.constant 0 : index
      %106 = vector.load %arg7[%105, %c0_102, %c0_103] : memref<16x16x128xf32, #tpu.memory_space<vmem>>, vector<1x1x128xf32>
      %107 = vector.shape_cast %106 : vector<1x1x128xf32> to vector<1x128xf32>
      %108 = vector.shape_cast %103 : vector<1x128xf32> to vector<1x1x128xf32>
      tpu.vector_store %arg7[%105, %c0_102, %c0_103], %108 {strides = array<i32>} : memref<16x16x128xf32, #tpu.memory_space<vmem>>, vector<1x1x128xf32>,
      %109 = vector.extract_strided_slice %97 {offsets = [12, 0], sizes = [1, 128], strides = [1, 1]} : vector<14x128xf32> to vector<1x128xf32>
      %c1_i32_104 = arith.constant 1 : i32
      %110 = arith.addi %19, %c1_i32_104 : i32
      %111 = arith.index_cast %110 : i32 to index
      %c15_105 = arith.constant 15 : index
      %c0_106 = arith.constant 0 : index
      %112 = vector.load %arg7[%111, %c15_105, %c0_106] : memref<16x16x128xf32, #tpu.memory_space<vmem>>, vector<1x1x128xf32>
      %113 = vector.shape_cast %112 : vector<1x1x128xf32> to vector<1x128xf32>
      %114 = vector.shape_cast %109 : vector<1x128xf32> to vector<1x1x128xf32>
      tpu.vector_store %arg7[%111, %c15_105, %c0_106], %114 {strides = array<i32>} : memref<16x16x128xf32, #tpu.memory_space<vmem>>, vector<1x1x128xf32>,
    }
    %c14_i32_18 = arith.constant 14 : i32
    %c2_19 = arith.constant 2 : index
    %c0_20 = arith.constant 0 : index
    %c0_21 = arith.constant 0 : index
    %9 = vector.load %arg7[%c2_19, %c0_20, %c0_21] : memref<16x16x128xf32, #tpu.memory_space<vmem>>, vector<1x16x128xf32>
    %c0_22 = arith.constant 0 : index
    %c0_23 = arith.constant 0 : index
    %c0_24 = arith.constant 0 : index
    %10 = vector.load %arg7[%c0_22, %c0_23, %c0_24] : memref<16x16x128xf32, #tpu.memory_space<vmem>>, vector<1x16x128xf32>
    tpu.vector_store %arg7[%c0_22, %c0_23, %c0_24], %9 {strides = array<i32>} : memref<16x16x128xf32, #tpu.memory_space<vmem>>, vector<1x16x128xf32>,
    %c13_25 = arith.constant 13 : index
    %c0_26 = arith.constant 0 : index
    %c0_27 = arith.constant 0 : index
    %11 = vector.load %arg7[%c13_25, %c0_26, %c0_27] : memref<16x16x128xf32, #tpu.memory_space<vmem>>, vector<1x16x128xf32>
    %c15_28 = arith.constant 15 : index
    %c0_29 = arith.constant 0 : index
    %c0_30 = arith.constant 0 : index
    %12 = vector.load %arg7[%c15_28, %c0_29, %c0_30] : memref<16x16x128xf32, #tpu.memory_space<vmem>>, vector<1x16x128xf32>
    tpu.vector_store %arg7[%c15_28, %c0_29, %c0_30], %11 {strides = array<i32>} : memref<16x16x128xf32, #tpu.memory_space<vmem>>, vector<1x16x128xf32>,
    %c0_31 = arith.constant 0 : index
    %c0_32 = arith.constant 0 : index
    %c0_33 = arith.constant 0 : index
    %13 = vector.load %arg7[%c0_31, %c0_32, %c0_33] : memref<16x16x128xf32, #tpu.memory_space<vmem>>, vector<16x16x128xf32>
    %14 = arith.truncf %13 : vector<16x16x128xf32> to vector<16x16x128xbf16>
    %c0_34 = arith.constant 0 : index
    %c0_35 = arith.constant 0 : index
    %c0_36 = arith.constant 0 : index
    %c0_37 = arith.constant 0 : index
    %15 = vector.load %arg6[%c0_34, %c0_35, %c0_36, %c0_37] : memref<1x16x16x128xbf16, #tpu.memory_space<vmem>>, vector<1x16x16x128xbf16>
    %16 = vector.shape_cast %15 : vector<1x16x16x128xbf16> to vector<16x16x128xbf16>
    %17 = vector.shape_cast %14 : vector<16x16x128xbf16> to vector<1x16x16x128xbf16>
    tpu.vector_store %arg6[%c0_34, %c0_35, %c0_36, %c0_37], %17 {strides = array<i32>} : memref<1x16x16x128xbf16, #tpu.memory_space<vmem>>, vector<1x16x16x128xbf16>,
    return
  }
  func.func @transform_0(%arg0: i32) -> (i32, i32, i32, i32) {
    %c0_i32 = arith.constant 0 : i32
    %c0_i32_0 = arith.constant 0 : i32
    %c0_i32_1 = arith.constant 0 : i32
    %c0_i32_2 = arith.constant 0 : i32
    return %arg0, %c0_i32, %c0_i32_0, %c0_i32_1 : i32, i32, i32, i32
  }
  func.func @transform_1(%arg0: i32) -> (i32, i32, i32) {
    %c0_i32 = arith.constant 0 : i32
    %c0_i32_0 = arith.constant 0 : i32
    %c0_i32_1 = arith.constant 0 : i32
    %c0_i32_2 = arith.constant 0 : i32
    return %c0_i32, %c0_i32_0, %c0_i32_1 : i32, i32, i32
  }
  func.func @transform_2(%arg0: i32) -> (i32, i32, i32) {
    %c0_i32 = arith.constant 0 : i32
    %c0_i32_0 = arith.constant 0 : i32
    %c0_i32_1 = arith.constant 0 : i32
    %c0_i32_2 = arith.constant 0 : i32
    return %c0_i32, %c0_i32_0, %c0_i32_1 : i32, i32, i32
  }
  func.func @transform_3(%arg0: i32) -> (i32, i32) {
    %c0_i32 = arith.constant 0 : i32
    %c0_i32_0 = arith.constant 0 : i32
    %c0_i32_1 = arith.constant 0 : i32
    return %c0_i32, %c0_i32_0 : i32, i32
  }
  func.func @transform_4(%arg0: i32) -> (i32, i32) {
    %c0_i32 = arith.constant 0 : i32
    %c0_i32_0 = arith.constant 0 : i32
    %c0_i32_1 = arith.constant 0 : i32
    return %c0_i32, %c0_i32_0 : i32, i32
  }
  func.func @transform_5(%arg0: i32) -> (i32, i32, i32, i32) {
    %c0_i32 = arith.constant 0 : i32
    %c0_i32_0 = arith.constant 0 : i32
    %c0_i32_1 = arith.constant 0 : i32
    %c0_i32_2 = arith.constant 0 : i32
    return %arg0, %c0_i32, %c0_i32_0, %c0_i32_1 : i32, i32, i32, i32
  }
}

module attributes {stable_mosaic.version = 11 : i64} {
  func.func @kernel(%arg0: i32, %arg1: memref<1x8x8x128xbf16, #tpu.memory_space<vmem>>, %arg2: memref<9x128x128xbf16, #tpu.memory_space<vmem>>, %arg3: memref<9x128x128xbf16, #tpu.memory_space<vmem>>, %arg4: memref<1x128xf32, #tpu.memory_space<vmem>>, %arg5: memref<1x128xf32, #tpu.memory_space<vmem>>, %arg6: memref<1x8x8x128xbf16, #tpu.memory_space<vmem>>, %arg7: memref<8x8x128xf32, #tpu.memory_space<vmem>>, %arg8: memref<8x8x128xbf16, #tpu.memory_space<vmem>>) attributes {dimension_semantics = [#tpu.dimension_semantics<parallel>], iteration_bounds = array<i64: 2>, scalar_prefetch = 0 : i64, scratch_operands = 2 : i64, tpu.core_type = #tpu.core_type<tc>, window_params = [{transform_indices = @transform_0, window_bounds = array<i64: 1, 8, 8, 128>}, {pipeline_mode = #tpu.pipeline_mode<synchronous>, transform_indices = @transform_1, window_bounds = array<i64: 9, 128, 128>}, {pipeline_mode = #tpu.pipeline_mode<synchronous>, transform_indices = @transform_2, window_bounds = array<i64: 9, 128, 128>}, {pipeline_mode = #tpu.pipeline_mode<synchronous>, transform_indices = @transform_3, window_bounds = array<i64: 1, 128>}, {pipeline_mode = #tpu.pipeline_mode<synchronous>, transform_indices = @transform_4, window_bounds = array<i64: 1, 128>}, {transform_indices = @transform_5, window_bounds = array<i64: 1, 8, 8, 128>}]} {
    %c0_i32 = arith.constant 0 : i32
    %c6_i32 = arith.constant 6 : i32
    %0 = arith.addi %c0_i32, %c6_i32 : i32
    %c1_i32 = arith.constant 1 : i32
    scf.for %arg9 = %c0_i32 to %0 step %c1_i32  : i32 {
      %c1_i32_38 = arith.constant 1 : i32
      %18 = arith.muli %arg9, %c1_i32_38 : i32
      %c0_i32_39 = arith.constant 0 : i32
      %19 = arith.addi %c0_i32_39, %18 : i32
      %cst = arith.constant 0.000000e+00 : f32
      %20 = vector.broadcast %cst : f32 to vector<6x128xf32>
      %c0_i32_40 = arith.constant 0 : i32
      %21 = arith.addi %19, %c0_i32_40 : i32
      %c0_41 = arith.constant 0 : index
      %22 = arith.index_cast %21 : i32 to index
      %c0_42 = arith.constant 0 : index
      %c0_43 = arith.constant 0 : index
      %23 = vector.load %arg1[%c0_41, %22, %c0_42, %c0_43] : memref<1x8x8x128xbf16, #tpu.memory_space<vmem>>, vector<1x1x6x128xbf16>
      %24 = vector.shape_cast %23 : vector<1x1x6x128xbf16> to vector<6x128xbf16>
      %c0_44 = arith.constant 0 : index
      %c0_45 = arith.constant 0 : index
      %c0_46 = arith.constant 0 : index
      %25 = vector.load %arg2[%c0_44, %c0_45, %c0_46] : memref<9x128x128xbf16, #tpu.memory_space<vmem>>, vector<1x128x128xbf16>
      %26 = vector.shape_cast %25 : vector<1x128x128xbf16> to vector<128x128xbf16>
      %cst_47 = arith.constant dense<0.000000e+00> : vector<6x128xf32>
      %27 = tpu.matmul %24, %26, %cst_47 {dimension_numbers = #tpu.dot_dimension_numbers<[1], [0], [0], [1], [0, 0, 1, 1], [], []>} : vector<6x128xbf16>, vector<128x128xbf16>, vector<6x128xf32> -> vector<6x128xf32>
      %28 = arith.addf %20, %27 : vector<6x128xf32>
      %c0_i32_48 = arith.constant 0 : i32
      %29 = arith.addi %19, %c0_i32_48 : i32
      %c0_49 = arith.constant 0 : index
      %30 = arith.index_cast %29 : i32 to index
      %c1 = arith.constant 1 : index
      %c0_50 = arith.constant 0 : index
      %31 = vector.load %arg1[%c0_49, %30, %c1, %c0_50] : memref<1x8x8x128xbf16, #tpu.memory_space<vmem>>, vector<1x1x6x128xbf16>
      %32 = vector.shape_cast %31 : vector<1x1x6x128xbf16> to vector<6x128xbf16>
      %c1_51 = arith.constant 1 : index
      %c0_52 = arith.constant 0 : index
      %c0_53 = arith.constant 0 : index
      %33 = vector.load %arg2[%c1_51, %c0_52, %c0_53] : memref<9x128x128xbf16, #tpu.memory_space<vmem>>, vector<1x128x128xbf16>
      %34 = vector.shape_cast %33 : vector<1x128x128xbf16> to vector<128x128xbf16>
      %cst_54 = arith.constant dense<0.000000e+00> : vector<6x128xf32>
      %35 = tpu.matmul %32, %34, %cst_54 {dimension_numbers = #tpu.dot_dimension_numbers<[1], [0], [0], [1], [0, 0, 1, 1], [], []>} : vector<6x128xbf16>, vector<128x128xbf16>, vector<6x128xf32> -> vector<6x128xf32>
      %36 = arith.addf %28, %35 : vector<6x128xf32>
      %c0_i32_55 = arith.constant 0 : i32
      %37 = arith.addi %19, %c0_i32_55 : i32
      %c0_56 = arith.constant 0 : index
      %38 = arith.index_cast %37 : i32 to index
      %c2_57 = arith.constant 2 : index
      %c0_58 = arith.constant 0 : index
      %39 = vector.load %arg1[%c0_56, %38, %c2_57, %c0_58] : memref<1x8x8x128xbf16, #tpu.memory_space<vmem>>, vector<1x1x6x128xbf16>
      %40 = vector.shape_cast %39 : vector<1x1x6x128xbf16> to vector<6x128xbf16>
      %c2_59 = arith.constant 2 : index
      %c0_60 = arith.constant 0 : index
      %c0_61 = arith.constant 0 : index
      %41 = vector.load %arg2[%c2_59, %c0_60, %c0_61] : memref<9x128x128xbf16, #tpu.memory_space<vmem>>, vector<1x128x128xbf16>
      %42 = vector.shape_cast %41 : vector<1x128x128xbf16> to vector<128x128xbf16>
      %cst_62 = arith.constant dense<0.000000e+00> : vector<6x128xf32>
      %43 = tpu.matmul %40, %42, %cst_62 {dimension_numbers = #tpu.dot_dimension_numbers<[1], [0], [0], [1], [0, 0, 1, 1], [], []>} : vector<6x128xbf16>, vector<128x128xbf16>, vector<6x128xf32> -> vector<6x128xf32>
      %44 = arith.addf %36, %43 : vector<6x128xf32>
      %c1_i32_63 = arith.constant 1 : i32
      %45 = arith.addi %19, %c1_i32_63 : i32
      %c0_64 = arith.constant 0 : index
      %46 = arith.index_cast %45 : i32 to index
      %c0_65 = arith.constant 0 : index
      %c0_66 = arith.constant 0 : index
      %47 = vector.load %arg1[%c0_64, %46, %c0_65, %c0_66] : memref<1x8x8x128xbf16, #tpu.memory_space<vmem>>, vector<1x1x6x128xbf16>
      %48 = vector.shape_cast %47 : vector<1x1x6x128xbf16> to vector<6x128xbf16>
      %c3 = arith.constant 3 : index
      %c0_67 = arith.constant 0 : index
      %c0_68 = arith.constant 0 : index
      %49 = vector.load %arg2[%c3, %c0_67, %c0_68] : memref<9x128x128xbf16, #tpu.memory_space<vmem>>, vector<1x128x128xbf16>
      %50 = vector.shape_cast %49 : vector<1x128x128xbf16> to vector<128x128xbf16>
      %cst_69 = arith.constant dense<0.000000e+00> : vector<6x128xf32>
      %51 = tpu.matmul %48, %50, %cst_69 {dimension_numbers = #tpu.dot_dimension_numbers<[1], [0], [0], [1], [0, 0, 1, 1], [], []>} : vector<6x128xbf16>, vector<128x128xbf16>, vector<6x128xf32> -> vector<6x128xf32>
      %52 = arith.addf %44, %51 : vector<6x128xf32>
      %c1_i32_70 = arith.constant 1 : i32
      %53 = arith.addi %19, %c1_i32_70 : i32
      %c0_71 = arith.constant 0 : index
      %54 = arith.index_cast %53 : i32 to index
      %c1_72 = arith.constant 1 : index
      %c0_73 = arith.constant 0 : index
      %55 = vector.load %arg1[%c0_71, %54, %c1_72, %c0_73] : memref<1x8x8x128xbf16, #tpu.memory_space<vmem>>, vector<1x1x6x128xbf16>
      %56 = vector.shape_cast %55 : vector<1x1x6x128xbf16> to vector<6x128xbf16>
      %c4 = arith.constant 4 : index
      %c0_74 = arith.constant 0 : index
      %c0_75 = arith.constant 0 : index
      %57 = vector.load %arg2[%c4, %c0_74, %c0_75] : memref<9x128x128xbf16, #tpu.memory_space<vmem>>, vector<1x128x128xbf16>
      %58 = vector.shape_cast %57 : vector<1x128x128xbf16> to vector<128x128xbf16>
      %cst_76 = arith.constant dense<0.000000e+00> : vector<6x128xf32>
      %59 = tpu.matmul %56, %58, %cst_76 {dimension_numbers = #tpu.dot_dimension_numbers<[1], [0], [0], [1], [0, 0, 1, 1], [], []>} : vector<6x128xbf16>, vector<128x128xbf16>, vector<6x128xf32> -> vector<6x128xf32>
      %60 = arith.addf %52, %59 : vector<6x128xf32>
      %c1_i32_77 = arith.constant 1 : i32
      %61 = arith.addi %19, %c1_i32_77 : i32
      %c0_78 = arith.constant 0 : index
      %62 = arith.index_cast %61 : i32 to index
      %c2_79 = arith.constant 2 : index
      %c0_80 = arith.constant 0 : index
      %63 = vector.load %arg1[%c0_78, %62, %c2_79, %c0_80] : memref<1x8x8x128xbf16, #tpu.memory_space<vmem>>, vector<1x1x6x128xbf16>
      %64 = vector.shape_cast %63 : vector<1x1x6x128xbf16> to vector<6x128xbf16>
      %c5_81 = arith.constant 5 : index
      %c0_82 = arith.constant 0 : index
      %c0_83 = arith.constant 0 : index
      %65 = vector.load %arg2[%c5_81, %c0_82, %c0_83] : memref<9x128x128xbf16, #tpu.memory_space<vmem>>, vector<1x128x128xbf16>
      %66 = vector.shape_cast %65 : vector<1x128x128xbf16> to vector<128x128xbf16>
      %cst_84 = arith.constant dense<0.000000e+00> : vector<6x128xf32>
      %67 = tpu.matmul %64, %66, %cst_84 {dimension_numbers = #tpu.dot_dimension_numbers<[1], [0], [0], [1], [0, 0, 1, 1], [], []>} : vector<6x128xbf16>, vector<128x128xbf16>, vector<6x128xf32> -> vector<6x128xf32>
      %68 = arith.addf %60, %67 : vector<6x128xf32>
      %c2_i32 = arith.constant 2 : i32
      %69 = arith.addi %19, %c2_i32 : i32
      %c0_85 = arith.constant 0 : index
      %70 = arith.index_cast %69 : i32 to index
      %c0_86 = arith.constant 0 : index
      %c0_87 = arith.constant 0 : index
      %71 = vector.load %arg1[%c0_85, %70, %c0_86, %c0_87] : memref<1x8x8x128xbf16, #tpu.memory_space<vmem>>, vector<1x1x6x128xbf16>
      %72 = vector.shape_cast %71 : vector<1x1x6x128xbf16> to vector<6x128xbf16>
      %c6 = arith.constant 6 : index
      %c0_88 = arith.constant 0 : index
      %c0_89 = arith.constant 0 : index
      %73 = vector.load %arg2[%c6, %c0_88, %c0_89] : memref<9x128x128xbf16, #tpu.memory_space<vmem>>, vector<1x128x128xbf16>
      %74 = vector.shape_cast %73 : vector<1x128x128xbf16> to vector<128x128xbf16>
      %cst_90 = arith.constant dense<0.000000e+00> : vector<6x128xf32>
      %75 = tpu.matmul %72, %74, %cst_90 {dimension_numbers = #tpu.dot_dimension_numbers<[1], [0], [0], [1], [0, 0, 1, 1], [], []>} : vector<6x128xbf16>, vector<128x128xbf16>, vector<6x128xf32> -> vector<6x128xf32>
      %76 = arith.addf %68, %75 : vector<6x128xf32>
      %c2_i32_91 = arith.constant 2 : i32
      %77 = arith.addi %19, %c2_i32_91 : i32
      %c0_92 = arith.constant 0 : index
      %78 = arith.index_cast %77 : i32 to index
      %c1_93 = arith.constant 1 : index
      %c0_94 = arith.constant 0 : index
      %79 = vector.load %arg1[%c0_92, %78, %c1_93, %c0_94] : memref<1x8x8x128xbf16, #tpu.memory_space<vmem>>, vector<1x1x6x128xbf16>
      %80 = vector.shape_cast %79 : vector<1x1x6x128xbf16> to vector<6x128xbf16>
      %c7_95 = arith.constant 7 : index
      %c0_96 = arith.constant 0 : index
      %c0_97 = arith.constant 0 : index
      %81 = vector.load %arg2[%c7_95, %c0_96, %c0_97] : memref<9x128x128xbf16, #tpu.memory_space<vmem>>, vector<1x128x128xbf16>
      %82 = vector.shape_cast %81 : vector<1x128x128xbf16> to vector<128x128xbf16>
      %cst_98 = arith.constant dense<0.000000e+00> : vector<6x128xf32>
      %83 = tpu.matmul %80, %82, %cst_98 {dimension_numbers = #tpu.dot_dimension_numbers<[1], [0], [0], [1], [0, 0, 1, 1], [], []>} : vector<6x128xbf16>, vector<128x128xbf16>, vector<6x128xf32> -> vector<6x128xf32>
      %84 = arith.addf %76, %83 : vector<6x128xf32>
      %c2_i32_99 = arith.constant 2 : i32
      %85 = arith.addi %19, %c2_i32_99 : i32
      %c0_100 = arith.constant 0 : index
      %86 = arith.index_cast %85 : i32 to index
      %c2_101 = arith.constant 2 : index
      %c0_102 = arith.constant 0 : index
      %87 = vector.load %arg1[%c0_100, %86, %c2_101, %c0_102] : memref<1x8x8x128xbf16, #tpu.memory_space<vmem>>, vector<1x1x6x128xbf16>
      %88 = vector.shape_cast %87 : vector<1x1x6x128xbf16> to vector<6x128xbf16>
      %c8 = arith.constant 8 : index
      %c0_103 = arith.constant 0 : index
      %c0_104 = arith.constant 0 : index
      %89 = vector.load %arg2[%c8, %c0_103, %c0_104] : memref<9x128x128xbf16, #tpu.memory_space<vmem>>, vector<1x128x128xbf16>
      %90 = vector.shape_cast %89 : vector<1x128x128xbf16> to vector<128x128xbf16>
      %cst_105 = arith.constant dense<0.000000e+00> : vector<6x128xf32>
      %91 = tpu.matmul %88, %90, %cst_105 {dimension_numbers = #tpu.dot_dimension_numbers<[1], [0], [0], [1], [0, 0, 1, 1], [], []>} : vector<6x128xbf16>, vector<128x128xbf16>, vector<6x128xf32> -> vector<6x128xf32>
      %92 = arith.addf %84, %91 : vector<6x128xf32>
      %c0_106 = arith.constant 0 : index
      %c0_107 = arith.constant 0 : index
      %93 = vector.load %arg4[%c0_106, %c0_107] : memref<1x128xf32, #tpu.memory_space<vmem>>, vector<1x128xf32>
      %94 = vector.broadcast %93 : vector<1x128xf32> to vector<6x128xf32>
      %95 = arith.addf %92, %94 : vector<6x128xf32>
      %cst_108 = arith.constant 0.000000e+00 : f32
      %96 = vector.broadcast %cst_108 : f32 to vector<6x128xf32>
      %97 = arith.maximumf %95, %96 : vector<6x128xf32>
      %c1_i32_109 = arith.constant 1 : i32
      %98 = arith.addi %19, %c1_i32_109 : i32
      %99 = arith.index_cast %98 : i32 to index
      %c1_110 = arith.constant 1 : index
      %c0_111 = arith.constant 0 : index
      %100 = vector.load %arg7[%99, %c1_110, %c0_111] : memref<8x8x128xf32, #tpu.memory_space<vmem>>, vector<1x6x128xf32>
      %101 = vector.shape_cast %100 : vector<1x6x128xf32> to vector<6x128xf32>
      %102 = vector.shape_cast %97 : vector<6x128xf32> to vector<1x6x128xf32>
      tpu.vector_store %arg7[%99, %c1_110, %c0_111], %102 {strides = array<i32>} : memref<8x8x128xf32, #tpu.memory_space<vmem>>, vector<1x6x128xf32>,
      %103 = vector.extract_strided_slice %97 {offsets = [1, 0], sizes = [1, 128], strides = [1, 1]} : vector<6x128xf32> to vector<1x128xf32>
      %c1_i32_112 = arith.constant 1 : i32
      %104 = arith.addi %19, %c1_i32_112 : i32
      %105 = arith.index_cast %104 : i32 to index
      %c0_113 = arith.constant 0 : index
      %c0_114 = arith.constant 0 : index
      %106 = vector.load %arg7[%105, %c0_113, %c0_114] : memref<8x8x128xf32, #tpu.memory_space<vmem>>, vector<1x1x128xf32>
      %107 = vector.shape_cast %106 : vector<1x1x128xf32> to vector<1x128xf32>
      %108 = vector.shape_cast %103 : vector<1x128xf32> to vector<1x1x128xf32>
      tpu.vector_store %arg7[%105, %c0_113, %c0_114], %108 {strides = array<i32>} : memref<8x8x128xf32, #tpu.memory_space<vmem>>, vector<1x1x128xf32>,
      %109 = vector.extract_strided_slice %97 {offsets = [4, 0], sizes = [1, 128], strides = [1, 1]} : vector<6x128xf32> to vector<1x128xf32>
      %c1_i32_115 = arith.constant 1 : i32
      %110 = arith.addi %19, %c1_i32_115 : i32
      %111 = arith.index_cast %110 : i32 to index
      %c7_116 = arith.constant 7 : index
      %c0_117 = arith.constant 0 : index
      %112 = vector.load %arg7[%111, %c7_116, %c0_117] : memref<8x8x128xf32, #tpu.memory_space<vmem>>, vector<1x1x128xf32>
      %113 = vector.shape_cast %112 : vector<1x1x128xf32> to vector<1x128xf32>
      %114 = vector.shape_cast %109 : vector<1x128xf32> to vector<1x1x128xf32>
      tpu.vector_store %arg7[%111, %c7_116, %c0_117], %114 {strides = array<i32>} : memref<8x8x128xf32, #tpu.memory_space<vmem>>, vector<1x1x128xf32>,
    }
    %c6_i32_0 = arith.constant 6 : i32
    %c2 = arith.constant 2 : index
    %c0 = arith.constant 0 : index
    %c0_1 = arith.constant 0 : index
    %1 = vector.load %arg7[%c2, %c0, %c0_1] : memref<8x8x128xf32, #tpu.memory_space<vmem>>, vector<1x8x128xf32>
    %c0_2 = arith.constant 0 : index
    %c0_3 = arith.constant 0 : index
    %c0_4 = arith.constant 0 : index
    %2 = vector.load %arg7[%c0_2, %c0_3, %c0_4] : memref<8x8x128xf32, #tpu.memory_space<vmem>>, vector<1x8x128xf32>
    tpu.vector_store %arg7[%c0_2, %c0_3, %c0_4], %1 {strides = array<i32>} : memref<8x8x128xf32, #tpu.memory_space<vmem>>, vector<1x8x128xf32>,
    %c5 = arith.constant 5 : index
    %c0_5 = arith.constant 0 : index
    %c0_6 = arith.constant 0 : index
    %3 = vector.load %arg7[%c5, %c0_5, %c0_6] : memref<8x8x128xf32, #tpu.memory_space<vmem>>, vector<1x8x128xf32>
    %c7 = arith.constant 7 : index
    %c0_7 = arith.constant 0 : index
    %c0_8 = arith.constant 0 : index
    %4 = vector.load %arg7[%c7, %c0_7, %c0_8] : memref<8x8x128xf32, #tpu.memory_space<vmem>>, vector<1x8x128xf32>
    tpu.vector_store %arg7[%c7, %c0_7, %c0_8], %3 {strides = array<i32>} : memref<8x8x128xf32, #tpu.memory_space<vmem>>, vector<1x8x128xf32>,
    %c0_9 = arith.constant 0 : index
    %c0_10 = arith.constant 0 : index
    %c0_11 = arith.constant 0 : index
    %5 = vector.load %arg7[%c0_9, %c0_10, %c0_11] : memref<8x8x128xf32, #tpu.memory_space<vmem>>, vector<8x8x128xf32>
    %6 = arith.truncf %5 : vector<8x8x128xf32> to vector<8x8x128xbf16>
    %c0_12 = arith.constant 0 : index
    %c0_13 = arith.constant 0 : index
    %c0_14 = arith.constant 0 : index
    %7 = vector.load %arg8[%c0_12, %c0_13, %c0_14] : memref<8x8x128xbf16, #tpu.memory_space<vmem>>, vector<8x8x128xbf16>
    tpu.vector_store %arg8[%c0_12, %c0_13, %c0_14], %6 {strides = array<i32>} : memref<8x8x128xbf16, #tpu.memory_space<vmem>>, vector<8x8x128xbf16>,
    %c0_i32_15 = arith.constant 0 : i32
    %c6_i32_16 = arith.constant 6 : i32
    %8 = arith.addi %c0_i32_15, %c6_i32_16 : i32
    %c1_i32_17 = arith.constant 1 : i32
    scf.for %arg9 = %c0_i32_15 to %8 step %c1_i32_17  : i32 {
      %c1_i32_38 = arith.constant 1 : i32
      %18 = arith.muli %arg9, %c1_i32_38 : i32
      %c0_i32_39 = arith.constant 0 : i32
      %19 = arith.addi %c0_i32_39, %18 : i32
      %cst = arith.constant 0.000000e+00 : f32
      %20 = vector.broadcast %cst : f32 to vector<6x128xf32>
      %c0_i32_40 = arith.constant 0 : i32
      %21 = arith.addi %19, %c0_i32_40 : i32
      %22 = arith.index_cast %21 : i32 to index
      %c0_41 = arith.constant 0 : index
      %c0_42 = arith.constant 0 : index
      %23 = vector.load %arg8[%22, %c0_41, %c0_42] : memref<8x8x128xbf16, #tpu.memory_space<vmem>>, vector<1x6x128xbf16>
      %24 = vector.shape_cast %23 : vector<1x6x128xbf16> to vector<6x128xbf16>
      %c0_43 = arith.constant 0 : index
      %c0_44 = arith.constant 0 : index
      %c0_45 = arith.constant 0 : index
      %25 = vector.load %arg3[%c0_43, %c0_44, %c0_45] : memref<9x128x128xbf16, #tpu.memory_space<vmem>>, vector<1x128x128xbf16>
      %26 = vector.shape_cast %25 : vector<1x128x128xbf16> to vector<128x128xbf16>
      %cst_46 = arith.constant dense<0.000000e+00> : vector<6x128xf32>
      %27 = tpu.matmul %24, %26, %cst_46 {dimension_numbers = #tpu.dot_dimension_numbers<[1], [0], [0], [1], [0, 0, 1, 1], [], []>} : vector<6x128xbf16>, vector<128x128xbf16>, vector<6x128xf32> -> vector<6x128xf32>
      %28 = arith.addf %20, %27 : vector<6x128xf32>
      %c0_i32_47 = arith.constant 0 : i32
      %29 = arith.addi %19, %c0_i32_47 : i32
      %30 = arith.index_cast %29 : i32 to index
      %c1 = arith.constant 1 : index
      %c0_48 = arith.constant 0 : index
      %31 = vector.load %arg8[%30, %c1, %c0_48] : memref<8x8x128xbf16, #tpu.memory_space<vmem>>, vector<1x6x128xbf16>
      %32 = vector.shape_cast %31 : vector<1x6x128xbf16> to vector<6x128xbf16>
      %c1_49 = arith.constant 1 : index
      %c0_50 = arith.constant 0 : index
      %c0_51 = arith.constant 0 : index
      %33 = vector.load %arg3[%c1_49, %c0_50, %c0_51] : memref<9x128x128xbf16, #tpu.memory_space<vmem>>, vector<1x128x128xbf16>
      %34 = vector.shape_cast %33 : vector<1x128x128xbf16> to vector<128x128xbf16>
      %cst_52 = arith.constant dense<0.000000e+00> : vector<6x128xf32>
      %35 = tpu.matmul %32, %34, %cst_52 {dimension_numbers = #tpu.dot_dimension_numbers<[1], [0], [0], [1], [0, 0, 1, 1], [], []>} : vector<6x128xbf16>, vector<128x128xbf16>, vector<6x128xf32> -> vector<6x128xf32>
      %36 = arith.addf %28, %35 : vector<6x128xf32>
      %c0_i32_53 = arith.constant 0 : i32
      %37 = arith.addi %19, %c0_i32_53 : i32
      %38 = arith.index_cast %37 : i32 to index
      %c2_54 = arith.constant 2 : index
      %c0_55 = arith.constant 0 : index
      %39 = vector.load %arg8[%38, %c2_54, %c0_55] : memref<8x8x128xbf16, #tpu.memory_space<vmem>>, vector<1x6x128xbf16>
      %40 = vector.shape_cast %39 : vector<1x6x128xbf16> to vector<6x128xbf16>
      %c2_56 = arith.constant 2 : index
      %c0_57 = arith.constant 0 : index
      %c0_58 = arith.constant 0 : index
      %41 = vector.load %arg3[%c2_56, %c0_57, %c0_58] : memref<9x128x128xbf16, #tpu.memory_space<vmem>>, vector<1x128x128xbf16>
      %42 = vector.shape_cast %41 : vector<1x128x128xbf16> to vector<128x128xbf16>
      %cst_59 = arith.constant dense<0.000000e+00> : vector<6x128xf32>
      %43 = tpu.matmul %40, %42, %cst_59 {dimension_numbers = #tpu.dot_dimension_numbers<[1], [0], [0], [1], [0, 0, 1, 1], [], []>} : vector<6x128xbf16>, vector<128x128xbf16>, vector<6x128xf32> -> vector<6x128xf32>
      %44 = arith.addf %36, %43 : vector<6x128xf32>
      %c1_i32_60 = arith.constant 1 : i32
      %45 = arith.addi %19, %c1_i32_60 : i32
      %46 = arith.index_cast %45 : i32 to index
      %c0_61 = arith.constant 0 : index
      %c0_62 = arith.constant 0 : index
      %47 = vector.load %arg8[%46, %c0_61, %c0_62] : memref<8x8x128xbf16, #tpu.memory_space<vmem>>, vector<1x6x128xbf16>
      %48 = vector.shape_cast %47 : vector<1x6x128xbf16> to vector<6x128xbf16>
      %c3 = arith.constant 3 : index
      %c0_63 = arith.constant 0 : index
      %c0_64 = arith.constant 0 : index
      %49 = vector.load %arg3[%c3, %c0_63, %c0_64] : memref<9x128x128xbf16, #tpu.memory_space<vmem>>, vector<1x128x128xbf16>
      %50 = vector.shape_cast %49 : vector<1x128x128xbf16> to vector<128x128xbf16>
      %cst_65 = arith.constant dense<0.000000e+00> : vector<6x128xf32>
      %51 = tpu.matmul %48, %50, %cst_65 {dimension_numbers = #tpu.dot_dimension_numbers<[1], [0], [0], [1], [0, 0, 1, 1], [], []>} : vector<6x128xbf16>, vector<128x128xbf16>, vector<6x128xf32> -> vector<6x128xf32>
      %52 = arith.addf %44, %51 : vector<6x128xf32>
      %c1_i32_66 = arith.constant 1 : i32
      %53 = arith.addi %19, %c1_i32_66 : i32
      %54 = arith.index_cast %53 : i32 to index
      %c1_67 = arith.constant 1 : index
      %c0_68 = arith.constant 0 : index
      %55 = vector.load %arg8[%54, %c1_67, %c0_68] : memref<8x8x128xbf16, #tpu.memory_space<vmem>>, vector<1x6x128xbf16>
      %56 = vector.shape_cast %55 : vector<1x6x128xbf16> to vector<6x128xbf16>
      %c4 = arith.constant 4 : index
      %c0_69 = arith.constant 0 : index
      %c0_70 = arith.constant 0 : index
      %57 = vector.load %arg3[%c4, %c0_69, %c0_70] : memref<9x128x128xbf16, #tpu.memory_space<vmem>>, vector<1x128x128xbf16>
      %58 = vector.shape_cast %57 : vector<1x128x128xbf16> to vector<128x128xbf16>
      %cst_71 = arith.constant dense<0.000000e+00> : vector<6x128xf32>
      %59 = tpu.matmul %56, %58, %cst_71 {dimension_numbers = #tpu.dot_dimension_numbers<[1], [0], [0], [1], [0, 0, 1, 1], [], []>} : vector<6x128xbf16>, vector<128x128xbf16>, vector<6x128xf32> -> vector<6x128xf32>
      %60 = arith.addf %52, %59 : vector<6x128xf32>
      %c1_i32_72 = arith.constant 1 : i32
      %61 = arith.addi %19, %c1_i32_72 : i32
      %62 = arith.index_cast %61 : i32 to index
      %c2_73 = arith.constant 2 : index
      %c0_74 = arith.constant 0 : index
      %63 = vector.load %arg8[%62, %c2_73, %c0_74] : memref<8x8x128xbf16, #tpu.memory_space<vmem>>, vector<1x6x128xbf16>
      %64 = vector.shape_cast %63 : vector<1x6x128xbf16> to vector<6x128xbf16>
      %c5_75 = arith.constant 5 : index
      %c0_76 = arith.constant 0 : index
      %c0_77 = arith.constant 0 : index
      %65 = vector.load %arg3[%c5_75, %c0_76, %c0_77] : memref<9x128x128xbf16, #tpu.memory_space<vmem>>, vector<1x128x128xbf16>
      %66 = vector.shape_cast %65 : vector<1x128x128xbf16> to vector<128x128xbf16>
      %cst_78 = arith.constant dense<0.000000e+00> : vector<6x128xf32>
      %67 = tpu.matmul %64, %66, %cst_78 {dimension_numbers = #tpu.dot_dimension_numbers<[1], [0], [0], [1], [0, 0, 1, 1], [], []>} : vector<6x128xbf16>, vector<128x128xbf16>, vector<6x128xf32> -> vector<6x128xf32>
      %68 = arith.addf %60, %67 : vector<6x128xf32>
      %c2_i32 = arith.constant 2 : i32
      %69 = arith.addi %19, %c2_i32 : i32
      %70 = arith.index_cast %69 : i32 to index
      %c0_79 = arith.constant 0 : index
      %c0_80 = arith.constant 0 : index
      %71 = vector.load %arg8[%70, %c0_79, %c0_80] : memref<8x8x128xbf16, #tpu.memory_space<vmem>>, vector<1x6x128xbf16>
      %72 = vector.shape_cast %71 : vector<1x6x128xbf16> to vector<6x128xbf16>
      %c6 = arith.constant 6 : index
      %c0_81 = arith.constant 0 : index
      %c0_82 = arith.constant 0 : index
      %73 = vector.load %arg3[%c6, %c0_81, %c0_82] : memref<9x128x128xbf16, #tpu.memory_space<vmem>>, vector<1x128x128xbf16>
      %74 = vector.shape_cast %73 : vector<1x128x128xbf16> to vector<128x128xbf16>
      %cst_83 = arith.constant dense<0.000000e+00> : vector<6x128xf32>
      %75 = tpu.matmul %72, %74, %cst_83 {dimension_numbers = #tpu.dot_dimension_numbers<[1], [0], [0], [1], [0, 0, 1, 1], [], []>} : vector<6x128xbf16>, vector<128x128xbf16>, vector<6x128xf32> -> vector<6x128xf32>
      %76 = arith.addf %68, %75 : vector<6x128xf32>
      %c2_i32_84 = arith.constant 2 : i32
      %77 = arith.addi %19, %c2_i32_84 : i32
      %78 = arith.index_cast %77 : i32 to index
      %c1_85 = arith.constant 1 : index
      %c0_86 = arith.constant 0 : index
      %79 = vector.load %arg8[%78, %c1_85, %c0_86] : memref<8x8x128xbf16, #tpu.memory_space<vmem>>, vector<1x6x128xbf16>
      %80 = vector.shape_cast %79 : vector<1x6x128xbf16> to vector<6x128xbf16>
      %c7_87 = arith.constant 7 : index
      %c0_88 = arith.constant 0 : index
      %c0_89 = arith.constant 0 : index
      %81 = vector.load %arg3[%c7_87, %c0_88, %c0_89] : memref<9x128x128xbf16, #tpu.memory_space<vmem>>, vector<1x128x128xbf16>
      %82 = vector.shape_cast %81 : vector<1x128x128xbf16> to vector<128x128xbf16>
      %cst_90 = arith.constant dense<0.000000e+00> : vector<6x128xf32>
      %83 = tpu.matmul %80, %82, %cst_90 {dimension_numbers = #tpu.dot_dimension_numbers<[1], [0], [0], [1], [0, 0, 1, 1], [], []>} : vector<6x128xbf16>, vector<128x128xbf16>, vector<6x128xf32> -> vector<6x128xf32>
      %84 = arith.addf %76, %83 : vector<6x128xf32>
      %c2_i32_91 = arith.constant 2 : i32
      %85 = arith.addi %19, %c2_i32_91 : i32
      %86 = arith.index_cast %85 : i32 to index
      %c2_92 = arith.constant 2 : index
      %c0_93 = arith.constant 0 : index
      %87 = vector.load %arg8[%86, %c2_92, %c0_93] : memref<8x8x128xbf16, #tpu.memory_space<vmem>>, vector<1x6x128xbf16>
      %88 = vector.shape_cast %87 : vector<1x6x128xbf16> to vector<6x128xbf16>
      %c8 = arith.constant 8 : index
      %c0_94 = arith.constant 0 : index
      %c0_95 = arith.constant 0 : index
      %89 = vector.load %arg3[%c8, %c0_94, %c0_95] : memref<9x128x128xbf16, #tpu.memory_space<vmem>>, vector<1x128x128xbf16>
      %90 = vector.shape_cast %89 : vector<1x128x128xbf16> to vector<128x128xbf16>
      %cst_96 = arith.constant dense<0.000000e+00> : vector<6x128xf32>
      %91 = tpu.matmul %88, %90, %cst_96 {dimension_numbers = #tpu.dot_dimension_numbers<[1], [0], [0], [1], [0, 0, 1, 1], [], []>} : vector<6x128xbf16>, vector<128x128xbf16>, vector<6x128xf32> -> vector<6x128xf32>
      %92 = arith.addf %84, %91 : vector<6x128xf32>
      %c0_97 = arith.constant 0 : index
      %c0_98 = arith.constant 0 : index
      %93 = vector.load %arg5[%c0_97, %c0_98] : memref<1x128xf32, #tpu.memory_space<vmem>>, vector<1x128xf32>
      %94 = vector.broadcast %93 : vector<1x128xf32> to vector<6x128xf32>
      %95 = arith.addf %92, %94 : vector<6x128xf32>
      %cst_99 = arith.constant 0.000000e+00 : f32
      %96 = vector.broadcast %cst_99 : f32 to vector<6x128xf32>
      %97 = arith.maximumf %95, %96 : vector<6x128xf32>
      %c1_i32_100 = arith.constant 1 : i32
      %98 = arith.addi %19, %c1_i32_100 : i32
      %99 = arith.index_cast %98 : i32 to index
      %c1_101 = arith.constant 1 : index
      %c0_102 = arith.constant 0 : index
      %100 = vector.load %arg7[%99, %c1_101, %c0_102] : memref<8x8x128xf32, #tpu.memory_space<vmem>>, vector<1x6x128xf32>
      %101 = vector.shape_cast %100 : vector<1x6x128xf32> to vector<6x128xf32>
      %102 = vector.shape_cast %97 : vector<6x128xf32> to vector<1x6x128xf32>
      tpu.vector_store %arg7[%99, %c1_101, %c0_102], %102 {strides = array<i32>} : memref<8x8x128xf32, #tpu.memory_space<vmem>>, vector<1x6x128xf32>,
      %103 = vector.extract_strided_slice %97 {offsets = [1, 0], sizes = [1, 128], strides = [1, 1]} : vector<6x128xf32> to vector<1x128xf32>
      %c1_i32_103 = arith.constant 1 : i32
      %104 = arith.addi %19, %c1_i32_103 : i32
      %105 = arith.index_cast %104 : i32 to index
      %c0_104 = arith.constant 0 : index
      %c0_105 = arith.constant 0 : index
      %106 = vector.load %arg7[%105, %c0_104, %c0_105] : memref<8x8x128xf32, #tpu.memory_space<vmem>>, vector<1x1x128xf32>
      %107 = vector.shape_cast %106 : vector<1x1x128xf32> to vector<1x128xf32>
      %108 = vector.shape_cast %103 : vector<1x128xf32> to vector<1x1x128xf32>
      tpu.vector_store %arg7[%105, %c0_104, %c0_105], %108 {strides = array<i32>} : memref<8x8x128xf32, #tpu.memory_space<vmem>>, vector<1x1x128xf32>,
      %109 = vector.extract_strided_slice %97 {offsets = [4, 0], sizes = [1, 128], strides = [1, 1]} : vector<6x128xf32> to vector<1x128xf32>
      %c1_i32_106 = arith.constant 1 : i32
      %110 = arith.addi %19, %c1_i32_106 : i32
      %111 = arith.index_cast %110 : i32 to index
      %c7_107 = arith.constant 7 : index
      %c0_108 = arith.constant 0 : index
      %112 = vector.load %arg7[%111, %c7_107, %c0_108] : memref<8x8x128xf32, #tpu.memory_space<vmem>>, vector<1x1x128xf32>
      %113 = vector.shape_cast %112 : vector<1x1x128xf32> to vector<1x128xf32>
      %114 = vector.shape_cast %109 : vector<1x128xf32> to vector<1x1x128xf32>
      tpu.vector_store %arg7[%111, %c7_107, %c0_108], %114 {strides = array<i32>} : memref<8x8x128xf32, #tpu.memory_space<vmem>>, vector<1x1x128xf32>,
    }
    %c6_i32_18 = arith.constant 6 : i32
    %c2_19 = arith.constant 2 : index
    %c0_20 = arith.constant 0 : index
    %c0_21 = arith.constant 0 : index
    %9 = vector.load %arg7[%c2_19, %c0_20, %c0_21] : memref<8x8x128xf32, #tpu.memory_space<vmem>>, vector<1x8x128xf32>
    %c0_22 = arith.constant 0 : index
    %c0_23 = arith.constant 0 : index
    %c0_24 = arith.constant 0 : index
    %10 = vector.load %arg7[%c0_22, %c0_23, %c0_24] : memref<8x8x128xf32, #tpu.memory_space<vmem>>, vector<1x8x128xf32>
    tpu.vector_store %arg7[%c0_22, %c0_23, %c0_24], %9 {strides = array<i32>} : memref<8x8x128xf32, #tpu.memory_space<vmem>>, vector<1x8x128xf32>,
    %c5_25 = arith.constant 5 : index
    %c0_26 = arith.constant 0 : index
    %c0_27 = arith.constant 0 : index
    %11 = vector.load %arg7[%c5_25, %c0_26, %c0_27] : memref<8x8x128xf32, #tpu.memory_space<vmem>>, vector<1x8x128xf32>
    %c7_28 = arith.constant 7 : index
    %c0_29 = arith.constant 0 : index
    %c0_30 = arith.constant 0 : index
    %12 = vector.load %arg7[%c7_28, %c0_29, %c0_30] : memref<8x8x128xf32, #tpu.memory_space<vmem>>, vector<1x8x128xf32>
    tpu.vector_store %arg7[%c7_28, %c0_29, %c0_30], %11 {strides = array<i32>} : memref<8x8x128xf32, #tpu.memory_space<vmem>>, vector<1x8x128xf32>,
    %c0_31 = arith.constant 0 : index
    %c0_32 = arith.constant 0 : index
    %c0_33 = arith.constant 0 : index
    %13 = vector.load %arg7[%c0_31, %c0_32, %c0_33] : memref<8x8x128xf32, #tpu.memory_space<vmem>>, vector<8x8x128xf32>
    %14 = arith.truncf %13 : vector<8x8x128xf32> to vector<8x8x128xbf16>
    %c0_34 = arith.constant 0 : index
    %c0_35 = arith.constant 0 : index
    %c0_36 = arith.constant 0 : index
    %c0_37 = arith.constant 0 : index
    %15 = vector.load %arg6[%c0_34, %c0_35, %c0_36, %c0_37] : memref<1x8x8x128xbf16, #tpu.memory_space<vmem>>, vector<1x8x8x128xbf16>
    %16 = vector.shape_cast %15 : vector<1x8x8x128xbf16> to vector<8x8x128xbf16>
    %17 = vector.shape_cast %14 : vector<8x8x128xbf16> to vector<1x8x8x128xbf16>
    tpu.vector_store %arg6[%c0_34, %c0_35, %c0_36, %c0_37], %17 {strides = array<i32>} : memref<1x8x8x128xbf16, #tpu.memory_space<vmem>>, vector<1x8x8x128xbf16>,
    return
  }
  func.func @transform_0(%arg0: i32) -> (i32, i32, i32, i32) {
    %c0_i32 = arith.constant 0 : i32
    %c0_i32_0 = arith.constant 0 : i32
    %c0_i32_1 = arith.constant 0 : i32
    %c0_i32_2 = arith.constant 0 : i32
    return %arg0, %c0_i32, %c0_i32_0, %c0_i32_1 : i32, i32, i32, i32
  }
  func.func @transform_1(%arg0: i32) -> (i32, i32, i32) {
    %c0_i32 = arith.constant 0 : i32
    %c0_i32_0 = arith.constant 0 : i32
    %c0_i32_1 = arith.constant 0 : i32
    %c0_i32_2 = arith.constant 0 : i32
    return %c0_i32, %c0_i32_0, %c0_i32_1 : i32, i32, i32
  }
  func.func @transform_2(%arg0: i32) -> (i32, i32, i32) {
    %c0_i32 = arith.constant 0 : i32
    %c0_i32_0 = arith.constant 0 : i32
    %c0_i32_1 = arith.constant 0 : i32
    %c0_i32_2 = arith.constant 0 : i32
    return %c0_i32, %c0_i32_0, %c0_i32_1 : i32, i32, i32
  }
  func.func @transform_3(%arg0: i32) -> (i32, i32) {
    %c0_i32 = arith.constant 0 : i32
    %c0_i32_0 = arith.constant 0 : i32
    %c0_i32_1 = arith.constant 0 : i32
    return %c0_i32, %c0_i32_0 : i32, i32
  }
  func.func @transform_4(%arg0: i32) -> (i32, i32) {
    %c0_i32 = arith.constant 0 : i32
    %c0_i32_0 = arith.constant 0 : i32
    %c0_i32_1 = arith.constant 0 : i32
    return %c0_i32, %c0_i32_0 : i32, i32
  }
  func.func @transform_5(%arg0: i32) -> (i32, i32, i32, i32) {
    %c0_i32 = arith.constant 0 : i32
    %c0_i32_0 = arith.constant 0 : i32
    %c0_i32_1 = arith.constant 0 : i32
    %c0_i32_2 = arith.constant 0 : i32
    return %arg0, %c0_i32, %c0_i32_0, %c0_i32_1 : i32, i32, i32, i32
  }
}

module attributes {stable_mosaic.version = 11 : i64} {
  func.func @kernel(%arg0: i32, %arg1: memref<1x16x16x128xbf16, #tpu.memory_space<vmem>>, %arg2: memref<1x16x16x128xbf16, #tpu.memory_space<vmem>>, %arg3: memref<9x128x128xbf16, #tpu.memory_space<vmem>>, %arg4: memref<9x128x128xbf16, #tpu.memory_space<vmem>>, %arg5: memref<9x128x128xbf16, #tpu.memory_space<vmem>>, %arg6: memref<1x128xf32, #tpu.memory_space<vmem>>, %arg7: memref<1x128xf32, #tpu.memory_space<vmem>>, %arg8: memref<1x16x16x128xbf16, #tpu.memory_space<vmem>>, %arg9: memref<16x16x128xf32, #tpu.memory_space<vmem>>, %arg10: memref<16x16x128xbf16, #tpu.memory_space<vmem>>) attributes {dimension_semantics = [#tpu.dimension_semantics<parallel>], iteration_bounds = array<i64: 2>, scalar_prefetch = 0 : i64, scratch_operands = 2 : i64, tpu.core_type = #tpu.core_type<tc>, window_params = [{transform_indices = @transform_0, window_bounds = array<i64: 1, 16, 16, 128>}, {transform_indices = @transform_1, window_bounds = array<i64: 1, 16, 16, 128>}, {pipeline_mode = #tpu.pipeline_mode<synchronous>, transform_indices = @transform_2, window_bounds = array<i64: 9, 128, 128>}, {pipeline_mode = #tpu.pipeline_mode<synchronous>, transform_indices = @transform_3, window_bounds = array<i64: 9, 128, 128>}, {pipeline_mode = #tpu.pipeline_mode<synchronous>, transform_indices = @transform_4, window_bounds = array<i64: 9, 128, 128>}, {pipeline_mode = #tpu.pipeline_mode<synchronous>, transform_indices = @transform_5, window_bounds = array<i64: 1, 128>}, {pipeline_mode = #tpu.pipeline_mode<synchronous>, transform_indices = @transform_6, window_bounds = array<i64: 1, 128>}, {transform_indices = @transform_7, window_bounds = array<i64: 1, 16, 16, 128>}]} {
    %c0_i32 = arith.constant 0 : i32
    %c14_i32 = arith.constant 14 : i32
    %0 = arith.addi %c0_i32, %c14_i32 : i32
    %c1_i32 = arith.constant 1 : i32
    scf.for %arg11 = %c0_i32 to %0 step %c1_i32  : i32 {
      %c1_i32_38 = arith.constant 1 : i32
      %18 = arith.muli %arg11, %c1_i32_38 : i32
      %c0_i32_39 = arith.constant 0 : i32
      %19 = arith.addi %c0_i32_39, %18 : i32
      %cst = arith.constant 0.000000e+00 : f32
      %20 = vector.broadcast %cst : f32 to vector<14x128xf32>
      %c0_i32_40 = arith.constant 0 : i32
      %21 = arith.addi %19, %c0_i32_40 : i32
      %c0_41 = arith.constant 0 : index
      %22 = arith.index_cast %21 : i32 to index
      %c0_42 = arith.constant 0 : index
      %c0_43 = arith.constant 0 : index
      %23 = vector.load %arg1[%c0_41, %22, %c0_42, %c0_43] : memref<1x16x16x128xbf16, #tpu.memory_space<vmem>>, vector<1x1x14x128xbf16>
      %24 = vector.shape_cast %23 : vector<1x1x14x128xbf16> to vector<14x128xbf16>
      %c0_44 = arith.constant 0 : index
      %c0_45 = arith.constant 0 : index
      %c0_46 = arith.constant 0 : index
      %25 = vector.load %arg3[%c0_44, %c0_45, %c0_46] : memref<9x128x128xbf16, #tpu.memory_space<vmem>>, vector<1x128x128xbf16>
      %26 = vector.shape_cast %25 : vector<1x128x128xbf16> to vector<128x128xbf16>
      %cst_47 = arith.constant dense<0.000000e+00> : vector<14x128xf32>
      %27 = tpu.matmul %24, %26, %cst_47 {dimension_numbers = #tpu.dot_dimension_numbers<[1], [0], [0], [1], [0, 0, 1, 1], [], []>} : vector<14x128xbf16>, vector<128x128xbf16>, vector<14x128xf32> -> vector<14x128xf32>
      %28 = arith.addf %20, %27 : vector<14x128xf32>
      %c0_i32_48 = arith.constant 0 : i32
      %29 = arith.addi %19, %c0_i32_48 : i32
      %c0_49 = arith.constant 0 : index
      %30 = arith.index_cast %29 : i32 to index
      %c0_50 = arith.constant 0 : index
      %c0_51 = arith.constant 0 : index
      %31 = vector.load %arg2[%c0_49, %30, %c0_50, %c0_51] : memref<1x16x16x128xbf16, #tpu.memory_space<vmem>>, vector<1x1x14x128xbf16>
      %32 = vector.shape_cast %31 : vector<1x1x14x128xbf16> to vector<14x128xbf16>
      %c0_52 = arith.constant 0 : index
      %c0_53 = arith.constant 0 : index
      %c0_54 = arith.constant 0 : index
      %33 = vector.load %arg4[%c0_52, %c0_53, %c0_54] : memref<9x128x128xbf16, #tpu.memory_space<vmem>>, vector<1x128x128xbf16>
      %34 = vector.shape_cast %33 : vector<1x128x128xbf16> to vector<128x128xbf16>
      %cst_55 = arith.constant dense<0.000000e+00> : vector<14x128xf32>
      %35 = tpu.matmul %32, %34, %cst_55 {dimension_numbers = #tpu.dot_dimension_numbers<[1], [0], [0], [1], [0, 0, 1, 1], [], []>} : vector<14x128xbf16>, vector<128x128xbf16>, vector<14x128xf32> -> vector<14x128xf32>
      %36 = arith.addf %28, %35 : vector<14x128xf32>
      %c0_i32_56 = arith.constant 0 : i32
      %37 = arith.addi %19, %c0_i32_56 : i32
      %c0_57 = arith.constant 0 : index
      %38 = arith.index_cast %37 : i32 to index
      %c1 = arith.constant 1 : index
      %c0_58 = arith.constant 0 : index
      %39 = vector.load %arg1[%c0_57, %38, %c1, %c0_58] : memref<1x16x16x128xbf16, #tpu.memory_space<vmem>>, vector<1x1x14x128xbf16>
      %40 = vector.shape_cast %39 : vector<1x1x14x128xbf16> to vector<14x128xbf16>
      %c1_59 = arith.constant 1 : index
      %c0_60 = arith.constant 0 : index
      %c0_61 = arith.constant 0 : index
      %41 = vector.load %arg3[%c1_59, %c0_60, %c0_61] : memref<9x128x128xbf16, #tpu.memory_space<vmem>>, vector<1x128x128xbf16>
      %42 = vector.shape_cast %41 : vector<1x128x128xbf16> to vector<128x128xbf16>
      %cst_62 = arith.constant dense<0.000000e+00> : vector<14x128xf32>
      %43 = tpu.matmul %40, %42, %cst_62 {dimension_numbers = #tpu.dot_dimension_numbers<[1], [0], [0], [1], [0, 0, 1, 1], [], []>} : vector<14x128xbf16>, vector<128x128xbf16>, vector<14x128xf32> -> vector<14x128xf32>
      %44 = arith.addf %36, %43 : vector<14x128xf32>
      %c0_i32_63 = arith.constant 0 : i32
      %45 = arith.addi %19, %c0_i32_63 : i32
      %c0_64 = arith.constant 0 : index
      %46 = arith.index_cast %45 : i32 to index
      %c1_65 = arith.constant 1 : index
      %c0_66 = arith.constant 0 : index
      %47 = vector.load %arg2[%c0_64, %46, %c1_65, %c0_66] : memref<1x16x16x128xbf16, #tpu.memory_space<vmem>>, vector<1x1x14x128xbf16>
      %48 = vector.shape_cast %47 : vector<1x1x14x128xbf16> to vector<14x128xbf16>
      %c1_67 = arith.constant 1 : index
      %c0_68 = arith.constant 0 : index
      %c0_69 = arith.constant 0 : index
      %49 = vector.load %arg4[%c1_67, %c0_68, %c0_69] : memref<9x128x128xbf16, #tpu.memory_space<vmem>>, vector<1x128x128xbf16>
      %50 = vector.shape_cast %49 : vector<1x128x128xbf16> to vector<128x128xbf16>
      %cst_70 = arith.constant dense<0.000000e+00> : vector<14x128xf32>
      %51 = tpu.matmul %48, %50, %cst_70 {dimension_numbers = #tpu.dot_dimension_numbers<[1], [0], [0], [1], [0, 0, 1, 1], [], []>} : vector<14x128xbf16>, vector<128x128xbf16>, vector<14x128xf32> -> vector<14x128xf32>
      %52 = arith.addf %44, %51 : vector<14x128xf32>
      %c0_i32_71 = arith.constant 0 : i32
      %53 = arith.addi %19, %c0_i32_71 : i32
      %c0_72 = arith.constant 0 : index
      %54 = arith.index_cast %53 : i32 to index
      %c2_73 = arith.constant 2 : index
      %c0_74 = arith.constant 0 : index
      %55 = vector.load %arg1[%c0_72, %54, %c2_73, %c0_74] : memref<1x16x16x128xbf16, #tpu.memory_space<vmem>>, vector<1x1x14x128xbf16>
      %56 = vector.shape_cast %55 : vector<1x1x14x128xbf16> to vector<14x128xbf16>
      %c2_75 = arith.constant 2 : index
      %c0_76 = arith.constant 0 : index
      %c0_77 = arith.constant 0 : index
      %57 = vector.load %arg3[%c2_75, %c0_76, %c0_77] : memref<9x128x128xbf16, #tpu.memory_space<vmem>>, vector<1x128x128xbf16>
      %58 = vector.shape_cast %57 : vector<1x128x128xbf16> to vector<128x128xbf16>
      %cst_78 = arith.constant dense<0.000000e+00> : vector<14x128xf32>
      %59 = tpu.matmul %56, %58, %cst_78 {dimension_numbers = #tpu.dot_dimension_numbers<[1], [0], [0], [1], [0, 0, 1, 1], [], []>} : vector<14x128xbf16>, vector<128x128xbf16>, vector<14x128xf32> -> vector<14x128xf32>
      %60 = arith.addf %52, %59 : vector<14x128xf32>
      %c0_i32_79 = arith.constant 0 : i32
      %61 = arith.addi %19, %c0_i32_79 : i32
      %c0_80 = arith.constant 0 : index
      %62 = arith.index_cast %61 : i32 to index
      %c2_81 = arith.constant 2 : index
      %c0_82 = arith.constant 0 : index
      %63 = vector.load %arg2[%c0_80, %62, %c2_81, %c0_82] : memref<1x16x16x128xbf16, #tpu.memory_space<vmem>>, vector<1x1x14x128xbf16>
      %64 = vector.shape_cast %63 : vector<1x1x14x128xbf16> to vector<14x128xbf16>
      %c2_83 = arith.constant 2 : index
      %c0_84 = arith.constant 0 : index
      %c0_85 = arith.constant 0 : index
      %65 = vector.load %arg4[%c2_83, %c0_84, %c0_85] : memref<9x128x128xbf16, #tpu.memory_space<vmem>>, vector<1x128x128xbf16>
      %66 = vector.shape_cast %65 : vector<1x128x128xbf16> to vector<128x128xbf16>
      %cst_86 = arith.constant dense<0.000000e+00> : vector<14x128xf32>
      %67 = tpu.matmul %64, %66, %cst_86 {dimension_numbers = #tpu.dot_dimension_numbers<[1], [0], [0], [1], [0, 0, 1, 1], [], []>} : vector<14x128xbf16>, vector<128x128xbf16>, vector<14x128xf32> -> vector<14x128xf32>
      %68 = arith.addf %60, %67 : vector<14x128xf32>
      %c1_i32_87 = arith.constant 1 : i32
      %69 = arith.addi %19, %c1_i32_87 : i32
      %c0_88 = arith.constant 0 : index
      %70 = arith.index_cast %69 : i32 to index
      %c0_89 = arith.constant 0 : index
      %c0_90 = arith.constant 0 : index
      %71 = vector.load %arg1[%c0_88, %70, %c0_89, %c0_90] : memref<1x16x16x128xbf16, #tpu.memory_space<vmem>>, vector<1x1x14x128xbf16>
      %72 = vector.shape_cast %71 : vector<1x1x14x128xbf16> to vector<14x128xbf16>
      %c3 = arith.constant 3 : index
      %c0_91 = arith.constant 0 : index
      %c0_92 = arith.constant 0 : index
      %73 = vector.load %arg3[%c3, %c0_91, %c0_92] : memref<9x128x128xbf16, #tpu.memory_space<vmem>>, vector<1x128x128xbf16>
      %74 = vector.shape_cast %73 : vector<1x128x128xbf16> to vector<128x128xbf16>
      %cst_93 = arith.constant dense<0.000000e+00> : vector<14x128xf32>
      %75 = tpu.matmul %72, %74, %cst_93 {dimension_numbers = #tpu.dot_dimension_numbers<[1], [0], [0], [1], [0, 0, 1, 1], [], []>} : vector<14x128xbf16>, vector<128x128xbf16>, vector<14x128xf32> -> vector<14x128xf32>
      %76 = arith.addf %68, %75 : vector<14x128xf32>
      %c1_i32_94 = arith.constant 1 : i32
      %77 = arith.addi %19, %c1_i32_94 : i32
      %c0_95 = arith.constant 0 : index
      %78 = arith.index_cast %77 : i32 to index
      %c0_96 = arith.constant 0 : index
      %c0_97 = arith.constant 0 : index
      %79 = vector.load %arg2[%c0_95, %78, %c0_96, %c0_97] : memref<1x16x16x128xbf16, #tpu.memory_space<vmem>>, vector<1x1x14x128xbf16>
      %80 = vector.shape_cast %79 : vector<1x1x14x128xbf16> to vector<14x128xbf16>
      %c3_98 = arith.constant 3 : index
      %c0_99 = arith.constant 0 : index
      %c0_100 = arith.constant 0 : index
      %81 = vector.load %arg4[%c3_98, %c0_99, %c0_100] : memref<9x128x128xbf16, #tpu.memory_space<vmem>>, vector<1x128x128xbf16>
      %82 = vector.shape_cast %81 : vector<1x128x128xbf16> to vector<128x128xbf16>
      %cst_101 = arith.constant dense<0.000000e+00> : vector<14x128xf32>
      %83 = tpu.matmul %80, %82, %cst_101 {dimension_numbers = #tpu.dot_dimension_numbers<[1], [0], [0], [1], [0, 0, 1, 1], [], []>} : vector<14x128xbf16>, vector<128x128xbf16>, vector<14x128xf32> -> vector<14x128xf32>
      %84 = arith.addf %76, %83 : vector<14x128xf32>
      %c1_i32_102 = arith.constant 1 : i32
      %85 = arith.addi %19, %c1_i32_102 : i32
      %c0_103 = arith.constant 0 : index
      %86 = arith.index_cast %85 : i32 to index
      %c1_104 = arith.constant 1 : index
      %c0_105 = arith.constant 0 : index
      %87 = vector.load %arg1[%c0_103, %86, %c1_104, %c0_105] : memref<1x16x16x128xbf16, #tpu.memory_space<vmem>>, vector<1x1x14x128xbf16>
      %88 = vector.shape_cast %87 : vector<1x1x14x128xbf16> to vector<14x128xbf16>
      %c4 = arith.constant 4 : index
      %c0_106 = arith.constant 0 : index
      %c0_107 = arith.constant 0 : index
      %89 = vector.load %arg3[%c4, %c0_106, %c0_107] : memref<9x128x128xbf16, #tpu.memory_space<vmem>>, vector<1x128x128xbf16>
      %90 = vector.shape_cast %89 : vector<1x128x128xbf16> to vector<128x128xbf16>
      %cst_108 = arith.constant dense<0.000000e+00> : vector<14x128xf32>
      %91 = tpu.matmul %88, %90, %cst_108 {dimension_numbers = #tpu.dot_dimension_numbers<[1], [0], [0], [1], [0, 0, 1, 1], [], []>} : vector<14x128xbf16>, vector<128x128xbf16>, vector<14x128xf32> -> vector<14x128xf32>
      %92 = arith.addf %84, %91 : vector<14x128xf32>
      %c1_i32_109 = arith.constant 1 : i32
      %93 = arith.addi %19, %c1_i32_109 : i32
      %c0_110 = arith.constant 0 : index
      %94 = arith.index_cast %93 : i32 to index
      %c1_111 = arith.constant 1 : index
      %c0_112 = arith.constant 0 : index
      %95 = vector.load %arg2[%c0_110, %94, %c1_111, %c0_112] : memref<1x16x16x128xbf16, #tpu.memory_space<vmem>>, vector<1x1x14x128xbf16>
      %96 = vector.shape_cast %95 : vector<1x1x14x128xbf16> to vector<14x128xbf16>
      %c4_113 = arith.constant 4 : index
      %c0_114 = arith.constant 0 : index
      %c0_115 = arith.constant 0 : index
      %97 = vector.load %arg4[%c4_113, %c0_114, %c0_115] : memref<9x128x128xbf16, #tpu.memory_space<vmem>>, vector<1x128x128xbf16>
      %98 = vector.shape_cast %97 : vector<1x128x128xbf16> to vector<128x128xbf16>
      %cst_116 = arith.constant dense<0.000000e+00> : vector<14x128xf32>
      %99 = tpu.matmul %96, %98, %cst_116 {dimension_numbers = #tpu.dot_dimension_numbers<[1], [0], [0], [1], [0, 0, 1, 1], [], []>} : vector<14x128xbf16>, vector<128x128xbf16>, vector<14x128xf32> -> vector<14x128xf32>
      %100 = arith.addf %92, %99 : vector<14x128xf32>
      %c1_i32_117 = arith.constant 1 : i32
      %101 = arith.addi %19, %c1_i32_117 : i32
      %c0_118 = arith.constant 0 : index
      %102 = arith.index_cast %101 : i32 to index
      %c2_119 = arith.constant 2 : index
      %c0_120 = arith.constant 0 : index
      %103 = vector.load %arg1[%c0_118, %102, %c2_119, %c0_120] : memref<1x16x16x128xbf16, #tpu.memory_space<vmem>>, vector<1x1x14x128xbf16>
      %104 = vector.shape_cast %103 : vector<1x1x14x128xbf16> to vector<14x128xbf16>
      %c5 = arith.constant 5 : index
      %c0_121 = arith.constant 0 : index
      %c0_122 = arith.constant 0 : index
      %105 = vector.load %arg3[%c5, %c0_121, %c0_122] : memref<9x128x128xbf16, #tpu.memory_space<vmem>>, vector<1x128x128xbf16>
      %106 = vector.shape_cast %105 : vector<1x128x128xbf16> to vector<128x128xbf16>
      %cst_123 = arith.constant dense<0.000000e+00> : vector<14x128xf32>
      %107 = tpu.matmul %104, %106, %cst_123 {dimension_numbers = #tpu.dot_dimension_numbers<[1], [0], [0], [1], [0, 0, 1, 1], [], []>} : vector<14x128xbf16>, vector<128x128xbf16>, vector<14x128xf32> -> vector<14x128xf32>
      %108 = arith.addf %100, %107 : vector<14x128xf32>
      %c1_i32_124 = arith.constant 1 : i32
      %109 = arith.addi %19, %c1_i32_124 : i32
      %c0_125 = arith.constant 0 : index
      %110 = arith.index_cast %109 : i32 to index
      %c2_126 = arith.constant 2 : index
      %c0_127 = arith.constant 0 : index
      %111 = vector.load %arg2[%c0_125, %110, %c2_126, %c0_127] : memref<1x16x16x128xbf16, #tpu.memory_space<vmem>>, vector<1x1x14x128xbf16>
      %112 = vector.shape_cast %111 : vector<1x1x14x128xbf16> to vector<14x128xbf16>
      %c5_128 = arith.constant 5 : index
      %c0_129 = arith.constant 0 : index
      %c0_130 = arith.constant 0 : index
      %113 = vector.load %arg4[%c5_128, %c0_129, %c0_130] : memref<9x128x128xbf16, #tpu.memory_space<vmem>>, vector<1x128x128xbf16>
      %114 = vector.shape_cast %113 : vector<1x128x128xbf16> to vector<128x128xbf16>
      %cst_131 = arith.constant dense<0.000000e+00> : vector<14x128xf32>
      %115 = tpu.matmul %112, %114, %cst_131 {dimension_numbers = #tpu.dot_dimension_numbers<[1], [0], [0], [1], [0, 0, 1, 1], [], []>} : vector<14x128xbf16>, vector<128x128xbf16>, vector<14x128xf32> -> vector<14x128xf32>
      %116 = arith.addf %108, %115 : vector<14x128xf32>
      %c2_i32 = arith.constant 2 : i32
      %117 = arith.addi %19, %c2_i32 : i32
      %c0_132 = arith.constant 0 : index
      %118 = arith.index_cast %117 : i32 to index
      %c0_133 = arith.constant 0 : index
      %c0_134 = arith.constant 0 : index
      %119 = vector.load %arg1[%c0_132, %118, %c0_133, %c0_134] : memref<1x16x16x128xbf16, #tpu.memory_space<vmem>>, vector<1x1x14x128xbf16>
      %120 = vector.shape_cast %119 : vector<1x1x14x128xbf16> to vector<14x128xbf16>
      %c6 = arith.constant 6 : index
      %c0_135 = arith.constant 0 : index
      %c0_136 = arith.constant 0 : index
      %121 = vector.load %arg3[%c6, %c0_135, %c0_136] : memref<9x128x128xbf16, #tpu.memory_space<vmem>>, vector<1x128x128xbf16>
      %122 = vector.shape_cast %121 : vector<1x128x128xbf16> to vector<128x128xbf16>
      %cst_137 = arith.constant dense<0.000000e+00> : vector<14x128xf32>
      %123 = tpu.matmul %120, %122, %cst_137 {dimension_numbers = #tpu.dot_dimension_numbers<[1], [0], [0], [1], [0, 0, 1, 1], [], []>} : vector<14x128xbf16>, vector<128x128xbf16>, vector<14x128xf32> -> vector<14x128xf32>
      %124 = arith.addf %116, %123 : vector<14x128xf32>
      %c2_i32_138 = arith.constant 2 : i32
      %125 = arith.addi %19, %c2_i32_138 : i32
      %c0_139 = arith.constant 0 : index
      %126 = arith.index_cast %125 : i32 to index
      %c0_140 = arith.constant 0 : index
      %c0_141 = arith.constant 0 : index
      %127 = vector.load %arg2[%c0_139, %126, %c0_140, %c0_141] : memref<1x16x16x128xbf16, #tpu.memory_space<vmem>>, vector<1x1x14x128xbf16>
      %128 = vector.shape_cast %127 : vector<1x1x14x128xbf16> to vector<14x128xbf16>
      %c6_142 = arith.constant 6 : index
      %c0_143 = arith.constant 0 : index
      %c0_144 = arith.constant 0 : index
      %129 = vector.load %arg4[%c6_142, %c0_143, %c0_144] : memref<9x128x128xbf16, #tpu.memory_space<vmem>>, vector<1x128x128xbf16>
      %130 = vector.shape_cast %129 : vector<1x128x128xbf16> to vector<128x128xbf16>
      %cst_145 = arith.constant dense<0.000000e+00> : vector<14x128xf32>
      %131 = tpu.matmul %128, %130, %cst_145 {dimension_numbers = #tpu.dot_dimension_numbers<[1], [0], [0], [1], [0, 0, 1, 1], [], []>} : vector<14x128xbf16>, vector<128x128xbf16>, vector<14x128xf32> -> vector<14x128xf32>
      %132 = arith.addf %124, %131 : vector<14x128xf32>
      %c2_i32_146 = arith.constant 2 : i32
      %133 = arith.addi %19, %c2_i32_146 : i32
      %c0_147 = arith.constant 0 : index
      %134 = arith.index_cast %133 : i32 to index
      %c1_148 = arith.constant 1 : index
      %c0_149 = arith.constant 0 : index
      %135 = vector.load %arg1[%c0_147, %134, %c1_148, %c0_149] : memref<1x16x16x128xbf16, #tpu.memory_space<vmem>>, vector<1x1x14x128xbf16>
      %136 = vector.shape_cast %135 : vector<1x1x14x128xbf16> to vector<14x128xbf16>
      %c7 = arith.constant 7 : index
      %c0_150 = arith.constant 0 : index
      %c0_151 = arith.constant 0 : index
      %137 = vector.load %arg3[%c7, %c0_150, %c0_151] : memref<9x128x128xbf16, #tpu.memory_space<vmem>>, vector<1x128x128xbf16>
      %138 = vector.shape_cast %137 : vector<1x128x128xbf16> to vector<128x128xbf16>
      %cst_152 = arith.constant dense<0.000000e+00> : vector<14x128xf32>
      %139 = tpu.matmul %136, %138, %cst_152 {dimension_numbers = #tpu.dot_dimension_numbers<[1], [0], [0], [1], [0, 0, 1, 1], [], []>} : vector<14x128xbf16>, vector<128x128xbf16>, vector<14x128xf32> -> vector<14x128xf32>
      %140 = arith.addf %132, %139 : vector<14x128xf32>
      %c2_i32_153 = arith.constant 2 : i32
      %141 = arith.addi %19, %c2_i32_153 : i32
      %c0_154 = arith.constant 0 : index
      %142 = arith.index_cast %141 : i32 to index
      %c1_155 = arith.constant 1 : index
      %c0_156 = arith.constant 0 : index
      %143 = vector.load %arg2[%c0_154, %142, %c1_155, %c0_156] : memref<1x16x16x128xbf16, #tpu.memory_space<vmem>>, vector<1x1x14x128xbf16>
      %144 = vector.shape_cast %143 : vector<1x1x14x128xbf16> to vector<14x128xbf16>
      %c7_157 = arith.constant 7 : index
      %c0_158 = arith.constant 0 : index
      %c0_159 = arith.constant 0 : index
      %145 = vector.load %arg4[%c7_157, %c0_158, %c0_159] : memref<9x128x128xbf16, #tpu.memory_space<vmem>>, vector<1x128x128xbf16>
      %146 = vector.shape_cast %145 : vector<1x128x128xbf16> to vector<128x128xbf16>
      %cst_160 = arith.constant dense<0.000000e+00> : vector<14x128xf32>
      %147 = tpu.matmul %144, %146, %cst_160 {dimension_numbers = #tpu.dot_dimension_numbers<[1], [0], [0], [1], [0, 0, 1, 1], [], []>} : vector<14x128xbf16>, vector<128x128xbf16>, vector<14x128xf32> -> vector<14x128xf32>
      %148 = arith.addf %140, %147 : vector<14x128xf32>
      %c2_i32_161 = arith.constant 2 : i32
      %149 = arith.addi %19, %c2_i32_161 : i32
      %c0_162 = arith.constant 0 : index
      %150 = arith.index_cast %149 : i32 to index
      %c2_163 = arith.constant 2 : index
      %c0_164 = arith.constant 0 : index
      %151 = vector.load %arg1[%c0_162, %150, %c2_163, %c0_164] : memref<1x16x16x128xbf16, #tpu.memory_space<vmem>>, vector<1x1x14x128xbf16>
      %152 = vector.shape_cast %151 : vector<1x1x14x128xbf16> to vector<14x128xbf16>
      %c8 = arith.constant 8 : index
      %c0_165 = arith.constant 0 : index
      %c0_166 = arith.constant 0 : index
      %153 = vector.load %arg3[%c8, %c0_165, %c0_166] : memref<9x128x128xbf16, #tpu.memory_space<vmem>>, vector<1x128x128xbf16>
      %154 = vector.shape_cast %153 : vector<1x128x128xbf16> to vector<128x128xbf16>
      %cst_167 = arith.constant dense<0.000000e+00> : vector<14x128xf32>
      %155 = tpu.matmul %152, %154, %cst_167 {dimension_numbers = #tpu.dot_dimension_numbers<[1], [0], [0], [1], [0, 0, 1, 1], [], []>} : vector<14x128xbf16>, vector<128x128xbf16>, vector<14x128xf32> -> vector<14x128xf32>
      %156 = arith.addf %148, %155 : vector<14x128xf32>
      %c2_i32_168 = arith.constant 2 : i32
      %157 = arith.addi %19, %c2_i32_168 : i32
      %c0_169 = arith.constant 0 : index
      %158 = arith.index_cast %157 : i32 to index
      %c2_170 = arith.constant 2 : index
      %c0_171 = arith.constant 0 : index
      %159 = vector.load %arg2[%c0_169, %158, %c2_170, %c0_171] : memref<1x16x16x128xbf16, #tpu.memory_space<vmem>>, vector<1x1x14x128xbf16>
      %160 = vector.shape_cast %159 : vector<1x1x14x128xbf16> to vector<14x128xbf16>
      %c8_172 = arith.constant 8 : index
      %c0_173 = arith.constant 0 : index
      %c0_174 = arith.constant 0 : index
      %161 = vector.load %arg4[%c8_172, %c0_173, %c0_174] : memref<9x128x128xbf16, #tpu.memory_space<vmem>>, vector<1x128x128xbf16>
      %162 = vector.shape_cast %161 : vector<1x128x128xbf16> to vector<128x128xbf16>
      %cst_175 = arith.constant dense<0.000000e+00> : vector<14x128xf32>
      %163 = tpu.matmul %160, %162, %cst_175 {dimension_numbers = #tpu.dot_dimension_numbers<[1], [0], [0], [1], [0, 0, 1, 1], [], []>} : vector<14x128xbf16>, vector<128x128xbf16>, vector<14x128xf32> -> vector<14x128xf32>
      %164 = arith.addf %156, %163 : vector<14x128xf32>
      %c0_176 = arith.constant 0 : index
      %c0_177 = arith.constant 0 : index
      %165 = vector.load %arg6[%c0_176, %c0_177] : memref<1x128xf32, #tpu.memory_space<vmem>>, vector<1x128xf32>
      %166 = vector.broadcast %165 : vector<1x128xf32> to vector<14x128xf32>
      %167 = arith.addf %164, %166 : vector<14x128xf32>
      %cst_178 = arith.constant 0.000000e+00 : f32
      %168 = vector.broadcast %cst_178 : f32 to vector<14x128xf32>
      %169 = arith.maximumf %167, %168 : vector<14x128xf32>
      %c1_i32_179 = arith.constant 1 : i32
      %170 = arith.addi %19, %c1_i32_179 : i32
      %171 = arith.index_cast %170 : i32 to index
      %c1_180 = arith.constant 1 : index
      %c0_181 = arith.constant 0 : index
      %172 = vector.load %arg9[%171, %c1_180, %c0_181] : memref<16x16x128xf32, #tpu.memory_space<vmem>>, vector<1x14x128xf32>
      %173 = vector.shape_cast %172 : vector<1x14x128xf32> to vector<14x128xf32>
      %174 = vector.shape_cast %169 : vector<14x128xf32> to vector<1x14x128xf32>
      tpu.vector_store %arg9[%171, %c1_180, %c0_181], %174 {strides = array<i32>} : memref<16x16x128xf32, #tpu.memory_space<vmem>>, vector<1x14x128xf32>,
      %175 = vector.extract_strided_slice %169 {offsets = [1, 0], sizes = [1, 128], strides = [1, 1]} : vector<14x128xf32> to vector<1x128xf32>
      %c1_i32_182 = arith.constant 1 : i32
      %176 = arith.addi %19, %c1_i32_182 : i32
      %177 = arith.index_cast %176 : i32 to index
      %c0_183 = arith.constant 0 : index
      %c0_184 = arith.constant 0 : index
      %178 = vector.load %arg9[%177, %c0_183, %c0_184] : memref<16x16x128xf32, #tpu.memory_space<vmem>>, vector<1x1x128xf32>
      %179 = vector.shape_cast %178 : vector<1x1x128xf32> to vector<1x128xf32>
      %180 = vector.shape_cast %175 : vector<1x128xf32> to vector<1x1x128xf32>
      tpu.vector_store %arg9[%177, %c0_183, %c0_184], %180 {strides = array<i32>} : memref<16x16x128xf32, #tpu.memory_space<vmem>>, vector<1x1x128xf32>,
      %181 = vector.extract_strided_slice %169 {offsets = [12, 0], sizes = [1, 128], strides = [1, 1]} : vector<14x128xf32> to vector<1x128xf32>
      %c1_i32_185 = arith.constant 1 : i32
      %182 = arith.addi %19, %c1_i32_185 : i32
      %183 = arith.index_cast %182 : i32 to index
      %c15_186 = arith.constant 15 : index
      %c0_187 = arith.constant 0 : index
      %184 = vector.load %arg9[%183, %c15_186, %c0_187] : memref<16x16x128xf32, #tpu.memory_space<vmem>>, vector<1x1x128xf32>
      %185 = vector.shape_cast %184 : vector<1x1x128xf32> to vector<1x128xf32>
      %186 = vector.shape_cast %181 : vector<1x128xf32> to vector<1x1x128xf32>
      tpu.vector_store %arg9[%183, %c15_186, %c0_187], %186 {strides = array<i32>} : memref<16x16x128xf32, #tpu.memory_space<vmem>>, vector<1x1x128xf32>,
    }
    %c14_i32_0 = arith.constant 14 : i32
    %c2 = arith.constant 2 : index
    %c0 = arith.constant 0 : index
    %c0_1 = arith.constant 0 : index
    %1 = vector.load %arg9[%c2, %c0, %c0_1] : memref<16x16x128xf32, #tpu.memory_space<vmem>>, vector<1x16x128xf32>
    %c0_2 = arith.constant 0 : index
    %c0_3 = arith.constant 0 : index
    %c0_4 = arith.constant 0 : index
    %2 = vector.load %arg9[%c0_2, %c0_3, %c0_4] : memref<16x16x128xf32, #tpu.memory_space<vmem>>, vector<1x16x128xf32>
    tpu.vector_store %arg9[%c0_2, %c0_3, %c0_4], %1 {strides = array<i32>} : memref<16x16x128xf32, #tpu.memory_space<vmem>>, vector<1x16x128xf32>,
    %c13 = arith.constant 13 : index
    %c0_5 = arith.constant 0 : index
    %c0_6 = arith.constant 0 : index
    %3 = vector.load %arg9[%c13, %c0_5, %c0_6] : memref<16x16x128xf32, #tpu.memory_space<vmem>>, vector<1x16x128xf32>
    %c15 = arith.constant 15 : index
    %c0_7 = arith.constant 0 : index
    %c0_8 = arith.constant 0 : index
    %4 = vector.load %arg9[%c15, %c0_7, %c0_8] : memref<16x16x128xf32, #tpu.memory_space<vmem>>, vector<1x16x128xf32>
    tpu.vector_store %arg9[%c15, %c0_7, %c0_8], %3 {strides = array<i32>} : memref<16x16x128xf32, #tpu.memory_space<vmem>>, vector<1x16x128xf32>,
    %c0_9 = arith.constant 0 : index
    %c0_10 = arith.constant 0 : index
    %c0_11 = arith.constant 0 : index
    %5 = vector.load %arg9[%c0_9, %c0_10, %c0_11] : memref<16x16x128xf32, #tpu.memory_space<vmem>>, vector<16x16x128xf32>
    %6 = arith.truncf %5 : vector<16x16x128xf32> to vector<16x16x128xbf16>
    %c0_12 = arith.constant 0 : index
    %c0_13 = arith.constant 0 : index
    %c0_14 = arith.constant 0 : index
    %7 = vector.load %arg10[%c0_12, %c0_13, %c0_14] : memref<16x16x128xbf16, #tpu.memory_space<vmem>>, vector<16x16x128xbf16>
    tpu.vector_store %arg10[%c0_12, %c0_13, %c0_14], %6 {strides = array<i32>} : memref<16x16x128xbf16, #tpu.memory_space<vmem>>, vector<16x16x128xbf16>,
    %c0_i32_15 = arith.constant 0 : i32
    %c14_i32_16 = arith.constant 14 : i32
    %8 = arith.addi %c0_i32_15, %c14_i32_16 : i32
    %c1_i32_17 = arith.constant 1 : i32
    scf.for %arg11 = %c0_i32_15 to %8 step %c1_i32_17  : i32 {
      %c1_i32_38 = arith.constant 1 : i32
      %18 = arith.muli %arg11, %c1_i32_38 : i32
      %c0_i32_39 = arith.constant 0 : i32
      %19 = arith.addi %c0_i32_39, %18 : i32
      %cst = arith.constant 0.000000e+00 : f32
      %20 = vector.broadcast %cst : f32 to vector<14x128xf32>
      %c0_i32_40 = arith.constant 0 : i32
      %21 = arith.addi %19, %c0_i32_40 : i32
      %22 = arith.index_cast %21 : i32 to index
      %c0_41 = arith.constant 0 : index
      %c0_42 = arith.constant 0 : index
      %23 = vector.load %arg10[%22, %c0_41, %c0_42] : memref<16x16x128xbf16, #tpu.memory_space<vmem>>, vector<1x14x128xbf16>
      %24 = vector.shape_cast %23 : vector<1x14x128xbf16> to vector<14x128xbf16>
      %c0_43 = arith.constant 0 : index
      %c0_44 = arith.constant 0 : index
      %c0_45 = arith.constant 0 : index
      %25 = vector.load %arg5[%c0_43, %c0_44, %c0_45] : memref<9x128x128xbf16, #tpu.memory_space<vmem>>, vector<1x128x128xbf16>
      %26 = vector.shape_cast %25 : vector<1x128x128xbf16> to vector<128x128xbf16>
      %cst_46 = arith.constant dense<0.000000e+00> : vector<14x128xf32>
      %27 = tpu.matmul %24, %26, %cst_46 {dimension_numbers = #tpu.dot_dimension_numbers<[1], [0], [0], [1], [0, 0, 1, 1], [], []>} : vector<14x128xbf16>, vector<128x128xbf16>, vector<14x128xf32> -> vector<14x128xf32>
      %28 = arith.addf %20, %27 : vector<14x128xf32>
      %c0_i32_47 = arith.constant 0 : i32
      %29 = arith.addi %19, %c0_i32_47 : i32
      %30 = arith.index_cast %29 : i32 to index
      %c1 = arith.constant 1 : index
      %c0_48 = arith.constant 0 : index
      %31 = vector.load %arg10[%30, %c1, %c0_48] : memref<16x16x128xbf16, #tpu.memory_space<vmem>>, vector<1x14x128xbf16>
      %32 = vector.shape_cast %31 : vector<1x14x128xbf16> to vector<14x128xbf16>
      %c1_49 = arith.constant 1 : index
      %c0_50 = arith.constant 0 : index
      %c0_51 = arith.constant 0 : index
      %33 = vector.load %arg5[%c1_49, %c0_50, %c0_51] : memref<9x128x128xbf16, #tpu.memory_space<vmem>>, vector<1x128x128xbf16>
      %34 = vector.shape_cast %33 : vector<1x128x128xbf16> to vector<128x128xbf16>
      %cst_52 = arith.constant dense<0.000000e+00> : vector<14x128xf32>
      %35 = tpu.matmul %32, %34, %cst_52 {dimension_numbers = #tpu.dot_dimension_numbers<[1], [0], [0], [1], [0, 0, 1, 1], [], []>} : vector<14x128xbf16>, vector<128x128xbf16>, vector<14x128xf32> -> vector<14x128xf32>
      %36 = arith.addf %28, %35 : vector<14x128xf32>
      %c0_i32_53 = arith.constant 0 : i32
      %37 = arith.addi %19, %c0_i32_53 : i32
      %38 = arith.index_cast %37 : i32 to index
      %c2_54 = arith.constant 2 : index
      %c0_55 = arith.constant 0 : index
      %39 = vector.load %arg10[%38, %c2_54, %c0_55] : memref<16x16x128xbf16, #tpu.memory_space<vmem>>, vector<1x14x128xbf16>
      %40 = vector.shape_cast %39 : vector<1x14x128xbf16> to vector<14x128xbf16>
      %c2_56 = arith.constant 2 : index
      %c0_57 = arith.constant 0 : index
      %c0_58 = arith.constant 0 : index
      %41 = vector.load %arg5[%c2_56, %c0_57, %c0_58] : memref<9x128x128xbf16, #tpu.memory_space<vmem>>, vector<1x128x128xbf16>
      %42 = vector.shape_cast %41 : vector<1x128x128xbf16> to vector<128x128xbf16>
      %cst_59 = arith.constant dense<0.000000e+00> : vector<14x128xf32>
      %43 = tpu.matmul %40, %42, %cst_59 {dimension_numbers = #tpu.dot_dimension_numbers<[1], [0], [0], [1], [0, 0, 1, 1], [], []>} : vector<14x128xbf16>, vector<128x128xbf16>, vector<14x128xf32> -> vector<14x128xf32>
      %44 = arith.addf %36, %43 : vector<14x128xf32>
      %c1_i32_60 = arith.constant 1 : i32
      %45 = arith.addi %19, %c1_i32_60 : i32
      %46 = arith.index_cast %45 : i32 to index
      %c0_61 = arith.constant 0 : index
      %c0_62 = arith.constant 0 : index
      %47 = vector.load %arg10[%46, %c0_61, %c0_62] : memref<16x16x128xbf16, #tpu.memory_space<vmem>>, vector<1x14x128xbf16>
      %48 = vector.shape_cast %47 : vector<1x14x128xbf16> to vector<14x128xbf16>
      %c3 = arith.constant 3 : index
      %c0_63 = arith.constant 0 : index
      %c0_64 = arith.constant 0 : index
      %49 = vector.load %arg5[%c3, %c0_63, %c0_64] : memref<9x128x128xbf16, #tpu.memory_space<vmem>>, vector<1x128x128xbf16>
      %50 = vector.shape_cast %49 : vector<1x128x128xbf16> to vector<128x128xbf16>
      %cst_65 = arith.constant dense<0.000000e+00> : vector<14x128xf32>
      %51 = tpu.matmul %48, %50, %cst_65 {dimension_numbers = #tpu.dot_dimension_numbers<[1], [0], [0], [1], [0, 0, 1, 1], [], []>} : vector<14x128xbf16>, vector<128x128xbf16>, vector<14x128xf32> -> vector<14x128xf32>
      %52 = arith.addf %44, %51 : vector<14x128xf32>
      %c1_i32_66 = arith.constant 1 : i32
      %53 = arith.addi %19, %c1_i32_66 : i32
      %54 = arith.index_cast %53 : i32 to index
      %c1_67 = arith.constant 1 : index
      %c0_68 = arith.constant 0 : index
      %55 = vector.load %arg10[%54, %c1_67, %c0_68] : memref<16x16x128xbf16, #tpu.memory_space<vmem>>, vector<1x14x128xbf16>
      %56 = vector.shape_cast %55 : vector<1x14x128xbf16> to vector<14x128xbf16>
      %c4 = arith.constant 4 : index
      %c0_69 = arith.constant 0 : index
      %c0_70 = arith.constant 0 : index
      %57 = vector.load %arg5[%c4, %c0_69, %c0_70] : memref<9x128x128xbf16, #tpu.memory_space<vmem>>, vector<1x128x128xbf16>
      %58 = vector.shape_cast %57 : vector<1x128x128xbf16> to vector<128x128xbf16>
      %cst_71 = arith.constant dense<0.000000e+00> : vector<14x128xf32>
      %59 = tpu.matmul %56, %58, %cst_71 {dimension_numbers = #tpu.dot_dimension_numbers<[1], [0], [0], [1], [0, 0, 1, 1], [], []>} : vector<14x128xbf16>, vector<128x128xbf16>, vector<14x128xf32> -> vector<14x128xf32>
      %60 = arith.addf %52, %59 : vector<14x128xf32>
      %c1_i32_72 = arith.constant 1 : i32
      %61 = arith.addi %19, %c1_i32_72 : i32
      %62 = arith.index_cast %61 : i32 to index
      %c2_73 = arith.constant 2 : index
      %c0_74 = arith.constant 0 : index
      %63 = vector.load %arg10[%62, %c2_73, %c0_74] : memref<16x16x128xbf16, #tpu.memory_space<vmem>>, vector<1x14x128xbf16>
      %64 = vector.shape_cast %63 : vector<1x14x128xbf16> to vector<14x128xbf16>
      %c5 = arith.constant 5 : index
      %c0_75 = arith.constant 0 : index
      %c0_76 = arith.constant 0 : index
      %65 = vector.load %arg5[%c5, %c0_75, %c0_76] : memref<9x128x128xbf16, #tpu.memory_space<vmem>>, vector<1x128x128xbf16>
      %66 = vector.shape_cast %65 : vector<1x128x128xbf16> to vector<128x128xbf16>
      %cst_77 = arith.constant dense<0.000000e+00> : vector<14x128xf32>
      %67 = tpu.matmul %64, %66, %cst_77 {dimension_numbers = #tpu.dot_dimension_numbers<[1], [0], [0], [1], [0, 0, 1, 1], [], []>} : vector<14x128xbf16>, vector<128x128xbf16>, vector<14x128xf32> -> vector<14x128xf32>
      %68 = arith.addf %60, %67 : vector<14x128xf32>
      %c2_i32 = arith.constant 2 : i32
      %69 = arith.addi %19, %c2_i32 : i32
      %70 = arith.index_cast %69 : i32 to index
      %c0_78 = arith.constant 0 : index
      %c0_79 = arith.constant 0 : index
      %71 = vector.load %arg10[%70, %c0_78, %c0_79] : memref<16x16x128xbf16, #tpu.memory_space<vmem>>, vector<1x14x128xbf16>
      %72 = vector.shape_cast %71 : vector<1x14x128xbf16> to vector<14x128xbf16>
      %c6 = arith.constant 6 : index
      %c0_80 = arith.constant 0 : index
      %c0_81 = arith.constant 0 : index
      %73 = vector.load %arg5[%c6, %c0_80, %c0_81] : memref<9x128x128xbf16, #tpu.memory_space<vmem>>, vector<1x128x128xbf16>
      %74 = vector.shape_cast %73 : vector<1x128x128xbf16> to vector<128x128xbf16>
      %cst_82 = arith.constant dense<0.000000e+00> : vector<14x128xf32>
      %75 = tpu.matmul %72, %74, %cst_82 {dimension_numbers = #tpu.dot_dimension_numbers<[1], [0], [0], [1], [0, 0, 1, 1], [], []>} : vector<14x128xbf16>, vector<128x128xbf16>, vector<14x128xf32> -> vector<14x128xf32>
      %76 = arith.addf %68, %75 : vector<14x128xf32>
      %c2_i32_83 = arith.constant 2 : i32
      %77 = arith.addi %19, %c2_i32_83 : i32
      %78 = arith.index_cast %77 : i32 to index
      %c1_84 = arith.constant 1 : index
      %c0_85 = arith.constant 0 : index
      %79 = vector.load %arg10[%78, %c1_84, %c0_85] : memref<16x16x128xbf16, #tpu.memory_space<vmem>>, vector<1x14x128xbf16>
      %80 = vector.shape_cast %79 : vector<1x14x128xbf16> to vector<14x128xbf16>
      %c7 = arith.constant 7 : index
      %c0_86 = arith.constant 0 : index
      %c0_87 = arith.constant 0 : index
      %81 = vector.load %arg5[%c7, %c0_86, %c0_87] : memref<9x128x128xbf16, #tpu.memory_space<vmem>>, vector<1x128x128xbf16>
      %82 = vector.shape_cast %81 : vector<1x128x128xbf16> to vector<128x128xbf16>
      %cst_88 = arith.constant dense<0.000000e+00> : vector<14x128xf32>
      %83 = tpu.matmul %80, %82, %cst_88 {dimension_numbers = #tpu.dot_dimension_numbers<[1], [0], [0], [1], [0, 0, 1, 1], [], []>} : vector<14x128xbf16>, vector<128x128xbf16>, vector<14x128xf32> -> vector<14x128xf32>
      %84 = arith.addf %76, %83 : vector<14x128xf32>
      %c2_i32_89 = arith.constant 2 : i32
      %85 = arith.addi %19, %c2_i32_89 : i32
      %86 = arith.index_cast %85 : i32 to index
      %c2_90 = arith.constant 2 : index
      %c0_91 = arith.constant 0 : index
      %87 = vector.load %arg10[%86, %c2_90, %c0_91] : memref<16x16x128xbf16, #tpu.memory_space<vmem>>, vector<1x14x128xbf16>
      %88 = vector.shape_cast %87 : vector<1x14x128xbf16> to vector<14x128xbf16>
      %c8 = arith.constant 8 : index
      %c0_92 = arith.constant 0 : index
      %c0_93 = arith.constant 0 : index
      %89 = vector.load %arg5[%c8, %c0_92, %c0_93] : memref<9x128x128xbf16, #tpu.memory_space<vmem>>, vector<1x128x128xbf16>
      %90 = vector.shape_cast %89 : vector<1x128x128xbf16> to vector<128x128xbf16>
      %cst_94 = arith.constant dense<0.000000e+00> : vector<14x128xf32>
      %91 = tpu.matmul %88, %90, %cst_94 {dimension_numbers = #tpu.dot_dimension_numbers<[1], [0], [0], [1], [0, 0, 1, 1], [], []>} : vector<14x128xbf16>, vector<128x128xbf16>, vector<14x128xf32> -> vector<14x128xf32>
      %92 = arith.addf %84, %91 : vector<14x128xf32>
      %c0_95 = arith.constant 0 : index
      %c0_96 = arith.constant 0 : index
      %93 = vector.load %arg7[%c0_95, %c0_96] : memref<1x128xf32, #tpu.memory_space<vmem>>, vector<1x128xf32>
      %94 = vector.broadcast %93 : vector<1x128xf32> to vector<14x128xf32>
      %95 = arith.addf %92, %94 : vector<14x128xf32>
      %cst_97 = arith.constant 0.000000e+00 : f32
      %96 = vector.broadcast %cst_97 : f32 to vector<14x128xf32>
      %97 = arith.maximumf %95, %96 : vector<14x128xf32>
      %c1_i32_98 = arith.constant 1 : i32
      %98 = arith.addi %19, %c1_i32_98 : i32
      %99 = arith.index_cast %98 : i32 to index
      %c1_99 = arith.constant 1 : index
      %c0_100 = arith.constant 0 : index
      %100 = vector.load %arg9[%99, %c1_99, %c0_100] : memref<16x16x128xf32, #tpu.memory_space<vmem>>, vector<1x14x128xf32>
      %101 = vector.shape_cast %100 : vector<1x14x128xf32> to vector<14x128xf32>
      %102 = vector.shape_cast %97 : vector<14x128xf32> to vector<1x14x128xf32>
      tpu.vector_store %arg9[%99, %c1_99, %c0_100], %102 {strides = array<i32>} : memref<16x16x128xf32, #tpu.memory_space<vmem>>, vector<1x14x128xf32>,
      %103 = vector.extract_strided_slice %97 {offsets = [1, 0], sizes = [1, 128], strides = [1, 1]} : vector<14x128xf32> to vector<1x128xf32>
      %c1_i32_101 = arith.constant 1 : i32
      %104 = arith.addi %19, %c1_i32_101 : i32
      %105 = arith.index_cast %104 : i32 to index
      %c0_102 = arith.constant 0 : index
      %c0_103 = arith.constant 0 : index
      %106 = vector.load %arg9[%105, %c0_102, %c0_103] : memref<16x16x128xf32, #tpu.memory_space<vmem>>, vector<1x1x128xf32>
      %107 = vector.shape_cast %106 : vector<1x1x128xf32> to vector<1x128xf32>
      %108 = vector.shape_cast %103 : vector<1x128xf32> to vector<1x1x128xf32>
      tpu.vector_store %arg9[%105, %c0_102, %c0_103], %108 {strides = array<i32>} : memref<16x16x128xf32, #tpu.memory_space<vmem>>, vector<1x1x128xf32>,
      %109 = vector.extract_strided_slice %97 {offsets = [12, 0], sizes = [1, 128], strides = [1, 1]} : vector<14x128xf32> to vector<1x128xf32>
      %c1_i32_104 = arith.constant 1 : i32
      %110 = arith.addi %19, %c1_i32_104 : i32
      %111 = arith.index_cast %110 : i32 to index
      %c15_105 = arith.constant 15 : index
      %c0_106 = arith.constant 0 : index
      %112 = vector.load %arg9[%111, %c15_105, %c0_106] : memref<16x16x128xf32, #tpu.memory_space<vmem>>, vector<1x1x128xf32>
      %113 = vector.shape_cast %112 : vector<1x1x128xf32> to vector<1x128xf32>
      %114 = vector.shape_cast %109 : vector<1x128xf32> to vector<1x1x128xf32>
      tpu.vector_store %arg9[%111, %c15_105, %c0_106], %114 {strides = array<i32>} : memref<16x16x128xf32, #tpu.memory_space<vmem>>, vector<1x1x128xf32>,
    }
    %c14_i32_18 = arith.constant 14 : i32
    %c2_19 = arith.constant 2 : index
    %c0_20 = arith.constant 0 : index
    %c0_21 = arith.constant 0 : index
    %9 = vector.load %arg9[%c2_19, %c0_20, %c0_21] : memref<16x16x128xf32, #tpu.memory_space<vmem>>, vector<1x16x128xf32>
    %c0_22 = arith.constant 0 : index
    %c0_23 = arith.constant 0 : index
    %c0_24 = arith.constant 0 : index
    %10 = vector.load %arg9[%c0_22, %c0_23, %c0_24] : memref<16x16x128xf32, #tpu.memory_space<vmem>>, vector<1x16x128xf32>
    tpu.vector_store %arg9[%c0_22, %c0_23, %c0_24], %9 {strides = array<i32>} : memref<16x16x128xf32, #tpu.memory_space<vmem>>, vector<1x16x128xf32>,
    %c13_25 = arith.constant 13 : index
    %c0_26 = arith.constant 0 : index
    %c0_27 = arith.constant 0 : index
    %11 = vector.load %arg9[%c13_25, %c0_26, %c0_27] : memref<16x16x128xf32, #tpu.memory_space<vmem>>, vector<1x16x128xf32>
    %c15_28 = arith.constant 15 : index
    %c0_29 = arith.constant 0 : index
    %c0_30 = arith.constant 0 : index
    %12 = vector.load %arg9[%c15_28, %c0_29, %c0_30] : memref<16x16x128xf32, #tpu.memory_space<vmem>>, vector<1x16x128xf32>
    tpu.vector_store %arg9[%c15_28, %c0_29, %c0_30], %11 {strides = array<i32>} : memref<16x16x128xf32, #tpu.memory_space<vmem>>, vector<1x16x128xf32>,
    %c0_31 = arith.constant 0 : index
    %c0_32 = arith.constant 0 : index
    %c0_33 = arith.constant 0 : index
    %13 = vector.load %arg9[%c0_31, %c0_32, %c0_33] : memref<16x16x128xf32, #tpu.memory_space<vmem>>, vector<16x16x128xf32>
    %14 = arith.truncf %13 : vector<16x16x128xf32> to vector<16x16x128xbf16>
    %c0_34 = arith.constant 0 : index
    %c0_35 = arith.constant 0 : index
    %c0_36 = arith.constant 0 : index
    %c0_37 = arith.constant 0 : index
    %15 = vector.load %arg8[%c0_34, %c0_35, %c0_36, %c0_37] : memref<1x16x16x128xbf16, #tpu.memory_space<vmem>>, vector<1x16x16x128xbf16>
    %16 = vector.shape_cast %15 : vector<1x16x16x128xbf16> to vector<16x16x128xbf16>
    %17 = vector.shape_cast %14 : vector<16x16x128xbf16> to vector<1x16x16x128xbf16>
    tpu.vector_store %arg8[%c0_34, %c0_35, %c0_36, %c0_37], %17 {strides = array<i32>} : memref<1x16x16x128xbf16, #tpu.memory_space<vmem>>, vector<1x16x16x128xbf16>,
    return
  }
  func.func @transform_0(%arg0: i32) -> (i32, i32, i32, i32) {
    %c0_i32 = arith.constant 0 : i32
    %c0_i32_0 = arith.constant 0 : i32
    %c0_i32_1 = arith.constant 0 : i32
    %c0_i32_2 = arith.constant 0 : i32
    return %arg0, %c0_i32, %c0_i32_0, %c0_i32_1 : i32, i32, i32, i32
  }
  func.func @transform_1(%arg0: i32) -> (i32, i32, i32, i32) {
    %c0_i32 = arith.constant 0 : i32
    %c0_i32_0 = arith.constant 0 : i32
    %c0_i32_1 = arith.constant 0 : i32
    %c0_i32_2 = arith.constant 0 : i32
    return %arg0, %c0_i32, %c0_i32_0, %c0_i32_1 : i32, i32, i32, i32
  }
  func.func @transform_2(%arg0: i32) -> (i32, i32, i32) {
    %c0_i32 = arith.constant 0 : i32
    %c0_i32_0 = arith.constant 0 : i32
    %c0_i32_1 = arith.constant 0 : i32
    %c0_i32_2 = arith.constant 0 : i32
    return %c0_i32, %c0_i32_0, %c0_i32_1 : i32, i32, i32
  }
  func.func @transform_3(%arg0: i32) -> (i32, i32, i32) {
    %c0_i32 = arith.constant 0 : i32
    %c0_i32_0 = arith.constant 0 : i32
    %c0_i32_1 = arith.constant 0 : i32
    %c0_i32_2 = arith.constant 0 : i32
    return %c0_i32, %c0_i32_0, %c0_i32_1 : i32, i32, i32
  }
  func.func @transform_4(%arg0: i32) -> (i32, i32, i32) {
    %c0_i32 = arith.constant 0 : i32
    %c0_i32_0 = arith.constant 0 : i32
    %c0_i32_1 = arith.constant 0 : i32
    %c0_i32_2 = arith.constant 0 : i32
    return %c0_i32, %c0_i32_0, %c0_i32_1 : i32, i32, i32
  }
  func.func @transform_5(%arg0: i32) -> (i32, i32) {
    %c0_i32 = arith.constant 0 : i32
    %c0_i32_0 = arith.constant 0 : i32
    %c0_i32_1 = arith.constant 0 : i32
    return %c0_i32, %c0_i32_0 : i32, i32
  }
  func.func @transform_6(%arg0: i32) -> (i32, i32) {
    %c0_i32 = arith.constant 0 : i32
    %c0_i32_0 = arith.constant 0 : i32
    %c0_i32_1 = arith.constant 0 : i32
    return %c0_i32, %c0_i32_0 : i32, i32
  }
  func.func @transform_7(%arg0: i32) -> (i32, i32, i32, i32) {
    %c0_i32 = arith.constant 0 : i32
    %c0_i32_0 = arith.constant 0 : i32
    %c0_i32_1 = arith.constant 0 : i32
    %c0_i32_2 = arith.constant 0 : i32
    return %arg0, %c0_i32, %c0_i32_0, %c0_i32_1 : i32, i32, i32, i32
  }
}

module attributes {stable_mosaic.version = 11 : i64} {
  func.func @kernel(%arg0: i32, %arg1: memref<1x16x16x128xbf16, #tpu.memory_space<vmem>>, %arg2: memref<128x128xbf16, #tpu.memory_space<vmem>>, %arg3: memref<1x128xf32, #tpu.memory_space<vmem>>, %arg4: memref<1x16x16x128xf32, #tpu.memory_space<vmem>>) attributes {dimension_semantics = [#tpu.dimension_semantics<parallel>], iteration_bounds = array<i64: 2>, scalar_prefetch = 0 : i64, scratch_operands = 0 : i64, tpu.core_type = #tpu.core_type<tc>, window_params = [{transform_indices = @transform_0, window_bounds = array<i64: 1, 16, 16, 128>}, {pipeline_mode = #tpu.pipeline_mode<synchronous>, transform_indices = @transform_1, window_bounds = array<i64: 128, 128>}, {pipeline_mode = #tpu.pipeline_mode<synchronous>, transform_indices = @transform_2, window_bounds = array<i64: 1, 128>}, {transform_indices = @transform_3, window_bounds = array<i64: 1, 16, 16, 128>}]} {
    %c0_i32 = arith.constant 0 : i32
    %c16_i32 = arith.constant 16 : i32
    %0 = arith.addi %c0_i32, %c16_i32 : i32
    %c1_i32 = arith.constant 1 : i32
    scf.for %arg5 = %c0_i32 to %0 step %c1_i32  : i32 {
      %c1_i32_1 = arith.constant 1 : i32
      %1 = arith.muli %arg5, %c1_i32_1 : i32
      %c0_i32_2 = arith.constant 0 : i32
      %2 = arith.addi %c0_i32_2, %1 : i32
      %c0 = arith.constant 0 : index
      %3 = arith.index_cast %2 : i32 to index
      %c0_3 = arith.constant 0 : index
      %c0_4 = arith.constant 0 : index
      %4 = vector.load %arg1[%c0, %3, %c0_3, %c0_4] : memref<1x16x16x128xbf16, #tpu.memory_space<vmem>>, vector<1x1x16x128xbf16>
      %5 = vector.shape_cast %4 : vector<1x1x16x128xbf16> to vector<16x128xbf16>
      %c0_5 = arith.constant 0 : index
      %c0_6 = arith.constant 0 : index
      %6 = vector.load %arg2[%c0_5, %c0_6] : memref<128x128xbf16, #tpu.memory_space<vmem>>, vector<128x128xbf16>
      %cst = arith.constant dense<0.000000e+00> : vector<16x128xf32>
      %7 = tpu.matmul %5, %6, %cst {dimension_numbers = #tpu.dot_dimension_numbers<[1], [0], [0], [1], [0, 0, 1, 1], [], []>} : vector<16x128xbf16>, vector<128x128xbf16>, vector<16x128xf32> -> vector<16x128xf32>
      %c0_7 = arith.constant 0 : index
      %c0_8 = arith.constant 0 : index
      %8 = vector.load %arg3[%c0_7, %c0_8] : memref<1x128xf32, #tpu.memory_space<vmem>>, vector<1x128xf32>
      %9 = vector.broadcast %8 : vector<1x128xf32> to vector<16x128xf32>
      %10 = arith.addf %7, %9 : vector<16x128xf32>
      %11 = math.tanh %10 : vector<16x128xf32>
      %c0_9 = arith.constant 0 : index
      %12 = arith.index_cast %2 : i32 to index
      %c0_10 = arith.constant 0 : index
      %c0_11 = arith.constant 0 : index
      %13 = vector.load %arg4[%c0_9, %12, %c0_10, %c0_11] : memref<1x16x16x128xf32, #tpu.memory_space<vmem>>, vector<1x1x16x128xf32>
      %14 = vector.shape_cast %13 : vector<1x1x16x128xf32> to vector<16x128xf32>
      %15 = vector.shape_cast %11 : vector<16x128xf32> to vector<1x1x16x128xf32>
      tpu.vector_store %arg4[%c0_9, %12, %c0_10, %c0_11], %15 {strides = array<i32>} : memref<1x16x16x128xf32, #tpu.memory_space<vmem>>, vector<1x1x16x128xf32>,
    }
    %c16_i32_0 = arith.constant 16 : i32
    return
  }
  func.func @transform_0(%arg0: i32) -> (i32, i32, i32, i32) {
    %c0_i32 = arith.constant 0 : i32
    %c0_i32_0 = arith.constant 0 : i32
    %c0_i32_1 = arith.constant 0 : i32
    %c0_i32_2 = arith.constant 0 : i32
    return %arg0, %c0_i32, %c0_i32_0, %c0_i32_1 : i32, i32, i32, i32
  }
  func.func @transform_1(%arg0: i32) -> (i32, i32) {
    %c0_i32 = arith.constant 0 : i32
    %c0_i32_0 = arith.constant 0 : i32
    %c0_i32_1 = arith.constant 0 : i32
    return %c0_i32, %c0_i32_0 : i32, i32
  }
  func.func @transform_2(%arg0: i32) -> (i32, i32) {
    %c0_i32 = arith.constant 0 : i32
    %c0_i32_0 = arith.constant 0 : i32
    %c0_i32_1 = arith.constant 0 : i32
    return %c0_i32, %c0_i32_0 : i32, i32
  }
  func.func @transform_3(%arg0: i32) -> (i32, i32, i32, i32) {
    %c0_i32 = arith.constant 0 : i32
    %c0_i32_0 = arith.constant 0 : i32
    %c0_i32_1 = arith.constant 0 : i32
    %c0_i32_2 = arith.constant 0 : i32
    return %arg0, %c0_i32, %c0_i32_0, %c0_i32_1 : i32, i32, i32, i32
  }
}

</mosaic_0001>

<llo_original>
// kernel: _lambda_.7
$region0: #{_lambda_.7}
  #allocation0 [shape = 'u32[]', space=smem, size = 0x4, offset = 0x4, fixed_abs, tag = 'smem constant byte address 0x4 - core index']
  #allocation1 [shape = 'u32[144,128]{1,0:T(1,128)}', space=vmem, size = 0x12000, scoped, tag = 'internal scratch']
  %s0 = inlined_call_operand.vmem [shape: bf16[2,16,16,128], index: 0, kind: input, shape index: {}]
  %s1 = inlined_call_operand.vmem [shape: bf16[128,128], index: 1, kind: input, shape index: {}]
  %s2 = inlined_call_operand.vmem [shape: f32[1,128], index: 2, kind: input, shape index: {}]
  %s3 = inlined_call_operand.vmem [shape: f32[2,16,16,128], index: 3, kind: output, shape index: {}]
  %s4 = sld [smem:[#allocation0]]
  $region52: #{_lambda_.7} parent=0
    _
  %s6 = ssub.s32 1, %s4
  %s7 = scalar_select 0, %s6, %s4
  loop: start=0, step=1, limit=4
  $region2: #{_lambda_.7} parent=0 // loop_pre_header
    _
  $region3: #{_lambda_.7} parent=0 // loop_header
    %s9 = sphi 0, %s13
    %p10 = scmp.ge.s32.totalorder %s9, 4
    %s19 = sphi 0, %s21
    %s22 = sphi 0, %s19
    %s23 = sphi 0, %s22
    %s39 = sphi 0, %s23
    %s43 = sphi 0, %s43
    %s45 = sphi 0, %s43
    %s46 = sphi 0, %s45
    %s60 = sphi 0, %s46
    %s64 = sphi 0, %s64
    %s66 = sphi 0, %s64
    %s67 = sphi 0, %s66
    %s81 = sphi 0, %s67
    %s87 = sphi 0, %s89
    %s90 = sphi 0, %s87
    %s91 = sphi 0, %s90
    %s107 = sphi 0, %s91
  $region4: #{_lambda_.7} parent=0 // loop_header_branch
    %12 = sbr.rel (%p10) target = $region8
  $region5: #{_lambda_.7} parent=0 // loop_body
    %s14 = ssub.s32 %s9, 1
    %s15 = ssub.s32 %s9, 2
    %s16 = sadd.s32 %s9, 1
    %s17 = ssub.s32 %s9, %s16
    %p18 = scmp.eq.s32.totalorder %s17, 0
    %s20 = sadd.s32 %s19, 1
    %s21 = scalar_select %p18, %s19, %s20
    %p24 = pneg %p18
    %p25 = scmp.eq.s32.totalorder %s9, 1
    %p26 = por %p24, %p25
    %p27 = scmp.ne.s32.totalorder %s19, %s22
    %p28 = scmp.eq.s32.totalorder %s9, 0
    %p29 = por %p27, %p28
    %p30 = scmp.ne.s32.totalorder %s19, %s22
    %p31 = scmp.eq.s32.totalorder %s14, 1
    %p32 = por %p30, %p31
    %p33 = scmp.ne.s32.totalorder %s22, %s23
    %p34 = scmp.eq.s32.totalorder %s14, 0
    %p35 = por %p33, %p34
    %p36 = scmp.ne.s32.totalorder %s22, %s23
    %p37 = scmp.eq.s32.totalorder %s15, 1
    %p38 = por %p36, %p37
    %p40 = scmp.ne.s32.totalorder %s23, %s39
    %p41 = scmp.eq.s32.totalorder %s15, 0
    %p42 = por %p40, %p41
    %s44 = sadd.s32 %s43, 1
    %p47 = scmp.eq.s32.totalorder %s9, 1
    %p48 = scmp.ne.s32.totalorder %s43, %s45
    %p49 = scmp.eq.s32.totalorder %s9, 0
    %p50 = por %p48, %p49
    %p51 = scmp.ne.s32.totalorder %s43, %s45
    %p52 = scmp.eq.s32.totalorder %s14, 1
    %p53 = por %p51, %p52
    %p54 = scmp.ne.s32.totalorder %s45, %s46
    %p55 = scmp.eq.s32.totalorder %s14, 0
    %p56 = por %p54, %p55
    %p57 = scmp.ne.s32.totalorder %s45, %s46
    %p58 = scmp.eq.s32.totalorder %s15, 1
    %p59 = por %p57, %p58
    %p61 = scmp.ne.s32.totalorder %s46, %s60
    %p62 = scmp.eq.s32.totalorder %s15, 0
    %p63 = por %p61, %p62
    %s65 = sadd.s32 %s64, 1
    %p68 = scmp.eq.s32.totalorder %s9, 1
    %p69 = scmp.ne.s32.totalorder %s64, %s66
    %p70 = scmp.eq.s32.totalorder %s9, 0
    %p71 = por %p69, %p70
    %p72 = scmp.ne.s32.totalorder %s64, %s66
    %p73 = scmp.eq.s32.totalorder %s14, 1
    %p74 = por %p72, %p73
    %p75 = scmp.ne.s32.totalorder %s66, %s67
    %p76 = scmp.eq.s32.totalorder %s14, 0
    %p77 = por %p75, %p76
    %p78 = scmp.ne.s32.totalorder %s66, %s67
    %p79 = scmp.eq.s32.totalorder %s15, 1
    %p80 = por %p78, %p79
    %p82 = scmp.ne.s32.totalorder %s67, %s81
    %p83 = scmp.eq.s32.totalorder %s15, 0
    %p84 = por %p82, %p83
    %s85 = ssub.s32 %s9, %s16
    %p86 = scmp.eq.s32.totalorder %s85, 0
    %s88 = sadd.s32 %s87, 1
    %s89 = scalar_select %p86, %s87, %s88
    %p92 = pneg %p86
    %p93 = scmp.eq.s32.totalorder %s9, 1
    %p94 = por %p92, %p93
    %p95 = scmp.ne.s32.totalorder %s87, %s90
    %p96 = scmp.eq.s32.totalorder %s9, 0
    %p97 = por %p95, %p96
    %p98 = scmp.ne.s32.totalorder %s87, %s90
    %p99 = scmp.eq.s32.totalorder %s14, 1
    %p100 = por %p98, %p99
    %p101 = scmp.ne.s32.totalorder %s90, %s91
    %p102 = scmp.eq.s32.totalorder %s14, 0
    %p103 = por %p101, %p102
    %p104 = scmp.ne.s32.totalorder %s90, %s91
    %p105 = scmp.eq.s32.totalorder %s15, 1
    %p106 = por %p104, %p105
    %p108 = scmp.ne.s32.totalorder %s91, %s107
    %p109 = scmp.eq.s32.totalorder %s15, 0
    %p110 = por %p108, %p109
    %p111 = scmp.le.s32.totalorder 1, %s9
    %p112 = scmp.lt.s32.totalorder %s9, 3
    %p113 = pnand %p111, %p112
    %p114 = pneg %p113
    // Predicated region
    $region9: #{_lambda_.7} parent=5 // pred_check
      _
    $region10: #{_lambda_.7} parent=5 // pred_check_branch
      %116 = sbr.rel (%p113) target = $region12
    $region11: #{_lambda_.7} parent=5 // pred_region
      %s117 = ssub.s32 %s9, 1
      // Predicated region
      $region13: #{_lambda_.7} parent=11 // pred_check
        %p118 = pneg %p56
      $region14: #{_lambda_.7} parent=11 // pred_check_branch
        %120 = sbr.rel (%p118) target = $region16
      $region15: #{_lambda_.7} parent=11 // pred_region
        _
      $region16: #{_lambda_.7} parent=11 // pred_fallthru
        _
      // Predicated region
      $region17: #{_lambda_.7} parent=11 // pred_check
        %p121 = pneg %p77
      $region18: #{_lambda_.7} parent=11 // pred_check_branch
        %123 = sbr.rel (%p121) target = $region20
      $region19: #{_lambda_.7} parent=11 // pred_region
        _
      $region20: #{_lambda_.7} parent=11 // pred_fallthru
        _
    $region12: #{_lambda_.7} parent=5 // pred_fallthru
      _
    %p124 = scmp.lt.s32.totalorder %s9, 2
    // Predicated region
    $region21: #{_lambda_.7} parent=5 // pred_check
      %p125 = pneg %p124
    $region22: #{_lambda_.7} parent=5 // pred_check_branch
      %127 = sbr.rel (%p125) target = $region24
    $region23: #{_lambda_.7} parent=5 // pred_region
      // Predicated region
      $region25: #{_lambda_.7} parent=23 // pred_check
        %p128 = pneg %p29
      $region26: #{_lambda_.7} parent=23 // pred_check_branch
        %130 = sbr.rel (%p128) target = $region28
      $region27: #{_lambda_.7} parent=23 // pred_region
        %p131 = scmp.lt.s32.totalorder %s9, 1
        %s132 = scalar_select %p131, %s9, 1
        %s133 = smul.addr %s132, 32
        %s134 = smul.addr %s133, 4
        %s135 = scalar_lea.vmem %s0, %s134
      $region28: #{_lambda_.7} parent=23 // pred_fallthru
        _
    $region24: #{_lambda_.7} parent=5 // pred_fallthru
      _
    %p136 = scmp.le.s32.totalorder 1, %s9
    %p137 = scmp.lt.s32.totalorder %s9, 3
    %p138 = pnand %p136, %p137
    %p139 = pneg %p138
    // Predicated region
    $region29: #{_lambda_.7} parent=5 // pred_check
      _
    $region30: #{_lambda_.7} parent=5 // pred_check_branch
      %141 = sbr.rel (%p138) target = $region32
    $region31: #{_lambda_.7} parent=5 // pred_region
      %s142 = ssub.s32 %s9, 1
      %p143 = scmp.lt.s32.totalorder %s14, 1
      %s144 = scalar_select %p143, %s14, 1
      %s145 = smul.addr %s144, 32
      %s146 = smul.addr %s145, 4
      %s147 = scalar_lea.vmem %s0, %s146
      %p148 = pneg %p35
      %p149 = pneg %p32
      %p150 = pneg %p56
      %p151 = pneg %p53
      %p152 = pneg %p77
      %p153 = pneg %p74
      %p154 = pneg %p103
      %p155 = pneg %p100
      %p156 = scmp.lt.s32.totalorder %s14, 1
      %s157 = scalar_select %p156, %s14, 1
      %s158 = smul.addr %s157, 32
      %s159 = smul.addr %s158, 8
      %s160 = scalar_lea.vmem %s3, %s159
      %p161 = scmp.lt.s32.totalorder %s14, 1
      %s162 = scalar_select %p161, %s14, 1
      %s163 = smul.addr %s162, 32
      %s164 = smul.addr %s163, 4
      %s165 = scalar_lea.vmem %s0, %s164
      %p166 = scmp.lt.s32.totalorder %s14, 1
      %s167 = scalar_select %p166, %s14, 1
      %s168 = smul.addr %s167, 32
      %s169 = smul.addr %s168, 8
      %s170 = scalar_lea.vmem %s3, %s169
      loop: start=0, step=1, limit=16
      $region33: #{_lambda_.7} parent=31 // loop_pre_header
        _
      $region34: #{_lambda_.7} parent=31 // loop_header
        %s173 = sphi 0, %s177
        %p174 = scmp.ge.s32.totalorder %s173, 16
      $region35: #{_lambda_.7} parent=31 // loop_header_branch
        %176 = sbr.rel (%p174) target = $region39
      $region36: #{_lambda_.7} parent=31 // loop_body
        %s178 = smul.u32 %s173, 2
        %s179 = smul.addr %s178, 4
        %s180 = scalar_lea.vmem %s165, %s179
        %v181 = vld [vmem:[%s180] sm:$0xf]
        %v182 = vld [vmem:[%s180 + $0x4] sm:$0xf]
        %v183 = vld [vmem:[%s1] sm:$0xf]
        %v184 = vld [vmem:[%s1 + $0x4] sm:$0xf]
        %v185 = vld [vmem:[%s1 + $0x8] sm:$0xf]
        %v186 = vld [vmem:[%s1 + $0xc] sm:$0xf]
        %v187 = vld [vmem:[%s1 + $0x10] sm:$0xf]
        %v188 = vld [vmem:[%s1 + $0x14] sm:$0xf]
        %v189 = vld [vmem:[%s1 + $0x18] sm:$0xf]
        %v190 = vld [vmem:[%s1 + $0x1c] sm:$0xf]
        %v191 = vld [vmem:[%s1 + $0x20] sm:$0xf]
        %v192 = vld [vmem:[%s1 + $0x24] sm:$0xf]
        %v193 = vld [vmem:[%s1 + $0x28] sm:$0xf]
        %v194 = vld [vmem:[%s1 + $0x2c] sm:$0xf]
        %v195 = vld [vmem:[%s1 + $0x30] sm:$0xf]
        %v196 = vld [vmem:[%s1 + $0x34] sm:$0xf]
        %v197 = vld [vmem:[%s1 + $0x38] sm:$0xf]
        %v198 = vld [vmem:[%s1 + $0x3c] sm:$0xf]
        %v199 = vld [vmem:[%s2] sm:$0x1]
        %v201 = vlaneseq
        %v202 = vshrl.u32 %v201, 7
        %v203 = vsub.s32 0, %v202
        %v204 = vrot.slane %v199, %v203
        %v208 = vunpack.c.l.b16 %v181
        %v209 = vunpack.c.l.b16 %v182
        %v210 = vpack.c.b16 %v209, %v208
        %v228 = vunpack.c.l.b16 %v183
        %v229 = vunpack.c.l.b16 %v184
        %v230 = vunpack.c.l.b16 %v185
        %v231 = vunpack.c.l.b16 %v186
        %v232 = vunpack.c.l.b16 %v187
        %v233 = vunpack.c.l.b16 %v188
        %v234 = vunpack.c.l.b16 %v189
        %v235 = vunpack.c.l.b16 %v190
        %v236 = vunpack.c.l.b16 %v191
        %v237 = vunpack.c.l.b16 %v192
        %v238 = vunpack.c.l.b16 %v193
        %v239 = vunpack.c.l.b16 %v194
        %v240 = vunpack.c.l.b16 %v195
        %v241 = vunpack.c.l.b16 %v196
        %v242 = vunpack.c.l.b16 %v197
        %v243 = vunpack.c.l.b16 %v198
        %v244 = vpack.c.b16 %v229, %v228
        %v245 = vpack.c.b16 %v231, %v230
        %v246 = vpack.c.b16 %v233, %v232
        %v247 = vpack.c.b16 %v235, %v234
        %v248 = vpack.c.b16 %v237, %v236
        %v249 = vpack.c.b16 %v239, %v238
        %v250 = vpack.c.b16 %v241, %v240
        %v251 = vpack.c.b16 %v243, %v242
        %260 = vmatprep.subr.bf16.mxu0 0
        %261 = vmatpush1.bf16.msra.mxu0 %v244
        %262 = vmatprep.subr.bf16.mxu0 0
        %263 = vmatpush1.bf16.msra.mxu0 %v245
        %264 = vmatprep.subr.bf16.mxu0 0
        %265 = vmatpush1.bf16.msra.mxu0 %v246
        %266 = vmatprep.subr.bf16.mxu0 0
        %267 = vmatpush1.bf16.msra.mxu0 %v247
        %268 = vmatprep.subr.bf16.mxu0 0
        %269 = vmatpush1.bf16.msra.mxu0 %v248
        %270 = vmatprep.subr.bf16.mxu0 0
        %271 = vmatpush1.bf16.msra.mxu0 %v249
        %272 = vmatprep.subr.bf16.mxu0 0
        %273 = vmatpush1.bf16.msra.mxu0 %v250
        %274 = vmatprep.subr.bf16.mxu0 0
        %275 = vmatpush1.bf16.msra.mxu0 %v251
        %276 = vmatprep.subr.bf16.mxu0 0
        %277 = vmatpush1.bf16.msra.mxu0 0
        %278 = vmatprep.subr.bf16.mxu0 0
        %279 = vmatpush1.bf16.msra.mxu0 0
        %280 = vmatprep.subr.bf16.mxu0 0
        %281 = vmatpush1.bf16.msra.mxu0 0
        %282 = vmatprep.subr.bf16.mxu0 0
        %283 = vmatpush1.bf16.msra.mxu0 0
        %284 = vmatprep.subr.bf16.mxu0 0
        %285 = vmatpush1.bf16.msra.mxu0 0
        %286 = vmatprep.subr.bf16.mxu0 0
        %287 = vmatpush1.bf16.msra.mxu0 0
        %288 = vmatprep.subr.bf16.mxu0 0
        %289 = vmatpush1.bf16.msra.mxu0 0
        %290 = vmatprep.subr.bf16.mxu0 0
        %291 = vmatpush1.bf16.msra.mxu0 0
        %292 = vmatprep.mubr.bf16.mxu0 0
        %293 = vmatmul.mubr.bf16.gmra.mrb[0].mxu0 %v210
        %v294 = vpop.f32.mrb[0].mxu0
        %v295 = vadd.f32 %v204, %v294
        %v296 = vpop.f32.mrb[0].mxu0
        %v297 = vpop.f32.mrb[0].mxu0
        %v298 = vadd.f32 %v204, %v297
        %v299 = vpop.f32.mrb[0].mxu0
        %300 = vdwg.mxu0
        %v301 = vtanh.pop %v295
        %v302 = vtanh.pop %v298
        %s303 = smul.u32 %s173, 16
        %s304 = scalar_lea.vmem %s170, %s303
        %305 = vst [vmem:[%s304] sm:$0xff] %v301
        %306 = vst [vmem:[%s304 + $0x8] sm:$0xff] %v302
      $region37: #{_lambda_.7} parent=31 // loop_footer
        %s177 = sadd.s32 1, %s173
      $region38: #{_lambda_.7} parent=31 // loop_footer_branch
        %172 = sbr.rel target = $region34
      $region39: #{_lambda_.7} parent=31 // loop_exit
        _
      %p307 = scmp.lt.s32.totalorder %s14, 1
      %s308 = scalar_select %p307, %s14, 1
      %s309 = smul.addr %s308, 32
      %s310 = smul.addr %s309, 8
      %s311 = scalar_lea.vmem %s3, %s310
      // Predicated region
      $region40: #{_lambda_.7} parent=31 // pred_check
        %p312 = pneg %p100
      $region41: #{_lambda_.7} parent=31 // pred_check_branch
        %314 = sbr.rel (%p312) target = $region43
      $region42: #{_lambda_.7} parent=31 // pred_region
        _
      $region43: #{_lambda_.7} parent=31 // pred_fallthru
        _
    $region32: #{_lambda_.7} parent=5 // pred_fallthru
      _
    %p315 = scmp.le.s32.totalorder 2, %s9
    // Predicated region
    $region44: #{_lambda_.7} parent=5 // pred_check
      %p316 = pneg %p315
    $region45: #{_lambda_.7} parent=5 // pred_check_branch
      %318 = sbr.rel (%p316) target = $region47
    $region46: #{_lambda_.7} parent=5 // pred_region
      %s319 = ssub.s32 %s9, 2
      // Predicated region
      $region48: #{_lambda_.7} parent=46 // pred_check
        %p320 = pneg %p106
      $region49: #{_lambda_.7} parent=46 // pred_check_branch
        %322 = sbr.rel (%p320) target = $region51
      $region50: #{_lambda_.7} parent=46 // pred_region
        %p323 = scmp.lt.s32.totalorder %s15, 1
        %s324 = scalar_select %p323, %s15, 1
        %s325 = smul.addr %s324, 32
        %s326 = smul.addr %s325, 8
        %s327 = scalar_lea.vmem %s3, %s326
      $region51: #{_lambda_.7} parent=46 // pred_fallthru
        _
    $region47: #{_lambda_.7} parent=5 // pred_fallthru
      _
  $region6: #{_lambda_.7} parent=0 // loop_footer
    %s13 = sadd.s32 1, %s9
  $region7: #{_lambda_.7} parent=0 // loop_footer_branch
    %8 = sbr.rel target = $region3
  $region8: #{_lambda_.7} parent=0 // loop_exit
    _

// kernel: _lambda_.4
$region0: #{_lambda_.4}
  #allocation0 [shape = 'u32[]', space=smem, size = 0x4, offset = 0x4, fixed_abs, tag = 'smem constant byte address 0x4 - core index']
  #allocation1 [shape = 'u32[144,128]{1,0:T(1,128)}', space=vmem, size = 0x12000, scoped, tag = 'internal scratch']
  #allocation2 [shape = 'f32[16,16,128]{2,1,0:T(8,128)}', space=vmem, size = 0x20000, scoped, tag = 'scratch operand']
  #allocation3 [shape = 'bf16[16,16,128]{2,1,0:T(16,128)(2,1)}', space=vmem, size = 0x10000, scoped, tag = 'scratch operand']
  %s0 = inlined_call_operand.vmem [shape: bf16[2,16,16,128], index: 0, kind: input, shape index: {}]
  %s1 = inlined_call_operand.hbm [shape: bf16[9,128,128], index: 1, kind: input, shape index: {}]
  %s2 = inlined_call_operand.vmem [shape: bf16[9,128,128], index: 2, kind: input, shape index: {}]
  %s3 = inlined_call_operand.vmem [shape: f32[1,128], index: 3, kind: input, shape index: {}]
  %s4 = inlined_call_operand.vmem [shape: f32[1,128], index: 4, kind: input, shape index: {}]
  %s5 = inlined_call_operand.vmem [shape: bf16[2,16,16,128], index: 5, kind: output, shape index: {}]
  %s6 = sld [smem:[#allocation0]]
  $region71: #{_lambda_.4} parent=0
    _
  %s8 = ssub.s32 1, %s6
  %s9 = scalar_select 0, %s8, %s6
  $region1: #{_lambda_.4} parent=0
    #allocation4 [shape = 'u8[294912]{0}', space=vmem, size = 0x48000, scoped, tag = 'input window, operand 1, single buffered']
    #allocation5 [shape = 's32[2]{0}', space=sflag, size = 0x8, scoped, tag = 'scoped memory for _lambda_.4']
    %10 = vsyncpa [#allocation5], 0
    loop: start=0, step=1, limit=4
    $region2: #{_lambda_.4} parent=1 // loop_pre_header
      _
    $region3: #{_lambda_.4} parent=1 // loop_header
      %s12 = sphi 0, %s16
      %p13 = scmp.ge.s32.totalorder %s12, 4
      %s22 = sphi 0, %s24
      %s25 = sphi 0, %s22
      %s26 = sphi 0, %s25
      %s42 = sphi 0, %s26
      %s46 = sphi 0, %s46
      %s48 = sphi 0, %s46
      %s49 = sphi 0, %s48
      %s63 = sphi 0, %s49
      %s67 = sphi 0, %s67
      %s69 = sphi 0, %s67
      %s70 = sphi 0, %s69
      %s84 = sphi 0, %s70
      %s88 = sphi 0, %s88
      %s90 = sphi 0, %s88
      %s91 = sphi 0, %s90
      %s105 = sphi 0, %s91
      %s109 = sphi 0, %s109
      %s111 = sphi 0, %s109
      %s112 = sphi 0, %s111
      %s126 = sphi 0, %s112
      %s132 = sphi 0, %s134
      %s135 = sphi 0, %s132
      %s136 = sphi 0, %s135
      %s152 = sphi 0, %s136
    $region4: #{_lambda_.4} parent=1 // loop_header_branch
      %15 = sbr.rel (%p13) target = $region8
    $region5: #{_lambda_.4} parent=1 // loop_body
      %s17 = ssub.s32 %s12, 1
      %s18 = ssub.s32 %s12, 2
      %s19 = sadd.s32 %s12, 1
      %s20 = ssub.s32 %s12, %s19
      %p21 = scmp.eq.s32.totalorder %s20, 0
      %s23 = sadd.s32 %s22, 1
      %s24 = scalar_select %p21, %s22, %s23
      %p27 = pneg %p21
      %p28 = scmp.eq.s32.totalorder %s12, 1
      %p29 = por %p27, %p28
      %p30 = scmp.ne.s32.totalorder %s22, %s25
      %p31 = scmp.eq.s32.totalorder %s12, 0
      %p32 = por %p30, %p31
      %p33 = scmp.ne.s32.totalorder %s22, %s25
      %p34 = scmp.eq.s32.totalorder %s17, 1
      %p35 = por %p33, %p34
      %p36 = scmp.ne.s32.totalorder %s25, %s26
      %p37 = scmp.eq.s32.totalorder %s17, 0
      %p38 = por %p36, %p37
      %p39 = scmp.ne.s32.totalorder %s25, %s26
      %p40 = scmp.eq.s32.totalorder %s18, 1
      %p41 = por %p39, %p40
      %p43 = scmp.ne.s32.totalorder %s26, %s42
      %p44 = scmp.eq.s32.totalorder %s18, 0
      %p45 = por %p43, %p44
      %s47 = sadd.s32 %s46, 1
      %p50 = scmp.eq.s32.totalorder %s12, 1
      %p51 = scmp.ne.s32.totalorder %s46, %s48
      %p52 = scmp.eq.s32.totalorder %s12, 0
      %p53 = por %p51, %p52
      %p54 = scmp.ne.s32.totalorder %s46, %s48
      %p55 = scmp.eq.s32.totalorder %s17, 1
      %p56 = por %p54, %p55
      %p57 = scmp.ne.s32.totalorder %s48, %s49
      %p58 = scmp.eq.s32.totalorder %s17, 0
      %p59 = por %p57, %p58
      %p60 = scmp.ne.s32.totalorder %s48, %s49
      %p61 = scmp.eq.s32.totalorder %s18, 1
      %p62 = por %p60, %p61
      %p64 = scmp.ne.s32.totalorder %s49, %s63
      %p65 = scmp.eq.s32.totalorder %s18, 0
      %p66 = por %p64, %p65
      %s68 = sadd.s32 %s67, 1
      %p71 = scmp.eq.s32.totalorder %s12, 1
      %p72 = scmp.ne.s32.totalorder %s67, %s69
      %p73 = scmp.eq.s32.totalorder %s12, 0
      %p74 = por %p72, %p73
      %p75 = scmp.ne.s32.totalorder %s67, %s69
      %p76 = scmp.eq.s32.totalorder %s17, 1
      %p77 = por %p75, %p76
      %p78 = scmp.ne.s32.totalorder %s69, %s70
      %p79 = scmp.eq.s32.totalorder %s17, 0
      %p80 = por %p78, %p79
      %p81 = scmp.ne.s32.totalorder %s69, %s70
      %p82 = scmp.eq.s32.totalorder %s18, 1
      %p83 = por %p81, %p82
      %p85 = scmp.ne.s32.totalorder %s70, %s84
      %p86 = scmp.eq.s32.totalorder %s18, 0
      %p87 = por %p85, %p86
      %s89 = sadd.s32 %s88, 1
      %p92 = scmp.eq.s32.totalorder %s12, 1
      %p93 = scmp.ne.s32.totalorder %s88, %s90
      %p94 = scmp.eq.s32.totalorder %s12, 0
      %p95 = por %p93, %p94
      %p96 = scmp.ne.s32.totalorder %s88, %s90
      %p97 = scmp.eq.s32.totalorder %s17, 1
      %p98 = por %p96, %p97
      %p99 = scmp.ne.s32.totalorder %s90, %s91
      %p100 = scmp.eq.s32.totalorder %s17, 0
      %p101 = por %p99, %p100
      %p102 = scmp.ne.s32.totalorder %s90, %s91
      %p103 = scmp.eq.s32.totalorder %s18, 1
      %p104 = por %p102, %p103
      %p106 = scmp.ne.s32.totalorder %s91, %s105
      %p107 = scmp.eq.s32.totalorder %s18, 0
      %p108 = por %p106, %p107
      %s110 = sadd.s32 %s109, 1
      %p113 = scmp.eq.s32.totalorder %s12, 1
      %p114 = scmp.ne.s32.totalorder %s109, %s111
      %p115 = scmp.eq.s32.totalorder %s12, 0
      %p116 = por %p114, %p115
      %p117 = scmp.ne.s32.totalorder %s109, %s111
      %p118 = scmp.eq.s32.totalorder %s17, 1
      %p119 = por %p117, %p118
      %p120 = scmp.ne.s32.totalorder %s111, %s112
      %p121 = scmp.eq.s32.totalorder %s17, 0
      %p122 = por %p120, %p121
      %p123 = scmp.ne.s32.totalorder %s111, %s112
      %p124 = scmp.eq.s32.totalorder %s18, 1
      %p125 = por %p123, %p124
      %p127 = scmp.ne.s32.totalorder %s112, %s126
      %p128 = scmp.eq.s32.totalorder %s18, 0
      %p129 = por %p127, %p128
      %s130 = ssub.s32 %s12, %s19
      %p131 = scmp.eq.s32.totalorder %s130, 0
      %s133 = sadd.s32 %s132, 1
      %s134 = scalar_select %p131, %s132, %s133
      %p137 = pneg %p131
      %p138 = scmp.eq.s32.totalorder %s12, 1
      %p139 = por %p137, %p138
      %p140 = scmp.ne.s32.totalorder %s132, %s135
      %p141 = scmp.eq.s32.totalorder %s12, 0
      %p142 = por %p140, %p141
      %p143 = scmp.ne.s32.totalorder %s132, %s135
      %p144 = scmp.eq.s32.totalorder %s17, 1
      %p145 = por %p143, %p144
      %p146 = scmp.ne.s32.totalorder %s135, %s136
      %p147 = scmp.eq.s32.totalorder %s17, 0
      %p148 = por %p146, %p147
      %p149 = scmp.ne.s32.totalorder %s135, %s136
      %p150 = scmp.eq.s32.totalorder %s18, 1
      %p151 = por %p149, %p150
      %p153 = scmp.ne.s32.totalorder %s136, %s152
      %p154 = scmp.eq.s32.totalorder %s18, 0
      %p155 = por %p153, %p154
      %p156 = scmp.le.s32.totalorder 1, %s12
      %p157 = scmp.lt.s32.totalorder %s12, 3
      %p158 = pnand %p156, %p157
      %p159 = pneg %p158
      // Predicated region
      $region9: #{_lambda_.4} parent=5 // pred_check
        _
      $region10: #{_lambda_.4} parent=5 // pred_check_branch
        %161 = sbr.rel (%p158) target = $region12
      $region11: #{_lambda_.4} parent=5 // pred_region
        %s162 = ssub.s32 %s12, 1
        // Predicated region
        $region13: #{_lambda_.4} parent=11 // pred_check
          %p163 = pneg %p59
        $region14: #{_lambda_.4} parent=11 // pred_check_branch
          %165 = sbr.rel (%p163) target = $region16
        $region15: #{_lambda_.4} parent=11 // pred_region
          %s167 = ssub.s32 9216, 9216
          %168 = vsyncadd [#allocation5], %s167
          %s169 = sshll.u32 [#allocation4], 4
          %s170 = int_to_ptr.vmem [resolvable:$true] %s169
          %175 = dma.hbm_to_vmem [thread:$0]  %s1, 9216, %s170, [#allocation5], 64, 64, 4
        $region16: #{_lambda_.4} parent=11 // pred_fallthru
          _
        // Predicated region
        $region17: #{_lambda_.4} parent=11 // pred_check
          %p176 = pneg %p80
        $region18: #{_lambda_.4} parent=11 // pred_check_branch
          %178 = sbr.rel (%p176) target = $region20
        $region19: #{_lambda_.4} parent=11 // pred_region
          _
        $region20: #{_lambda_.4} parent=11 // pred_fallthru
          _
        // Predicated region
        $region21: #{_lambda_.4} parent=11 // pred_check
          %p179 = pneg %p101
        $region22: #{_lambda_.4} parent=11 // pred_check_branch
          %181 = sbr.rel (%p179) target = $region24
        $region23: #{_lambda_.4} parent=11 // pred_region
          _
        $region24: #{_lambda_.4} parent=11 // pred_fallthru
          _
        // Predicated region
        $region25: #{_lambda_.4} parent=11 // pred_check
          %p182 = pneg %p122
        $region26: #{_lambda_.4} parent=11 // pred_check_branch
          %184 = sbr.rel (%p182) target = $region28
        $region27: #{_lambda_.4} parent=11 // pred_region
          _
        $region28: #{_lambda_.4} parent=11 // pred_fallthru
          _
      $region12: #{_lambda_.4} parent=5 // pred_fallthru
        _
      %p185 = scmp.lt.s32.totalorder %s12, 2
      // Predicated region
      $region29: #{_lambda_.4} parent=5 // pred_check
        %p186 = pneg %p185
      $region30: #{_lambda_.4} parent=5 // pred_check_branch
        %188 = sbr.rel (%p186) target = $region32
      $region31: #{_lambda_.4} parent=5 // pred_region
        // Predicated region
        $region33: #{_lambda_.4} parent=31 // pred_check
          %p189 = pneg %p32
        $region34: #{_lambda_.4} parent=31 // pred_check_branch
          %191 = sbr.rel (%p189) target = $region36
        $region35: #{_lambda_.4} parent=31 // pred_region
          %p192 = scmp.lt.s32.totalorder %s12, 1
          %s193 = scalar_select %p192, %s12, 1
          %s194 = smul.addr %s193, 32
          %s195 = smul.addr %s194, 4
          %s196 = scalar_lea.vmem %s0, %s195
        $region36: #{_lambda_.4} parent=31 // pred_fallthru
          _
      $region32: #{_lambda_.4} parent=5 // pred_fallthru
        _
      %p197 = scmp.le.s32.totalorder 1, %s12
      %p198 = scmp.lt.s32.totalorder %s12, 3
      %p199 = pnand %p197, %p198
      %p200 = pneg %p199
      // Predicated region
      $region37: #{_lambda_.4} parent=5 // pred_check
        _
      $region38: #{_lambda_.4} parent=5 // pred_check_branch
        %202 = sbr.rel (%p199) target = $region40
      $region39: #{_lambda_.4} parent=5 // pred_region
        %s203 = ssub.s32 %s12, 1
        // Predicated region
        $region41: #{_lambda_.4} parent=39 // pred_check
          %p204 = pneg %p59
        $region42: #{_lambda_.4} parent=39 // pred_check_branch
          %206 = sbr.rel (%p204) target = $region44
        $region43: #{_lambda_.4} parent=39 // pred_region
          %207 = dma.done [#allocation5], 9216
        $region44: #{_lambda_.4} parent=39 // pred_fallthru
          _
        %p208 = scmp.lt.s32.totalorder %s17, 1
        %s209 = scalar_select %p208, %s17, 1
        %s210 = smul.addr %s209, 32
        %s211 = smul.addr %s210, 4
        %s212 = scalar_lea.vmem %s0, %s211
        %p213 = pneg %p38
        %p214 = pneg %p35
        %p215 = pneg %p59
        %p216 = pneg %p56
        %p217 = pneg %p80
        %p218 = pneg %p77
        %p219 = pneg %p101
        %p220 = pneg %p98
        %p221 = pneg %p122
        %p222 = pneg %p119
        %p223 = pneg %p148
        %p224 = pneg %p145
        %p225 = scmp.lt.s32.totalorder %s17, 1
        %s226 = scalar_select %p225, %s17, 1
        %s227 = smul.addr %s226, 32
        %s228 = smul.addr %s227, 4
        %s229 = scalar_lea.vmem %s5, %s228
        %p230 = scmp.lt.s32.totalorder %s17, 1
        %s231 = scalar_select %p230, %s17, 1
        %s232 = smul.addr %s231, 32
        %s233 = smul.addr %s232, 4
        %s234 = scalar_lea.vmem %s0, %s233
        %p235 = scmp.lt.s32.totalorder %s17, 1
        %s236 = scalar_select %p235, %s17, 1
        %s237 = smul.addr %s236, 32
        %s238 = smul.addr %s237, 4
        %s239 = scalar_lea.vmem %s5, %s238
        loop: start=0, step=1, limit=14
        $region45: #{_lambda_.4} parent=39 // loop_pre_header
          _
        $region46: #{_lambda_.4} parent=39 // loop_header
          %s242 = sphi 0, %s246
          %p243 = scmp.ge.s32.totalorder %s242, 14
        $region47: #{_lambda_.4} parent=39 // loop_header_branch
          %245 = sbr.rel (%p243) target = $region51
        $region48: #{_lambda_.4} parent=39 // loop_body
          %s247 = smul.u32 %s242, 2
          %s248 = smul.addr %s247, 4
          %s249 = scalar_lea.vmem %s234, %s248
          %v250 = vld [vmem:[%s249] sm:$0xf]
          %v251 = vld [vmem:[%s249 + $0x4] sm:$0x7]
          %v252 = vld [vmem:[#allocation4] sm:$0xf]
          %v253 = vld [vmem:[#allocation4 + $0x4] sm:$0xf]
          %v254 = vld [vmem:[#allocation4 + $0x8] sm:$0xf]
          %v255 = vld [vmem:[#allocation4 + $0xc] sm:$0xf]
          %v256 = vld [vmem:[#allocation4 + $0x10] sm:$0xf]
          %v257 = vld [vmem:[#allocation4 + $0x14] sm:$0xf]
          %v258 = vld [vmem:[#allocation4 + $0x18] sm:$0xf]
          %v259 = vld [vmem:[#allocation4 + $0x1c] sm:$0xf]
          %v260 = vld [vmem:[#allocation4 + $0x20] sm:$0xf]
          %v261 = vld [vmem:[#allocation4 + $0x24] sm:$0xf]
          %v262 = vld [vmem:[#allocation4 + $0x28] sm:$0xf]
          %v263 = vld [vmem:[#allocation4 + $0x2c] sm:$0xf]
          %v264 = vld [vmem:[#allocation4 + $0x30] sm:$0xf]
          %v265 = vld [vmem:[#allocation4 + $0x34] sm:$0xf]
          %v266 = vld [vmem:[#allocation4 + $0x38] sm:$0xf]
          %v267 = vld [vmem:[#allocation4 + $0x3c] sm:$0xf]
          %v268 = vld [vmem:[%s249 + $0x4] sm:$0xf]
          %s269 = scalar_lea.vmem [#allocation4], 64
          %v270 = vld [vmem:[%s269] sm:$0xf]
          %v271 = vld [vmem:[%s269 + $0x4] sm:$0xf]
          %v272 = vld [vmem:[%s269 + $0x8] sm:$0xf]
          %v273 = vld [vmem:[%s269 + $0xc] sm:$0xf]
          %v274 = vld [vmem:[%s269 + $0x10] sm:$0xf]
          %v275 = vld [vmem:[%s269 + $0x14] sm:$0xf]
          %v276 = vld [vmem:[%s269 + $0x18] sm:$0xf]
          %v277 = vld [vmem:[%s269 + $0x1c] sm:$0xf]
          %v278 = vld [vmem:[%s269 + $0x20] sm:$0xf]
          %v279 = vld [vmem:[%s269 + $0x24] sm:$0xf]
          %v280 = vld [vmem:[%s269 + $0x28] sm:$0xf]
          %v281 = vld [vmem:[%s269 + $0x2c] sm:$0xf]
          %v282 = vld [vmem:[%s269 + $0x30] sm:$0xf]
          %v283 = vld [vmem:[%s269 + $0x34] sm:$0xf]
          %v284 = vld [vmem:[%s269 + $0x38] sm:$0xf]
          %v285 = vld [vmem:[%s269 + $0x3c] sm:$0xf]
          %v288 = vunpack.c.l.b16 %v250
          %v289 = vunpack.c.l.b16 %v268
          %v290 = vpack.c.b16 %v289, %v288
          %v292 = vshrl.u32 %v290, 16
          %v294 = vshll.u32 %v290, 16
          %v296 = vrot.slane %v294, 1
          %v297 = vor.u32 %v292, %v296
          %v315 = vunpack.c.l.b16 %v270
          %v316 = vunpack.c.l.b16 %v271
          %v317 = vunpack.c.l.b16 %v272
          %v318 = vunpack.c.l.b16 %v273
          %v319 = vunpack.c.l.b16 %v274
          %v320 = vunpack.c.l.b16 %v275
          %v321 = vunpack.c.l.b16 %v276
          %v322 = vunpack.c.l.b16 %v277
          %v323 = vunpack.c.l.b16 %v278
          %v324 = vunpack.c.l.b16 %v279
          %v325 = vunpack.c.l.b16 %v280
          %v326 = vunpack.c.l.b16 %v281
          %v327 = vunpack.c.l.b16 %v282
          %v328 = vunpack.c.l.b16 %v283
          %v329 = vunpack.c.l.b16 %v284
          %v330 = vunpack.c.l.b16 %v285
          %v331 = vpack.c.b16 %v316, %v315
          %v332 = vpack.c.b16 %v318, %v317
          %v333 = vpack.c.b16 %v320, %v319
          %v334 = vpack.c.b16 %v322, %v321
          %v335 = vpack.c.b16 %v324, %v323
          %v336 = vpack.c.b16 %v326, %v325
          %v337 = vpack.c.b16 %v328, %v327
          %v338 = vpack.c.b16 %v330, %v329
          %347 = vmatprep.subr.bf16.mxu0 0
          %348 = vmatpush1.bf16.msra.mxu0 %v331
          %349 = vmatprep.subr.bf16.mxu0 0
          %350 = vmatpush1.bf16.msra.mxu0 %v332
          %351 = vmatprep.subr.bf16.mxu0 0
          %352 = vmatpush1.bf16.msra.mxu0 %v333
          %353 = vmatprep.subr.bf16.mxu0 0
          %354 = vmatpush1.bf16.msra.mxu0 %v334
          %355 = vmatprep.subr.bf16.mxu0 0
          %356 = vmatpush1.bf16.msra.mxu0 %v335
          %357 = vmatprep.subr.bf16.mxu0 0
          %358 = vmatpush1.bf16.msra.mxu0 %v336
          %359 = vmatprep.subr.bf16.mxu0 0
          %360 = vmatpush1.bf16.msra.mxu0 %v337
          %361 = vmatprep.subr.bf16.mxu0 0
          %362 = vmatpush1.bf16.msra.mxu0 %v338
          %363 = vmatprep.subr.bf16.mxu0 0
          %364 = vmatpush1.bf16.msra.mxu0 0
          %365 = vmatprep.subr.bf16.mxu0 0
          %366 = vmatpush1.bf16.msra.mxu0 0
          %367 = vmatprep.subr.bf16.mxu0 0
          %368 = vmatpush1.bf16.msra.mxu0 0
          %369 = vmatprep.subr.bf16.mxu0 0
          %370 = vmatpush1.bf16.msra.mxu0 0
          %371 = vmatprep.subr.bf16.mxu0 0
          %372 = vmatpush1.bf16.msra.mxu0 0
          %373 = vmatprep.subr.bf16.mxu0 0
          %374 = vmatpush1.bf16.msra.mxu0 0
          %375 = vmatprep.subr.bf16.mxu0 0
          %376 = vmatpush1.bf16.msra.mxu0 0
          %377 = vmatprep.subr.bf16.mxu0 0
          %378 = vmatpush1.bf16.msra.mxu0 0
          %379 = vmatprep.mubr.bf16.mxu0 0
          %380 = vmatmul.mubr.bf16.gmra.mrb[0].mxu0 %v297
          %v381 = vpop.f32.mrb[0].mxu0
          %v382 = vadd.f32 0.0, %v381
          %v383 = vpop.f32.mrb[0].mxu0
          %v384 = vpop.f32.mrb[0].mxu0
          %v385 = vadd.f32 0.0, %v384
          %v386 = vpop.f32.mrb[0].mxu0
          %387 = vdwg.mxu0
          %v389 = vunpack.c.l.b16 %v251
          %v390 = vpack.c.b16 %v389, %v288
          %v408 = vunpack.c.l.b16 %v252
          %v409 = vunpack.c.l.b16 %v253
          %v410 = vunpack.c.l.b16 %v254
          %v411 = vunpack.c.l.b16 %v255
          %v412 = vunpack.c.l.b16 %v256
          %v413 = vunpack.c.l.b16 %v257
          %v414 = vunpack.c.l.b16 %v258
          %v415 = vunpack.c.l.b16 %v259
          %v416 = vunpack.c.l.b16 %v260
          %v417 = vunpack.c.l.b16 %v261
          %v418 = vunpack.c.l.b16 %v262
          %v419 = vunpack.c.l.b16 %v263
          %v420 = vunpack.c.l.b16 %v264
          %v421 = vunpack.c.l.b16 %v265
          %v422 = vunpack.c.l.b16 %v266
          %v423 = vunpack.c.l.b16 %v267
          %v424 = vpack.c.b16 %v409, %v408
          %v425 = vpack.c.b16 %v411, %v410
          %v426 = vpack.c.b16 %v413, %v412
          %v427 = vpack.c.b16 %v415, %v414
          %v428 = vpack.c.b16 %v417, %v416
          %v429 = vpack.c.b16 %v419, %v418
          %v430 = vpack.c.b16 %v421, %v420
          %v431 = vpack.c.b16 %v423, %v422
          %440 = vmatprep.subr.bf16.mxu0 0
          %441 = vmatpush1.bf16.msra.mxu0 %v424
          %442 = vmatprep.subr.bf16.mxu0 0
          %443 = vmatpush1.bf16.msra.mxu0 %v425
          %444 = vmatprep.subr.bf16.mxu0 0
          %445 = vmatpush1.bf16.msra.mxu0 %v426
          %446 = vmatprep.subr.bf16.mxu0 0
          %447 = vmatpush1.bf16.msra.mxu0 %v427
          %448 = vmatprep.subr.bf16.mxu0 0
          %449 = vmatpush1.bf16.msra.mxu0 %v428
          %450 = vmatprep.subr.bf16.mxu0 0
          %451 = vmatpush1.bf16.msra.mxu0 %v429
          %452 = vmatprep.subr.bf16.mxu0 0
          %453 = vmatpush1.bf16.msra.mxu0 %v430
          %454 = vmatprep.subr.bf16.mxu0 0
          %455 = vmatpush1.bf16.msra.mxu0 %v431
          %456 = vmatprep.subr.bf16.mxu0 0
          %457 = vmatpush1.bf16.msra.mxu0 0
          %458 = vmatprep.subr.bf16.mxu0 0
          %459 = vmatpush1.bf16.msra.mxu0 0
          %460 = vmatprep.subr.bf16.mxu0 0
          %461 = vmatpush1.bf16.msra.mxu0 0
          %462 = vmatprep.subr.bf16.mxu0 0
          %463 = vmatpush1.bf16.msra.mxu0 0
          %464 = vmatprep.subr.bf16.mxu0 0
          %465 = vmatpush1.bf16.msra.mxu0 0
          %466 = vmatprep.subr.bf16.mxu0 0
          %467 = vmatpush1.bf16.msra.mxu0 0
          %468 = vmatprep.subr.bf16.mxu0 0
          %469 = vmatpush1.bf16.msra.mxu0 0
          %470 = vmatprep.subr.bf16.mxu0 0
          %471 = vmatpush1.bf16.msra.mxu0 0
          %472 = vmatprep.mubr.bf16.mxu0 0
          %473 = vmatmul.mubr.bf16.gmra.mrb[0].mxu0 %v390
          %v474 = vpop.f32.mrb[0].mxu0
          %v475 = vadd.f32 %v382, %v474
          %v476 = vpop.f32.mrb[0].mxu0
          %v477 = vpop.f32.mrb[0].mxu0
          %v478 = vadd.f32 %v385, %v477
          %v479 = vpop.f32.mrb[0].mxu0
          %480 = vdwg.mxu0
          %v481 = vld [vmem:[%s249] sm:$0xe]
          %s482 = scalar_lea.vmem [#allocation4], 128
          %v483 = vld [vmem:[%s482] sm:$0xf]
          %v484 = vld [vmem:[%s482 + $0x4] sm:$0xf]
          %v485 = vld [vmem:[%s482 + $0x8] sm:$0xf]
          %v486 = vld [vmem:[%s482 + $0xc] sm:$0xf]
          %v487 = vld [vmem:[%s482 + $0x10] sm:$0xf]
          %v488 = vld [vmem:[%s482 + $0x14] sm:$0xf]
          %v489 = vld [vmem:[%s482 + $0x18] sm:$0xf]
          %v490 = vld [vmem:[%s482 + $0x1c] sm:$0xf]
          %v491 = vld [vmem:[%s482 + $0x20] sm:$0xf]
          %v492 = vld [vmem:[%s482 + $0x24] sm:$0xf]
          %v493 = vld [vmem:[%s482 + $0x28] sm:$0xf]
          %v494 = vld [vmem:[%s482 + $0x2c] sm:$0xf]
          %v495 = vld [vmem:[%s482 + $0x30] sm:$0xf]
          %v496 = vld [vmem:[%s482 + $0x34] sm:$0xf]
          %v497 = vld [vmem:[%s482 + $0x38] sm:$0xf]
          %v498 = vld [vmem:[%s482 + $0x3c] sm:$0xf]
          %v500 = vunpack.c.l.b16 %v481
          %v501 = vpack.c.b16 %v289, %v500
          %v502 = vrot.slane %v501, 1
          %v520 = vunpack.c.l.b16 %v483
          %v521 = vunpack.c.l.b16 %v484
          %v522 = vunpack.c.l.b16 %v485
          %v523 = vunpack.c.l.b16 %v486
          %v524 = vunpack.c.l.b16 %v487
          %v525 = vunpack.c.l.b16 %v488
          %v526 = vunpack.c.l.b16 %v489
          %v527 = vunpack.c.l.b16 %v490
          %v528 = vunpack.c.l.b16 %v491
          %v529 = vunpack.c.l.b16 %v492
          %v530 = vunpack.c.l.b16 %v493
          %v531 = vunpack.c.l.b16 %v494
          %v532 = vunpack.c.l.b16 %v495
          %v533 = vunpack.c.l.b16 %v496
          %v534 = vunpack.c.l.b16 %v497
          %v535 = vunpack.c.l.b16 %v498
          %v536 = vpack.c.b16 %v521, %v520
          %v537 = vpack.c.b16 %v523, %v522
          %v538 = vpack.c.b16 %v525, %v524
          %v539 = vpack.c.b16 %v527, %v526
          %v540 = vpack.c.b16 %v529, %v528
          %v541 = vpack.c.b16 %v531, %v530
          %v542 = vpack.c.b16 %v533, %v532
          %v543 = vpack.c.b16 %v535, %v534
          %552 = vmatprep.subr.bf16.mxu0 0
          %553 = vmatpush1.bf16.msra.mxu0 %v536
          %554 = vmatprep.subr.bf16.mxu0 0
          %555 = vmatpush1.bf16.msra.mxu0 %v537
          %556 = vmatprep.subr.bf16.mxu0 0
          %557 = vmatpush1.bf16.msra.mxu0 %v538
          %558 = vmatprep.subr.bf16.mxu0 0
          %559 = vmatpush1.bf16.msra.mxu0 %v539
          %560 = vmatprep.subr.bf16.mxu0 0
          %561 = vmatpush1.bf16.msra.mxu0 %v540
          %562 = vmatprep.subr.bf16.mxu0 0
          %563 = vmatpush1.bf16.msra.mxu0 %v541
          %564 = vmatprep.subr.bf16.mxu0 0
          %565 = vmatpush1.bf16.msra.mxu0 %v542
          %566 = vmatprep.subr.bf16.mxu0 0
          %567 = vmatpush1.bf16.msra.mxu0 %v543
          %568 = vmatprep.subr.bf16.mxu0 0
          %569 = vmatpush1.bf16.msra.mxu0 0
          %570 = vmatprep.subr.bf16.mxu0 0
          %571 = vmatpush1.bf16.msra.mxu0 0
          %572 = vmatprep.subr.bf16.mxu0 0
          %573 = vmatpush1.bf16.msra.mxu0 0
          %574 = vmatprep.subr.bf16.mxu0 0
          %575 = vmatpush1.bf16.msra.mxu0 0
          %576 = vmatprep.subr.bf16.mxu0 0
          %577 = vmatpush1.bf16.msra.mxu0 0
          %578 = vmatprep.subr.bf16.mxu0 0
          %579 = vmatpush1.bf16.msra.mxu0 0
          %580 = vmatprep.subr.bf16.mxu0 0
          %581 = vmatpush1.bf16.msra.mxu0 0
          %582 = vmatprep.subr.bf16.mxu0 0
          %583 = vmatpush1.bf16.msra.mxu0 0
          %584 = vmatprep.mubr.bf16.mxu0 0
          %585 = vmatmul.mubr.bf16.gmra.mrb[0].mxu0 %v502
          %v586 = vpop.f32.mrb[0].mxu0
          %v587 = vadd.f32 0.0, %v586
          %v588 = vpop.f32.mrb[0].mxu0
          %v589 = vpop.f32.mrb[0].mxu0
          %v590 = vadd.f32 0.0, %v589
          %v591 = vpop.f32.mrb[0].mxu0
          %592 = vdwg.mxu0
          %v593 = vadd.f32 %v475, %v587
          %v594 = vadd.f32 %v478, %v590
          %s595 = sadd.s32 %s242, 1
          %s596 = smul.u32 %s595, 2
          %s597 = smul.addr %s596, 4
          %s598 = scalar_lea.vmem %s234, %s597
          %v599 = vld [vmem:[%s598] sm:$0xf]
          %v600 = vld [vmem:[%s598 + $0x4] sm:$0x7]
          %s601 = scalar_lea.vmem [#allocation4], 192
          %v602 = vld [vmem:[%s601] sm:$0xf]
          %v603 = vld [vmem:[%s601 + $0x4] sm:$0xf]
          %v604 = vld [vmem:[%s601 + $0x8] sm:$0xf]
          %v605 = vld [vmem:[%s601 + $0xc] sm:$0xf]
          %v606 = vld [vmem:[%s601 + $0x10] sm:$0xf]
          %v607 = vld [vmem:[%s601 + $0x14] sm:$0xf]
          %v608 = vld [vmem:[%s601 + $0x18] sm:$0xf]
          %v609 = vld [vmem:[%s601 + $0x1c] sm:$0xf]
          %v610 = vld [vmem:[%s601 + $0x20] sm:$0xf]
          %v611 = vld [vmem:[%s601 + $0x24] sm:$0xf]
          %v612 = vld [vmem:[%s601 + $0x28] sm:$0xf]
          %v613 = vld [vmem:[%s601 + $0x2c] sm:$0xf]
          %v614 = vld [vmem:[%s601 + $0x30] sm:$0xf]
          %v615 = vld [vmem:[%s601 + $0x34] sm:$0xf]
          %v616 = vld [vmem:[%s601 + $0x38] sm:$0xf]
          %v617 = vld [vmem:[%s601 + $0x3c] sm:$0xf]
          %v620 = vunpack.c.l.b16 %v599
          %v621 = vunpack.c.l.b16 %v600
          %v622 = vpack.c.b16 %v621, %v620
          %v640 = vunpack.c.l.b16 %v602
          %v641 = vunpack.c.l.b16 %v603
          %v642 = vunpack.c.l.b16 %v604
          %v643 = vunpack.c.l.b16 %v605
          %v644 = vunpack.c.l.b16 %v606
          %v645 = vunpack.c.l.b16 %v607
          %v646 = vunpack.c.l.b16 %v608
          %v647 = vunpack.c.l.b16 %v609
          %v648 = vunpack.c.l.b16 %v610
          %v649 = vunpack.c.l.b16 %v611
          %v650 = vunpack.c.l.b16 %v612
          %v651 = vunpack.c.l.b16 %v613
          %v652 = vunpack.c.l.b16 %v614
          %v653 = vunpack.c.l.b16 %v615
          %v654 = vunpack.c.l.b16 %v616
          %v655 = vunpack.c.l.b16 %v617
          %v656 = vpack.c.b16 %v641, %v640
          %v657 = vpack.c.b16 %v643, %v642
          %v658 = vpack.c.b16 %v645, %v644
          %v659 = vpack.c.b16 %v647, %v646
          %v660 = vpack.c.b16 %v649, %v648
          %v661 = vpack.c.b16 %v651, %v650
          %v662 = vpack.c.b16 %v653, %v652
          %v663 = vpack.c.b16 %v655, %v654
          %672 = vmatprep.subr.bf16.mxu0 0
          %673 = vmatpush1.bf16.msra.mxu0 %v656
          %674 = vmatprep.subr.bf16.mxu0 0
          %675 = vmatpush1.bf16.msra.mxu0 %v657
          %676 = vmatprep.subr.bf16.mxu0 0
          %677 = vmatpush1.bf16.msra.mxu0 %v658
          %678 = vmatprep.subr.bf16.mxu0 0
          %679 = vmatpush1.bf16.msra.mxu0 %v659
          %680 = vmatprep.subr.bf16.mxu0 0
          %681 = vmatpush1.bf16.msra.mxu0 %v660
          %682 = vmatprep.subr.bf16.mxu0 0
          %683 = vmatpush1.bf16.msra.mxu0 %v661
          %684 = vmatprep.subr.bf16.mxu0 0
          %685 = vmatpush1.bf16.msra.mxu0 %v662
          %686 = vmatprep.subr.bf16.mxu0 0
          %687 = vmatpush1.bf16.msra.mxu0 %v663
          %688 = vmatprep.subr.bf16.mxu0 0
          %689 = vmatpush1.bf16.msra.mxu0 0
          %690 = vmatprep.subr.bf16.mxu0 0
          %691 = vmatpush1.bf16.msra.mxu0 0
          %692 = vmatprep.subr.bf16.mxu0 0
          %693 = vmatpush1.bf16.msra.mxu0 0
          %694 = vmatprep.subr.bf16.mxu0 0
          %695 = vmatpush1.bf16.msra.mxu0 0
          %696 = vmatprep.subr.bf16.mxu0 0
          %697 = vmatpush1.bf16.msra.mxu0 0
          %698 = vmatprep.subr.bf16.mxu0 0
          %699 = vmatpush1.bf16.msra.mxu0 0
          %700 = vmatprep.subr.bf16.mxu0 0
          %701 = vmatpush1.bf16.msra.mxu0 0
          %702 = vmatprep.subr.bf16.mxu0 0
          %703 = vmatpush1.bf16.msra.mxu0 0
          %704 = vmatprep.mubr.bf16.mxu0 0
          %705 = vmatmul.mubr.bf16.gmra.mrb[0].mxu0 %v622
          %v706 = vpop.f32.mrb[0].mxu0
          %v707 = vadd.f32 0.0, %v706
          %v708 = vpop.f32.mrb[0].mxu0
          %v709 = vpop.f32.mrb[0].mxu0
          %v710 = vadd.f32 0.0, %v709
          %v711 = vpop.f32.mrb[0].mxu0
          %712 = vdwg.mxu0
          %v713 = vadd.f32 %v593, %v707
          %v714 = vadd.f32 %v594, %v710
          %v715 = vld [vmem:[%s598 + $0x4] sm:$0xf]
          %s716 = scalar_lea.vmem [#allocation4], 256
          %v717 = vld [vmem:[%s716] sm:$0xf]
          %v718 = vld [vmem:[%s716 + $0x4] sm:$0xf]
          %v719 = vld [vmem:[%s716 + $0x8] sm:$0xf]
          %v720 = vld [vmem:[%s716 + $0xc] sm:$0xf]
          %v721 = vld [vmem:[%s716 + $0x10] sm:$0xf]
          %v722 = vld [vmem:[%s716 + $0x14] sm:$0xf]
          %v723 = vld [vmem:[%s716 + $0x18] sm:$0xf]
          %v724 = vld [vmem:[%s716 + $0x1c] sm:$0xf]
          %v725 = vld [vmem:[%s716 + $0x20] sm:$0xf]
          %v726 = vld [vmem:[%s716 + $0x24] sm:$0xf]
          %v727 = vld [vmem:[%s716 + $0x28] sm:$0xf]
          %v728 = vld [vmem:[%s716 + $0x2c] sm:$0xf]
          %v729 = vld [vmem:[%s716 + $0x30] sm:$0xf]
          %v730 = vld [vmem:[%s716 + $0x34] sm:$0xf]
          %v731 = vld [vmem:[%s716 + $0x38] sm:$0xf]
          %v732 = vld [vmem:[%s716 + $0x3c] sm:$0xf]
          %v734 = vunpack.c.l.b16 %v715
          %v735 = vpack.c.b16 %v734, %v620
          %v737 = vshrl.u32 %v735, 16
          %v739 = vshll.u32 %v735, 16
          %v741 = vrot.slane %v739, 1
          %v742 = vor.u32 %v737, %v741
          %v760 = vunpack.c.l.b16 %v717
          %v761 = vunpack.c.l.b16 %v718
          %v762 = vunpack.c.l.b16 %v719
          %v763 = vunpack.c.l.b16 %v720
          %v764 = vunpack.c.l.b16 %v721
          %v765 = vunpack.c.l.b16 %v722
          %v766 = vunpack.c.l.b16 %v723
          %v767 = vunpack.c.l.b16 %v724
          %v768 = vunpack.c.l.b16 %v725
          %v769 = vunpack.c.l.b16 %v726
          %v770 = vunpack.c.l.b16 %v727
          %v771 = vunpack.c.l.b16 %v728
          %v772 = vunpack.c.l.b16 %v729
          %v773 = vunpack.c.l.b16 %v730
          %v774 = vunpack.c.l.b16 %v731
          %v775 = vunpack.c.l.b16 %v732
          %v776 = vpack.c.b16 %v761, %v760
          %v777 = vpack.c.b16 %v763, %v762
          %v778 = vpack.c.b16 %v765, %v764
          %v779 = vpack.c.b16 %v767, %v766
          %v780 = vpack.c.b16 %v769, %v768
          %v781 = vpack.c.b16 %v771, %v770
          %v782 = vpack.c.b16 %v773, %v772
          %v783 = vpack.c.b16 %v775, %v774
          %792 = vmatprep.subr.bf16.mxu0 0
          %793 = vmatpush1.bf16.msra.mxu0 %v776
          %794 = vmatprep.subr.bf16.mxu0 0
          %795 = vmatpush1.bf16.msra.mxu0 %v777
          %796 = vmatprep.subr.bf16.mxu0 0
          %797 = vmatpush1.bf16.msra.mxu0 %v778
          %798 = vmatprep.subr.bf16.mxu0 0
          %799 = vmatpush1.bf16.msra.mxu0 %v779
          %800 = vmatprep.subr.bf16.mxu0 0
          %801 = vmatpush1.bf16.msra.mxu0 %v780
          %802 = vmatprep.subr.bf16.mxu0 0
          %803 = vmatpush1.bf16.msra.mxu0 %v781
          %804 = vmatprep.subr.bf16.mxu0 0
          %805 = vmatpush1.bf16.msra.mxu0 %v782
          %806 = vmatprep.subr.bf16.mxu0 0
          %807 = vmatpush1.bf16.msra.mxu0 %v783
          %808 = vmatprep.subr.bf16.mxu0 0
          %809 = vmatpush1.bf16.msra.mxu0 0
          %810 = vmatprep.subr.bf16.mxu0 0
          %811 = vmatpush1.bf16.msra.mxu0 0
          %812 = vmatprep.subr.bf16.mxu0 0
          %813 = vmatpush1.bf16.msra.mxu0 0
          %814 = vmatprep.subr.bf16.mxu0 0
          %815 = vmatpush1.bf16.msra.mxu0 0
          %816 = vmatprep.subr.bf16.mxu0 0
          %817 = vmatpush1.bf16.msra.mxu0 0
          %818 = vmatprep.subr.bf16.mxu0 0
          %819 = vmatpush1.bf16.msra.mxu0 0
          %820 = vmatprep.subr.bf16.mxu0 0
          %821 = vmatpush1.bf16.msra.mxu0 0
          %822 = vmatprep.subr.bf16.mxu0 0
          %823 = vmatpush1.bf16.msra.mxu0 0
          %824 = vmatprep.mubr.bf16.mxu0 0
          %825 = vmatmul.mubr.bf16.gmra.mrb[0].mxu0 %v742
          %v826 = vpop.f32.mrb[0].mxu0
          %v827 = vadd.f32 0.0, %v826
          %v828 = vpop.f32.mrb[0].mxu0
          %v829 = vpop.f32.mrb[0].mxu0
          %v830 = vadd.f32 0.0, %v829
          %v831 = vpop.f32.mrb[0].mxu0
          %832 = vdwg.mxu0
          %v833 = vadd.f32 %v713, %v827
          %v834 = vadd.f32 %v714, %v830
          %v835 = vld [vmem:[%s598] sm:$0xe]
          %s836 = scalar_lea.vmem [#allocation4], 320
          %v837 = vld [vmem:[%s836] sm:$0xf]
          %v838 = vld [vmem:[%s836 + $0x4] sm:$0xf]
          %v839 = vld [vmem:[%s836 + $0x8] sm:$0xf]
          %v840 = vld [vmem:[%s836 + $0xc] sm:$0xf]
          %v841 = vld [vmem:[%s836 + $0x10] sm:$0xf]
          %v842 = vld [vmem:[%s836 + $0x14] sm:$0xf]
          %v843 = vld [vmem:[%s836 + $0x18] sm:$0xf]
          %v844 = vld [vmem:[%s836 + $0x1c] sm:$0xf]
          %v845 = vld [vmem:[%s836 + $0x20] sm:$0xf]
          %v846 = vld [vmem:[%s836 + $0x24] sm:$0xf]
          %v847 = vld [vmem:[%s836 + $0x28] sm:$0xf]
          %v848 = vld [vmem:[%s836 + $0x2c] sm:$0xf]
          %v849 = vld [vmem:[%s836 + $0x30] sm:$0xf]
          %v850 = vld [vmem:[%s836 + $0x34] sm:$0xf]
          %v851 = vld [vmem:[%s836 + $0x38] sm:$0xf]
          %v852 = vld [vmem:[%s836 + $0x3c] sm:$0xf]
          %v854 = vunpack.c.l.b16 %v835
          %v855 = vpack.c.b16 %v734, %v854
          %v856 = vrot.slane %v855, 1
          %v874 = vunpack.c.l.b16 %v837
          %v875 = vunpack.c.l.b16 %v838
          %v876 = vunpack.c.l.b16 %v839
          %v877 = vunpack.c.l.b16 %v840
          %v878 = vunpack.c.l.b16 %v841
          %v879 = vunpack.c.l.b16 %v842
          %v880 = vunpack.c.l.b16 %v843
          %v881 = vunpack.c.l.b16 %v844
          %v882 = vunpack.c.l.b16 %v845
          %v883 = vunpack.c.l.b16 %v846
          %v884 = vunpack.c.l.b16 %v847
          %v885 = vunpack.c.l.b16 %v848
          %v886 = vunpack.c.l.b16 %v849
          %v887 = vunpack.c.l.b16 %v850
          %v888 = vunpack.c.l.b16 %v851
          %v889 = vunpack.c.l.b16 %v852
          %v890 = vpack.c.b16 %v875, %v874
          %v891 = vpack.c.b16 %v877, %v876
          %v892 = vpack.c.b16 %v879, %v878
          %v893 = vpack.c.b16 %v881, %v880
          %v894 = vpack.c.b16 %v883, %v882
          %v895 = vpack.c.b16 %v885, %v884
          %v896 = vpack.c.b16 %v887, %v886
          %v897 = vpack.c.b16 %v889, %v888
          %906 = vmatprep.subr.bf16.mxu0 0
          %907 = vmatpush1.bf16.msra.mxu0 %v890
          %908 = vmatprep.subr.bf16.mxu0 0
          %909 = vmatpush1.bf16.msra.mxu0 %v891
          %910 = vmatprep.subr.bf16.mxu0 0
          %911 = vmatpush1.bf16.msra.mxu0 %v892
          %912 = vmatprep.subr.bf16.mxu0 0
          %913 = vmatpush1.bf16.msra.mxu0 %v893
          %914 = vmatprep.subr.bf16.mxu0 0
          %915 = vmatpush1.bf16.msra.mxu0 %v894
          %916 = vmatprep.subr.bf16.mxu0 0
          %917 = vmatpush1.bf16.msra.mxu0 %v895
          %918 = vmatprep.subr.bf16.mxu0 0
          %919 = vmatpush1.bf16.msra.mxu0 %v896
          %920 = vmatprep.subr.bf16.mxu0 0
          %921 = vmatpush1.bf16.msra.mxu0 %v897
          %922 = vmatprep.subr.bf16.mxu0 0
          %923 = vmatpush1.bf16.msra.mxu0 0
          %924 = vmatprep.subr.bf16.mxu0 0
          %925 = vmatpush1.bf16.msra.mxu0 0
          %926 = vmatprep.subr.bf16.mxu0 0
          %927 = vmatpush1.bf16.msra.mxu0 0
          %928 = vmatprep.subr.bf16.mxu0 0
          %929 = vmatpush1.bf16.msra.mxu0 0
          %930 = vmatprep.subr.bf16.mxu0 0
          %931 = vmatpush1.bf16.msra.mxu0 0
          %932 = vmatprep.subr.bf16.mxu0 0
          %933 = vmatpush1.bf16.msra.mxu0 0
          %934 = vmatprep.subr.bf16.mxu0 0
          %935 = vmatpush1.bf16.msra.mxu0 0
          %936 = vmatprep.subr.bf16.mxu0 0
          %937 = vmatpush1.bf16.msra.mxu0 0
          %938 = vmatprep.mubr.bf16.mxu0 0
          %939 = vmatmul.mubr.bf16.gmra.mrb[0].mxu0 %v856
          %v940 = vpop.f32.mrb[0].mxu0
          %v941 = vadd.f32 0.0, %v940
          %v942 = vpop.f32.mrb[0].mxu0
          %v943 = vpop.f32.mrb[0].mxu0
          %v944 = vadd.f32 0.0, %v943
          %v945 = vpop.f32.mrb[0].mxu0
          %946 = vdwg.mxu0
          %v947 = vadd.f32 %v833, %v941
          %v948 = vadd.f32 %v834, %v944
          %s949 = sadd.s32 %s242, 2
          %s950 = smul.u32 %s949, 2
          %s951 = smul.addr %s950, 4
          %s952 = scalar_lea.vmem %s234, %s951
          %v953 = vld [vmem:[%s952] sm:$0xf]
          %v954 = vld [vmem:[%s952 + $0x4] sm:$0x7]
          %s955 = scalar_lea.vmem [#allocation4], 384
          %v956 = vld [vmem:[%s955] sm:$0xf]
          %v957 = vld [vmem:[%s955 + $0x4] sm:$0xf]
          %v958 = vld [vmem:[%s955 + $0x8] sm:$0xf]
          %v959 = vld [vmem:[%s955 + $0xc] sm:$0xf]
          %v960 = vld [vmem:[%s955 + $0x10] sm:$0xf]
          %v961 = vld [vmem:[%s955 + $0x14] sm:$0xf]
          %v962 = vld [vmem:[%s955 + $0x18] sm:$0xf]
          %v963 = vld [vmem:[%s955 + $0x1c] sm:$0xf]
          %v964 = vld [vmem:[%s955 + $0x20] sm:$0xf]
          %v965 = vld [vmem:[%s955 + $0x24] sm:$0xf]
          %v966 = vld [vmem:[%s955 + $0x28] sm:$0xf]
          %v967 = vld [vmem:[%s955 + $0x2c] sm:$0xf]
          %v968 = vld [vmem:[%s955 + $0x30] sm:$0xf]
          %v969 = vld [vmem:[%s955 + $0x34] sm:$0xf]
          %v970 = vld [vmem:[%s955 + $0x38] sm:$0xf]
          %v971 = vld [vmem:[%s955 + $0x3c] sm:$0xf]
          %v974 = vunpack.c.l.b16 %v953
          %v975 = vunpack.c.l.b16 %v954
          %v976 = vpack.c.b16 %v975, %v974
          %v994 = vunpack.c.l.b16 %v956
          %v995 = vunpack.c.l.b16 %v957
          %v996 = vunpack.c.l.b16 %v958
          %v997 = vunpack.c.l.b16 %v959
          %v998 = vunpack.c.l.b16 %v960
          %v999 = vunpack.c.l.b16 %v961
          %v1000 = vunpack.c.l.b16 %v962
          %v1001 = vunpack.c.l.b16 %v963
          %v1002 = vunpack.c.l.b16 %v964
          %v1003 = vunpack.c.l.b16 %v965
          %v1004 = vunpack.c.l.b16 %v966
          %v1005 = vunpack.c.l.b16 %v967
          %v1006 = vunpack.c.l.b16 %v968
          %v1007 = vunpack.c.l.b16 %v969
          %v1008 = vunpack.c.l.b16 %v970
          %v1009 = vunpack.c.l.b16 %v971
          %v1010 = vpack.c.b16 %v995, %v994
          %v1011 = vpack.c.b16 %v997, %v996
          %v1012 = vpack.c.b16 %v999, %v998
          %v1013 = vpack.c.b16 %v1001, %v1000
          %v1014 = vpack.c.b16 %v1003, %v1002
          %v1015 = vpack.c.b16 %v1005, %v1004
          %v1016 = vpack.c.b16 %v1007, %v1006
          %v1017 = vpack.c.b16 %v1009, %v1008
          %1026 = vmatprep.subr.bf16.mxu0 0
          %1027 = vmatpush1.bf16.msra.mxu0 %v1010
          %1028 = vmatprep.subr.bf16.mxu0 0
          %1029 = vmatpush1.bf16.msra.mxu0 %v1011
          %1030 = vmatprep.subr.bf16.mxu0 0
          %1031 = vmatpush1.bf16.msra.mxu0 %v1012
          %1032 = vmatprep.subr.bf16.mxu0 0
          %1033 = vmatpush1.bf16.msra.mxu0 %v1013
          %1034 = vmatprep.subr.bf16.mxu0 0
          %1035 = vmatpush1.bf16.msra.mxu0 %v1014
          %1036 = vmatprep.subr.bf16.mxu0 0
          %1037 = vmatpush1.bf16.msra.mxu0 %v1015
          %1038 = vmatprep.subr.bf16.mxu0 0
          %1039 = vmatpush1.bf16.msra.mxu0 %v1016
          %1040 = vmatprep.subr.bf16.mxu0 0
          %1041 = vmatpush1.bf16.msra.mxu0 %v1017
          %1042 = vmatprep.subr.bf16.mxu0 0
          %1043 = vmatpush1.bf16.msra.mxu0 0
          %1044 = vmatprep.subr.bf16.mxu0 0
          %1045 = vmatpush1.bf16.msra.mxu0 0
          %1046 = vmatprep.subr.bf16.mxu0 0
          %1047 = vmatpush1.bf16.msra.mxu0 0
          %1048 = vmatprep.subr.bf16.mxu0 0
          %1049 = vmatpush1.bf16.msra.mxu0 0
          %1050 = vmatprep.subr.bf16.mxu0 0
          %1051 = vmatpush1.bf16.msra.mxu0 0
          %1052 = vmatprep.subr.bf16.mxu0 0
          %1053 = vmatpush1.bf16.msra.mxu0 0
          %1054 = vmatprep.subr.bf16.mxu0 0
          %1055 = vmatpush1.bf16.msra.mxu0 0
          %1056 = vmatprep.subr.bf16.mxu0 0
          %1057 = vmatpush1.bf16.msra.mxu0 0
          %1058 = vmatprep.mubr.bf16.mxu0 0
          %1059 = vmatmul.mubr.bf16.gmra.mrb[0].mxu0 %v976
          %v1060 = vpop.f32.mrb[0].mxu0
          %v1061 = vadd.f32 0.0, %v1060
          %v1062 = vpop.f32.mrb[0].mxu0
          %v1063 = vpop.f32.mrb[0].mxu0
          %v1064 = vadd.f32 0.0, %v1063
          %v1065 = vpop.f32.mrb[0].mxu0
          %1066 = vdwg.mxu0
          %v1067 = vadd.f32 %v947, %v1061
          %v1068 = vadd.f32 %v948, %v1064
          %v1069 = vld [vmem:[%s952 + $0x4] sm:$0xf]
          %s1070 = scalar_lea.vmem [#allocation4], 448
          %v1071 = vld [vmem:[%s1070] sm:$0xf]
          %v1072 = vld [vmem:[%s1070 + $0x4] sm:$0xf]
          %v1073 = vld [vmem:[%s1070 + $0x8] sm:$0xf]
          %v1074 = vld [vmem:[%s1070 + $0xc] sm:$0xf]
          %v1075 = vld [vmem:[%s1070 + $0x10] sm:$0xf]
          %v1076 = vld [vmem:[%s1070 + $0x14] sm:$0xf]
          %v1077 = vld [vmem:[%s1070 + $0x18] sm:$0xf]
          %v1078 = vld [vmem:[%s1070 + $0x1c] sm:$0xf]
          %v1079 = vld [vmem:[%s1070 + $0x20] sm:$0xf]
          %v1080 = vld [vmem:[%s1070 + $0x24] sm:$0xf]
          %v1081 = vld [vmem:[%s1070 + $0x28] sm:$0xf]
          %v1082 = vld [vmem:[%s1070 + $0x2c] sm:$0xf]
          %v1083 = vld [vmem:[%s1070 + $0x30] sm:$0xf]
          %v1084 = vld [vmem:[%s1070 + $0x34] sm:$0xf]
          %v1085 = vld [vmem:[%s1070 + $0x38] sm:$0xf]
          %v1086 = vld [vmem:[%s1070 + $0x3c] sm:$0xf]
          %v1088 = vunpack.c.l.b16 %v1069
          %v1089 = vpack.c.b16 %v1088, %v974
          %v1091 = vshrl.u32 %v1089, 16
          %v1093 = vshll.u32 %v1089, 16
          %v1095 = vrot.slane %v1093, 1
          %v1096 = vor.u32 %v1091, %v1095
          %v1114 = vunpack.c.l.b16 %v1071
          %v1115 = vunpack.c.l.b16 %v1072
          %v1116 = vunpack.c.l.b16 %v1073
          %v1117 = vunpack.c.l.b16 %v1074
          %v1118 = vunpack.c.l.b16 %v1075
          %v1119 = vunpack.c.l.b16 %v1076
          %v1120 = vunpack.c.l.b16 %v1077
          %v1121 = vunpack.c.l.b16 %v1078
          %v1122 = vunpack.c.l.b16 %v1079
          %v1123 = vunpack.c.l.b16 %v1080
          %v1124 = vunpack.c.l.b16 %v1081
          %v1125 = vunpack.c.l.b16 %v1082
          %v1126 = vunpack.c.l.b16 %v1083
          %v1127 = vunpack.c.l.b16 %v1084
          %v1128 = vunpack.c.l.b16 %v1085
          %v1129 = vunpack.c.l.b16 %v1086
          %v1130 = vpack.c.b16 %v1115, %v1114
          %v1131 = vpack.c.b16 %v1117, %v1116
          %v1132 = vpack.c.b16 %v1119, %v1118
          %v1133 = vpack.c.b16 %v1121, %v1120
          %v1134 = vpack.c.b16 %v1123, %v1122
          %v1135 = vpack.c.b16 %v1125, %v1124
          %v1136 = vpack.c.b16 %v1127, %v1126
          %v1137 = vpack.c.b16 %v1129, %v1128
          %1146 = vmatprep.subr.bf16.mxu0 0
          %1147 = vmatpush1.bf16.msra.mxu0 %v1130
          %1148 = vmatprep.subr.bf16.mxu0 0
          %1149 = vmatpush1.bf16.msra.mxu0 %v1131
          %1150 = vmatprep.subr.bf16.mxu0 0
          %1151 = vmatpush1.bf16.msra.mxu0 %v1132
          %1152 = vmatprep.subr.bf16.mxu0 0
          %1153 = vmatpush1.bf16.msra.mxu0 %v1133
          %1154 = vmatprep.subr.bf16.mxu0 0
          %1155 = vmatpush1.bf16.msra.mxu0 %v1134
          %1156 = vmatprep.subr.bf16.mxu0 0
          %1157 = vmatpush1.bf16.msra.mxu0 %v1135
          %1158 = vmatprep.subr.bf16.mxu0 0
          %1159 = vmatpush1.bf16.msra.mxu0 %v1136
          %1160 = vmatprep.subr.bf16.mxu0 0
          %1161 = vmatpush1.bf16.msra.mxu0 %v1137
          %1162 = vmatprep.subr.bf16.mxu0 0
          %1163 = vmatpush1.bf16.msra.mxu0 0
          %1164 = vmatprep.subr.bf16.mxu0 0
          %1165 = vmatpush1.bf16.msra.mxu0 0
          %1166 = vmatprep.subr.bf16.mxu0 0
          %1167 = vmatpush1.bf16.msra.mxu0 0
          %1168 = vmatprep.subr.bf16.mxu0 0
          %1169 = vmatpush1.bf16.msra.mxu0 0
          %1170 = vmatprep.subr.bf16.mxu0 0
          %1171 = vmatpush1.bf16.msra.mxu0 0
          %1172 = vmatprep.subr.bf16.mxu0 0
          %1173 = vmatpush1.bf16.msra.mxu0 0
          %1174 = vmatprep.subr.bf16.mxu0 0
          %1175 = vmatpush1.bf16.msra.mxu0 0
          %1176 = vmatprep.subr.bf16.mxu0 0
          %1177 = vmatpush1.bf16.msra.mxu0 0
          %1178 = vmatprep.mubr.bf16.mxu0 0
          %1179 = vmatmul.mubr.bf16.gmra.mrb[0].mxu0 %v1096
          %v1180 = vpop.f32.mrb[0].mxu0
          %v1181 = vadd.f32 0.0, %v1180
          %v1182 = vpop.f32.mrb[0].mxu0
          %v1183 = vpop.f32.mrb[0].mxu0
          %v1184 = vadd.f32 0.0, %v1183
          %v1185 = vpop.f32.mrb[0].mxu0
          %1186 = vdwg.mxu0
          %v1187 = vadd.f32 %v1067, %v1181
          %v1188 = vadd.f32 %v1068, %v1184
          %v1189 = vld [vmem:[%s952] sm:$0xe]
          %s1190 = scalar_lea.vmem [#allocation4], 512
          %v1191 = vld [vmem:[%s1190] sm:$0xf]
          %v1192 = vld [vmem:[%s1190 + $0x4] sm:$0xf]
          %v1193 = vld [vmem:[%s1190 + $0x8] sm:$0xf]
          %v1194 = vld [vmem:[%s1190 + $0xc] sm:$0xf]
          %v1195 = vld [vmem:[%s1190 + $0x10] sm:$0xf]
          %v1196 = vld [vmem:[%s1190 + $0x14] sm:$0xf]
          %v1197 = vld [vmem:[%s1190 + $0x18] sm:$0xf]
          %v1198 = vld [vmem:[%s1190 + $0x1c] sm:$0xf]
          %v1199 = vld [vmem:[%s1190 + $0x20] sm:$0xf]
          %v1200 = vld [vmem:[%s1190 + $0x24] sm:$0xf]
          %v1201 = vld [vmem:[%s1190 + $0x28] sm:$0xf]
          %v1202 = vld [vmem:[%s1190 + $0x2c] sm:$0xf]
          %v1203 = vld [vmem:[%s1190 + $0x30] sm:$0xf]
          %v1204 = vld [vmem:[%s1190 + $0x34] sm:$0xf]
          %v1205 = vld [vmem:[%s1190 + $0x38] sm:$0xf]
          %v1206 = vld [vmem:[%s1190 + $0x3c] sm:$0xf]
          %v1208 = vunpack.c.l.b16 %v1189
          %v1209 = vpack.c.b16 %v1088, %v1208
          %v1210 = vrot.slane %v1209, 1
          %v1228 = vunpack.c.l.b16 %v1191
          %v1229 = vunpack.c.l.b16 %v1192
          %v1230 = vunpack.c.l.b16 %v1193
          %v1231 = vunpack.c.l.b16 %v1194
          %v1232 = vunpack.c.l.b16 %v1195
          %v1233 = vunpack.c.l.b16 %v1196
          %v1234 = vunpack.c.l.b16 %v1197
          %v1235 = vunpack.c.l.b16 %v1198
          %v1236 = vunpack.c.l.b16 %v1199
          %v1237 = vunpack.c.l.b16 %v1200
          %v1238 = vunpack.c.l.b16 %v1201
          %v1239 = vunpack.c.l.b16 %v1202
          %v1240 = vunpack.c.l.b16 %v1203
          %v1241 = vunpack.c.l.b16 %v1204
          %v1242 = vunpack.c.l.b16 %v1205
          %v1243 = vunpack.c.l.b16 %v1206
          %v1244 = vpack.c.b16 %v1229, %v1228
          %v1245 = vpack.c.b16 %v1231, %v1230
          %v1246 = vpack.c.b16 %v1233, %v1232
          %v1247 = vpack.c.b16 %v1235, %v1234
          %v1248 = vpack.c.b16 %v1237, %v1236
          %v1249 = vpack.c.b16 %v1239, %v1238
          %v1250 = vpack.c.b16 %v1241, %v1240
          %v1251 = vpack.c.b16 %v1243, %v1242
          %1260 = vmatprep.subr.bf16.mxu0 0
          %1261 = vmatpush1.bf16.msra.mxu0 %v1244
          %1262 = vmatprep.subr.bf16.mxu0 0
          %1263 = vmatpush1.bf16.msra.mxu0 %v1245
          %1264 = vmatprep.subr.bf16.mxu0 0
          %1265 = vmatpush1.bf16.msra.mxu0 %v1246
          %1266 = vmatprep.subr.bf16.mxu0 0
          %1267 = vmatpush1.bf16.msra.mxu0 %v1247
          %1268 = vmatprep.subr.bf16.mxu0 0
          %1269 = vmatpush1.bf16.msra.mxu0 %v1248
          %1270 = vmatprep.subr.bf16.mxu0 0
          %1271 = vmatpush1.bf16.msra.mxu0 %v1249
          %1272 = vmatprep.subr.bf16.mxu0 0
          %1273 = vmatpush1.bf16.msra.mxu0 %v1250
          %1274 = vmatprep.subr.bf16.mxu0 0
          %1275 = vmatpush1.bf16.msra.mxu0 %v1251
          %1276 = vmatprep.subr.bf16.mxu0 0
          %1277 = vmatpush1.bf16.msra.mxu0 0
          %1278 = vmatprep.subr.bf16.mxu0 0
          %1279 = vmatpush1.bf16.msra.mxu0 0
          %1280 = vmatprep.subr.bf16.mxu0 0
          %1281 = vmatpush1.bf16.msra.mxu0 0
          %1282 = vmatprep.subr.bf16.mxu0 0
          %1283 = vmatpush1.bf16.msra.mxu0 0
          %1284 = vmatprep.subr.bf16.mxu0 0
          %1285 = vmatpush1.bf16.msra.mxu0 0
          %1286 = vmatprep.subr.bf16.mxu0 0
          %1287 = vmatpush1.bf16.msra.mxu0 0
          %1288 = vmatprep.subr.bf16.mxu0 0
          %1289 = vmatpush1.bf16.msra.mxu0 0
          %1290 = vmatprep.subr.bf16.mxu0 0
          %1291 = vmatpush1.bf16.msra.mxu0 0
          %1292 = vmatprep.mubr.bf16.mxu0 0
          %1293 = vmatmul.mubr.bf16.gmra.mrb[0].mxu0 %v1210
          %v1294 = vpop.f32.mrb[0].mxu0
          %v1295 = vadd.f32 0.0, %v1294
          %v1296 = vpop.f32.mrb[0].mxu0
          %v1297 = vpop.f32.mrb[0].mxu0
          %v1298 = vadd.f32 0.0, %v1297
          %v1299 = vpop.f32.mrb[0].mxu0
          %1300 = vdwg.mxu0
          %v1301 = vadd.f32 %v1187, %v1295
          %v1302 = vadd.f32 %v1188, %v1298
          %v1303 = vld [vmem:[%s3] sm:$0x1]
          %v1305 = vlaneseq
          %v1306 = vshrl.u32 %v1305, 7
          %v1307 = vsub.s32 0, %v1306
          %v1308 = vrot.slane %v1303, %v1307
          %v1310 = vadd.f32 %v1301, %v1308
          %v1311 = vadd.f32 %v1302, %v1308
          %v1312 = vmax.f32 %v1310, 0.0
          %v1313 = vmax.f32 %v1311, 0.0
          %s1314 = smul.u32 %s595, 16
          %s1315 = scalar_lea.vmem [#allocation2], %s1314
          %1316 = vst [vmem:[%s1315 + $0x1] sm:$0xff] %v1312
          %1317 = vst [vmem:[%s1315 + $0x9] sm:$0x3f] %v1313
          %1318 = vst [vmem:[%s1315 - $0x1] sm:$0x2] %v1312
          %1319 = vst [vmem:[%s1315 + $0xb] sm:$0x10] %v1313
        $region49: #{_lambda_.4} parent=39 // loop_footer
          %s246 = sadd.s32 1, %s242
        $region50: #{_lambda_.4} parent=39 // loop_footer_branch
          %241 = sbr.rel target = $region46
        $region51: #{_lambda_.4} parent=39 // loop_exit
          _
        %s1320 = scalar_lea.vmem [#allocation2], 32
        %v1321 = vld [vmem:[%s1320] sm:$0xff]
        %v1322 = vld [vmem:[%s1320 + $0x8] sm:$0xff]
        %1323 = vst [vmem:[#allocation2] sm:$0xff] %v1321
        %1324 = vst [vmem:[#allocation2 + $0x8] sm:$0xff] %v1322
        %s1325 = scalar_lea.vmem [#allocation2], 208
        %v1326 = vld [vmem:[%s1325] sm:$0xff]
        %v1327 = vld [vmem:[%s1325 + $0x8] sm:$0xff]
        %s1328 = scalar_lea.vmem [#allocation2], 240
        %1329 = vst [vmem:[%s1328] sm:$0xff] %v1326
        %1330 = vst [vmem:[%s1328 + $0x8] sm:$0xff] %v1327
        %v1331 = vld [vmem:[#allocation2] sm:$0xff]
        %v1332 = vld [vmem:[#allocation2 + $0x8] sm:$0xff]
        %v1333 = vld [vmem:[#allocation2 + $0x10] sm:$0xff]
        %v1334 = vld [vmem:[#allocation2 + $0x18] sm:$0xff]
        %v1335 = vld [vmem:[#allocation2 + $0x20] sm:$0xff]
        %v1336 = vld [vmem:[#allocation2 + $0x28] sm:$0xff]
        %v1337 = vld [vmem:[#allocation2 + $0x30] sm:$0xff]
        %v1338 = vld [vmem:[#allocation2 + $0x38] sm:$0xff]
        %v1339 = vld [vmem:[#allocation2 + $0x40] sm:$0xff]
        %v1340 = vld [vmem:[#allocation2 + $0x48] sm:$0xff]
        %v1341 = vld [vmem:[#allocation2 + $0x50] sm:$0xff]
        %v1342 = vld [vmem:[#allocation2 + $0x58] sm:$0xff]
        %v1343 = vld [vmem:[#allocation2 + $0x60] sm:$0xff]
        %v1344 = vld [vmem:[#allocation2 + $0x68] sm:$0xff]
        %v1345 = vld [vmem:[#allocation2 + $0x70] sm:$0xff]
        %v1346 = vld [vmem:[#allocation2 + $0x78] sm:$0xff]
        %v1347 = vld [vmem:[#allocation2 + $0x80] sm:$0xff]
        %v1348 = vld [vmem:[#allocation2 + $0x88] sm:$0xff]
        %v1349 = vld [vmem:[#allocation2 + $0x90] sm:$0xff]
        %v1350 = vld [vmem:[#allocation2 + $0x98] sm:$0xff]
        %v1351 = vld [vmem:[#allocation2 + $0xa0] sm:$0xff]
        %v1352 = vld [vmem:[#allocation2 + $0xa8] sm:$0xff]
        %v1353 = vld [vmem:[#allocation2 + $0xb0] sm:$0xff]
        %v1354 = vld [vmem:[#allocation2 + $0xb8] sm:$0xff]
        %v1355 = vld [vmem:[#allocation2 + $0xc0] sm:$0xff]
        %v1356 = vld [vmem:[#allocation2 + $0xc8] sm:$0xff]
        %v1357 = vld [vmem:[#allocation2 + $0xd0] sm:$0xff]
        %v1358 = vld [vmem:[#allocation2 + $0xd8] sm:$0xff]
        %v1359 = vld [vmem:[#allocation2 + $0xe0] sm:$0xff]
        %v1360 = vld [vmem:[#allocation2 + $0xe8] sm:$0xff]
        %v1361 = vld [vmem:[#allocation2 + $0xf0] sm:$0xff]
        %v1362 = vld [vmem:[#allocation2 + $0xf8] sm:$0xff]
        %v1363 = vpack.c.bf16 %v1332, %v1331
        %v1364 = vpack.c.bf16 %v1334, %v1333
        %v1365 = vpack.c.bf16 %v1336, %v1335
        %v1366 = vpack.c.bf16 %v1338, %v1337
        %v1367 = vpack.c.bf16 %v1340, %v1339
        %v1368 = vpack.c.bf16 %v1342, %v1341
        %v1369 = vpack.c.bf16 %v1344, %v1343
        %v1370 = vpack.c.bf16 %v1346, %v1345
        %v1371 = vpack.c.bf16 %v1348, %v1347
        %v1372 = vpack.c.bf16 %v1350, %v1349
        %v1373 = vpack.c.bf16 %v1352, %v1351
        %v1374 = vpack.c.bf16 %v1354, %v1353
        %v1375 = vpack.c.bf16 %v1356, %v1355
        %v1376 = vpack.c.bf16 %v1358, %v1357
        %v1377 = vpack.c.bf16 %v1360, %v1359
        %v1378 = vpack.c.bf16 %v1362, %v1361
        %1379 = vst [vmem:[#allocation3] sm:$0xff] %v1363
        %1380 = vst [vmem:[#allocation3 + $0x8] sm:$0xff] %v1364
        %1381 = vst [vmem:[#allocation3 + $0x10] sm:$0xff] %v1365
        %1382 = vst [vmem:[#allocation3 + $0x18] sm:$0xff] %v1366
        %1383 = vst [vmem:[#allocation3 + $0x20] sm:$0xff] %v1367
        %1384 = vst [vmem:[#allocation3 + $0x28] sm:$0xff] %v1368
        %1385 = vst [vmem:[#allocation3 + $0x30] sm:$0xff] %v1369
        %1386 = vst [vmem:[#allocation3 + $0x38] sm:$0xff] %v1370
        %1387 = vst [vmem:[#allocation3 + $0x40] sm:$0xff] %v1371
        %1388 = vst [vmem:[#allocation3 + $0x48] sm:$0xff] %v1372
        %1389 = vst [vmem:[#allocation3 + $0x50] sm:$0xff] %v1373
        %1390 = vst [vmem:[#allocation3 + $0x58] sm:$0xff] %v1374
        %1391 = vst [vmem:[#allocation3 + $0x60] sm:$0xff] %v1375
        %1392 = vst [vmem:[#allocation3 + $0x68] sm:$0xff] %v1376
        %1393 = vst [vmem:[#allocation3 + $0x70] sm:$0xff] %v1377
        %1394 = vst [vmem:[#allocation3 + $0x78] sm:$0xff] %v1378
        loop: start=0, step=1, limit=14
        $region52: #{_lambda_.4} parent=39 // loop_pre_header
          _
        $region53: #{_lambda_.4} parent=39 // loop_header
          %s1396 = sphi 0, %s1400
          %p1397 = scmp.ge.s32.totalorder %s1396, 14
        $region54: #{_lambda_.4} parent=39 // loop_header_branch
          %1399 = sbr.rel (%p1397) target = $region58
        $region55: #{_lambda_.4} parent=39 // loop_body
          %s1401 = smul.addr %s1396, 8
          %s1402 = scalar_lea.vmem [#allocation3], %s1401
          %v1403 = vld [vmem:[%s1402] sm:$0x7f]
          %v1404 = vld [vmem:[%s2] sm:$0xf]
          %v1405 = vld [vmem:[%s2 + $0x4] sm:$0xf]
          %v1406 = vld [vmem:[%s2 + $0x8] sm:$0xf]
          %v1407 = vld [vmem:[%s2 + $0xc] sm:$0xf]
          %v1408 = vld [vmem:[%s2 + $0x10] sm:$0xf]
          %v1409 = vld [vmem:[%s2 + $0x14] sm:$0xf]
          %v1410 = vld [vmem:[%s2 + $0x18] sm:$0xf]
          %v1411 = vld [vmem:[%s2 + $0x1c] sm:$0xf]
          %v1412 = vld [vmem:[%s2 + $0x20] sm:$0xf]
          %v1413 = vld [vmem:[%s2 + $0x24] sm:$0xf]
          %v1414 = vld [vmem:[%s2 + $0x28] sm:$0xf]
          %v1415 = vld [vmem:[%s2 + $0x2c] sm:$0xf]
          %v1416 = vld [vmem:[%s2 + $0x30] sm:$0xf]
          %v1417 = vld [vmem:[%s2 + $0x34] sm:$0xf]
          %v1418 = vld [vmem:[%s2 + $0x38] sm:$0xf]
          %v1419 = vld [vmem:[%s2 + $0x3c] sm:$0xf]
          %v1420 = vld [vmem:[%s1402] sm:$0xff]
          %s1421 = scalar_lea.vmem %s2, 64
          %v1422 = vld [vmem:[%s1421] sm:$0xf]
          %v1423 = vld [vmem:[%s1421 + $0x4] sm:$0xf]
          %v1424 = vld [vmem:[%s1421 + $0x8] sm:$0xf]
          %v1425 = vld [vmem:[%s1421 + $0xc] sm:$0xf]
          %v1426 = vld [vmem:[%s1421 + $0x10] sm:$0xf]
          %v1427 = vld [vmem:[%s1421 + $0x14] sm:$0xf]
          %v1428 = vld [vmem:[%s1421 + $0x18] sm:$0xf]
          %v1429 = vld [vmem:[%s1421 + $0x1c] sm:$0xf]
          %v1430 = vld [vmem:[%s1421 + $0x20] sm:$0xf]
          %v1431 = vld [vmem:[%s1421 + $0x24] sm:$0xf]
          %v1432 = vld [vmem:[%s1421 + $0x28] sm:$0xf]
          %v1433 = vld [vmem:[%s1421 + $0x2c] sm:$0xf]
          %v1434 = vld [vmem:[%s1421 + $0x30] sm:$0xf]
          %v1435 = vld [vmem:[%s1421 + $0x34] sm:$0xf]
          %v1436 = vld [vmem:[%s1421 + $0x38] sm:$0xf]
          %v1437 = vld [vmem:[%s1421 + $0x3c] sm:$0xf]
          %v1439 = vshrl.u32 %v1420, 16
          %v1441 = vshll.u32 %v1420, 16
          %v1443 = vrot.slane %v1441, 1
          %v1444 = vor.u32 %v1439, %v1443
          %v1462 = vunpack.c.l.b16 %v1422
          %v1463 = vunpack.c.l.b16 %v1423
          %v1464 = vunpack.c.l.b16 %v1424
          %v1465 = vunpack.c.l.b16 %v1425
          %v1466 = vunpack.c.l.b16 %v1426
          %v1467 = vunpack.c.l.b16 %v1427
          %v1468 = vunpack.c.l.b16 %v1428
          %v1469 = vunpack.c.l.b16 %v1429
          %v1470 = vunpack.c.l.b16 %v1430
          %v1471 = vunpack.c.l.b16 %v1431
          %v1472 = vunpack.c.l.b16 %v1432
          %v1473 = vunpack.c.l.b16 %v1433
          %v1474 = vunpack.c.l.b16 %v1434
          %v1475 = vunpack.c.l.b16 %v1435
          %v1476 = vunpack.c.l.b16 %v1436
          %v1477 = vunpack.c.l.b16 %v1437
          %v1478 = vpack.c.b16 %v1463, %v1462
          %v1479 = vpack.c.b16 %v1465, %v1464
          %v1480 = vpack.c.b16 %v1467, %v1466
          %v1481 = vpack.c.b16 %v1469, %v1468
          %v1482 = vpack.c.b16 %v1471, %v1470
          %v1483 = vpack.c.b16 %v1473, %v1472
          %v1484 = vpack.c.b16 %v1475, %v1474
          %v1485 = vpack.c.b16 %v1477, %v1476
          %1494 = vmatprep.subr.bf16.mxu0 0
          %1495 = vmatpush1.bf16.msra.mxu0 %v1478
          %1496 = vmatprep.subr.bf16.mxu0 0
          %1497 = vmatpush1.bf16.msra.mxu0 %v1479
          %1498 = vmatprep.subr.bf16.mxu0 0
          %1499 = vmatpush1.bf16.msra.mxu0 %v1480
          %1500 = vmatprep.subr.bf16.mxu0 0
          %1501 = vmatpush1.bf16.msra.mxu0 %v1481
          %1502 = vmatprep.subr.bf16.mxu0 0
          %1503 = vmatpush1.bf16.msra.mxu0 %v1482
          %1504 = vmatprep.subr.bf16.mxu0 0
          %1505 = vmatpush1.bf16.msra.mxu0 %v1483
          %1506 = vmatprep.subr.bf16.mxu0 0
          %1507 = vmatpush1.bf16.msra.mxu0 %v1484
          %1508 = vmatprep.subr.bf16.mxu0 0
          %1509 = vmatpush1.bf16.msra.mxu0 %v1485
          %1510 = vmatprep.subr.bf16.mxu0 0
          %1511 = vmatpush1.bf16.msra.mxu0 0
          %1512 = vmatprep.subr.bf16.mxu0 0
          %1513 = vmatpush1.bf16.msra.mxu0 0
          %1514 = vmatprep.subr.bf16.mxu0 0
          %1515 = vmatpush1.bf16.msra.mxu0 0
          %1516 = vmatprep.subr.bf16.mxu0 0
          %1517 = vmatpush1.bf16.msra.mxu0 0
          %1518 = vmatprep.subr.bf16.mxu0 0
          %1519 = vmatpush1.bf16.msra.mxu0 0
          %1520 = vmatprep.subr.bf16.mxu0 0
          %1521 = vmatpush1.bf16.msra.mxu0 0
          %1522 = vmatprep.subr.bf16.mxu0 0
          %1523 = vmatpush1.bf16.msra.mxu0 0
          %1524 = vmatprep.subr.bf16.mxu0 0
          %1525 = vmatpush1.bf16.msra.mxu0 0
          %1526 = vmatprep.mubr.bf16.mxu0 0
          %1527 = vmatmul.mubr.bf16.gmra.mrb[0].mxu0 %v1444
          %v1528 = vpop.f32.mrb[0].mxu0
          %v1529 = vadd.f32 0.0, %v1528
          %v1530 = vpop.f32.mrb[0].mxu0
          %v1531 = vpop.f32.mrb[0].mxu0
          %v1532 = vadd.f32 0.0, %v1531
          %v1533 = vpop.f32.mrb[0].mxu0
          %1534 = vdwg.mxu0
          %v1551 = vunpack.c.l.b16 %v1404
          %v1552 = vunpack.c.l.b16 %v1405
          %v1553 = vunpack.c.l.b16 %v1406
          %v1554 = vunpack.c.l.b16 %v1407
          %v1555 = vunpack.c.l.b16 %v1408
          %v1556 = vunpack.c.l.b16 %v1409
          %v1557 = vunpack.c.l.b16 %v1410
          %v1558 = vunpack.c.l.b16 %v1411
          %v1559 = vunpack.c.l.b16 %v1412
          %v1560 = vunpack.c.l.b16 %v1413
          %v1561 = vunpack.c.l.b16 %v1414
          %v1562 = vunpack.c.l.b16 %v1415
          %v1563 = vunpack.c.l.b16 %v1416
          %v1564 = vunpack.c.l.b16 %v1417
          %v1565 = vunpack.c.l.b16 %v1418
          %v1566 = vunpack.c.l.b16 %v1419
          %v1567 = vpack.c.b16 %v1552, %v1551
          %v1568 = vpack.c.b16 %v1554, %v1553
          %v1569 = vpack.c.b16 %v1556, %v1555
          %v1570 = vpack.c.b16 %v1558, %v1557
          %v1571 = vpack.c.b16 %v1560, %v1559
          %v1572 = vpack.c.b16 %v1562, %v1561
          %v1573 = vpack.c.b16 %v1564, %v1563
          %v1574 = vpack.c.b16 %v1566, %v1565
          %1583 = vmatprep.subr.bf16.mxu0 0
          %1584 = vmatpush1.bf16.msra.mxu0 %v1567
          %1585 = vmatprep.subr.bf16.mxu0 0
          %1586 = vmatpush1.bf16.msra.mxu0 %v1568
          %1587 = vmatprep.subr.bf16.mxu0 0
          %1588 = vmatpush1.bf16.msra.mxu0 %v1569
          %1589 = vmatprep.subr.bf16.mxu0 0
          %1590 = vmatpush1.bf16.msra.mxu0 %v1570
          %1591 = vmatprep.subr.bf16.mxu0 0
          %1592 = vmatpush1.bf16.msra.mxu0 %v1571
          %1593 = vmatprep.subr.bf16.mxu0 0
          %1594 = vmatpush1.bf16.msra.mxu0 %v1572
          %1595 = vmatprep.subr.bf16.mxu0 0
          %1596 = vmatpush1.bf16.msra.mxu0 %v1573
          %1597 = vmatprep.subr.bf16.mxu0 0
          %1598 = vmatpush1.bf16.msra.mxu0 %v1574
          %1599 = vmatprep.subr.bf16.mxu0 0
          %1600 = vmatpush1.bf16.msra.mxu0 0
          %1601 = vmatprep.subr.bf16.mxu0 0
          %1602 = vmatpush1.bf16.msra.mxu0 0
          %1603 = vmatprep.subr.bf16.mxu0 0
          %1604 = vmatpush1.bf16.msra.mxu0 0
          %1605 = vmatprep.subr.bf16.mxu0 0
          %1606 = vmatpush1.bf16.msra.mxu0 0
          %1607 = vmatprep.subr.bf16.mxu0 0
          %1608 = vmatpush1.bf16.msra.mxu0 0
          %1609 = vmatprep.subr.bf16.mxu0 0
          %1610 = vmatpush1.bf16.msra.mxu0 0
          %1611 = vmatprep.subr.bf16.mxu0 0
          %1612 = vmatpush1.bf16.msra.mxu0 0
          %1613 = vmatprep.subr.bf16.mxu0 0
          %1614 = vmatpush1.bf16.msra.mxu0 0
          %1615 = vmatprep.mubr.bf16.mxu0 0
          %1616 = vmatmul.mubr.bf16.gmra.mrb[0].mxu0 %v1403
          %v1617 = vpop.f32.mrb[0].mxu0
          %v1618 = vadd.f32 %v1529, %v1617
          %v1619 = vpop.f32.mrb[0].mxu0
          %v1620 = vpop.f32.mrb[0].mxu0
          %v1621 = vadd.f32 %v1532, %v1620
          %v1622 = vpop.f32.mrb[0].mxu0
          %1623 = vdwg.mxu0
          %v1624 = vld [vmem:[%s1402] sm:$0xfe]
          %s1625 = scalar_lea.vmem %s2, 128
          %v1626 = vld [vmem:[%s1625] sm:$0xf]
          %v1627 = vld [vmem:[%s1625 + $0x4] sm:$0xf]
          %v1628 = vld [vmem:[%s1625 + $0x8] sm:$0xf]
          %v1629 = vld [vmem:[%s1625 + $0xc] sm:$0xf]
          %v1630 = vld [vmem:[%s1625 + $0x10] sm:$0xf]
          %v1631 = vld [vmem:[%s1625 + $0x14] sm:$0xf]
          %v1632 = vld [vmem:[%s1625 + $0x18] sm:$0xf]
          %v1633 = vld [vmem:[%s1625 + $0x1c] sm:$0xf]
          %v1634 = vld [vmem:[%s1625 + $0x20] sm:$0xf]
          %v1635 = vld [vmem:[%s1625 + $0x24] sm:$0xf]
          %v1636 = vld [vmem:[%s1625 + $0x28] sm:$0xf]
          %v1637 = vld [vmem:[%s1625 + $0x2c] sm:$0xf]
          %v1638 = vld [vmem:[%s1625 + $0x30] sm:$0xf]
          %v1639 = vld [vmem:[%s1625 + $0x34] sm:$0xf]
          %v1640 = vld [vmem:[%s1625 + $0x38] sm:$0xf]
          %v1641 = vld [vmem:[%s1625 + $0x3c] sm:$0xf]
          %v1643 = vrot.slane %v1624, 1
          %v1661 = vunpack.c.l.b16 %v1626
          %v1662 = vunpack.c.l.b16 %v1627
          %v1663 = vunpack.c.l.b16 %v1628
          %v1664 = vunpack.c.l.b16 %v1629
          %v1665 = vunpack.c.l.b16 %v1630
          %v1666 = vunpack.c.l.b16 %v1631
          %v1667 = vunpack.c.l.b16 %v1632
          %v1668 = vunpack.c.l.b16 %v1633
          %v1669 = vunpack.c.l.b16 %v1634
          %v1670 = vunpack.c.l.b16 %v1635
          %v1671 = vunpack.c.l.b16 %v1636
          %v1672 = vunpack.c.l.b16 %v1637
          %v1673 = vunpack.c.l.b16 %v1638
          %v1674 = vunpack.c.l.b16 %v1639
          %v1675 = vunpack.c.l.b16 %v1640
          %v1676 = vunpack.c.l.b16 %v1641
          %v1677 = vpack.c.b16 %v1662, %v1661
          %v1678 = vpack.c.b16 %v1664, %v1663
          %v1679 = vpack.c.b16 %v1666, %v1665
          %v1680 = vpack.c.b16 %v1668, %v1667
          %v1681 = vpack.c.b16 %v1670, %v1669
          %v1682 = vpack.c.b16 %v1672, %v1671
          %v1683 = vpack.c.b16 %v1674, %v1673
          %v1684 = vpack.c.b16 %v1676, %v1675
          %1693 = vmatprep.subr.bf16.mxu0 0
          %1694 = vmatpush1.bf16.msra.mxu0 %v1677
          %1695 = vmatprep.subr.bf16.mxu0 0
          %1696 = vmatpush1.bf16.msra.mxu0 %v1678
          %1697 = vmatprep.subr.bf16.mxu0 0
          %1698 = vmatpush1.bf16.msra.mxu0 %v1679
          %1699 = vmatprep.subr.bf16.mxu0 0
          %1700 = vmatpush1.bf16.msra.mxu0 %v1680
          %1701 = vmatprep.subr.bf16.mxu0 0
          %1702 = vmatpush1.bf16.msra.mxu0 %v1681
          %1703 = vmatprep.subr.bf16.mxu0 0
          %1704 = vmatpush1.bf16.msra.mxu0 %v1682
          %1705 = vmatprep.subr.bf16.mxu0 0
          %1706 = vmatpush1.bf16.msra.mxu0 %v1683
          %1707 = vmatprep.subr.bf16.mxu0 0
          %1708 = vmatpush1.bf16.msra.mxu0 %v1684
          %1709 = vmatprep.subr.bf16.mxu0 0
          %1710 = vmatpush1.bf16.msra.mxu0 0
          %1711 = vmatprep.subr.bf16.mxu0 0
          %1712 = vmatpush1.bf16.msra.mxu0 0
          %1713 = vmatprep.subr.bf16.mxu0 0
          %1714 = vmatpush1.bf16.msra.mxu0 0
          %1715 = vmatprep.subr.bf16.mxu0 0
          %1716 = vmatpush1.bf16.msra.mxu0 0
          %1717 = vmatprep.subr.bf16.mxu0 0
          %1718 = vmatpush1.bf16.msra.mxu0 0
          %1719 = vmatprep.subr.bf16.mxu0 0
          %1720 = vmatpush1.bf16.msra.mxu0 0
          %1721 = vmatprep.subr.bf16.mxu0 0
          %1722 = vmatpush1.bf16.msra.mxu0 0
          %1723 = vmatprep.subr.bf16.mxu0 0
          %1724 = vmatpush1.bf16.msra.mxu0 0
          %1725 = vmatprep.mubr.bf16.mxu0 0
          %1726 = vmatmul.mubr.bf16.gmra.mrb[0].mxu0 %v1643
          %v1727 = vpop.f32.mrb[0].mxu0
          %v1728 = vadd.f32 0.0, %v1727
          %v1729 = vpop.f32.mrb[0].mxu0
          %v1730 = vpop.f32.mrb[0].mxu0
          %v1731 = vadd.f32 0.0, %v1730
          %v1732 = vpop.f32.mrb[0].mxu0
          %1733 = vdwg.mxu0
          %v1734 = vadd.f32 %v1618, %v1728
          %v1735 = vadd.f32 %v1621, %v1731
          %s1736 = sadd.s32 %s1396, 1
          %s1737 = smul.addr %s1736, 8
          %s1738 = scalar_lea.vmem [#allocation3], %s1737
          %v1739 = vld [vmem:[%s1738] sm:$0x7f]
          %s1740 = scalar_lea.vmem %s2, 192
          %v1741 = vld [vmem:[%s1740] sm:$0xf]
          %v1742 = vld [vmem:[%s1740 + $0x4] sm:$0xf]
          %v1743 = vld [vmem:[%s1740 + $0x8] sm:$0xf]
          %v1744 = vld [vmem:[%s1740 + $0xc] sm:$0xf]
          %v1745 = vld [vmem:[%s1740 + $0x10] sm:$0xf]
          %v1746 = vld [vmem:[%s1740 + $0x14] sm:$0xf]
          %v1747 = vld [vmem:[%s1740 + $0x18] sm:$0xf]
          %v1748 = vld [vmem:[%s1740 + $0x1c] sm:$0xf]
          %v1749 = vld [vmem:[%s1740 + $0x20] sm:$0xf]
          %v1750 = vld [vmem:[%s1740 + $0x24] sm:$0xf]
          %v1751 = vld [vmem:[%s1740 + $0x28] sm:$0xf]
          %v1752 = vld [vmem:[%s1740 + $0x2c] sm:$0xf]
          %v1753 = vld [vmem:[%s1740 + $0x30] sm:$0xf]
          %v1754 = vld [vmem:[%s1740 + $0x34] sm:$0xf]
          %v1755 = vld [vmem:[%s1740 + $0x38] sm:$0xf]
          %v1756 = vld [vmem:[%s1740 + $0x3c] sm:$0xf]
          %v1773 = vunpack.c.l.b16 %v1741
          %v1774 = vunpack.c.l.b16 %v1742
          %v1775 = vunpack.c.l.b16 %v1743
          %v1776 = vunpack.c.l.b16 %v1744
          %v1777 = vunpack.c.l.b16 %v1745
          %v1778 = vunpack.c.l.b16 %v1746
          %v1779 = vunpack.c.l.b16 %v1747
          %v1780 = vunpack.c.l.b16 %v1748
          %v1781 = vunpack.c.l.b16 %v1749
          %v1782 = vunpack.c.l.b16 %v1750
          %v1783 = vunpack.c.l.b16 %v1751
          %v1784 = vunpack.c.l.b16 %v1752
          %v1785 = vunpack.c.l.b16 %v1753
          %v1786 = vunpack.c.l.b16 %v1754
          %v1787 = vunpack.c.l.b16 %v1755
          %v1788 = vunpack.c.l.b16 %v1756
          %v1789 = vpack.c.b16 %v1774, %v1773
          %v1790 = vpack.c.b16 %v1776, %v1775
          %v1791 = vpack.c.b16 %v1778, %v1777
          %v1792 = vpack.c.b16 %v1780, %v1779
          %v1793 = vpack.c.b16 %v1782, %v1781
          %v1794 = vpack.c.b16 %v1784, %v1783
          %v1795 = vpack.c.b16 %v1786, %v1785
          %v1796 = vpack.c.b16 %v1788, %v1787
          %1805 = vmatprep.subr.bf16.mxu0 0
          %1806 = vmatpush1.bf16.msra.mxu0 %v1789
          %1807 = vmatprep.subr.bf16.mxu0 0
          %1808 = vmatpush1.bf16.msra.mxu0 %v1790
          %1809 = vmatprep.subr.bf16.mxu0 0
          %1810 = vmatpush1.bf16.msra.mxu0 %v1791
          %1811 = vmatprep.subr.bf16.mxu0 0
          %1812 = vmatpush1.bf16.msra.mxu0 %v1792
          %1813 = vmatprep.subr.bf16.mxu0 0
          %1814 = vmatpush1.bf16.msra.mxu0 %v1793
          %1815 = vmatprep.subr.bf16.mxu0 0
          %1816 = vmatpush1.bf16.msra.mxu0 %v1794
          %1817 = vmatprep.subr.bf16.mxu0 0
          %1818 = vmatpush1.bf16.msra.mxu0 %v1795
          %1819 = vmatprep.subr.bf16.mxu0 0
          %1820 = vmatpush1.bf16.msra.mxu0 %v1796
          %1821 = vmatprep.subr.bf16.mxu0 0
          %1822 = vmatpush1.bf16.msra.mxu0 0
          %1823 = vmatprep.subr.bf16.mxu0 0
          %1824 = vmatpush1.bf16.msra.mxu0 0
          %1825 = vmatprep.subr.bf16.mxu0 0
          %1826 = vmatpush1.bf16.msra.mxu0 0
          %1827 = vmatprep.subr.bf16.mxu0 0
          %1828 = vmatpush1.bf16.msra.mxu0 0
          %1829 = vmatprep.subr.bf16.mxu0 0
          %1830 = vmatpush1.bf16.msra.mxu0 0
          %1831 = vmatprep.subr.bf16.mxu0 0
          %1832 = vmatpush1.bf16.msra.mxu0 0
          %1833 = vmatprep.subr.bf16.mxu0 0
          %1834 = vmatpush1.bf16.msra.mxu0 0
          %1835 = vmatprep.subr.bf16.mxu0 0
          %1836 = vmatpush1.bf16.msra.mxu0 0
          %1837 = vmatprep.mubr.bf16.mxu0 0
          %1838 = vmatmul.mubr.bf16.gmra.mrb[0].mxu0 %v1739
          %v1839 = vpop.f32.mrb[0].mxu0
          %v1840 = vadd.f32 0.0, %v1839
          %v1841 = vpop.f32.mrb[0].mxu0
          %v1842 = vpop.f32.mrb[0].mxu0
          %v1843 = vadd.f32 0.0, %v1842
          %v1844 = vpop.f32.mrb[0].mxu0
          %1845 = vdwg.mxu0
          %v1846 = vadd.f32 %v1734, %v1840
          %v1847 = vadd.f32 %v1735, %v1843
          %v1848 = vld [vmem:[%s1738] sm:$0xff]
          %s1849 = scalar_lea.vmem %s2, 256
          %v1850 = vld [vmem:[%s1849] sm:$0xf]
          %v1851 = vld [vmem:[%s1849 + $0x4] sm:$0xf]
          %v1852 = vld [vmem:[%s1849 + $0x8] sm:$0xf]
          %v1853 = vld [vmem:[%s1849 + $0xc] sm:$0xf]
          %v1854 = vld [vmem:[%s1849 + $0x10] sm:$0xf]
          %v1855 = vld [vmem:[%s1849 + $0x14] sm:$0xf]
          %v1856 = vld [vmem:[%s1849 + $0x18] sm:$0xf]
          %v1857 = vld [vmem:[%s1849 + $0x1c] sm:$0xf]
          %v1858 = vld [vmem:[%s1849 + $0x20] sm:$0xf]
          %v1859 = vld [vmem:[%s1849 + $0x24] sm:$0xf]
          %v1860 = vld [vmem:[%s1849 + $0x28] sm:$0xf]
          %v1861 = vld [vmem:[%s1849 + $0x2c] sm:$0xf]
          %v1862 = vld [vmem:[%s1849 + $0x30] sm:$0xf]
          %v1863 = vld [vmem:[%s1849 + $0x34] sm:$0xf]
          %v1864 = vld [vmem:[%s1849 + $0x38] sm:$0xf]
          %v1865 = vld [vmem:[%s1849 + $0x3c] sm:$0xf]
          %v1867 = vshrl.u32 %v1848, 16
          %v1869 = vshll.u32 %v1848, 16
          %v1871 = vrot.slane %v1869, 1
          %v1872 = vor.u32 %v1867, %v1871
          %v1890 = vunpack.c.l.b16 %v1850
          %v1891 = vunpack.c.l.b16 %v1851
          %v1892 = vunpack.c.l.b16 %v1852
          %v1893 = vunpack.c.l.b16 %v1853
          %v1894 = vunpack.c.l.b16 %v1854
          %v1895 = vunpack.c.l.b16 %v1855
          %v1896 = vunpack.c.l.b16 %v1856
          %v1897 = vunpack.c.l.b16 %v1857
          %v1898 = vunpack.c.l.b16 %v1858
          %v1899 = vunpack.c.l.b16 %v1859
          %v1900 = vunpack.c.l.b16 %v1860
          %v1901 = vunpack.c.l.b16 %v1861
          %v1902 = vunpack.c.l.b16 %v1862
          %v1903 = vunpack.c.l.b16 %v1863
          %v1904 = vunpack.c.l.b16 %v1864
          %v1905 = vunpack.c.l.b16 %v1865
          %v1906 = vpack.c.b16 %v1891, %v1890
          %v1907 = vpack.c.b16 %v1893, %v1892
          %v1908 = vpack.c.b16 %v1895, %v1894
          %v1909 = vpack.c.b16 %v1897, %v1896
          %v1910 = vpack.c.b16 %v1899, %v1898
          %v1911 = vpack.c.b16 %v1901, %v1900
          %v1912 = vpack.c.b16 %v1903, %v1902
          %v1913 = vpack.c.b16 %v1905, %v1904
          %1922 = vmatprep.subr.bf16.mxu0 0
          %1923 = vmatpush1.bf16.msra.mxu0 %v1906
          %1924 = vmatprep.subr.bf16.mxu0 0
          %1925 = vmatpush1.bf16.msra.mxu0 %v1907
          %1926 = vmatprep.subr.bf16.mxu0 0
          %1927 = vmatpush1.bf16.msra.mxu0 %v1908
          %1928 = vmatprep.subr.bf16.mxu0 0
          %1929 = vmatpush1.bf16.msra.mxu0 %v1909
          %1930 = vmatprep.subr.bf16.mxu0 0
          %1931 = vmatpush1.bf16.msra.mxu0 %v1910
          %1932 = vmatprep.subr.bf16.mxu0 0
          %1933 = vmatpush1.bf16.msra.mxu0 %v1911
          %1934 = vmatprep.subr.bf16.mxu0 0
          %1935 = vmatpush1.bf16.msra.mxu0 %v1912
          %1936 = vmatprep.subr.bf16.mxu0 0
          %1937 = vmatpush1.bf16.msra.mxu0 %v1913
          %1938 = vmatprep.subr.bf16.mxu0 0
          %1939 = vmatpush1.bf16.msra.mxu0 0
          %1940 = vmatprep.subr.bf16.mxu0 0
          %1941 = vmatpush1.bf16.msra.mxu0 0
          %1942 = vmatprep.subr.bf16.mxu0 0
          %1943 = vmatpush1.bf16.msra.mxu0 0
          %1944 = vmatprep.subr.bf16.mxu0 0
          %1945 = vmatpush1.bf16.msra.mxu0 0
          %1946 = vmatprep.subr.bf16.mxu0 0
          %1947 = vmatpush1.bf16.msra.mxu0 0
          %1948 = vmatprep.subr.bf16.mxu0 0
          %1949 = vmatpush1.bf16.msra.mxu0 0
          %1950 = vmatprep.subr.bf16.mxu0 0
          %1951 = vmatpush1.bf16.msra.mxu0 0
          %1952 = vmatprep.subr.bf16.mxu0 0
          %1953 = vmatpush1.bf16.msra.mxu0 0
          %1954 = vmatprep.mubr.bf16.mxu0 0
          %1955 = vmatmul.mubr.bf16.gmra.mrb[0].mxu0 %v1872
          %v1956 = vpop.f32.mrb[0].mxu0
          %v1957 = vadd.f32 0.0, %v1956
          %v1958 = vpop.f32.mrb[0].mxu0
          %v1959 = vpop.f32.mrb[0].mxu0
          %v1960 = vadd.f32 0.0, %v1959
          %v1961 = vpop.f32.mrb[0].mxu0
          %1962 = vdwg.mxu0
          %v1963 = vadd.f32 %v1846, %v1957
          %v1964 = vadd.f32 %v1847, %v1960
          %v1965 = vld [vmem:[%s1738] sm:$0xfe]
          %s1966 = scalar_lea.vmem %s2, 320
          %v1967 = vld [vmem:[%s1966] sm:$0xf]
          %v1968 = vld [vmem:[%s1966 + $0x4] sm:$0xf]
          %v1969 = vld [vmem:[%s1966 + $0x8] sm:$0xf]
          %v1970 = vld [vmem:[%s1966 + $0xc] sm:$0xf]
          %v1971 = vld [vmem:[%s1966 + $0x10] sm:$0xf]
          %v1972 = vld [vmem:[%s1966 + $0x14] sm:$0xf]
          %v1973 = vld [vmem:[%s1966 + $0x18] sm:$0xf]
          %v1974 = vld [vmem:[%s1966 + $0x1c] sm:$0xf]
          %v1975 = vld [vmem:[%s1966 + $0x20] sm:$0xf]
          %v1976 = vld [vmem:[%s1966 + $0x24] sm:$0xf]
          %v1977 = vld [vmem:[%s1966 + $0x28] sm:$0xf]
          %v1978 = vld [vmem:[%s1966 + $0x2c] sm:$0xf]
          %v1979 = vld [vmem:[%s1966 + $0x30] sm:$0xf]
          %v1980 = vld [vmem:[%s1966 + $0x34] sm:$0xf]
          %v1981 = vld [vmem:[%s1966 + $0x38] sm:$0xf]
          %v1982 = vld [vmem:[%s1966 + $0x3c] sm:$0xf]
          %v1984 = vrot.slane %v1965, 1
          %v2002 = vunpack.c.l.b16 %v1967
          %v2003 = vunpack.c.l.b16 %v1968
          %v2004 = vunpack.c.l.b16 %v1969
          %v2005 = vunpack.c.l.b16 %v1970
          %v2006 = vunpack.c.l.b16 %v1971
          %v2007 = vunpack.c.l.b16 %v1972
          %v2008 = vunpack.c.l.b16 %v1973
          %v2009 = vunpack.c.l.b16 %v1974
          %v2010 = vunpack.c.l.b16 %v1975
          %v2011 = vunpack.c.l.b16 %v1976
          %v2012 = vunpack.c.l.b16 %v1977
          %v2013 = vunpack.c.l.b16 %v1978
          %v2014 = vunpack.c.l.b16 %v1979
          %v2015 = vunpack.c.l.b16 %v1980
          %v2016 = vunpack.c.l.b16 %v1981
          %v2017 = vunpack.c.l.b16 %v1982
          %v2018 = vpack.c.b16 %v2003, %v2002
          %v2019 = vpack.c.b16 %v2005, %v2004
          %v2020 = vpack.c.b16 %v2007, %v2006
          %v2021 = vpack.c.b16 %v2009, %v2008
          %v2022 = vpack.c.b16 %v2011, %v2010
          %v2023 = vpack.c.b16 %v2013, %v2012
          %v2024 = vpack.c.b16 %v2015, %v2014
          %v2025 = vpack.c.b16 %v2017, %v2016
          %2034 = vmatprep.subr.bf16.mxu0 0
          %2035 = vmatpush1.bf16.msra.mxu0 %v2018
          %2036 = vmatprep.subr.bf16.mxu0 0
          %2037 = vmatpush1.bf16.msra.mxu0 %v2019
          %2038 = vmatprep.subr.bf16.mxu0 0
          %2039 = vmatpush1.bf16.msra.mxu0 %v2020
          %2040 = vmatprep.subr.bf16.mxu0 0
          %2041 = vmatpush1.bf16.msra.mxu0 %v2021
          %2042 = vmatprep.subr.bf16.mxu0 0
          %2043 = vmatpush1.bf16.msra.mxu0 %v2022
          %2044 = vmatprep.subr.bf16.mxu0 0
          %2045 = vmatpush1.bf16.msra.mxu0 %v2023
          %2046 = vmatprep.subr.bf16.mxu0 0
          %2047 = vmatpush1.bf16.msra.mxu0 %v2024
          %2048 = vmatprep.subr.bf16.mxu0 0
          %2049 = vmatpush1.bf16.msra.mxu0 %v2025
          %2050 = vmatprep.subr.bf16.mxu0 0
          %2051 = vmatpush1.bf16.msra.mxu0 0
          %2052 = vmatprep.subr.bf16.mxu0 0
          %2053 = vmatpush1.bf16.msra.mxu0 0
          %2054 = vmatprep.subr.bf16.mxu0 0
          %2055 = vmatpush1.bf16.msra.mxu0 0
          %2056 = vmatprep.subr.bf16.mxu0 0
          %2057 = vmatpush1.bf16.msra.mxu0 0
          %2058 = vmatprep.subr.bf16.mxu0 0
          %2059 = vmatpush1.bf16.msra.mxu0 0
          %2060 = vmatprep.subr.bf16.mxu0 0
          %2061 = vmatpush1.bf16.msra.mxu0 0
          %2062 = vmatprep.subr.bf16.mxu0 0
          %2063 = vmatpush1.bf16.msra.mxu0 0
          %2064 = vmatprep.subr.bf16.mxu0 0
          %2065 = vmatpush1.bf16.msra.mxu0 0
          %2066 = vmatprep.mubr.bf16.mxu0 0
          %2067 = vmatmul.mubr.bf16.gmra.mrb[0].mxu0 %v1984
          %v2068 = vpop.f32.mrb[0].mxu0
          %v2069 = vadd.f32 0.0, %v2068
          %v2070 = vpop.f32.mrb[0].mxu0
          %v2071 = vpop.f32.mrb[0].mxu0
          %v2072 = vadd.f32 0.0, %v2071
          %v2073 = vpop.f32.mrb[0].mxu0
          %2074 = vdwg.mxu0
          %v2075 = vadd.f32 %v1963, %v2069
          %v2076 = vadd.f32 %v1964, %v2072
          %s2077 = sadd.s32 %s1396, 2
          %s2078 = smul.addr %s2077, 8
          %s2079 = scalar_lea.vmem [#allocation3], %s2078
          %v2080 = vld [vmem:[%s2079] sm:$0x7f]
          %s2081 = scalar_lea.vmem %s2, 384
          %v2082 = vld [vmem:[%s2081] sm:$0xf]
          %v2083 = vld [vmem:[%s2081 + $0x4] sm:$0xf]
          %v2084 = vld [vmem:[%s2081 + $0x8] sm:$0xf]
          %v2085 = vld [vmem:[%s2081 + $0xc] sm:$0xf]
          %v2086 = vld [vmem:[%s2081 + $0x10] sm:$0xf]
          %v2087 = vld [vmem:[%s2081 + $0x14] sm:$0xf]
          %v2088 = vld [vmem:[%s2081 + $0x18] sm:$0xf]
          %v2089 = vld [vmem:[%s2081 + $0x1c] sm:$0xf]
          %v2090 = vld [vmem:[%s2081 + $0x20] sm:$0xf]
          %v2091 = vld [vmem:[%s2081 + $0x24] sm:$0xf]
          %v2092 = vld [vmem:[%s2081 + $0x28] sm:$0xf]
          %v2093 = vld [vmem:[%s2081 + $0x2c] sm:$0xf]
          %v2094 = vld [vmem:[%s2081 + $0x30] sm:$0xf]
          %v2095 = vld [vmem:[%s2081 + $0x34] sm:$0xf]
          %v2096 = vld [vmem:[%s2081 + $0x38] sm:$0xf]
          %v2097 = vld [vmem:[%s2081 + $0x3c] sm:$0xf]
          %v2114 = vunpack.c.l.b16 %v2082
          %v2115 = vunpack.c.l.b16 %v2083
          %v2116 = vunpack.c.l.b16 %v2084
          %v2117 = vunpack.c.l.b16 %v2085
          %v2118 = vunpack.c.l.b16 %v2086
          %v2119 = vunpack.c.l.b16 %v2087
          %v2120 = vunpack.c.l.b16 %v2088
          %v2121 = vunpack.c.l.b16 %v2089
          %v2122 = vunpack.c.l.b16 %v2090
          %v2123 = vunpack.c.l.b16 %v2091
          %v2124 = vunpack.c.l.b16 %v2092
          %v2125 = vunpack.c.l.b16 %v2093
          %v2126 = vunpack.c.l.b16 %v2094
          %v2127 = vunpack.c.l.b16 %v2095
          %v2128 = vunpack.c.l.b16 %v2096
          %v2129 = vunpack.c.l.b16 %v2097
          %v2130 = vpack.c.b16 %v2115, %v2114
          %v2131 = vpack.c.b16 %v2117, %v2116
          %v2132 = vpack.c.b16 %v2119, %v2118
          %v2133 = vpack.c.b16 %v2121, %v2120
          %v2134 = vpack.c.b16 %v2123, %v2122
          %v2135 = vpack.c.b16 %v2125, %v2124
          %v2136 = vpack.c.b16 %v2127, %v2126
          %v2137 = vpack.c.b16 %v2129, %v2128
          %2146 = vmatprep.subr.bf16.mxu0 0
          %2147 = vmatpush1.bf16.msra.mxu0 %v2130
          %2148 = vmatprep.subr.bf16.mxu0 0
          %2149 = vmatpush1.bf16.msra.mxu0 %v2131
          %2150 = vmatprep.subr.bf16.mxu0 0
          %2151 = vmatpush1.bf16.msra.mxu0 %v2132
          %2152 = vmatprep.subr.bf16.mxu0 0
          %2153 = vmatpush1.bf16.msra.mxu0 %v2133
          %2154 = vmatprep.subr.bf16.mxu0 0
          %2155 = vmatpush1.bf16.msra.mxu0 %v2134
          %2156 = vmatprep.subr.bf16.mxu0 0
          %2157 = vmatpush1.bf16.msra.mxu0 %v2135
          %2158 = vmatprep.subr.bf16.mxu0 0
          %2159 = vmatpush1.bf16.msra.mxu0 %v2136
          %2160 = vmatprep.subr.bf16.mxu0 0
          %2161 = vmatpush1.bf16.msra.mxu0 %v2137
          %2162 = vmatprep.subr.bf16.mxu0 0
          %2163 = vmatpush1.bf16.msra.mxu0 0
          %2164 = vmatprep.subr.bf16.mxu0 0
          %2165 = vmatpush1.bf16.msra.mxu0 0
          %2166 = vmatprep.subr.bf16.mxu0 0
          %2167 = vmatpush1.bf16.msra.mxu0 0
          %2168 = vmatprep.subr.bf16.mxu0 0
          %2169 = vmatpush1.bf16.msra.mxu0 0
          %2170 = vmatprep.subr.bf16.mxu0 0
          %2171 = vmatpush1.bf16.msra.mxu0 0
          %2172 = vmatprep.subr.bf16.mxu0 0
          %2173 = vmatpush1.bf16.msra.mxu0 0
          %2174 = vmatprep.subr.bf16.mxu0 0
          %2175 = vmatpush1.bf16.msra.mxu0 0
          %2176 = vmatprep.subr.bf16.mxu0 0
          %2177 = vmatpush1.bf16.msra.mxu0 0
          %2178 = vmatprep.mubr.bf16.mxu0 0
          %2179 = vmatmul.mubr.bf16.gmra.mrb[0].mxu0 %v2080
          %v2180 = vpop.f32.mrb[0].mxu0
          %v2181 = vadd.f32 0.0, %v2180
          %v2182 = vpop.f32.mrb[0].mxu0
          %v2183 = vpop.f32.mrb[0].mxu0
          %v2184 = vadd.f32 0.0, %v2183
          %v2185 = vpop.f32.mrb[0].mxu0
          %2186 = vdwg.mxu0
          %v2187 = vadd.f32 %v2075, %v2181
          %v2188 = vadd.f32 %v2076, %v2184
          %v2189 = vld [vmem:[%s2079] sm:$0xff]
          %s2190 = scalar_lea.vmem %s2, 448
          %v2191 = vld [vmem:[%s2190] sm:$0xf]
          %v2192 = vld [vmem:[%s2190 + $0x4] sm:$0xf]
          %v2193 = vld [vmem:[%s2190 + $0x8] sm:$0xf]
          %v2194 = vld [vmem:[%s2190 + $0xc] sm:$0xf]
          %v2195 = vld [vmem:[%s2190 + $0x10] sm:$0xf]
          %v2196 = vld [vmem:[%s2190 + $0x14] sm:$0xf]
          %v2197 = vld [vmem:[%s2190 + $0x18] sm:$0xf]
          %v2198 = vld [vmem:[%s2190 + $0x1c] sm:$0xf]
          %v2199 = vld [vmem:[%s2190 + $0x20] sm:$0xf]
          %v2200 = vld [vmem:[%s2190 + $0x24] sm:$0xf]
          %v2201 = vld [vmem:[%s2190 + $0x28] sm:$0xf]
          %v2202 = vld [vmem:[%s2190 + $0x2c] sm:$0xf]
          %v2203 = vld [vmem:[%s2190 + $0x30] sm:$0xf]
          %v2204 = vld [vmem:[%s2190 + $0x34] sm:$0xf]
          %v2205 = vld [vmem:[%s2190 + $0x38] sm:$0xf]
          %v2206 = vld [vmem:[%s2190 + $0x3c] sm:$0xf]
          %v2208 = vshrl.u32 %v2189, 16
          %v2210 = vshll.u32 %v2189, 16
          %v2212 = vrot.slane %v2210, 1
          %v2213 = vor.u32 %v2208, %v2212
          %v2231 = vunpack.c.l.b16 %v2191
          %v2232 = vunpack.c.l.b16 %v2192
          %v2233 = vunpack.c.l.b16 %v2193
          %v2234 = vunpack.c.l.b16 %v2194
          %v2235 = vunpack.c.l.b16 %v2195
          %v2236 = vunpack.c.l.b16 %v2196
          %v2237 = vunpack.c.l.b16 %v2197
          %v2238 = vunpack.c.l.b16 %v2198
          %v2239 = vunpack.c.l.b16 %v2199
          %v2240 = vunpack.c.l.b16 %v2200
          %v2241 = vunpack.c.l.b16 %v2201
          %v2242 = vunpack.c.l.b16 %v2202
          %v2243 = vunpack.c.l.b16 %v2203
          %v2244 = vunpack.c.l.b16 %v2204
          %v2245 = vunpack.c.l.b16 %v2205
          %v2246 = vunpack.c.l.b16 %v2206
          %v2247 = vpack.c.b16 %v2232, %v2231
          %v2248 = vpack.c.b16 %v2234, %v2233
          %v2249 = vpack.c.b16 %v2236, %v2235
          %v2250 = vpack.c.b16 %v2238, %v2237
          %v2251 = vpack.c.b16 %v2240, %v2239
          %v2252 = vpack.c.b16 %v2242, %v2241
          %v2253 = vpack.c.b16 %v2244, %v2243
          %v2254 = vpack.c.b16 %v2246, %v2245
          %2263 = vmatprep.subr.bf16.mxu0 0
          %2264 = vmatpush1.bf16.msra.mxu0 %v2247
          %2265 = vmatprep.subr.bf16.mxu0 0
          %2266 = vmatpush1.bf16.msra.mxu0 %v2248
          %2267 = vmatprep.subr.bf16.mxu0 0
          %2268 = vmatpush1.bf16.msra.mxu0 %v2249
          %2269 = vmatprep.subr.bf16.mxu0 0
          %2270 = vmatpush1.bf16.msra.mxu0 %v2250
          %2271 = vmatprep.subr.bf16.mxu0 0
          %2272 = vmatpush1.bf16.msra.mxu0 %v2251
          %2273 = vmatprep.subr.bf16.mxu0 0
          %2274 = vmatpush1.bf16.msra.mxu0 %v2252
          %2275 = vmatprep.subr.bf16.mxu0 0
          %2276 = vmatpush1.bf16.msra.mxu0 %v2253
          %2277 = vmatprep.subr.bf16.mxu0 0
          %2278 = vmatpush1.bf16.msra.mxu0 %v2254
          %2279 = vmatprep.subr.bf16.mxu0 0
          %2280 = vmatpush1.bf16.msra.mxu0 0
          %2281 = vmatprep.subr.bf16.mxu0 0
          %2282 = vmatpush1.bf16.msra.mxu0 0
          %2283 = vmatprep.subr.bf16.mxu0 0
          %2284 = vmatpush1.bf16.msra.mxu0 0
          %2285 = vmatprep.subr.bf16.mxu0 0
          %2286 = vmatpush1.bf16.msra.mxu0 0
          %2287 = vmatprep.subr.bf16.mxu0 0
          %2288 = vmatpush1.bf16.msra.mxu0 0
          %2289 = vmatprep.subr.bf16.mxu0 0
          %2290 = vmatpush1.bf16.msra.mxu0 0
          %2291 = vmatprep.subr.bf16.mxu0 0
          %2292 = vmatpush1.bf16.msra.mxu0 0
          %2293 = vmatprep.subr.bf16.mxu0 0
          %2294 = vmatpush1.bf16.msra.mxu0 0
          %2295 = vmatprep.mubr.bf16.mxu0 0
          %2296 = vmatmul.mubr.bf16.gmra.mrb[0].mxu0 %v2213
          %v2297 = vpop.f32.mrb[0].mxu0
          %v2298 = vadd.f32 0.0, %v2297
          %v2299 = vpop.f32.mrb[0].mxu0
          %v2300 = vpop.f32.mrb[0].mxu0
          %v2301 = vadd.f32 0.0, %v2300
          %v2302 = vpop.f32.mrb[0].mxu0
          %2303 = vdwg.mxu0
          %v2304 = vadd.f32 %v2187, %v2298
          %v2305 = vadd.f32 %v2188, %v2301
          %v2306 = vld [vmem:[%s2079] sm:$0xfe]
          %s2307 = scalar_lea.vmem %s2, 512
          %v2308 = vld [vmem:[%s2307] sm:$0xf]
          %v2309 = vld [vmem:[%s2307 + $0x4] sm:$0xf]
          %v2310 = vld [vmem:[%s2307 + $0x8] sm:$0xf]
          %v2311 = vld [vmem:[%s2307 + $0xc] sm:$0xf]
          %v2312 = vld [vmem:[%s2307 + $0x10] sm:$0xf]
          %v2313 = vld [vmem:[%s2307 + $0x14] sm:$0xf]
          %v2314 = vld [vmem:[%s2307 + $0x18] sm:$0xf]
          %v2315 = vld [vmem:[%s2307 + $0x1c] sm:$0xf]
          %v2316 = vld [vmem:[%s2307 + $0x20] sm:$0xf]
          %v2317 = vld [vmem:[%s2307 + $0x24] sm:$0xf]
          %v2318 = vld [vmem:[%s2307 + $0x28] sm:$0xf]
          %v2319 = vld [vmem:[%s2307 + $0x2c] sm:$0xf]
          %v2320 = vld [vmem:[%s2307 + $0x30] sm:$0xf]
          %v2321 = vld [vmem:[%s2307 + $0x34] sm:$0xf]
          %v2322 = vld [vmem:[%s2307 + $0x38] sm:$0xf]
          %v2323 = vld [vmem:[%s2307 + $0x3c] sm:$0xf]
          %v2325 = vrot.slane %v2306, 1
          %v2343 = vunpack.c.l.b16 %v2308
          %v2344 = vunpack.c.l.b16 %v2309
          %v2345 = vunpack.c.l.b16 %v2310
          %v2346 = vunpack.c.l.b16 %v2311
          %v2347 = vunpack.c.l.b16 %v2312
          %v2348 = vunpack.c.l.b16 %v2313
          %v2349 = vunpack.c.l.b16 %v2314
          %v2350 = vunpack.c.l.b16 %v2315
          %v2351 = vunpack.c.l.b16 %v2316
          %v2352 = vunpack.c.l.b16 %v2317
          %v2353 = vunpack.c.l.b16 %v2318
          %v2354 = vunpack.c.l.b16 %v2319
          %v2355 = vunpack.c.l.b16 %v2320
          %v2356 = vunpack.c.l.b16 %v2321
          %v2357 = vunpack.c.l.b16 %v2322
          %v2358 = vunpack.c.l.b16 %v2323
          %v2359 = vpack.c.b16 %v2344, %v2343
          %v2360 = vpack.c.b16 %v2346, %v2345
          %v2361 = vpack.c.b16 %v2348, %v2347
          %v2362 = vpack.c.b16 %v2350, %v2349
          %v2363 = vpack.c.b16 %v2352, %v2351
          %v2364 = vpack.c.b16 %v2354, %v2353
          %v2365 = vpack.c.b16 %v2356, %v2355
          %v2366 = vpack.c.b16 %v2358, %v2357
          %2375 = vmatprep.subr.bf16.mxu0 0
          %2376 = vmatpush1.bf16.msra.mxu0 %v2359
          %2377 = vmatprep.subr.bf16.mxu0 0
          %2378 = vmatpush1.bf16.msra.mxu0 %v2360
          %2379 = vmatprep.subr.bf16.mxu0 0
          %2380 = vmatpush1.bf16.msra.mxu0 %v2361
          %2381 = vmatprep.subr.bf16.mxu0 0
          %2382 = vmatpush1.bf16.msra.mxu0 %v2362
          %2383 = vmatprep.subr.bf16.mxu0 0
          %2384 = vmatpush1.bf16.msra.mxu0 %v2363
          %2385 = vmatprep.subr.bf16.mxu0 0
          %2386 = vmatpush1.bf16.msra.mxu0 %v2364
          %2387 = vmatprep.subr.bf16.mxu0 0
          %2388 = vmatpush1.bf16.msra.mxu0 %v2365
          %2389 = vmatprep.subr.bf16.mxu0 0
          %2390 = vmatpush1.bf16.msra.mxu0 %v2366
          %2391 = vmatprep.subr.bf16.mxu0 0
          %2392 = vmatpush1.bf16.msra.mxu0 0
          %2393 = vmatprep.subr.bf16.mxu0 0
          %2394 = vmatpush1.bf16.msra.mxu0 0
          %2395 = vmatprep.subr.bf16.mxu0 0
          %2396 = vmatpush1.bf16.msra.mxu0 0
          %2397 = vmatprep.subr.bf16.mxu0 0
          %2398 = vmatpush1.bf16.msra.mxu0 0
          %2399 = vmatprep.subr.bf16.mxu0 0
          %2400 = vmatpush1.bf16.msra.mxu0 0
          %2401 = vmatprep.subr.bf16.mxu0 0
          %2402 = vmatpush1.bf16.msra.mxu0 0
          %2403 = vmatprep.subr.bf16.mxu0 0
          %2404 = vmatpush1.bf16.msra.mxu0 0
          %2405 = vmatprep.subr.bf16.mxu0 0
          %2406 = vmatpush1.bf16.msra.mxu0 0
          %2407 = vmatprep.mubr.bf16.mxu0 0
          %2408 = vmatmul.mubr.bf16.gmra.mrb[0].mxu0 %v2325
          %v2409 = vpop.f32.mrb[0].mxu0
          %v2410 = vadd.f32 0.0, %v2409
          %v2411 = vpop.f32.mrb[0].mxu0
          %v2412 = vpop.f32.mrb[0].mxu0
          %v2413 = vadd.f32 0.0, %v2412
          %v2414 = vpop.f32.mrb[0].mxu0
          %2415 = vdwg.mxu0
          %v2416 = vadd.f32 %v2304, %v2410
          %v2417 = vadd.f32 %v2305, %v2413
          %v2418 = vld [vmem:[%s4] sm:$0x1]
          %v2420 = vlaneseq
          %v2421 = vshrl.u32 %v2420, 7
          %v2422 = vsub.s32 0, %v2421
          %v2423 = vrot.slane %v2418, %v2422
          %v2425 = vadd.f32 %v2416, %v2423
          %v2426 = vadd.f32 %v2417, %v2423
          %v2427 = vmax.f32 %v2425, 0.0
          %v2428 = vmax.f32 %v2426, 0.0
          %s2429 = smul.u32 %s1736, 16
          %s2430 = scalar_lea.vmem [#allocation2], %s2429
          %2431 = vst [vmem:[%s2430 + $0x1] sm:$0xff] %v2427
          %2432 = vst [vmem:[%s2430 + $0x9] sm:$0x3f] %v2428
          %2433 = vst [vmem:[%s2430 - $0x1] sm:$0x2] %v2427
          %2434 = vst [vmem:[%s2430 + $0xb] sm:$0x10] %v2428
        $region56: #{_lambda_.4} parent=39 // loop_footer
          %s1400 = sadd.s32 1, %s1396
        $region57: #{_lambda_.4} parent=39 // loop_footer_branch
          %1395 = sbr.rel target = $region53
        $region58: #{_lambda_.4} parent=39 // loop_exit
          _
        %v2435 = vld [vmem:[%s1320] sm:$0xff]
        %v2436 = vld [vmem:[%s1320 + $0x8] sm:$0xff]
        %2437 = vst [vmem:[#allocation2] sm:$0xff] %v2435
        %2438 = vst [vmem:[#allocation2 + $0x8] sm:$0xff] %v2436
        %v2439 = vld [vmem:[%s1325] sm:$0xff]
        %v2440 = vld [vmem:[%s1325 + $0x8] sm:$0xff]
        %2441 = vst [vmem:[%s1328] sm:$0xff] %v2439
        %2442 = vst [vmem:[%s1328 + $0x8] sm:$0xff] %v2440
        %v2443 = vld [vmem:[#allocation2] sm:$0xff]
        %v2444 = vld [vmem:[#allocation2 + $0x8] sm:$0xff]
        %v2445 = vld [vmem:[#allocation2 + $0x10] sm:$0xff]
        %v2446 = vld [vmem:[#allocation2 + $0x18] sm:$0xff]
        %v2447 = vld [vmem:[#allocation2 + $0x20] sm:$0xff]
        %v2448 = vld [vmem:[#allocation2 + $0x28] sm:$0xff]
        %v2449 = vld [vmem:[#allocation2 + $0x30] sm:$0xff]
        %v2450 = vld [vmem:[#allocation2 + $0x38] sm:$0xff]
        %v2451 = vld [vmem:[#allocation2 + $0x40] sm:$0xff]
        %v2452 = vld [vmem:[#allocation2 + $0x48] sm:$0xff]
        %v2453 = vld [vmem:[#allocation2 + $0x50] sm:$0xff]
        %v2454 = vld [vmem:[#allocation2 + $0x58] sm:$0xff]
        %v2455 = vld [vmem:[#allocation2 + $0x60] sm:$0xff]
        %v2456 = vld [vmem:[#allocation2 + $0x68] sm:$0xff]
        %v2457 = vld [vmem:[#allocation2 + $0x70] sm:$0xff]
        %v2458 = vld [vmem:[#allocation2 + $0x78] sm:$0xff]
        %v2459 = vld [vmem:[#allocation2 + $0x80] sm:$0xff]
        %v2460 = vld [vmem:[#allocation2 + $0x88] sm:$0xff]
        %v2461 = vld [vmem:[#allocation2 + $0x90] sm:$0xff]
        %v2462 = vld [vmem:[#allocation2 + $0x98] sm:$0xff]
        %v2463 = vld [vmem:[#allocation2 + $0xa0] sm:$0xff]
        %v2464 = vld [vmem:[#allocation2 + $0xa8] sm:$0xff]
        %v2465 = vld [vmem:[#allocation2 + $0xb0] sm:$0xff]
        %v2466 = vld [vmem:[#allocation2 + $0xb8] sm:$0xff]
        %v2467 = vld [vmem:[#allocation2 + $0xc0] sm:$0xff]
        %v2468 = vld [vmem:[#allocation2 + $0xc8] sm:$0xff]
        %v2469 = vld [vmem:[#allocation2 + $0xd0] sm:$0xff]
        %v2470 = vld [vmem:[#allocation2 + $0xd8] sm:$0xff]
        %v2471 = vld [vmem:[#allocation2 + $0xe0] sm:$0xff]
        %v2472 = vld [vmem:[#allocation2 + $0xe8] sm:$0xff]
        %v2473 = vld [vmem:[#allocation2 + $0xf0] sm:$0xff]
        %v2474 = vld [vmem:[#allocation2 + $0xf8] sm:$0xff]
        %v2475 = vpack.c.bf16 %v2444, %v2443
        %v2476 = vpack.c.bf16 %v2446, %v2445
        %v2477 = vpack.c.bf16 %v2448, %v2447
        %v2478 = vpack.c.bf16 %v2450, %v2449
        %v2479 = vpack.c.bf16 %v2452, %v2451
        %v2480 = vpack.c.bf16 %v2454, %v2453
        %v2481 = vpack.c.bf16 %v2456, %v2455
        %v2482 = vpack.c.bf16 %v2458, %v2457
        %v2483 = vpack.c.bf16 %v2460, %v2459
        %v2484 = vpack.c.bf16 %v2462, %v2461
        %v2485 = vpack.c.bf16 %v2464, %v2463
        %v2486 = vpack.c.bf16 %v2466, %v2465
        %v2487 = vpack.c.bf16 %v2468, %v2467
        %v2488 = vpack.c.bf16 %v2470, %v2469
        %v2489 = vpack.c.bf16 %v2472, %v2471
        %v2490 = vpack.c.bf16 %v2474, %v2473
        %v2507 = vunpack.c.l.b16 %v2475
        %v2508 = vunpack.c.h.b16 %v2475
        %v2509 = vunpack.c.l.b16 %v2476
        %v2510 = vunpack.c.h.b16 %v2476
        %v2511 = vunpack.c.l.b16 %v2477
        %v2512 = vunpack.c.h.b16 %v2477
        %v2513 = vunpack.c.l.b16 %v2478
        %v2514 = vunpack.c.h.b16 %v2478
        %v2515 = vunpack.c.l.b16 %v2479
        %v2516 = vunpack.c.h.b16 %v2479
        %v2517 = vunpack.c.l.b16 %v2480
        %v2518 = vunpack.c.h.b16 %v2480
        %v2519 = vunpack.c.l.b16 %v2481
        %v2520 = vunpack.c.h.b16 %v2481
        %v2521 = vunpack.c.l.b16 %v2482
        %v2522 = vunpack.c.h.b16 %v2482
        %v2523 = vunpack.c.l.b16 %v2483
        %v2524 = vunpack.c.h.b16 %v2483
        %v2525 = vunpack.c.l.b16 %v2484
        %v2526 = vunpack.c.h.b16 %v2484
        %v2527 = vunpack.c.l.b16 %v2485
        %v2528 = vunpack.c.h.b16 %v2485
        %v2529 = vunpack.c.l.b16 %v2486
        %v2530 = vunpack.c.h.b16 %v2486
        %v2531 = vunpack.c.l.b16 %v2487
        %v2532 = vunpack.c.h.b16 %v2487
        %v2533 = vunpack.c.l.b16 %v2488
        %v2534 = vunpack.c.h.b16 %v2488
        %v2535 = vunpack.c.l.b16 %v2489
        %v2536 = vunpack.c.h.b16 %v2489
        %v2537 = vunpack.c.l.b16 %v2490
        %v2538 = vunpack.c.h.b16 %v2490
        %v2539 = vpack.c.b16 %v2507, %v2507
        %v2540 = vpack.c.b16 %v2508, %v2508
        %v2541 = vpack.c.b16 %v2509, %v2509
        %v2542 = vpack.c.b16 %v2510, %v2510
        %v2543 = vpack.c.b16 %v2511, %v2511
        %v2544 = vpack.c.b16 %v2512, %v2512
        %v2545 = vpack.c.b16 %v2513, %v2513
        %v2546 = vpack.c.b16 %v2514, %v2514
        %v2547 = vpack.c.b16 %v2515, %v2515
        %v2548 = vpack.c.b16 %v2516, %v2516
        %v2549 = vpack.c.b16 %v2517, %v2517
        %v2550 = vpack.c.b16 %v2518, %v2518
        %v2551 = vpack.c.b16 %v2519, %v2519
        %v2552 = vpack.c.b16 %v2520, %v2520
        %v2553 = vpack.c.b16 %v2521, %v2521
        %v2554 = vpack.c.b16 %v2522, %v2522
        %v2555 = vpack.c.b16 %v2523, %v2523
        %v2556 = vpack.c.b16 %v2524, %v2524
        %v2557 = vpack.c.b16 %v2525, %v2525
        %v2558 = vpack.c.b16 %v2526, %v2526
        %v2559 = vpack.c.b16 %v2527, %v2527
        %v2560 = vpack.c.b16 %v2528, %v2528
        %v2561 = vpack.c.b16 %v2529, %v2529
        %v2562 = vpack.c.b16 %v2530, %v2530
        %v2563 = vpack.c.b16 %v2531, %v2531
        %v2564 = vpack.c.b16 %v2532, %v2532
        %v2565 = vpack.c.b16 %v2533, %v2533
        %v2566 = vpack.c.b16 %v2534, %v2534
        %v2567 = vpack.c.b16 %v2535, %v2535
        %v2568 = vpack.c.b16 %v2536, %v2536
        %v2569 = vpack.c.b16 %v2537, %v2537
        %v2570 = vpack.c.b16 %v2538, %v2538
        %2603 = vst [vmem:[%s239] sm:$0xf] %v2539
        %2604 = vst [vmem:[%s239 + $0x4] sm:$0xf] %v2540
        %2605 = vst [vmem:[%s239 + $0x8] sm:$0xf] %v2541
        %2606 = vst [vmem:[%s239 + $0xc] sm:$0xf] %v2542
        %2607 = vst [vmem:[%s239 + $0x10] sm:$0xf] %v2543
        %2608 = vst [vmem:[%s239 + $0x14] sm:$0xf] %v2544
        %2609 = vst [vmem:[%s239 + $0x18] sm:$0xf] %v2545
        %2610 = vst [vmem:[%s239 + $0x1c] sm:$0xf] %v2546
        %2611 = vst [vmem:[%s239 + $0x20] sm:$0xf] %v2547
        %2612 = vst [vmem:[%s239 + $0x24] sm:$0xf] %v2548
        %2613 = vst [vmem:[%s239 + $0x28] sm:$0xf] %v2549
        %2614 = vst [vmem:[%s239 + $0x2c] sm:$0xf] %v2550
        %2615 = vst [vmem:[%s239 + $0x30] sm:$0xf] %v2551
        %2616 = vst [vmem:[%s239 + $0x34] sm:$0xf] %v2552
        %2617 = vst [vmem:[%s239 + $0x38] sm:$0xf] %v2553
        %2618 = vst [vmem:[%s239 + $0x3c] sm:$0xf] %v2554
        %2619 = vst [vmem:[%s239 + $0x40] sm:$0xf] %v2555
        %2620 = vst [vmem:[%s239 + $0x44] sm:$0xf] %v2556
        %2621 = vst [vmem:[%s239 + $0x48] sm:$0xf] %v2557
        %2622 = vst [vmem:[%s239 + $0x4c] sm:$0xf] %v2558
        %2623 = vst [vmem:[%s239 + $0x50] sm:$0xf] %v2559
        %2624 = vst [vmem:[%s239 + $0x54] sm:$0xf] %v2560
        %2625 = vst [vmem:[%s239 + $0x58] sm:$0xf] %v2561
        %2626 = vst [vmem:[%s239 + $0x5c] sm:$0xf] %v2562
        %2627 = vst [vmem:[%s239 + $0x60] sm:$0xf] %v2563
        %2628 = vst [vmem:[%s239 + $0x64] sm:$0xf] %v2564
        %2629 = vst [vmem:[%s239 + $0x68] sm:$0xf] %v2565
        %2630 = vst [vmem:[%s239 + $0x6c] sm:$0xf] %v2566
        %2631 = vst [vmem:[%s239 + $0x70] sm:$0xf] %v2567
        %2632 = vst [vmem:[%s239 + $0x74] sm:$0xf] %v2568
        %2633 = vst [vmem:[%s239 + $0x78] sm:$0xf] %v2569
        %2634 = vst [vmem:[%s239 + $0x7c] sm:$0xf] %v2570
        %p2635 = scmp.lt.s32.totalorder %s17, 1
        %s2636 = scalar_select %p2635, %s17, 1
        %s2637 = smul.addr %s2636, 32
        %s2638 = smul.addr %s2637, 4
        %s2639 = scalar_lea.vmem %s5, %s2638
        // Predicated region
        $region59: #{_lambda_.4} parent=39 // pred_check
          %p2640 = pneg %p145
        $region60: #{_lambda_.4} parent=39 // pred_check_branch
          %2642 = sbr.rel (%p2640) target = $region62
        $region61: #{_lambda_.4} parent=39 // pred_region
          _
        $region62: #{_lambda_.4} parent=39 // pred_fallthru
          _
      $region40: #{_lambda_.4} parent=5 // pred_fallthru
        _
      %p2643 = scmp.le.s32.totalorder 2, %s12
      // Predicated region
      $region63: #{_lambda_.4} parent=5 // pred_check
        %p2644 = pneg %p2643
      $region64: #{_lambda_.4} parent=5 // pred_check_branch
        %2646 = sbr.rel (%p2644) target = $region66
      $region65: #{_lambda_.4} parent=5 // pred_region
        %s2647 = ssub.s32 %s12, 2
        // Predicated region
        $region67: #{_lambda_.4} parent=65 // pred_check
          %p2648 = pneg %p151
        $region68: #{_lambda_.4} parent=65 // pred_check_branch
          %2650 = sbr.rel (%p2648) target = $region70
        $region69: #{_lambda_.4} parent=65 // pred_region
          %p2651 = scmp.lt.s32.totalorder %s18, 1
          %s2652 = scalar_select %p2651, %s18, 1
          %s2653 = smul.addr %s2652, 32
          %s2654 = smul.addr %s2653, 4
          %s2655 = scalar_lea.vmem %s5, %s2654
        $region70: #{_lambda_.4} parent=65 // pred_fallthru
          _
      $region66: #{_lambda_.4} parent=5 // pred_fallthru
        _
    $region6: #{_lambda_.4} parent=1 // loop_footer
      %s16 = sadd.s32 1, %s12
    $region7: #{_lambda_.4} parent=1 // loop_footer_branch
      %11 = sbr.rel target = $region3
    $region8: #{_lambda_.4} parent=1 // loop_exit
      _
    %2656 = vsyncpa [#allocation5], 1
    %s2657 = scalar_lea.sflag [#allocation5], 1
    %2658 = vsyncpa %s2657, 1

// kernel: _lambda_.5
$region0: #{_lambda_.5}
  #allocation0 [shape = 'u32[]', space=smem, size = 0x4, offset = 0x4, fixed_abs, tag = 'smem constant byte address 0x4 - core index']
  #allocation1 [shape = 'u32[144,128]{1,0:T(1,128)}', space=vmem, size = 0x12000, scoped, tag = 'internal scratch']
  #allocation2 [shape = 'f32[8,8,128]{2,1,0:T(8,128)}', space=vmem, size = 0x8000, scoped, tag = 'scratch operand']
  #allocation3 [shape = 'bf16[8,8,128]{2,1,0:T(8,128)(2,1)}', space=vmem, size = 0x4000, scoped, tag = 'scratch operand']
  %s0 = inlined_call_operand.vmem [shape: bf16[2,8,8,128], index: 0, kind: input, shape index: {}]
  %s1 = inlined_call_operand.vmem [shape: bf16[9,128,128], index: 1, kind: input, shape index: {}]
  %s2 = inlined_call_operand.vmem [shape: bf16[9,128,128], index: 2, kind: input, shape index: {}]
  %s3 = inlined_call_operand.vmem [shape: f32[1,128], index: 3, kind: input, shape index: {}]
  %s4 = inlined_call_operand.vmem [shape: f32[1,128], index: 4, kind: input, shape index: {}]
  %s5 = inlined_call_operand.vmem [shape: bf16[2,8,8,128], index: 5, kind: output, shape index: {}]
  %s6 = sld [smem:[#allocation0]]
  $region67: #{_lambda_.5} parent=0
    _
  %s8 = ssub.s32 1, %s6
  %s9 = scalar_select 0, %s8, %s6
  loop: start=0, step=1, limit=4
  $region2: #{_lambda_.5} parent=0 // loop_pre_header
    _
  $region3: #{_lambda_.5} parent=0 // loop_header
    %s11 = sphi 0, %s15
    %p12 = scmp.ge.s32.totalorder %s11, 4
    %s21 = sphi 0, %s23
    %s24 = sphi 0, %s21
    %s25 = sphi 0, %s24
    %s41 = sphi 0, %s25
    %s45 = sphi 0, %s45
    %s47 = sphi 0, %s45
    %s48 = sphi 0, %s47
    %s62 = sphi 0, %s48
    %s66 = sphi 0, %s66
    %s68 = sphi 0, %s66
    %s69 = sphi 0, %s68
    %s83 = sphi 0, %s69
    %s87 = sphi 0, %s87
    %s89 = sphi 0, %s87
    %s90 = sphi 0, %s89
    %s104 = sphi 0, %s90
    %s108 = sphi 0, %s108
    %s110 = sphi 0, %s108
    %s111 = sphi 0, %s110
    %s125 = sphi 0, %s111
    %s131 = sphi 0, %s133
    %s134 = sphi 0, %s131
    %s135 = sphi 0, %s134
    %s151 = sphi 0, %s135
  $region4: #{_lambda_.5} parent=0 // loop_header_branch
    %14 = sbr.rel (%p12) target = $region8
  $region5: #{_lambda_.5} parent=0 // loop_body
    %s16 = ssub.s32 %s11, 1
    %s17 = ssub.s32 %s11, 2
    %s18 = sadd.s32 %s11, 1
    %s19 = ssub.s32 %s11, %s18
    %p20 = scmp.eq.s32.totalorder %s19, 0
    %s22 = sadd.s32 %s21, 1
    %s23 = scalar_select %p20, %s21, %s22
    %p26 = pneg %p20
    %p27 = scmp.eq.s32.totalorder %s11, 1
    %p28 = por %p26, %p27
    %p29 = scmp.ne.s32.totalorder %s21, %s24
    %p30 = scmp.eq.s32.totalorder %s11, 0
    %p31 = por %p29, %p30
    %p32 = scmp.ne.s32.totalorder %s21, %s24
    %p33 = scmp.eq.s32.totalorder %s16, 1
    %p34 = por %p32, %p33
    %p35 = scmp.ne.s32.totalorder %s24, %s25
    %p36 = scmp.eq.s32.totalorder %s16, 0
    %p37 = por %p35, %p36
    %p38 = scmp.ne.s32.totalorder %s24, %s25
    %p39 = scmp.eq.s32.totalorder %s17, 1
    %p40 = por %p38, %p39
    %p42 = scmp.ne.s32.totalorder %s25, %s41
    %p43 = scmp.eq.s32.totalorder %s17, 0
    %p44 = por %p42, %p43
    %s46 = sadd.s32 %s45, 1
    %p49 = scmp.eq.s32.totalorder %s11, 1
    %p50 = scmp.ne.s32.totalorder %s45, %s47
    %p51 = scmp.eq.s32.totalorder %s11, 0
    %p52 = por %p50, %p51
    %p53 = scmp.ne.s32.totalorder %s45, %s47
    %p54 = scmp.eq.s32.totalorder %s16, 1
    %p55 = por %p53, %p54
    %p56 = scmp.ne.s32.totalorder %s47, %s48
    %p57 = scmp.eq.s32.totalorder %s16, 0
    %p58 = por %p56, %p57
    %p59 = scmp.ne.s32.totalorder %s47, %s48
    %p60 = scmp.eq.s32.totalorder %s17, 1
    %p61 = por %p59, %p60
    %p63 = scmp.ne.s32.totalorder %s48, %s62
    %p64 = scmp.eq.s32.totalorder %s17, 0
    %p65 = por %p63, %p64
    %s67 = sadd.s32 %s66, 1
    %p70 = scmp.eq.s32.totalorder %s11, 1
    %p71 = scmp.ne.s32.totalorder %s66, %s68
    %p72 = scmp.eq.s32.totalorder %s11, 0
    %p73 = por %p71, %p72
    %p74 = scmp.ne.s32.totalorder %s66, %s68
    %p75 = scmp.eq.s32.totalorder %s16, 1
    %p76 = por %p74, %p75
    %p77 = scmp.ne.s32.totalorder %s68, %s69
    %p78 = scmp.eq.s32.totalorder %s16, 0
    %p79 = por %p77, %p78
    %p80 = scmp.ne.s32.totalorder %s68, %s69
    %p81 = scmp.eq.s32.totalorder %s17, 1
    %p82 = por %p80, %p81
    %p84 = scmp.ne.s32.totalorder %s69, %s83
    %p85 = scmp.eq.s32.totalorder %s17, 0
    %p86 = por %p84, %p85
    %s88 = sadd.s32 %s87, 1
    %p91 = scmp.eq.s32.totalorder %s11, 1
    %p92 = scmp.ne.s32.totalorder %s87, %s89
    %p93 = scmp.eq.s32.totalorder %s11, 0
    %p94 = por %p92, %p93
    %p95 = scmp.ne.s32.totalorder %s87, %s89
    %p96 = scmp.eq.s32.totalorder %s16, 1
    %p97 = por %p95, %p96
    %p98 = scmp.ne.s32.totalorder %s89, %s90
    %p99 = scmp.eq.s32.totalorder %s16, 0
    %p100 = por %p98, %p99
    %p101 = scmp.ne.s32.totalorder %s89, %s90
    %p102 = scmp.eq.s32.totalorder %s17, 1
    %p103 = por %p101, %p102
    %p105 = scmp.ne.s32.totalorder %s90, %s104
    %p106 = scmp.eq.s32.totalorder %s17, 0
    %p107 = por %p105, %p106
    %s109 = sadd.s32 %s108, 1
    %p112 = scmp.eq.s32.totalorder %s11, 1
    %p113 = scmp.ne.s32.totalorder %s108, %s110
    %p114 = scmp.eq.s32.totalorder %s11, 0
    %p115 = por %p113, %p114
    %p116 = scmp.ne.s32.totalorder %s108, %s110
    %p117 = scmp.eq.s32.totalorder %s16, 1
    %p118 = por %p116, %p117
    %p119 = scmp.ne.s32.totalorder %s110, %s111
    %p120 = scmp.eq.s32.totalorder %s16, 0
    %p121 = por %p119, %p120
    %p122 = scmp.ne.s32.totalorder %s110, %s111
    %p123 = scmp.eq.s32.totalorder %s17, 1
    %p124 = por %p122, %p123
    %p126 = scmp.ne.s32.totalorder %s111, %s125
    %p127 = scmp.eq.s32.totalorder %s17, 0
    %p128 = por %p126, %p127
    %s129 = ssub.s32 %s11, %s18
    %p130 = scmp.eq.s32.totalorder %s129, 0
    %s132 = sadd.s32 %s131, 1
    %s133 = scalar_select %p130, %s131, %s132
    %p136 = pneg %p130
    %p137 = scmp.eq.s32.totalorder %s11, 1
    %p138 = por %p136, %p137
    %p139 = scmp.ne.s32.totalorder %s131, %s134
    %p140 = scmp.eq.s32.totalorder %s11, 0
    %p141 = por %p139, %p140
    %p142 = scmp.ne.s32.totalorder %s131, %s134
    %p143 = scmp.eq.s32.totalorder %s16, 1
    %p144 = por %p142, %p143
    %p145 = scmp.ne.s32.totalorder %s134, %s135
    %p146 = scmp.eq.s32.totalorder %s16, 0
    %p147 = por %p145, %p146
    %p148 = scmp.ne.s32.totalorder %s134, %s135
    %p149 = scmp.eq.s32.totalorder %s17, 1
    %p150 = por %p148, %p149
    %p152 = scmp.ne.s32.totalorder %s135, %s151
    %p153 = scmp.eq.s32.totalorder %s17, 0
    %p154 = por %p152, %p153
    %p155 = scmp.le.s32.totalorder 1, %s11
    %p156 = scmp.lt.s32.totalorder %s11, 3
    %p157 = pnand %p155, %p156
    %p158 = pneg %p157
    // Predicated region
    $region9: #{_lambda_.5} parent=5 // pred_check
      _
    $region10: #{_lambda_.5} parent=5 // pred_check_branch
      %160 = sbr.rel (%p157) target = $region12
    $region11: #{_lambda_.5} parent=5 // pred_region
      %s161 = ssub.s32 %s11, 1
      // Predicated region
      $region13: #{_lambda_.5} parent=11 // pred_check
        %p162 = pneg %p58
      $region14: #{_lambda_.5} parent=11 // pred_check_branch
        %164 = sbr.rel (%p162) target = $region16
      $region15: #{_lambda_.5} parent=11 // pred_region
        _
      $region16: #{_lambda_.5} parent=11 // pred_fallthru
        _
      // Predicated region
      $region17: #{_lambda_.5} parent=11 // pred_check
        %p165 = pneg %p79
      $region18: #{_lambda_.5} parent=11 // pred_check_branch
        %167 = sbr.rel (%p165) target = $region20
      $region19: #{_lambda_.5} parent=11 // pred_region
        _
      $region20: #{_lambda_.5} parent=11 // pred_fallthru
        _
      // Predicated region
      $region21: #{_lambda_.5} parent=11 // pred_check
        %p168 = pneg %p100
      $region22: #{_lambda_.5} parent=11 // pred_check_branch
        %170 = sbr.rel (%p168) target = $region24
      $region23: #{_lambda_.5} parent=11 // pred_region
        _
      $region24: #{_lambda_.5} parent=11 // pred_fallthru
        _
      // Predicated region
      $region25: #{_lambda_.5} parent=11 // pred_check
        %p171 = pneg %p121
      $region26: #{_lambda_.5} parent=11 // pred_check_branch
        %173 = sbr.rel (%p171) target = $region28
      $region27: #{_lambda_.5} parent=11 // pred_region
        _
      $region28: #{_lambda_.5} parent=11 // pred_fallthru
        _
    $region12: #{_lambda_.5} parent=5 // pred_fallthru
      _
    %p174 = scmp.lt.s32.totalorder %s11, 2
    // Predicated region
    $region29: #{_lambda_.5} parent=5 // pred_check
      %p175 = pneg %p174
    $region30: #{_lambda_.5} parent=5 // pred_check_branch
      %177 = sbr.rel (%p175) target = $region32
    $region31: #{_lambda_.5} parent=5 // pred_region
      // Predicated region
      $region33: #{_lambda_.5} parent=31 // pred_check
        %p178 = pneg %p31
      $region34: #{_lambda_.5} parent=31 // pred_check_branch
        %180 = sbr.rel (%p178) target = $region36
      $region35: #{_lambda_.5} parent=31 // pred_region
        %p181 = scmp.lt.s32.totalorder %s11, 1
        %s182 = scalar_select %p181, %s11, 1
        %s183 = smul.addr %s182, 8
        %s184 = smul.addr %s183, 4
        %s185 = scalar_lea.vmem %s0, %s184
      $region36: #{_lambda_.5} parent=31 // pred_fallthru
        _
    $region32: #{_lambda_.5} parent=5 // pred_fallthru
      _
    %p186 = scmp.le.s32.totalorder 1, %s11
    %p187 = scmp.lt.s32.totalorder %s11, 3
    %p188 = pnand %p186, %p187
    %p189 = pneg %p188
    // Predicated region
    $region37: #{_lambda_.5} parent=5 // pred_check
      _
    $region38: #{_lambda_.5} parent=5 // pred_check_branch
      %191 = sbr.rel (%p188) target = $region40
    $region39: #{_lambda_.5} parent=5 // pred_region
      %s192 = ssub.s32 %s11, 1
      %p193 = scmp.lt.s32.totalorder %s16, 1
      %s194 = scalar_select %p193, %s16, 1
      %s195 = smul.addr %s194, 8
      %s196 = smul.addr %s195, 4
      %s197 = scalar_lea.vmem %s0, %s196
      %p198 = pneg %p37
      %p199 = pneg %p34
      %p200 = pneg %p58
      %p201 = pneg %p55
      %p202 = pneg %p79
      %p203 = pneg %p76
      %p204 = pneg %p100
      %p205 = pneg %p97
      %p206 = pneg %p121
      %p207 = pneg %p118
      %p208 = pneg %p147
      %p209 = pneg %p144
      %p210 = scmp.lt.s32.totalorder %s16, 1
      %s211 = scalar_select %p210, %s16, 1
      %s212 = smul.addr %s211, 8
      %s213 = smul.addr %s212, 4
      %s214 = scalar_lea.vmem %s5, %s213
      %p215 = scmp.lt.s32.totalorder %s16, 1
      %s216 = scalar_select %p215, %s16, 1
      %s217 = smul.addr %s216, 8
      %s218 = smul.addr %s217, 4
      %s219 = scalar_lea.vmem %s0, %s218
      %p220 = scmp.lt.s32.totalorder %s16, 1
      %s221 = scalar_select %p220, %s16, 1
      %s222 = smul.addr %s221, 8
      %s223 = smul.addr %s222, 4
      %s224 = scalar_lea.vmem %s5, %s223
      loop: start=0, step=1, limit=6
      $region41: #{_lambda_.5} parent=39 // loop_pre_header
        _
      $region42: #{_lambda_.5} parent=39 // loop_header
        %s227 = sphi 0, %s231
        %p228 = scmp.ge.s32.totalorder %s227, 6
      $region43: #{_lambda_.5} parent=39 // loop_header_branch
        %230 = sbr.rel (%p228) target = $region47
      $region44: #{_lambda_.5} parent=39 // loop_body
        %s232 = smul.addr %s227, 4
        %s233 = scalar_lea.vmem %s219, %s232
        %v234 = vld [vmem:[%s233] sm:$0x7]
        %v235 = vld [vmem:[%s1] sm:$0xf]
        %v236 = vld [vmem:[%s1 + $0x4] sm:$0xf]
        %v237 = vld [vmem:[%s1 + $0x8] sm:$0xf]
        %v238 = vld [vmem:[%s1 + $0xc] sm:$0xf]
        %v239 = vld [vmem:[%s1 + $0x10] sm:$0xf]
        %v240 = vld [vmem:[%s1 + $0x14] sm:$0xf]
        %v241 = vld [vmem:[%s1 + $0x18] sm:$0xf]
        %v242 = vld [vmem:[%s1 + $0x1c] sm:$0xf]
        %v243 = vld [vmem:[%s1 + $0x20] sm:$0xf]
        %v244 = vld [vmem:[%s1 + $0x24] sm:$0xf]
        %v245 = vld [vmem:[%s1 + $0x28] sm:$0xf]
        %v246 = vld [vmem:[%s1 + $0x2c] sm:$0xf]
        %v247 = vld [vmem:[%s1 + $0x30] sm:$0xf]
        %v248 = vld [vmem:[%s1 + $0x34] sm:$0xf]
        %v249 = vld [vmem:[%s1 + $0x38] sm:$0xf]
        %v250 = vld [vmem:[%s1 + $0x3c] sm:$0xf]
        %v251 = vld [vmem:[%s233] sm:$0xf]
        %s252 = scalar_lea.vmem %s1, 64
        %v253 = vld [vmem:[%s252] sm:$0xf]
        %v254 = vld [vmem:[%s252 + $0x4] sm:$0xf]
        %v255 = vld [vmem:[%s252 + $0x8] sm:$0xf]
        %v256 = vld [vmem:[%s252 + $0xc] sm:$0xf]
        %v257 = vld [vmem:[%s252 + $0x10] sm:$0xf]
        %v258 = vld [vmem:[%s252 + $0x14] sm:$0xf]
        %v259 = vld [vmem:[%s252 + $0x18] sm:$0xf]
        %v260 = vld [vmem:[%s252 + $0x1c] sm:$0xf]
        %v261 = vld [vmem:[%s252 + $0x20] sm:$0xf]
        %v262 = vld [vmem:[%s252 + $0x24] sm:$0xf]
        %v263 = vld [vmem:[%s252 + $0x28] sm:$0xf]
        %v264 = vld [vmem:[%s252 + $0x2c] sm:$0xf]
        %v265 = vld [vmem:[%s252 + $0x30] sm:$0xf]
        %v266 = vld [vmem:[%s252 + $0x34] sm:$0xf]
        %v267 = vld [vmem:[%s252 + $0x38] sm:$0xf]
        %v268 = vld [vmem:[%s252 + $0x3c] sm:$0xf]
        %v270 = vunpack.c.l.b16 %v251
        %v271 = vpack.c.b16 %v270, %v270
        %v273 = vshrl.u32 %v271, 16
        %v275 = vshll.u32 %v271, 16
        %v277 = vrot.slane %v275, 1
        %v278 = vor.u32 %v273, %v277
        %v296 = vunpack.c.l.b16 %v253
        %v297 = vunpack.c.l.b16 %v254
        %v298 = vunpack.c.l.b16 %v255
        %v299 = vunpack.c.l.b16 %v256
        %v300 = vunpack.c.l.b16 %v257
        %v301 = vunpack.c.l.b16 %v258
        %v302 = vunpack.c.l.b16 %v259
        %v303 = vunpack.c.l.b16 %v260
        %v304 = vunpack.c.l.b16 %v261
        %v305 = vunpack.c.l.b16 %v262
        %v306 = vunpack.c.l.b16 %v263
        %v307 = vunpack.c.l.b16 %v264
        %v308 = vunpack.c.l.b16 %v265
        %v309 = vunpack.c.l.b16 %v266
        %v310 = vunpack.c.l.b16 %v267
        %v311 = vunpack.c.l.b16 %v268
        %v312 = vpack.c.b16 %v297, %v296
        %v313 = vpack.c.b16 %v299, %v298
        %v314 = vpack.c.b16 %v301, %v300
        %v315 = vpack.c.b16 %v303, %v302
        %v316 = vpack.c.b16 %v305, %v304
        %v317 = vpack.c.b16 %v307, %v306
        %v318 = vpack.c.b16 %v309, %v308
        %v319 = vpack.c.b16 %v311, %v310
        %328 = vmatprep.subr.bf16.mxu0 0
        %329 = vmatpush1.bf16.msra.mxu0 %v312
        %330 = vmatprep.subr.bf16.mxu0 0
        %331 = vmatpush1.bf16.msra.mxu0 %v313
        %332 = vmatprep.subr.bf16.mxu0 0
        %333 = vmatpush1.bf16.msra.mxu0 %v314
        %334 = vmatprep.subr.bf16.mxu0 0
        %335 = vmatpush1.bf16.msra.mxu0 %v315
        %336 = vmatprep.subr.bf16.mxu0 0
        %337 = vmatpush1.bf16.msra.mxu0 %v316
        %338 = vmatprep.subr.bf16.mxu0 0
        %339 = vmatpush1.bf16.msra.mxu0 %v317
        %340 = vmatprep.subr.bf16.mxu0 0
        %341 = vmatpush1.bf16.msra.mxu0 %v318
        %342 = vmatprep.subr.bf16.mxu0 0
        %343 = vmatpush1.bf16.msra.mxu0 %v319
        %344 = vmatprep.subr.bf16.mxu0 0
        %345 = vmatpush1.bf16.msra.mxu0 0
        %346 = vmatprep.subr.bf16.mxu0 0
        %347 = vmatpush1.bf16.msra.mxu0 0
        %348 = vmatprep.subr.bf16.mxu0 0
        %349 = vmatpush1.bf16.msra.mxu0 0
        %350 = vmatprep.subr.bf16.mxu0 0
        %351 = vmatpush1.bf16.msra.mxu0 0
        %352 = vmatprep.subr.bf16.mxu0 0
        %353 = vmatpush1.bf16.msra.mxu0 0
        %354 = vmatprep.subr.bf16.mxu0 0
        %355 = vmatpush1.bf16.msra.mxu0 0
        %356 = vmatprep.subr.bf16.mxu0 0
        %357 = vmatpush1.bf16.msra.mxu0 0
        %358 = vmatprep.subr.bf16.mxu0 0
        %359 = vmatpush1.bf16.msra.mxu0 0
        %360 = vmatprep.mubr.bf16.mxu0 0
        %361 = vmatmul.mubr.bf16.gmra.mrb[0].mxu0 %v278
        %v362 = vpop.f32.mrb[0].mxu0
        %v363 = vadd.f32 0.0, %v362
        %v364 = vpop.f32.mrb[0].mxu0
        %v365 = vpop.f32.mrb[0].mxu0
        %v366 = vpop.f32.mrb[0].mxu0
        %367 = vdwg.mxu0
        %v384 = vunpack.c.l.b16 %v235
        %v385 = vunpack.c.l.b16 %v236
        %v386 = vunpack.c.l.b16 %v237
        %v387 = vunpack.c.l.b16 %v238
        %v388 = vunpack.c.l.b16 %v239
        %v389 = vunpack.c.l.b16 %v240
        %v390 = vunpack.c.l.b16 %v241
        %v391 = vunpack.c.l.b16 %v242
        %v392 = vunpack.c.l.b16 %v243
        %v393 = vunpack.c.l.b16 %v244
        %v394 = vunpack.c.l.b16 %v245
        %v395 = vunpack.c.l.b16 %v246
        %v396 = vunpack.c.l.b16 %v247
        %v397 = vunpack.c.l.b16 %v248
        %v398 = vunpack.c.l.b16 %v249
        %v399 = vunpack.c.l.b16 %v250
        %v400 = vpack.c.b16 %v385, %v384
        %v401 = vpack.c.b16 %v387, %v386
        %v402 = vpack.c.b16 %v389, %v388
        %v403 = vpack.c.b16 %v391, %v390
        %v404 = vpack.c.b16 %v393, %v392
        %v405 = vpack.c.b16 %v395, %v394
        %v406 = vpack.c.b16 %v397, %v396
        %v407 = vpack.c.b16 %v399, %v398
        %416 = vmatprep.subr.bf16.mxu0 0
        %417 = vmatpush1.bf16.msra.mxu0 %v400
        %418 = vmatprep.subr.bf16.mxu0 0
        %419 = vmatpush1.bf16.msra.mxu0 %v401
        %420 = vmatprep.subr.bf16.mxu0 0
        %421 = vmatpush1.bf16.msra.mxu0 %v402
        %422 = vmatprep.subr.bf16.mxu0 0
        %423 = vmatpush1.bf16.msra.mxu0 %v403
        %424 = vmatprep.subr.bf16.mxu0 0
        %425 = vmatpush1.bf16.msra.mxu0 %v404
        %426 = vmatprep.subr.bf16.mxu0 0
        %427 = vmatpush1.bf16.msra.mxu0 %v405
        %428 = vmatprep.subr.bf16.mxu0 0
        %429 = vmatpush1.bf16.msra.mxu0 %v406
        %430 = vmatprep.subr.bf16.mxu0 0
        %431 = vmatpush1.bf16.msra.mxu0 %v407
        %432 = vmatprep.subr.bf16.mxu0 0
        %433 = vmatpush1.bf16.msra.mxu0 0
        %434 = vmatprep.subr.bf16.mxu0 0
        %435 = vmatpush1.bf16.msra.mxu0 0
        %436 = vmatprep.subr.bf16.mxu0 0
        %437 = vmatpush1.bf16.msra.mxu0 0
        %438 = vmatprep.subr.bf16.mxu0 0
        %439 = vmatpush1.bf16.msra.mxu0 0
        %440 = vmatprep.subr.bf16.mxu0 0
        %441 = vmatpush1.bf16.msra.mxu0 0
        %442 = vmatprep.subr.bf16.mxu0 0
        %443 = vmatpush1.bf16.msra.mxu0 0
        %444 = vmatprep.subr.bf16.mxu0 0
        %445 = vmatpush1.bf16.msra.mxu0 0
        %446 = vmatprep.subr.bf16.mxu0 0
        %447 = vmatpush1.bf16.msra.mxu0 0
        %448 = vmatprep.mubr.bf16.mxu0 0
        %449 = vmatmul.mubr.bf16.gmra.mrb[0].mxu0 %v234
        %v450 = vpop.f32.mrb[0].mxu0
        %v451 = vadd.f32 %v363, %v450
        %v452 = vpop.f32.mrb[0].mxu0
        %v453 = vpop.f32.mrb[0].mxu0
        %v454 = vpop.f32.mrb[0].mxu0
        %455 = vdwg.mxu0
        %v456 = vld [vmem:[%s233] sm:$0xe]
        %s457 = scalar_lea.vmem %s1, 128
        %v458 = vld [vmem:[%s457] sm:$0xf]
        %v459 = vld [vmem:[%s457 + $0x4] sm:$0xf]
        %v460 = vld [vmem:[%s457 + $0x8] sm:$0xf]
        %v461 = vld [vmem:[%s457 + $0xc] sm:$0xf]
        %v462 = vld [vmem:[%s457 + $0x10] sm:$0xf]
        %v463 = vld [vmem:[%s457 + $0x14] sm:$0xf]
        %v464 = vld [vmem:[%s457 + $0x18] sm:$0xf]
        %v465 = vld [vmem:[%s457 + $0x1c] sm:$0xf]
        %v466 = vld [vmem:[%s457 + $0x20] sm:$0xf]
        %v467 = vld [vmem:[%s457 + $0x24] sm:$0xf]
        %v468 = vld [vmem:[%s457 + $0x28] sm:$0xf]
        %v469 = vld [vmem:[%s457 + $0x2c] sm:$0xf]
        %v470 = vld [vmem:[%s457 + $0x30] sm:$0xf]
        %v471 = vld [vmem:[%s457 + $0x34] sm:$0xf]
        %v472 = vld [vmem:[%s457 + $0x38] sm:$0xf]
        %v473 = vld [vmem:[%s457 + $0x3c] sm:$0xf]
        %v475 = vunpack.c.l.b16 %v456
        %v476 = vpack.c.b16 %v475, %v475
        %v477 = vrot.slane %v476, 1
        %v495 = vunpack.c.l.b16 %v458
        %v496 = vunpack.c.l.b16 %v459
        %v497 = vunpack.c.l.b16 %v460
        %v498 = vunpack.c.l.b16 %v461
        %v499 = vunpack.c.l.b16 %v462
        %v500 = vunpack.c.l.b16 %v463
        %v501 = vunpack.c.l.b16 %v464
        %v502 = vunpack.c.l.b16 %v465
        %v503 = vunpack.c.l.b16 %v466
        %v504 = vunpack.c.l.b16 %v467
        %v505 = vunpack.c.l.b16 %v468
        %v506 = vunpack.c.l.b16 %v469
        %v507 = vunpack.c.l.b16 %v470
        %v508 = vunpack.c.l.b16 %v471
        %v509 = vunpack.c.l.b16 %v472
        %v510 = vunpack.c.l.b16 %v473
        %v511 = vpack.c.b16 %v496, %v495
        %v512 = vpack.c.b16 %v498, %v497
        %v513 = vpack.c.b16 %v500, %v499
        %v514 = vpack.c.b16 %v502, %v501
        %v515 = vpack.c.b16 %v504, %v503
        %v516 = vpack.c.b16 %v506, %v505
        %v517 = vpack.c.b16 %v508, %v507
        %v518 = vpack.c.b16 %v510, %v509
        %527 = vmatprep.subr.bf16.mxu0 0
        %528 = vmatpush1.bf16.msra.mxu0 %v511
        %529 = vmatprep.subr.bf16.mxu0 0
        %530 = vmatpush1.bf16.msra.mxu0 %v512
        %531 = vmatprep.subr.bf16.mxu0 0
        %532 = vmatpush1.bf16.msra.mxu0 %v513
        %533 = vmatprep.subr.bf16.mxu0 0
        %534 = vmatpush1.bf16.msra.mxu0 %v514
        %535 = vmatprep.subr.bf16.mxu0 0
        %536 = vmatpush1.bf16.msra.mxu0 %v515
        %537 = vmatprep.subr.bf16.mxu0 0
        %538 = vmatpush1.bf16.msra.mxu0 %v516
        %539 = vmatprep.subr.bf16.mxu0 0
        %540 = vmatpush1.bf16.msra.mxu0 %v517
        %541 = vmatprep.subr.bf16.mxu0 0
        %542 = vmatpush1.bf16.msra.mxu0 %v518
        %543 = vmatprep.subr.bf16.mxu0 0
        %544 = vmatpush1.bf16.msra.mxu0 0
        %545 = vmatprep.subr.bf16.mxu0 0
        %546 = vmatpush1.bf16.msra.mxu0 0
        %547 = vmatprep.subr.bf16.mxu0 0
        %548 = vmatpush1.bf16.msra.mxu0 0
        %549 = vmatprep.subr.bf16.mxu0 0
        %550 = vmatpush1.bf16.msra.mxu0 0
        %551 = vmatprep.subr.bf16.mxu0 0
        %552 = vmatpush1.bf16.msra.mxu0 0
        %553 = vmatprep.subr.bf16.mxu0 0
        %554 = vmatpush1.bf16.msra.mxu0 0
        %555 = vmatprep.subr.bf16.mxu0 0
        %556 = vmatpush1.bf16.msra.mxu0 0
        %557 = vmatprep.subr.bf16.mxu0 0
        %558 = vmatpush1.bf16.msra.mxu0 0
        %559 = vmatprep.mubr.bf16.mxu0 0
        %560 = vmatmul.mubr.bf16.gmra.mrb[0].mxu0 %v477
        %v561 = vpop.f32.mrb[0].mxu0
        %v562 = vadd.f32 0.0, %v561
        %v563 = vpop.f32.mrb[0].mxu0
        %v564 = vpop.f32.mrb[0].mxu0
        %v565 = vpop.f32.mrb[0].mxu0
        %566 = vdwg.mxu0
        %v567 = vadd.f32 %v451, %v562
        %s568 = sadd.s32 %s227, 1
        %s569 = smul.addr %s568, 4
        %s570 = scalar_lea.vmem %s219, %s569
        %v571 = vld [vmem:[%s570] sm:$0x7]
        %s572 = scalar_lea.vmem %s1, 192
        %v573 = vld [vmem:[%s572] sm:$0xf]
        %v574 = vld [vmem:[%s572 + $0x4] sm:$0xf]
        %v575 = vld [vmem:[%s572 + $0x8] sm:$0xf]
        %v576 = vld [vmem:[%s572 + $0xc] sm:$0xf]
        %v577 = vld [vmem:[%s572 + $0x10] sm:$0xf]
        %v578 = vld [vmem:[%s572 + $0x14] sm:$0xf]
        %v579 = vld [vmem:[%s572 + $0x18] sm:$0xf]
        %v580 = vld [vmem:[%s572 + $0x1c] sm:$0xf]
        %v581 = vld [vmem:[%s572 + $0x20] sm:$0xf]
        %v582 = vld [vmem:[%s572 + $0x24] sm:$0xf]
        %v583 = vld [vmem:[%s572 + $0x28] sm:$0xf]
        %v584 = vld [vmem:[%s572 + $0x2c] sm:$0xf]
        %v585 = vld [vmem:[%s572 + $0x30] sm:$0xf]
        %v586 = vld [vmem:[%s572 + $0x34] sm:$0xf]
        %v587 = vld [vmem:[%s572 + $0x38] sm:$0xf]
        %v588 = vld [vmem:[%s572 + $0x3c] sm:$0xf]
        %v605 = vunpack.c.l.b16 %v573
        %v606 = vunpack.c.l.b16 %v574
        %v607 = vunpack.c.l.b16 %v575
        %v608 = vunpack.c.l.b16 %v576
        %v609 = vunpack.c.l.b16 %v577
        %v610 = vunpack.c.l.b16 %v578
        %v611 = vunpack.c.l.b16 %v579
        %v612 = vunpack.c.l.b16 %v580
        %v613 = vunpack.c.l.b16 %v581
        %v614 = vunpack.c.l.b16 %v582
        %v615 = vunpack.c.l.b16 %v583
        %v616 = vunpack.c.l.b16 %v584
        %v617 = vunpack.c.l.b16 %v585
        %v618 = vunpack.c.l.b16 %v586
        %v619 = vunpack.c.l.b16 %v587
        %v620 = vunpack.c.l.b16 %v588
        %v621 = vpack.c.b16 %v606, %v605
        %v622 = vpack.c.b16 %v608, %v607
        %v623 = vpack.c.b16 %v610, %v609
        %v624 = vpack.c.b16 %v612, %v611
        %v625 = vpack.c.b16 %v614, %v613
        %v626 = vpack.c.b16 %v616, %v615
        %v627 = vpack.c.b16 %v618, %v617
        %v628 = vpack.c.b16 %v620, %v619
        %637 = vmatprep.subr.bf16.mxu0 0
        %638 = vmatpush1.bf16.msra.mxu0 %v621
        %639 = vmatprep.subr.bf16.mxu0 0
        %640 = vmatpush1.bf16.msra.mxu0 %v622
        %641 = vmatprep.subr.bf16.mxu0 0
        %642 = vmatpush1.bf16.msra.mxu0 %v623
        %643 = vmatprep.subr.bf16.mxu0 0
        %644 = vmatpush1.bf16.msra.mxu0 %v624
        %645 = vmatprep.subr.bf16.mxu0 0
        %646 = vmatpush1.bf16.msra.mxu0 %v625
        %647 = vmatprep.subr.bf16.mxu0 0
        %648 = vmatpush1.bf16.msra.mxu0 %v626
        %649 = vmatprep.subr.bf16.mxu0 0
        %650 = vmatpush1.bf16.msra.mxu0 %v627
        %651 = vmatprep.subr.bf16.mxu0 0
        %652 = vmatpush1.bf16.msra.mxu0 %v628
        %653 = vmatprep.subr.bf16.mxu0 0
        %654 = vmatpush1.bf16.msra.mxu0 0
        %655 = vmatprep.subr.bf16.mxu0 0
        %656 = vmatpush1.bf16.msra.mxu0 0
        %657 = vmatprep.subr.bf16.mxu0 0
        %658 = vmatpush1.bf16.msra.mxu0 0
        %659 = vmatprep.subr.bf16.mxu0 0
        %660 = vmatpush1.bf16.msra.mxu0 0
        %661 = vmatprep.subr.bf16.mxu0 0
        %662 = vmatpush1.bf16.msra.mxu0 0
        %663 = vmatprep.subr.bf16.mxu0 0
        %664 = vmatpush1.bf16.msra.mxu0 0
        %665 = vmatprep.subr.bf16.mxu0 0
        %666 = vmatpush1.bf16.msra.mxu0 0
        %667 = vmatprep.subr.bf16.mxu0 0
        %668 = vmatpush1.bf16.msra.mxu0 0
        %669 = vmatprep.mubr.bf16.mxu0 0
        %670 = vmatmul.mubr.bf16.gmra.mrb[0].mxu0 %v571
        %v671 = vpop.f32.mrb[0].mxu0
        %v672 = vadd.f32 0.0, %v671
        %v673 = vpop.f32.mrb[0].mxu0
        %v674 = vpop.f32.mrb[0].mxu0
        %v675 = vpop.f32.mrb[0].mxu0
        %676 = vdwg.mxu0
        %v677 = vadd.f32 %v567, %v672
        %v678 = vld [vmem:[%s570] sm:$0xf]
        %s679 = scalar_lea.vmem %s1, 256
        %v680 = vld [vmem:[%s679] sm:$0xf]
        %v681 = vld [vmem:[%s679 + $0x4] sm:$0xf]
        %v682 = vld [vmem:[%s679 + $0x8] sm:$0xf]
        %v683 = vld [vmem:[%s679 + $0xc] sm:$0xf]
        %v684 = vld [vmem:[%s679 + $0x10] sm:$0xf]
        %v685 = vld [vmem:[%s679 + $0x14] sm:$0xf]
        %v686 = vld [vmem:[%s679 + $0x18] sm:$0xf]
        %v687 = vld [vmem:[%s679 + $0x1c] sm:$0xf]
        %v688 = vld [vmem:[%s679 + $0x20] sm:$0xf]
        %v689 = vld [vmem:[%s679 + $0x24] sm:$0xf]
        %v690 = vld [vmem:[%s679 + $0x28] sm:$0xf]
        %v691 = vld [vmem:[%s679 + $0x2c] sm:$0xf]
        %v692 = vld [vmem:[%s679 + $0x30] sm:$0xf]
        %v693 = vld [vmem:[%s679 + $0x34] sm:$0xf]
        %v694 = vld [vmem:[%s679 + $0x38] sm:$0xf]
        %v695 = vld [vmem:[%s679 + $0x3c] sm:$0xf]
        %v697 = vunpack.c.l.b16 %v678
        %v698 = vpack.c.b16 %v697, %v697
        %v700 = vshrl.u32 %v698, 16
        %v702 = vshll.u32 %v698, 16
        %v704 = vrot.slane %v702, 1
        %v705 = vor.u32 %v700, %v704
        %v723 = vunpack.c.l.b16 %v680
        %v724 = vunpack.c.l.b16 %v681
        %v725 = vunpack.c.l.b16 %v682
        %v726 = vunpack.c.l.b16 %v683
        %v727 = vunpack.c.l.b16 %v684
        %v728 = vunpack.c.l.b16 %v685
        %v729 = vunpack.c.l.b16 %v686
        %v730 = vunpack.c.l.b16 %v687
        %v731 = vunpack.c.l.b16 %v688
        %v732 = vunpack.c.l.b16 %v689
        %v733 = vunpack.c.l.b16 %v690
        %v734 = vunpack.c.l.b16 %v691
        %v735 = vunpack.c.l.b16 %v692
        %v736 = vunpack.c.l.b16 %v693
        %v737 = vunpack.c.l.b16 %v694
        %v738 = vunpack.c.l.b16 %v695
        %v739 = vpack.c.b16 %v724, %v723
        %v740 = vpack.c.b16 %v726, %v725
        %v741 = vpack.c.b16 %v728, %v727
        %v742 = vpack.c.b16 %v730, %v729
        %v743 = vpack.c.b16 %v732, %v731
        %v744 = vpack.c.b16 %v734, %v733
        %v745 = vpack.c.b16 %v736, %v735
        %v746 = vpack.c.b16 %v738, %v737
        %755 = vmatprep.subr.bf16.mxu0 0
        %756 = vmatpush1.bf16.msra.mxu0 %v739
        %757 = vmatprep.subr.bf16.mxu0 0
        %758 = vmatpush1.bf16.msra.mxu0 %v740
        %759 = vmatprep.subr.bf16.mxu0 0
        %760 = vmatpush1.bf16.msra.mxu0 %v741
        %761 = vmatprep.subr.bf16.mxu0 0
        %762 = vmatpush1.bf16.msra.mxu0 %v742
        %763 = vmatprep.subr.bf16.mxu0 0
        %764 = vmatpush1.bf16.msra.mxu0 %v743
        %765 = vmatprep.subr.bf16.mxu0 0
        %766 = vmatpush1.bf16.msra.mxu0 %v744
        %767 = vmatprep.subr.bf16.mxu0 0
        %768 = vmatpush1.bf16.msra.mxu0 %v745
        %769 = vmatprep.subr.bf16.mxu0 0
        %770 = vmatpush1.bf16.msra.mxu0 %v746
        %771 = vmatprep.subr.bf16.mxu0 0
        %772 = vmatpush1.bf16.msra.mxu0 0
        %773 = vmatprep.subr.bf16.mxu0 0
        %774 = vmatpush1.bf16.msra.mxu0 0
        %775 = vmatprep.subr.bf16.mxu0 0
        %776 = vmatpush1.bf16.msra.mxu0 0
        %777 = vmatprep.subr.bf16.mxu0 0
        %778 = vmatpush1.bf16.msra.mxu0 0
        %779 = vmatprep.subr.bf16.mxu0 0
        %780 = vmatpush1.bf16.msra.mxu0 0
        %781 = vmatprep.subr.bf16.mxu0 0
        %782 = vmatpush1.bf16.msra.mxu0 0
        %783 = vmatprep.subr.bf16.mxu0 0
        %784 = vmatpush1.bf16.msra.mxu0 0
        %785 = vmatprep.subr.bf16.mxu0 0
        %786 = vmatpush1.bf16.msra.mxu0 0
        %787 = vmatprep.mubr.bf16.mxu0 0
        %788 = vmatmul.mubr.bf16.gmra.mrb[0].mxu0 %v705
        %v789 = vpop.f32.mrb[0].mxu0
        %v790 = vadd.f32 0.0, %v789
        %v791 = vpop.f32.mrb[0].mxu0
        %v792 = vpop.f32.mrb[0].mxu0
        %v793 = vpop.f32.mrb[0].mxu0
        %794 = vdwg.mxu0
        %v795 = vadd.f32 %v677, %v790
        %v796 = vld [vmem:[%s570] sm:$0xe]
        %s797 = scalar_lea.vmem %s1, 320
        %v798 = vld [vmem:[%s797] sm:$0xf]
        %v799 = vld [vmem:[%s797 + $0x4] sm:$0xf]
        %v800 = vld [vmem:[%s797 + $0x8] sm:$0xf]
        %v801 = vld [vmem:[%s797 + $0xc] sm:$0xf]
        %v802 = vld [vmem:[%s797 + $0x10] sm:$0xf]
        %v803 = vld [vmem:[%s797 + $0x14] sm:$0xf]
        %v804 = vld [vmem:[%s797 + $0x18] sm:$0xf]
        %v805 = vld [vmem:[%s797 + $0x1c] sm:$0xf]
        %v806 = vld [vmem:[%s797 + $0x20] sm:$0xf]
        %v807 = vld [vmem:[%s797 + $0x24] sm:$0xf]
        %v808 = vld [vmem:[%s797 + $0x28] sm:$0xf]
        %v809 = vld [vmem:[%s797 + $0x2c] sm:$0xf]
        %v810 = vld [vmem:[%s797 + $0x30] sm:$0xf]
        %v811 = vld [vmem:[%s797 + $0x34] sm:$0xf]
        %v812 = vld [vmem:[%s797 + $0x38] sm:$0xf]
        %v813 = vld [vmem:[%s797 + $0x3c] sm:$0xf]
        %v815 = vunpack.c.l.b16 %v796
        %v816 = vpack.c.b16 %v815, %v815
        %v817 = vrot.slane %v816, 1
        %v835 = vunpack.c.l.b16 %v798
        %v836 = vunpack.c.l.b16 %v799
        %v837 = vunpack.c.l.b16 %v800
        %v838 = vunpack.c.l.b16 %v801
        %v839 = vunpack.c.l.b16 %v802
        %v840 = vunpack.c.l.b16 %v803
        %v841 = vunpack.c.l.b16 %v804
        %v842 = vunpack.c.l.b16 %v805
        %v843 = vunpack.c.l.b16 %v806
        %v844 = vunpack.c.l.b16 %v807
        %v845 = vunpack.c.l.b16 %v808
        %v846 = vunpack.c.l.b16 %v809
        %v847 = vunpack.c.l.b16 %v810
        %v848 = vunpack.c.l.b16 %v811
        %v849 = vunpack.c.l.b16 %v812
        %v850 = vunpack.c.l.b16 %v813
        %v851 = vpack.c.b16 %v836, %v835
        %v852 = vpack.c.b16 %v838, %v837
        %v853 = vpack.c.b16 %v840, %v839
        %v854 = vpack.c.b16 %v842, %v841
        %v855 = vpack.c.b16 %v844, %v843
        %v856 = vpack.c.b16 %v846, %v845
        %v857 = vpack.c.b16 %v848, %v847
        %v858 = vpack.c.b16 %v850, %v849
        %867 = vmatprep.subr.bf16.mxu0 0
        %868 = vmatpush1.bf16.msra.mxu0 %v851
        %869 = vmatprep.subr.bf16.mxu0 0
        %870 = vmatpush1.bf16.msra.mxu0 %v852
        %871 = vmatprep.subr.bf16.mxu0 0
        %872 = vmatpush1.bf16.msra.mxu0 %v853
        %873 = vmatprep.subr.bf16.mxu0 0
        %874 = vmatpush1.bf16.msra.mxu0 %v854
        %875 = vmatprep.subr.bf16.mxu0 0
        %876 = vmatpush1.bf16.msra.mxu0 %v855
        %877 = vmatprep.subr.bf16.mxu0 0
        %878 = vmatpush1.bf16.msra.mxu0 %v856
        %879 = vmatprep.subr.bf16.mxu0 0
        %880 = vmatpush1.bf16.msra.mxu0 %v857
        %881 = vmatprep.subr.bf16.mxu0 0
        %882 = vmatpush1.bf16.msra.mxu0 %v858
        %883 = vmatprep.subr.bf16.mxu0 0
        %884 = vmatpush1.bf16.msra.mxu0 0
        %885 = vmatprep.subr.bf16.mxu0 0
        %886 = vmatpush1.bf16.msra.mxu0 0
        %887 = vmatprep.subr.bf16.mxu0 0
        %888 = vmatpush1.bf16.msra.mxu0 0
        %889 = vmatprep.subr.bf16.mxu0 0
        %890 = vmatpush1.bf16.msra.mxu0 0
        %891 = vmatprep.subr.bf16.mxu0 0
        %892 = vmatpush1.bf16.msra.mxu0 0
        %893 = vmatprep.subr.bf16.mxu0 0
        %894 = vmatpush1.bf16.msra.mxu0 0
        %895 = vmatprep.subr.bf16.mxu0 0
        %896 = vmatpush1.bf16.msra.mxu0 0
        %897 = vmatprep.subr.bf16.mxu0 0
        %898 = vmatpush1.bf16.msra.mxu0 0
        %899 = vmatprep.mubr.bf16.mxu0 0
        %900 = vmatmul.mubr.bf16.gmra.mrb[0].mxu0 %v817
        %v901 = vpop.f32.mrb[0].mxu0
        %v902 = vadd.f32 0.0, %v901
        %v903 = vpop.f32.mrb[0].mxu0
        %v904 = vpop.f32.mrb[0].mxu0
        %v905 = vpop.f32.mrb[0].mxu0
        %906 = vdwg.mxu0
        %v907 = vadd.f32 %v795, %v902
        %s908 = sadd.s32 %s227, 2
        %s909 = smul.addr %s908, 4
        %s910 = scalar_lea.vmem %s219, %s909
        %v911 = vld [vmem:[%s910] sm:$0x7]
        %s912 = scalar_lea.vmem %s1, 384
        %v913 = vld [vmem:[%s912] sm:$0xf]
        %v914 = vld [vmem:[%s912 + $0x4] sm:$0xf]
        %v915 = vld [vmem:[%s912 + $0x8] sm:$0xf]
        %v916 = vld [vmem:[%s912 + $0xc] sm:$0xf]
        %v917 = vld [vmem:[%s912 + $0x10] sm:$0xf]
        %v918 = vld [vmem:[%s912 + $0x14] sm:$0xf]
        %v919 = vld [vmem:[%s912 + $0x18] sm:$0xf]
        %v920 = vld [vmem:[%s912 + $0x1c] sm:$0xf]
        %v921 = vld [vmem:[%s912 + $0x20] sm:$0xf]
        %v922 = vld [vmem:[%s912 + $0x24] sm:$0xf]
        %v923 = vld [vmem:[%s912 + $0x28] sm:$0xf]
        %v924 = vld [vmem:[%s912 + $0x2c] sm:$0xf]
        %v925 = vld [vmem:[%s912 + $0x30] sm:$0xf]
        %v926 = vld [vmem:[%s912 + $0x34] sm:$0xf]
        %v927 = vld [vmem:[%s912 + $0x38] sm:$0xf]
        %v928 = vld [vmem:[%s912 + $0x3c] sm:$0xf]
        %v945 = vunpack.c.l.b16 %v913
        %v946 = vunpack.c.l.b16 %v914
        %v947 = vunpack.c.l.b16 %v915
        %v948 = vunpack.c.l.b16 %v916
        %v949 = vunpack.c.l.b16 %v917
        %v950 = vunpack.c.l.b16 %v918
        %v951 = vunpack.c.l.b16 %v919
        %v952 = vunpack.c.l.b16 %v920
        %v953 = vunpack.c.l.b16 %v921
        %v954 = vunpack.c.l.b16 %v922
        %v955 = vunpack.c.l.b16 %v923
        %v956 = vunpack.c.l.b16 %v924
        %v957 = vunpack.c.l.b16 %v925
        %v958 = vunpack.c.l.b16 %v926
        %v959 = vunpack.c.l.b16 %v927
        %v960 = vunpack.c.l.b16 %v928
        %v961 = vpack.c.b16 %v946, %v945
        %v962 = vpack.c.b16 %v948, %v947
        %v963 = vpack.c.b16 %v950, %v949
        %v964 = vpack.c.b16 %v952, %v951
        %v965 = vpack.c.b16 %v954, %v953
        %v966 = vpack.c.b16 %v956, %v955
        %v967 = vpack.c.b16 %v958, %v957
        %v968 = vpack.c.b16 %v960, %v959
        %977 = vmatprep.subr.bf16.mxu0 0
        %978 = vmatpush1.bf16.msra.mxu0 %v961
        %979 = vmatprep.subr.bf16.mxu0 0
        %980 = vmatpush1.bf16.msra.mxu0 %v962
        %981 = vmatprep.subr.bf16.mxu0 0
        %982 = vmatpush1.bf16.msra.mxu0 %v963
        %983 = vmatprep.subr.bf16.mxu0 0
        %984 = vmatpush1.bf16.msra.mxu0 %v964
        %985 = vmatprep.subr.bf16.mxu0 0
        %986 = vmatpush1.bf16.msra.mxu0 %v965
        %987 = vmatprep.subr.bf16.mxu0 0
        %988 = vmatpush1.bf16.msra.mxu0 %v966
        %989 = vmatprep.subr.bf16.mxu0 0
        %990 = vmatpush1.bf16.msra.mxu0 %v967
        %991 = vmatprep.subr.bf16.mxu0 0
        %992 = vmatpush1.bf16.msra.mxu0 %v968
        %993 = vmatprep.subr.bf16.mxu0 0
        %994 = vmatpush1.bf16.msra.mxu0 0
        %995 = vmatprep.subr.bf16.mxu0 0
        %996 = vmatpush1.bf16.msra.mxu0 0
        %997 = vmatprep.subr.bf16.mxu0 0
        %998 = vmatpush1.bf16.msra.mxu0 0
        %999 = vmatprep.subr.bf16.mxu0 0
        %1000 = vmatpush1.bf16.msra.mxu0 0
        %1001 = vmatprep.subr.bf16.mxu0 0
        %1002 = vmatpush1.bf16.msra.mxu0 0
        %1003 = vmatprep.subr.bf16.mxu0 0
        %1004 = vmatpush1.bf16.msra.mxu0 0
        %1005 = vmatprep.subr.bf16.mxu0 0
        %1006 = vmatpush1.bf16.msra.mxu0 0
        %1007 = vmatprep.subr.bf16.mxu0 0
        %1008 = vmatpush1.bf16.msra.mxu0 0
        %1009 = vmatprep.mubr.bf16.mxu0 0
        %1010 = vmatmul.mubr.bf16.gmra.mrb[0].mxu0 %v911
        %v1011 = vpop.f32.mrb[0].mxu0
        %v1012 = vadd.f32 0.0, %v1011
        %v1013 = vpop.f32.mrb[0].mxu0
        %v1014 = vpop.f32.mrb[0].mxu0
        %v1015 = vpop.f32.mrb[0].mxu0
        %1016 = vdwg.mxu0
        %v1017 = vadd.f32 %v907, %v1012
        %v1018 = vld [vmem:[%s910] sm:$0xf]
        %s1019 = scalar_lea.vmem %s1, 448
        %v1020 = vld [vmem:[%s1019] sm:$0xf]
        %v1021 = vld [vmem:[%s1019 + $0x4] sm:$0xf]
        %v1022 = vld [vmem:[%s1019 + $0x8] sm:$0xf]
        %v1023 = vld [vmem:[%s1019 + $0xc] sm:$0xf]
        %v1024 = vld [vmem:[%s1019 + $0x10] sm:$0xf]
        %v1025 = vld [vmem:[%s1019 + $0x14] sm:$0xf]
        %v1026 = vld [vmem:[%s1019 + $0x18] sm:$0xf]
        %v1027 = vld [vmem:[%s1019 + $0x1c] sm:$0xf]
        %v1028 = vld [vmem:[%s1019 + $0x20] sm:$0xf]
        %v1029 = vld [vmem:[%s1019 + $0x24] sm:$0xf]
        %v1030 = vld [vmem:[%s1019 + $0x28] sm:$0xf]
        %v1031 = vld [vmem:[%s1019 + $0x2c] sm:$0xf]
        %v1032 = vld [vmem:[%s1019 + $0x30] sm:$0xf]
        %v1033 = vld [vmem:[%s1019 + $0x34] sm:$0xf]
        %v1034 = vld [vmem:[%s1019 + $0x38] sm:$0xf]
        %v1035 = vld [vmem:[%s1019 + $0x3c] sm:$0xf]
        %v1037 = vunpack.c.l.b16 %v1018
        %v1038 = vpack.c.b16 %v1037, %v1037
        %v1040 = vshrl.u32 %v1038, 16
        %v1042 = vshll.u32 %v1038, 16
        %v1044 = vrot.slane %v1042, 1
        %v1045 = vor.u32 %v1040, %v1044
        %v1063 = vunpack.c.l.b16 %v1020
        %v1064 = vunpack.c.l.b16 %v1021
        %v1065 = vunpack.c.l.b16 %v1022
        %v1066 = vunpack.c.l.b16 %v1023
        %v1067 = vunpack.c.l.b16 %v1024
        %v1068 = vunpack.c.l.b16 %v1025
        %v1069 = vunpack.c.l.b16 %v1026
        %v1070 = vunpack.c.l.b16 %v1027
        %v1071 = vunpack.c.l.b16 %v1028
        %v1072 = vunpack.c.l.b16 %v1029
        %v1073 = vunpack.c.l.b16 %v1030
        %v1074 = vunpack.c.l.b16 %v1031
        %v1075 = vunpack.c.l.b16 %v1032
        %v1076 = vunpack.c.l.b16 %v1033
        %v1077 = vunpack.c.l.b16 %v1034
        %v1078 = vunpack.c.l.b16 %v1035
        %v1079 = vpack.c.b16 %v1064, %v1063
        %v1080 = vpack.c.b16 %v1066, %v1065
        %v1081 = vpack.c.b16 %v1068, %v1067
        %v1082 = vpack.c.b16 %v1070, %v1069
        %v1083 = vpack.c.b16 %v1072, %v1071
        %v1084 = vpack.c.b16 %v1074, %v1073
        %v1085 = vpack.c.b16 %v1076, %v1075
        %v1086 = vpack.c.b16 %v1078, %v1077
        %1095 = vmatprep.subr.bf16.mxu0 0
        %1096 = vmatpush1.bf16.msra.mxu0 %v1079
        %1097 = vmatprep.subr.bf16.mxu0 0
        %1098 = vmatpush1.bf16.msra.mxu0 %v1080
        %1099 = vmatprep.subr.bf16.mxu0 0
        %1100 = vmatpush1.bf16.msra.mxu0 %v1081
        %1101 = vmatprep.subr.bf16.mxu0 0
        %1102 = vmatpush1.bf16.msra.mxu0 %v1082
        %1103 = vmatprep.subr.bf16.mxu0 0
        %1104 = vmatpush1.bf16.msra.mxu0 %v1083
        %1105 = vmatprep.subr.bf16.mxu0 0
        %1106 = vmatpush1.bf16.msra.mxu0 %v1084
        %1107 = vmatprep.subr.bf16.mxu0 0
        %1108 = vmatpush1.bf16.msra.mxu0 %v1085
        %1109 = vmatprep.subr.bf16.mxu0 0
        %1110 = vmatpush1.bf16.msra.mxu0 %v1086
        %1111 = vmatprep.subr.bf16.mxu0 0
        %1112 = vmatpush1.bf16.msra.mxu0 0
        %1113 = vmatprep.subr.bf16.mxu0 0
        %1114 = vmatpush1.bf16.msra.mxu0 0
        %1115 = vmatprep.subr.bf16.mxu0 0
        %1116 = vmatpush1.bf16.msra.mxu0 0
        %1117 = vmatprep.subr.bf16.mxu0 0
        %1118 = vmatpush1.bf16.msra.mxu0 0
        %1119 = vmatprep.subr.bf16.mxu0 0
        %1120 = vmatpush1.bf16.msra.mxu0 0
        %1121 = vmatprep.subr.bf16.mxu0 0
        %1122 = vmatpush1.bf16.msra.mxu0 0
        %1123 = vmatprep.subr.bf16.mxu0 0
        %1124 = vmatpush1.bf16.msra.mxu0 0
        %1125 = vmatprep.subr.bf16.mxu0 0
        %1126 = vmatpush1.bf16.msra.mxu0 0
        %1127 = vmatprep.mubr.bf16.mxu0 0
        %1128 = vmatmul.mubr.bf16.gmra.mrb[0].mxu0 %v1045
        %v1129 = vpop.f32.mrb[0].mxu0
        %v1130 = vadd.f32 0.0, %v1129
        %v1131 = vpop.f32.mrb[0].mxu0
        %v1132 = vpop.f32.mrb[0].mxu0
        %v1133 = vpop.f32.mrb[0].mxu0
        %1134 = vdwg.mxu0
        %v1135 = vadd.f32 %v1017, %v1130
        %v1136 = vld [vmem:[%s910] sm:$0xe]
        %s1137 = scalar_lea.vmem %s1, 512
        %v1138 = vld [vmem:[%s1137] sm:$0xf]
        %v1139 = vld [vmem:[%s1137 + $0x4] sm:$0xf]
        %v1140 = vld [vmem:[%s1137 + $0x8] sm:$0xf]
        %v1141 = vld [vmem:[%s1137 + $0xc] sm:$0xf]
        %v1142 = vld [vmem:[%s1137 + $0x10] sm:$0xf]
        %v1143 = vld [vmem:[%s1137 + $0x14] sm:$0xf]
        %v1144 = vld [vmem:[%s1137 + $0x18] sm:$0xf]
        %v1145 = vld [vmem:[%s1137 + $0x1c] sm:$0xf]
        %v1146 = vld [vmem:[%s1137 + $0x20] sm:$0xf]
        %v1147 = vld [vmem:[%s1137 + $0x24] sm:$0xf]
        %v1148 = vld [vmem:[%s1137 + $0x28] sm:$0xf]
        %v1149 = vld [vmem:[%s1137 + $0x2c] sm:$0xf]
        %v1150 = vld [vmem:[%s1137 + $0x30] sm:$0xf]
        %v1151 = vld [vmem:[%s1137 + $0x34] sm:$0xf]
        %v1152 = vld [vmem:[%s1137 + $0x38] sm:$0xf]
        %v1153 = vld [vmem:[%s1137 + $0x3c] sm:$0xf]
        %v1155 = vunpack.c.l.b16 %v1136
        %v1156 = vpack.c.b16 %v1155, %v1155
        %v1157 = vrot.slane %v1156, 1
        %v1175 = vunpack.c.l.b16 %v1138
        %v1176 = vunpack.c.l.b16 %v1139
        %v1177 = vunpack.c.l.b16 %v1140
        %v1178 = vunpack.c.l.b16 %v1141
        %v1179 = vunpack.c.l.b16 %v1142
        %v1180 = vunpack.c.l.b16 %v1143
        %v1181 = vunpack.c.l.b16 %v1144
        %v1182 = vunpack.c.l.b16 %v1145
        %v1183 = vunpack.c.l.b16 %v1146
        %v1184 = vunpack.c.l.b16 %v1147
        %v1185 = vunpack.c.l.b16 %v1148
        %v1186 = vunpack.c.l.b16 %v1149
        %v1187 = vunpack.c.l.b16 %v1150
        %v1188 = vunpack.c.l.b16 %v1151
        %v1189 = vunpack.c.l.b16 %v1152
        %v1190 = vunpack.c.l.b16 %v1153
        %v1191 = vpack.c.b16 %v1176, %v1175
        %v1192 = vpack.c.b16 %v1178, %v1177
        %v1193 = vpack.c.b16 %v1180, %v1179
        %v1194 = vpack.c.b16 %v1182, %v1181
        %v1195 = vpack.c.b16 %v1184, %v1183
        %v1196 = vpack.c.b16 %v1186, %v1185
        %v1197 = vpack.c.b16 %v1188, %v1187
        %v1198 = vpack.c.b16 %v1190, %v1189
        %1207 = vmatprep.subr.bf16.mxu0 0
        %1208 = vmatpush1.bf16.msra.mxu0 %v1191
        %1209 = vmatprep.subr.bf16.mxu0 0
        %1210 = vmatpush1.bf16.msra.mxu0 %v1192
        %1211 = vmatprep.subr.bf16.mxu0 0
        %1212 = vmatpush1.bf16.msra.mxu0 %v1193
        %1213 = vmatprep.subr.bf16.mxu0 0
        %1214 = vmatpush1.bf16.msra.mxu0 %v1194
        %1215 = vmatprep.subr.bf16.mxu0 0
        %1216 = vmatpush1.bf16.msra.mxu0 %v1195
        %1217 = vmatprep.subr.bf16.mxu0 0
        %1218 = vmatpush1.bf16.msra.mxu0 %v1196
        %1219 = vmatprep.subr.bf16.mxu0 0
        %1220 = vmatpush1.bf16.msra.mxu0 %v1197
        %1221 = vmatprep.subr.bf16.mxu0 0
        %1222 = vmatpush1.bf16.msra.mxu0 %v1198
        %1223 = vmatprep.subr.bf16.mxu0 0
        %1224 = vmatpush1.bf16.msra.mxu0 0
        %1225 = vmatprep.subr.bf16.mxu0 0
        %1226 = vmatpush1.bf16.msra.mxu0 0
        %1227 = vmatprep.subr.bf16.mxu0 0
        %1228 = vmatpush1.bf16.msra.mxu0 0
        %1229 = vmatprep.subr.bf16.mxu0 0
        %1230 = vmatpush1.bf16.msra.mxu0 0
        %1231 = vmatprep.subr.bf16.mxu0 0
        %1232 = vmatpush1.bf16.msra.mxu0 0
        %1233 = vmatprep.subr.bf16.mxu0 0
        %1234 = vmatpush1.bf16.msra.mxu0 0
        %1235 = vmatprep.subr.bf16.mxu0 0
        %1236 = vmatpush1.bf16.msra.mxu0 0
        %1237 = vmatprep.subr.bf16.mxu0 0
        %1238 = vmatpush1.bf16.msra.mxu0 0
        %1239 = vmatprep.mubr.bf16.mxu0 0
        %1240 = vmatmul.mubr.bf16.gmra.mrb[0].mxu0 %v1157
        %v1241 = vpop.f32.mrb[0].mxu0
        %v1242 = vadd.f32 0.0, %v1241
        %v1243 = vpop.f32.mrb[0].mxu0
        %v1244 = vpop.f32.mrb[0].mxu0
        %v1245 = vpop.f32.mrb[0].mxu0
        %1246 = vdwg.mxu0
        %v1247 = vadd.f32 %v1135, %v1242
        %v1248 = vld [vmem:[%s3] sm:$0x1]
        %v1250 = vlaneseq
        %v1251 = vshrl.u32 %v1250, 7
        %v1252 = vsub.s32 0, %v1251
        %v1253 = vrot.slane %v1248, %v1252
        %v1255 = vadd.f32 %v1247, %v1253
        %v1256 = vmax.f32 %v1255, 0.0
        %s1257 = smul.u32 %s568, 8
        %s1258 = scalar_lea.vmem [#allocation2], %s1257
        %1259 = vst [vmem:[%s1258 + $0x1] sm:$0x3f] %v1256
        %1260 = vst [vmem:[%s1258 - $0x1] sm:$0x2] %v1256
        %1261 = vst [vmem:[%s1258 + $0x3] sm:$0x10] %v1256
      $region45: #{_lambda_.5} parent=39 // loop_footer
        %s231 = sadd.s32 1, %s227
      $region46: #{_lambda_.5} parent=39 // loop_footer_branch
        %226 = sbr.rel target = $region42
      $region47: #{_lambda_.5} parent=39 // loop_exit
        _
      %s1262 = scalar_lea.vmem [#allocation2], 16
      %v1263 = vld [vmem:[%s1262] sm:$0xff]
      %1264 = vst [vmem:[#allocation2] sm:$0xff] %v1263
      %s1265 = scalar_lea.vmem [#allocation2], 40
      %v1266 = vld [vmem:[%s1265] sm:$0xff]
      %s1267 = scalar_lea.vmem [#allocation2], 56
      %1268 = vst [vmem:[%s1267] sm:$0xff] %v1266
      %v1269 = vld [vmem:[#allocation2] sm:$0xff]
      %v1270 = vld [vmem:[#allocation2 + $0x8] sm:$0xff]
      %v1271 = vld [vmem:[#allocation2 + $0x10] sm:$0xff]
      %v1272 = vld [vmem:[#allocation2 + $0x18] sm:$0xff]
      %v1273 = vld [vmem:[#allocation2 + $0x20] sm:$0xff]
      %v1274 = vld [vmem:[#allocation2 + $0x28] sm:$0xff]
      %v1275 = vld [vmem:[#allocation2 + $0x30] sm:$0xff]
      %v1276 = vld [vmem:[#allocation2 + $0x38] sm:$0xff]
      %v1277 = vpack.c.bf16 %v1269, %v1269
      %v1278 = vpack.c.bf16 %v1270, %v1270
      %v1279 = vpack.c.bf16 %v1271, %v1271
      %v1280 = vpack.c.bf16 %v1272, %v1272
      %v1281 = vpack.c.bf16 %v1273, %v1273
      %v1282 = vpack.c.bf16 %v1274, %v1274
      %v1283 = vpack.c.bf16 %v1275, %v1275
      %v1284 = vpack.c.bf16 %v1276, %v1276
      %1285 = vst [vmem:[#allocation3] sm:$0xf] %v1277
      %1286 = vst [vmem:[#allocation3 + $0x4] sm:$0xf] %v1278
      %1287 = vst [vmem:[#allocation3 + $0x8] sm:$0xf] %v1279
      %1288 = vst [vmem:[#allocation3 + $0xc] sm:$0xf] %v1280
      %1289 = vst [vmem:[#allocation3 + $0x10] sm:$0xf] %v1281
      %1290 = vst [vmem:[#allocation3 + $0x14] sm:$0xf] %v1282
      %1291 = vst [vmem:[#allocation3 + $0x18] sm:$0xf] %v1283
      %1292 = vst [vmem:[#allocation3 + $0x1c] sm:$0xf] %v1284
      loop: start=0, step=1, limit=6
      $region48: #{_lambda_.5} parent=39 // loop_pre_header
        _
      $region49: #{_lambda_.5} parent=39 // loop_header
        %s1294 = sphi 0, %s1298
        %p1295 = scmp.ge.s32.totalorder %s1294, 6
      $region50: #{_lambda_.5} parent=39 // loop_header_branch
        %1297 = sbr.rel (%p1295) target = $region54
      $region51: #{_lambda_.5} parent=39 // loop_body
        %s1299 = smul.addr %s1294, 4
        %s1300 = scalar_lea.vmem [#allocation3], %s1299
        %v1301 = vld [vmem:[%s1300] sm:$0x7]
        %v1302 = vld [vmem:[%s2] sm:$0xf]
        %v1303 = vld [vmem:[%s2 + $0x4] sm:$0xf]
        %v1304 = vld [vmem:[%s2 + $0x8] sm:$0xf]
        %v1305 = vld [vmem:[%s2 + $0xc] sm:$0xf]
        %v1306 = vld [vmem:[%s2 + $0x10] sm:$0xf]
        %v1307 = vld [vmem:[%s2 + $0x14] sm:$0xf]
        %v1308 = vld [vmem:[%s2 + $0x18] sm:$0xf]
        %v1309 = vld [vmem:[%s2 + $0x1c] sm:$0xf]
        %v1310 = vld [vmem:[%s2 + $0x20] sm:$0xf]
        %v1311 = vld [vmem:[%s2 + $0x24] sm:$0xf]
        %v1312 = vld [vmem:[%s2 + $0x28] sm:$0xf]
        %v1313 = vld [vmem:[%s2 + $0x2c] sm:$0xf]
        %v1314 = vld [vmem:[%s2 + $0x30] sm:$0xf]
        %v1315 = vld [vmem:[%s2 + $0x34] sm:$0xf]
        %v1316 = vld [vmem:[%s2 + $0x38] sm:$0xf]
        %v1317 = vld [vmem:[%s2 + $0x3c] sm:$0xf]
        %v1318 = vld [vmem:[%s1300] sm:$0xf]
        %s1319 = scalar_lea.vmem %s2, 64
        %v1320 = vld [vmem:[%s1319] sm:$0xf]
        %v1321 = vld [vmem:[%s1319 + $0x4] sm:$0xf]
        %v1322 = vld [vmem:[%s1319 + $0x8] sm:$0xf]
        %v1323 = vld [vmem:[%s1319 + $0xc] sm:$0xf]
        %v1324 = vld [vmem:[%s1319 + $0x10] sm:$0xf]
        %v1325 = vld [vmem:[%s1319 + $0x14] sm:$0xf]
        %v1326 = vld [vmem:[%s1319 + $0x18] sm:$0xf]
        %v1327 = vld [vmem:[%s1319 + $0x1c] sm:$0xf]
        %v1328 = vld [vmem:[%s1319 + $0x20] sm:$0xf]
        %v1329 = vld [vmem:[%s1319 + $0x24] sm:$0xf]
        %v1330 = vld [vmem:[%s1319 + $0x28] sm:$0xf]
        %v1331 = vld [vmem:[%s1319 + $0x2c] sm:$0xf]
        %v1332 = vld [vmem:[%s1319 + $0x30] sm:$0xf]
        %v1333 = vld [vmem:[%s1319 + $0x34] sm:$0xf]
        %v1334 = vld [vmem:[%s1319 + $0x38] sm:$0xf]
        %v1335 = vld [vmem:[%s1319 + $0x3c] sm:$0xf]
        %v1337 = vunpack.c.l.b16 %v1318
        %v1338 = vpack.c.b16 %v1337, %v1337
        %v1340 = vshrl.u32 %v1338, 16
        %v1342 = vshll.u32 %v1338, 16
        %v1344 = vrot.slane %v1342, 1
        %v1345 = vor.u32 %v1340, %v1344
        %v1363 = vunpack.c.l.b16 %v1320
        %v1364 = vunpack.c.l.b16 %v1321
        %v1365 = vunpack.c.l.b16 %v1322
        %v1366 = vunpack.c.l.b16 %v1323
        %v1367 = vunpack.c.l.b16 %v1324
        %v1368 = vunpack.c.l.b16 %v1325
        %v1369 = vunpack.c.l.b16 %v1326
        %v1370 = vunpack.c.l.b16 %v1327
        %v1371 = vunpack.c.l.b16 %v1328
        %v1372 = vunpack.c.l.b16 %v1329
        %v1373 = vunpack.c.l.b16 %v1330
        %v1374 = vunpack.c.l.b16 %v1331
        %v1375 = vunpack.c.l.b16 %v1332
        %v1376 = vunpack.c.l.b16 %v1333
        %v1377 = vunpack.c.l.b16 %v1334
        %v1378 = vunpack.c.l.b16 %v1335
        %v1379 = vpack.c.b16 %v1364, %v1363
        %v1380 = vpack.c.b16 %v1366, %v1365
        %v1381 = vpack.c.b16 %v1368, %v1367
        %v1382 = vpack.c.b16 %v1370, %v1369
        %v1383 = vpack.c.b16 %v1372, %v1371
        %v1384 = vpack.c.b16 %v1374, %v1373
        %v1385 = vpack.c.b16 %v1376, %v1375
        %v1386 = vpack.c.b16 %v1378, %v1377
        %1395 = vmatprep.subr.bf16.mxu0 0
        %1396 = vmatpush1.bf16.msra.mxu0 %v1379
        %1397 = vmatprep.subr.bf16.mxu0 0
        %1398 = vmatpush1.bf16.msra.mxu0 %v1380
        %1399 = vmatprep.subr.bf16.mxu0 0
        %1400 = vmatpush1.bf16.msra.mxu0 %v1381
        %1401 = vmatprep.subr.bf16.mxu0 0
        %1402 = vmatpush1.bf16.msra.mxu0 %v1382
        %1403 = vmatprep.subr.bf16.mxu0 0
        %1404 = vmatpush1.bf16.msra.mxu0 %v1383
        %1405 = vmatprep.subr.bf16.mxu0 0
        %1406 = vmatpush1.bf16.msra.mxu0 %v1384
        %1407 = vmatprep.subr.bf16.mxu0 0
        %1408 = vmatpush1.bf16.msra.mxu0 %v1385
        %1409 = vmatprep.subr.bf16.mxu0 0
        %1410 = vmatpush1.bf16.msra.mxu0 %v1386
        %1411 = vmatprep.subr.bf16.mxu0 0
        %1412 = vmatpush1.bf16.msra.mxu0 0
        %1413 = vmatprep.subr.bf16.mxu0 0
        %1414 = vmatpush1.bf16.msra.mxu0 0
        %1415 = vmatprep.subr.bf16.mxu0 0
        %1416 = vmatpush1.bf16.msra.mxu0 0
        %1417 = vmatprep.subr.bf16.mxu0 0
        %1418 = vmatpush1.bf16.msra.mxu0 0
        %1419 = vmatprep.subr.bf16.mxu0 0
        %1420 = vmatpush1.bf16.msra.mxu0 0
        %1421 = vmatprep.subr.bf16.mxu0 0
        %1422 = vmatpush1.bf16.msra.mxu0 0
        %1423 = vmatprep.subr.bf16.mxu0 0
        %1424 = vmatpush1.bf16.msra.mxu0 0
        %1425 = vmatprep.subr.bf16.mxu0 0
        %1426 = vmatpush1.bf16.msra.mxu0 0
        %1427 = vmatprep.mubr.bf16.mxu0 0
        %1428 = vmatmul.mubr.bf16.gmra.mrb[0].mxu0 %v1345
        %v1429 = vpop.f32.mrb[0].mxu0
        %v1430 = vadd.f32 0.0, %v1429
        %v1431 = vpop.f32.mrb[0].mxu0
        %v1432 = vpop.f32.mrb[0].mxu0
        %v1433 = vpop.f32.mrb[0].mxu0
        %1434 = vdwg.mxu0
        %v1451 = vunpack.c.l.b16 %v1302
        %v1452 = vunpack.c.l.b16 %v1303
        %v1453 = vunpack.c.l.b16 %v1304
        %v1454 = vunpack.c.l.b16 %v1305
        %v1455 = vunpack.c.l.b16 %v1306
        %v1456 = vunpack.c.l.b16 %v1307
        %v1457 = vunpack.c.l.b16 %v1308
        %v1458 = vunpack.c.l.b16 %v1309
        %v1459 = vunpack.c.l.b16 %v1310
        %v1460 = vunpack.c.l.b16 %v1311
        %v1461 = vunpack.c.l.b16 %v1312
        %v1462 = vunpack.c.l.b16 %v1313
        %v1463 = vunpack.c.l.b16 %v1314
        %v1464 = vunpack.c.l.b16 %v1315
        %v1465 = vunpack.c.l.b16 %v1316
        %v1466 = vunpack.c.l.b16 %v1317
        %v1467 = vpack.c.b16 %v1452, %v1451
        %v1468 = vpack.c.b16 %v1454, %v1453
        %v1469 = vpack.c.b16 %v1456, %v1455
        %v1470 = vpack.c.b16 %v1458, %v1457
        %v1471 = vpack.c.b16 %v1460, %v1459
        %v1472 = vpack.c.b16 %v1462, %v1461
        %v1473 = vpack.c.b16 %v1464, %v1463
        %v1474 = vpack.c.b16 %v1466, %v1465
        %1483 = vmatprep.subr.bf16.mxu0 0
        %1484 = vmatpush1.bf16.msra.mxu0 %v1467
        %1485 = vmatprep.subr.bf16.mxu0 0
        %1486 = vmatpush1.bf16.msra.mxu0 %v1468
        %1487 = vmatprep.subr.bf16.mxu0 0
        %1488 = vmatpush1.bf16.msra.mxu0 %v1469
        %1489 = vmatprep.subr.bf16.mxu0 0
        %1490 = vmatpush1.bf16.msra.mxu0 %v1470
        %1491 = vmatprep.subr.bf16.mxu0 0
        %1492 = vmatpush1.bf16.msra.mxu0 %v1471
        %1493 = vmatprep.subr.bf16.mxu0 0
        %1494 = vmatpush1.bf16.msra.mxu0 %v1472
        %1495 = vmatprep.subr.bf16.mxu0 0
        %1496 = vmatpush1.bf16.msra.mxu0 %v1473
        %1497 = vmatprep.subr.bf16.mxu0 0
        %1498 = vmatpush1.bf16.msra.mxu0 %v1474
        %1499 = vmatprep.subr.bf16.mxu0 0
        %1500 = vmatpush1.bf16.msra.mxu0 0
        %1501 = vmatprep.subr.bf16.mxu0 0
        %1502 = vmatpush1.bf16.msra.mxu0 0
        %1503 = vmatprep.subr.bf16.mxu0 0
        %1504 = vmatpush1.bf16.msra.mxu0 0
        %1505 = vmatprep.subr.bf16.mxu0 0
        %1506 = vmatpush1.bf16.msra.mxu0 0
        %1507 = vmatprep.subr.bf16.mxu0 0
        %1508 = vmatpush1.bf16.msra.mxu0 0
        %1509 = vmatprep.subr.bf16.mxu0 0
        %1510 = vmatpush1.bf16.msra.mxu0 0
        %1511 = vmatprep.subr.bf16.mxu0 0
        %1512 = vmatpush1.bf16.msra.mxu0 0
        %1513 = vmatprep.subr.bf16.mxu0 0
        %1514 = vmatpush1.bf16.msra.mxu0 0
        %1515 = vmatprep.mubr.bf16.mxu0 0
        %1516 = vmatmul.mubr.bf16.gmra.mrb[0].mxu0 %v1301
        %v1517 = vpop.f32.mrb[0].mxu0
        %v1518 = vadd.f32 %v1430, %v1517
        %v1519 = vpop.f32.mrb[0].mxu0
        %v1520 = vpop.f32.mrb[0].mxu0
        %v1521 = vpop.f32.mrb[0].mxu0
        %1522 = vdwg.mxu0
        %v1523 = vld [vmem:[%s1300] sm:$0xe]
        %s1524 = scalar_lea.vmem %s2, 128
        %v1525 = vld [vmem:[%s1524] sm:$0xf]
        %v1526 = vld [vmem:[%s1524 + $0x4] sm:$0xf]
        %v1527 = vld [vmem:[%s1524 + $0x8] sm:$0xf]
        %v1528 = vld [vmem:[%s1524 + $0xc] sm:$0xf]
        %v1529 = vld [vmem:[%s1524 + $0x10] sm:$0xf]
        %v1530 = vld [vmem:[%s1524 + $0x14] sm:$0xf]
        %v1531 = vld [vmem:[%s1524 + $0x18] sm:$0xf]
        %v1532 = vld [vmem:[%s1524 + $0x1c] sm:$0xf]
        %v1533 = vld [vmem:[%s1524 + $0x20] sm:$0xf]
        %v1534 = vld [vmem:[%s1524 + $0x24] sm:$0xf]
        %v1535 = vld [vmem:[%s1524 + $0x28] sm:$0xf]
        %v1536 = vld [vmem:[%s1524 + $0x2c] sm:$0xf]
        %v1537 = vld [vmem:[%s1524 + $0x30] sm:$0xf]
        %v1538 = vld [vmem:[%s1524 + $0x34] sm:$0xf]
        %v1539 = vld [vmem:[%s1524 + $0x38] sm:$0xf]
        %v1540 = vld [vmem:[%s1524 + $0x3c] sm:$0xf]
        %v1542 = vunpack.c.l.b16 %v1523
        %v1543 = vpack.c.b16 %v1542, %v1542
        %v1544 = vrot.slane %v1543, 1
        %v1562 = vunpack.c.l.b16 %v1525
        %v1563 = vunpack.c.l.b16 %v1526
        %v1564 = vunpack.c.l.b16 %v1527
        %v1565 = vunpack.c.l.b16 %v1528
        %v1566 = vunpack.c.l.b16 %v1529
        %v1567 = vunpack.c.l.b16 %v1530
        %v1568 = vunpack.c.l.b16 %v1531
        %v1569 = vunpack.c.l.b16 %v1532
        %v1570 = vunpack.c.l.b16 %v1533
        %v1571 = vunpack.c.l.b16 %v1534
        %v1572 = vunpack.c.l.b16 %v1535
        %v1573 = vunpack.c.l.b16 %v1536
        %v1574 = vunpack.c.l.b16 %v1537
        %v1575 = vunpack.c.l.b16 %v1538
        %v1576 = vunpack.c.l.b16 %v1539
        %v1577 = vunpack.c.l.b16 %v1540
        %v1578 = vpack.c.b16 %v1563, %v1562
        %v1579 = vpack.c.b16 %v1565, %v1564
        %v1580 = vpack.c.b16 %v1567, %v1566
        %v1581 = vpack.c.b16 %v1569, %v1568
        %v1582 = vpack.c.b16 %v1571, %v1570
        %v1583 = vpack.c.b16 %v1573, %v1572
        %v1584 = vpack.c.b16 %v1575, %v1574
        %v1585 = vpack.c.b16 %v1577, %v1576
        %1594 = vmatprep.subr.bf16.mxu0 0
        %1595 = vmatpush1.bf16.msra.mxu0 %v1578
        %1596 = vmatprep.subr.bf16.mxu0 0
        %1597 = vmatpush1.bf16.msra.mxu0 %v1579
        %1598 = vmatprep.subr.bf16.mxu0 0
        %1599 = vmatpush1.bf16.msra.mxu0 %v1580
        %1600 = vmatprep.subr.bf16.mxu0 0
        %1601 = vmatpush1.bf16.msra.mxu0 %v1581
        %1602 = vmatprep.subr.bf16.mxu0 0
        %1603 = vmatpush1.bf16.msra.mxu0 %v1582
        %1604 = vmatprep.subr.bf16.mxu0 0
        %1605 = vmatpush1.bf16.msra.mxu0 %v1583
        %1606 = vmatprep.subr.bf16.mxu0 0
        %1607 = vmatpush1.bf16.msra.mxu0 %v1584
        %1608 = vmatprep.subr.bf16.mxu0 0
        %1609 = vmatpush1.bf16.msra.mxu0 %v1585
        %1610 = vmatprep.subr.bf16.mxu0 0
        %1611 = vmatpush1.bf16.msra.mxu0 0
        %1612 = vmatprep.subr.bf16.mxu0 0
        %1613 = vmatpush1.bf16.msra.mxu0 0
        %1614 = vmatprep.subr.bf16.mxu0 0
        %1615 = vmatpush1.bf16.msra.mxu0 0
        %1616 = vmatprep.subr.bf16.mxu0 0
        %1617 = vmatpush1.bf16.msra.mxu0 0
        %1618 = vmatprep.subr.bf16.mxu0 0
        %1619 = vmatpush1.bf16.msra.mxu0 0
        %1620 = vmatprep.subr.bf16.mxu0 0
        %1621 = vmatpush1.bf16.msra.mxu0 0
        %1622 = vmatprep.subr.bf16.mxu0 0
        %1623 = vmatpush1.bf16.msra.mxu0 0
        %1624 = vmatprep.subr.bf16.mxu0 0
        %1625 = vmatpush1.bf16.msra.mxu0 0
        %1626 = vmatprep.mubr.bf16.mxu0 0
        %1627 = vmatmul.mubr.bf16.gmra.mrb[0].mxu0 %v1544
        %v1628 = vpop.f32.mrb[0].mxu0
        %v1629 = vadd.f32 0.0, %v1628
        %v1630 = vpop.f32.mrb[0].mxu0
        %v1631 = vpop.f32.mrb[0].mxu0
        %v1632 = vpop.f32.mrb[0].mxu0
        %1633 = vdwg.mxu0
        %v1634 = vadd.f32 %v1518, %v1629
        %s1635 = sadd.s32 %s1294, 1
        %s1636 = smul.addr %s1635, 4
        %s1637 = scalar_lea.vmem [#allocation3], %s1636
        %v1638 = vld [vmem:[%s1637] sm:$0x7]
        %s1639 = scalar_lea.vmem %s2, 192
        %v1640 = vld [vmem:[%s1639] sm:$0xf]
        %v1641 = vld [vmem:[%s1639 + $0x4] sm:$0xf]
        %v1642 = vld [vmem:[%s1639 + $0x8] sm:$0xf]
        %v1643 = vld [vmem:[%s1639 + $0xc] sm:$0xf]
        %v1644 = vld [vmem:[%s1639 + $0x10] sm:$0xf]
        %v1645 = vld [vmem:[%s1639 + $0x14] sm:$0xf]
        %v1646 = vld [vmem:[%s1639 + $0x18] sm:$0xf]
        %v1647 = vld [vmem:[%s1639 + $0x1c] sm:$0xf]
        %v1648 = vld [vmem:[%s1639 + $0x20] sm:$0xf]
        %v1649 = vld [vmem:[%s1639 + $0x24] sm:$0xf]
        %v1650 = vld [vmem:[%s1639 + $0x28] sm:$0xf]
        %v1651 = vld [vmem:[%s1639 + $0x2c] sm:$0xf]
        %v1652 = vld [vmem:[%s1639 + $0x30] sm:$0xf]
        %v1653 = vld [vmem:[%s1639 + $0x34] sm:$0xf]
        %v1654 = vld [vmem:[%s1639 + $0x38] sm:$0xf]
        %v1655 = vld [vmem:[%s1639 + $0x3c] sm:$0xf]
        %v1672 = vunpack.c.l.b16 %v1640
        %v1673 = vunpack.c.l.b16 %v1641
        %v1674 = vunpack.c.l.b16 %v1642
        %v1675 = vunpack.c.l.b16 %v1643
        %v1676 = vunpack.c.l.b16 %v1644
        %v1677 = vunpack.c.l.b16 %v1645
        %v1678 = vunpack.c.l.b16 %v1646
        %v1679 = vunpack.c.l.b16 %v1647
        %v1680 = vunpack.c.l.b16 %v1648
        %v1681 = vunpack.c.l.b16 %v1649
        %v1682 = vunpack.c.l.b16 %v1650
        %v1683 = vunpack.c.l.b16 %v1651
        %v1684 = vunpack.c.l.b16 %v1652
        %v1685 = vunpack.c.l.b16 %v1653
        %v1686 = vunpack.c.l.b16 %v1654
        %v1687 = vunpack.c.l.b16 %v1655
        %v1688 = vpack.c.b16 %v1673, %v1672
        %v1689 = vpack.c.b16 %v1675, %v1674
        %v1690 = vpack.c.b16 %v1677, %v1676
        %v1691 = vpack.c.b16 %v1679, %v1678
        %v1692 = vpack.c.b16 %v1681, %v1680
        %v1693 = vpack.c.b16 %v1683, %v1682
        %v1694 = vpack.c.b16 %v1685, %v1684
        %v1695 = vpack.c.b16 %v1687, %v1686
        %1704 = vmatprep.subr.bf16.mxu0 0
        %1705 = vmatpush1.bf16.msra.mxu0 %v1688
        %1706 = vmatprep.subr.bf16.mxu0 0
        %1707 = vmatpush1.bf16.msra.mxu0 %v1689
        %1708 = vmatprep.subr.bf16.mxu0 0
        %1709 = vmatpush1.bf16.msra.mxu0 %v1690
        %1710 = vmatprep.subr.bf16.mxu0 0
        %1711 = vmatpush1.bf16.msra.mxu0 %v1691
        %1712 = vmatprep.subr.bf16.mxu0 0
        %1713 = vmatpush1.bf16.msra.mxu0 %v1692
        %1714 = vmatprep.subr.bf16.mxu0 0
        %1715 = vmatpush1.bf16.msra.mxu0 %v1693
        %1716 = vmatprep.subr.bf16.mxu0 0
        %1717 = vmatpush1.bf16.msra.mxu0 %v1694
        %1718 = vmatprep.subr.bf16.mxu0 0
        %1719 = vmatpush1.bf16.msra.mxu0 %v1695
        %1720 = vmatprep.subr.bf16.mxu0 0
        %1721 = vmatpush1.bf16.msra.mxu0 0
        %1722 = vmatprep.subr.bf16.mxu0 0
        %1723 = vmatpush1.bf16.msra.mxu0 0
        %1724 = vmatprep.subr.bf16.mxu0 0
        %1725 = vmatpush1.bf16.msra.mxu0 0
        %1726 = vmatprep.subr.bf16.mxu0 0
        %1727 = vmatpush1.bf16.msra.mxu0 0
        %1728 = vmatprep.subr.bf16.mxu0 0
        %1729 = vmatpush1.bf16.msra.mxu0 0
        %1730 = vmatprep.subr.bf16.mxu0 0
        %1731 = vmatpush1.bf16.msra.mxu0 0
        %1732 = vmatprep.subr.bf16.mxu0 0
        %1733 = vmatpush1.bf16.msra.mxu0 0
        %1734 = vmatprep.subr.bf16.mxu0 0
        %1735 = vmatpush1.bf16.msra.mxu0 0
        %1736 = vmatprep.mubr.bf16.mxu0 0
        %1737 = vmatmul.mubr.bf16.gmra.mrb[0].mxu0 %v1638
        %v1738 = vpop.f32.mrb[0].mxu0
        %v1739 = vadd.f32 0.0, %v1738
        %v1740 = vpop.f32.mrb[0].mxu0
        %v1741 = vpop.f32.mrb[0].mxu0
        %v1742 = vpop.f32.mrb[0].mxu0
        %1743 = vdwg.mxu0
        %v1744 = vadd.f32 %v1634, %v1739
        %v1745 = vld [vmem:[%s1637] sm:$0xf]
        %s1746 = scalar_lea.vmem %s2, 256
        %v1747 = vld [vmem:[%s1746] sm:$0xf]
        %v1748 = vld [vmem:[%s1746 + $0x4] sm:$0xf]
        %v1749 = vld [vmem:[%s1746 + $0x8] sm:$0xf]
        %v1750 = vld [vmem:[%s1746 + $0xc] sm:$0xf]
        %v1751 = vld [vmem:[%s1746 + $0x10] sm:$0xf]
        %v1752 = vld [vmem:[%s1746 + $0x14] sm:$0xf]
        %v1753 = vld [vmem:[%s1746 + $0x18] sm:$0xf]
        %v1754 = vld [vmem:[%s1746 + $0x1c] sm:$0xf]
        %v1755 = vld [vmem:[%s1746 + $0x20] sm:$0xf]
        %v1756 = vld [vmem:[%s1746 + $0x24] sm:$0xf]
        %v1757 = vld [vmem:[%s1746 + $0x28] sm:$0xf]
        %v1758 = vld [vmem:[%s1746 + $0x2c] sm:$0xf]
        %v1759 = vld [vmem:[%s1746 + $0x30] sm:$0xf]
        %v1760 = vld [vmem:[%s1746 + $0x34] sm:$0xf]
        %v1761 = vld [vmem:[%s1746 + $0x38] sm:$0xf]
        %v1762 = vld [vmem:[%s1746 + $0x3c] sm:$0xf]
        %v1764 = vunpack.c.l.b16 %v1745
        %v1765 = vpack.c.b16 %v1764, %v1764
        %v1767 = vshrl.u32 %v1765, 16
        %v1769 = vshll.u32 %v1765, 16
        %v1771 = vrot.slane %v1769, 1
        %v1772 = vor.u32 %v1767, %v1771
        %v1790 = vunpack.c.l.b16 %v1747
        %v1791 = vunpack.c.l.b16 %v1748
        %v1792 = vunpack.c.l.b16 %v1749
        %v1793 = vunpack.c.l.b16 %v1750
        %v1794 = vunpack.c.l.b16 %v1751
        %v1795 = vunpack.c.l.b16 %v1752
        %v1796 = vunpack.c.l.b16 %v1753
        %v1797 = vunpack.c.l.b16 %v1754
        %v1798 = vunpack.c.l.b16 %v1755
        %v1799 = vunpack.c.l.b16 %v1756
        %v1800 = vunpack.c.l.b16 %v1757
        %v1801 = vunpack.c.l.b16 %v1758
        %v1802 = vunpack.c.l.b16 %v1759
        %v1803 = vunpack.c.l.b16 %v1760
        %v1804 = vunpack.c.l.b16 %v1761
        %v1805 = vunpack.c.l.b16 %v1762
        %v1806 = vpack.c.b16 %v1791, %v1790
        %v1807 = vpack.c.b16 %v1793, %v1792
        %v1808 = vpack.c.b16 %v1795, %v1794
        %v1809 = vpack.c.b16 %v1797, %v1796
        %v1810 = vpack.c.b16 %v1799, %v1798
        %v1811 = vpack.c.b16 %v1801, %v1800
        %v1812 = vpack.c.b16 %v1803, %v1802
        %v1813 = vpack.c.b16 %v1805, %v1804
        %1822 = vmatprep.subr.bf16.mxu0 0
        %1823 = vmatpush1.bf16.msra.mxu0 %v1806
        %1824 = vmatprep.subr.bf16.mxu0 0
        %1825 = vmatpush1.bf16.msra.mxu0 %v1807
        %1826 = vmatprep.subr.bf16.mxu0 0
        %1827 = vmatpush1.bf16.msra.mxu0 %v1808
        %1828 = vmatprep.subr.bf16.mxu0 0
        %1829 = vmatpush1.bf16.msra.mxu0 %v1809
        %1830 = vmatprep.subr.bf16.mxu0 0
        %1831 = vmatpush1.bf16.msra.mxu0 %v1810
        %1832 = vmatprep.subr.bf16.mxu0 0
        %1833 = vmatpush1.bf16.msra.mxu0 %v1811
        %1834 = vmatprep.subr.bf16.mxu0 0
        %1835 = vmatpush1.bf16.msra.mxu0 %v1812
        %1836 = vmatprep.subr.bf16.mxu0 0
        %1837 = vmatpush1.bf16.msra.mxu0 %v1813
        %1838 = vmatprep.subr.bf16.mxu0 0
        %1839 = vmatpush1.bf16.msra.mxu0 0
        %1840 = vmatprep.subr.bf16.mxu0 0
        %1841 = vmatpush1.bf16.msra.mxu0 0
        %1842 = vmatprep.subr.bf16.mxu0 0
        %1843 = vmatpush1.bf16.msra.mxu0 0
        %1844 = vmatprep.subr.bf16.mxu0 0
        %1845 = vmatpush1.bf16.msra.mxu0 0
        %1846 = vmatprep.subr.bf16.mxu0 0
        %1847 = vmatpush1.bf16.msra.mxu0 0
        %1848 = vmatprep.subr.bf16.mxu0 0
        %1849 = vmatpush1.bf16.msra.mxu0 0
        %1850 = vmatprep.subr.bf16.mxu0 0
        %1851 = vmatpush1.bf16.msra.mxu0 0
        %1852 = vmatprep.subr.bf16.mxu0 0
        %1853 = vmatpush1.bf16.msra.mxu0 0
        %1854 = vmatprep.mubr.bf16.mxu0 0
        %1855 = vmatmul.mubr.bf16.gmra.mrb[0].mxu0 %v1772
        %v1856 = vpop.f32.mrb[0].mxu0
        %v1857 = vadd.f32 0.0, %v1856
        %v1858 = vpop.f32.mrb[0].mxu0
        %v1859 = vpop.f32.mrb[0].mxu0
        %v1860 = vpop.f32.mrb[0].mxu0
        %1861 = vdwg.mxu0
        %v1862 = vadd.f32 %v1744, %v1857
        %v1863 = vld [vmem:[%s1637] sm:$0xe]
        %s1864 = scalar_lea.vmem %s2, 320
        %v1865 = vld [vmem:[%s1864] sm:$0xf]
        %v1866 = vld [vmem:[%s1864 + $0x4] sm:$0xf]
        %v1867 = vld [vmem:[%s1864 + $0x8] sm:$0xf]
        %v1868 = vld [vmem:[%s1864 + $0xc] sm:$0xf]
        %v1869 = vld [vmem:[%s1864 + $0x10] sm:$0xf]
        %v1870 = vld [vmem:[%s1864 + $0x14] sm:$0xf]
        %v1871 = vld [vmem:[%s1864 + $0x18] sm:$0xf]
        %v1872 = vld [vmem:[%s1864 + $0x1c] sm:$0xf]
        %v1873 = vld [vmem:[%s1864 + $0x20] sm:$0xf]
        %v1874 = vld [vmem:[%s1864 + $0x24] sm:$0xf]
        %v1875 = vld [vmem:[%s1864 + $0x28] sm:$0xf]
        %v1876 = vld [vmem:[%s1864 + $0x2c] sm:$0xf]
        %v1877 = vld [vmem:[%s1864 + $0x30] sm:$0xf]
        %v1878 = vld [vmem:[%s1864 + $0x34] sm:$0xf]
        %v1879 = vld [vmem:[%s1864 + $0x38] sm:$0xf]
        %v1880 = vld [vmem:[%s1864 + $0x3c] sm:$0xf]
        %v1882 = vunpack.c.l.b16 %v1863
        %v1883 = vpack.c.b16 %v1882, %v1882
        %v1884 = vrot.slane %v1883, 1
        %v1902 = vunpack.c.l.b16 %v1865
        %v1903 = vunpack.c.l.b16 %v1866
        %v1904 = vunpack.c.l.b16 %v1867
        %v1905 = vunpack.c.l.b16 %v1868
        %v1906 = vunpack.c.l.b16 %v1869
        %v1907 = vunpack.c.l.b16 %v1870
        %v1908 = vunpack.c.l.b16 %v1871
        %v1909 = vunpack.c.l.b16 %v1872
        %v1910 = vunpack.c.l.b16 %v1873
        %v1911 = vunpack.c.l.b16 %v1874
        %v1912 = vunpack.c.l.b16 %v1875
        %v1913 = vunpack.c.l.b16 %v1876
        %v1914 = vunpack.c.l.b16 %v1877
        %v1915 = vunpack.c.l.b16 %v1878
        %v1916 = vunpack.c.l.b16 %v1879
        %v1917 = vunpack.c.l.b16 %v1880
        %v1918 = vpack.c.b16 %v1903, %v1902
        %v1919 = vpack.c.b16 %v1905, %v1904
        %v1920 = vpack.c.b16 %v1907, %v1906
        %v1921 = vpack.c.b16 %v1909, %v1908
        %v1922 = vpack.c.b16 %v1911, %v1910
        %v1923 = vpack.c.b16 %v1913, %v1912
        %v1924 = vpack.c.b16 %v1915, %v1914
        %v1925 = vpack.c.b16 %v1917, %v1916
        %1934 = vmatprep.subr.bf16.mxu0 0
        %1935 = vmatpush1.bf16.msra.mxu0 %v1918
        %1936 = vmatprep.subr.bf16.mxu0 0
        %1937 = vmatpush1.bf16.msra.mxu0 %v1919
        %1938 = vmatprep.subr.bf16.mxu0 0
        %1939 = vmatpush1.bf16.msra.mxu0 %v1920
        %1940 = vmatprep.subr.bf16.mxu0 0
        %1941 = vmatpush1.bf16.msra.mxu0 %v1921
        %1942 = vmatprep.subr.bf16.mxu0 0
        %1943 = vmatpush1.bf16.msra.mxu0 %v1922
        %1944 = vmatprep.subr.bf16.mxu0 0
        %1945 = vmatpush1.bf16.msra.mxu0 %v1923
        %1946 = vmatprep.subr.bf16.mxu0 0
        %1947 = vmatpush1.bf16.msra.mxu0 %v1924
        %1948 = vmatprep.subr.bf16.mxu0 0
        %1949 = vmatpush1.bf16.msra.mxu0 %v1925
        %1950 = vmatprep.subr.bf16.mxu0 0
        %1951 = vmatpush1.bf16.msra.mxu0 0
        %1952 = vmatprep.subr.bf16.mxu0 0
        %1953 = vmatpush1.bf16.msra.mxu0 0
        %1954 = vmatprep.subr.bf16.mxu0 0
        %1955 = vmatpush1.bf16.msra.mxu0 0
        %1956 = vmatprep.subr.bf16.mxu0 0
        %1957 = vmatpush1.bf16.msra.mxu0 0
        %1958 = vmatprep.subr.bf16.mxu0 0
        %1959 = vmatpush1.bf16.msra.mxu0 0
        %1960 = vmatprep.subr.bf16.mxu0 0
        %1961 = vmatpush1.bf16.msra.mxu0 0
        %1962 = vmatprep.subr.bf16.mxu0 0
        %1963 = vmatpush1.bf16.msra.mxu0 0
        %1964 = vmatprep.subr.bf16.mxu0 0
        %1965 = vmatpush1.bf16.msra.mxu0 0
        %1966 = vmatprep.mubr.bf16.mxu0 0
        %1967 = vmatmul.mubr.bf16.gmra.mrb[0].mxu0 %v1884
        %v1968 = vpop.f32.mrb[0].mxu0
        %v1969 = vadd.f32 0.0, %v1968
        %v1970 = vpop.f32.mrb[0].mxu0
        %v1971 = vpop.f32.mrb[0].mxu0
        %v1972 = vpop.f32.mrb[0].mxu0
        %1973 = vdwg.mxu0
        %v1974 = vadd.f32 %v1862, %v1969
        %s1975 = sadd.s32 %s1294, 2
        %s1976 = smul.addr %s1975, 4
        %s1977 = scalar_lea.vmem [#allocation3], %s1976
        %v1978 = vld [vmem:[%s1977] sm:$0x7]
        %s1979 = scalar_lea.vmem %s2, 384
        %v1980 = vld [vmem:[%s1979] sm:$0xf]
        %v1981 = vld [vmem:[%s1979 + $0x4] sm:$0xf]
        %v1982 = vld [vmem:[%s1979 + $0x8] sm:$0xf]
        %v1983 = vld [vmem:[%s1979 + $0xc] sm:$0xf]
        %v1984 = vld [vmem:[%s1979 + $0x10] sm:$0xf]
        %v1985 = vld [vmem:[%s1979 + $0x14] sm:$0xf]
        %v1986 = vld [vmem:[%s1979 + $0x18] sm:$0xf]
        %v1987 = vld [vmem:[%s1979 + $0x1c] sm:$0xf]
        %v1988 = vld [vmem:[%s1979 + $0x20] sm:$0xf]
        %v1989 = vld [vmem:[%s1979 + $0x24] sm:$0xf]
        %v1990 = vld [vmem:[%s1979 + $0x28] sm:$0xf]
        %v1991 = vld [vmem:[%s1979 + $0x2c] sm:$0xf]
        %v1992 = vld [vmem:[%s1979 + $0x30] sm:$0xf]
        %v1993 = vld [vmem:[%s1979 + $0x34] sm:$0xf]
        %v1994 = vld [vmem:[%s1979 + $0x38] sm:$0xf]
        %v1995 = vld [vmem:[%s1979 + $0x3c] sm:$0xf]
        %v2012 = vunpack.c.l.b16 %v1980
        %v2013 = vunpack.c.l.b16 %v1981
        %v2014 = vunpack.c.l.b16 %v1982
        %v2015 = vunpack.c.l.b16 %v1983
        %v2016 = vunpack.c.l.b16 %v1984
        %v2017 = vunpack.c.l.b16 %v1985
        %v2018 = vunpack.c.l.b16 %v1986
        %v2019 = vunpack.c.l.b16 %v1987
        %v2020 = vunpack.c.l.b16 %v1988
        %v2021 = vunpack.c.l.b16 %v1989
        %v2022 = vunpack.c.l.b16 %v1990
        %v2023 = vunpack.c.l.b16 %v1991
        %v2024 = vunpack.c.l.b16 %v1992
        %v2025 = vunpack.c.l.b16 %v1993
        %v2026 = vunpack.c.l.b16 %v1994
        %v2027 = vunpack.c.l.b16 %v1995
        %v2028 = vpack.c.b16 %v2013, %v2012
        %v2029 = vpack.c.b16 %v2015, %v2014
        %v2030 = vpack.c.b16 %v2017, %v2016
        %v2031 = vpack.c.b16 %v2019, %v2018
        %v2032 = vpack.c.b16 %v2021, %v2020
        %v2033 = vpack.c.b16 %v2023, %v2022
        %v2034 = vpack.c.b16 %v2025, %v2024
        %v2035 = vpack.c.b16 %v2027, %v2026
        %2044 = vmatprep.subr.bf16.mxu0 0
        %2045 = vmatpush1.bf16.msra.mxu0 %v2028
        %2046 = vmatprep.subr.bf16.mxu0 0
        %2047 = vmatpush1.bf16.msra.mxu0 %v2029
        %2048 = vmatprep.subr.bf16.mxu0 0
        %2049 = vmatpush1.bf16.msra.mxu0 %v2030
        %2050 = vmatprep.subr.bf16.mxu0 0
        %2051 = vmatpush1.bf16.msra.mxu0 %v2031
        %2052 = vmatprep.subr.bf16.mxu0 0
        %2053 = vmatpush1.bf16.msra.mxu0 %v2032
        %2054 = vmatprep.subr.bf16.mxu0 0
        %2055 = vmatpush1.bf16.msra.mxu0 %v2033
        %2056 = vmatprep.subr.bf16.mxu0 0
        %2057 = vmatpush1.bf16.msra.mxu0 %v2034
        %2058 = vmatprep.subr.bf16.mxu0 0
        %2059 = vmatpush1.bf16.msra.mxu0 %v2035
        %2060 = vmatprep.subr.bf16.mxu0 0
        %2061 = vmatpush1.bf16.msra.mxu0 0
        %2062 = vmatprep.subr.bf16.mxu0 0
        %2063 = vmatpush1.bf16.msra.mxu0 0
        %2064 = vmatprep.subr.bf16.mxu0 0
        %2065 = vmatpush1.bf16.msra.mxu0 0
        %2066 = vmatprep.subr.bf16.mxu0 0
        %2067 = vmatpush1.bf16.msra.mxu0 0
        %2068 = vmatprep.subr.bf16.mxu0 0
        %2069 = vmatpush1.bf16.msra.mxu0 0
        %2070 = vmatprep.subr.bf16.mxu0 0
        %2071 = vmatpush1.bf16.msra.mxu0 0
        %2072 = vmatprep.subr.bf16.mxu0 0
        %2073 = vmatpush1.bf16.msra.mxu0 0
        %2074 = vmatprep.subr.bf16.mxu0 0
        %2075 = vmatpush1.bf16.msra.mxu0 0
        %2076 = vmatprep.mubr.bf16.mxu0 0
        %2077 = vmatmul.mubr.bf16.gmra.mrb[0].mxu0 %v1978
        %v2078 = vpop.f32.mrb[0].mxu0
        %v2079 = vadd.f32 0.0, %v2078
        %v2080 = vpop.f32.mrb[0].mxu0
        %v2081 = vpop.f32.mrb[0].mxu0
        %v2082 = vpop.f32.mrb[0].mxu0
        %2083 = vdwg.mxu0
        %v2084 = vadd.f32 %v1974, %v2079
        %v2085 = vld [vmem:[%s1977] sm:$0xf]
        %s2086 = scalar_lea.vmem %s2, 448
        %v2087 = vld [vmem:[%s2086] sm:$0xf]
        %v2088 = vld [vmem:[%s2086 + $0x4] sm:$0xf]
        %v2089 = vld [vmem:[%s2086 + $0x8] sm:$0xf]
        %v2090 = vld [vmem:[%s2086 + $0xc] sm:$0xf]
        %v2091 = vld [vmem:[%s2086 + $0x10] sm:$0xf]
        %v2092 = vld [vmem:[%s2086 + $0x14] sm:$0xf]
        %v2093 = vld [vmem:[%s2086 + $0x18] sm:$0xf]
        %v2094 = vld [vmem:[%s2086 + $0x1c] sm:$0xf]
        %v2095 = vld [vmem:[%s2086 + $0x20] sm:$0xf]
        %v2096 = vld [vmem:[%s2086 + $0x24] sm:$0xf]
        %v2097 = vld [vmem:[%s2086 + $0x28] sm:$0xf]
        %v2098 = vld [vmem:[%s2086 + $0x2c] sm:$0xf]
        %v2099 = vld [vmem:[%s2086 + $0x30] sm:$0xf]
        %v2100 = vld [vmem:[%s2086 + $0x34] sm:$0xf]
        %v2101 = vld [vmem:[%s2086 + $0x38] sm:$0xf]
        %v2102 = vld [vmem:[%s2086 + $0x3c] sm:$0xf]
        %v2104 = vunpack.c.l.b16 %v2085
        %v2105 = vpack.c.b16 %v2104, %v2104
        %v2107 = vshrl.u32 %v2105, 16
        %v2109 = vshll.u32 %v2105, 16
        %v2111 = vrot.slane %v2109, 1
        %v2112 = vor.u32 %v2107, %v2111
        %v2130 = vunpack.c.l.b16 %v2087
        %v2131 = vunpack.c.l.b16 %v2088
        %v2132 = vunpack.c.l.b16 %v2089
        %v2133 = vunpack.c.l.b16 %v2090
        %v2134 = vunpack.c.l.b16 %v2091
        %v2135 = vunpack.c.l.b16 %v2092
        %v2136 = vunpack.c.l.b16 %v2093
        %v2137 = vunpack.c.l.b16 %v2094
        %v2138 = vunpack.c.l.b16 %v2095
        %v2139 = vunpack.c.l.b16 %v2096
        %v2140 = vunpack.c.l.b16 %v2097
        %v2141 = vunpack.c.l.b16 %v2098
        %v2142 = vunpack.c.l.b16 %v2099
        %v2143 = vunpack.c.l.b16 %v2100
        %v2144 = vunpack.c.l.b16 %v2101
        %v2145 = vunpack.c.l.b16 %v2102
        %v2146 = vpack.c.b16 %v2131, %v2130
        %v2147 = vpack.c.b16 %v2133, %v2132
        %v2148 = vpack.c.b16 %v2135, %v2134
        %v2149 = vpack.c.b16 %v2137, %v2136
        %v2150 = vpack.c.b16 %v2139, %v2138
        %v2151 = vpack.c.b16 %v2141, %v2140
        %v2152 = vpack.c.b16 %v2143, %v2142
        %v2153 = vpack.c.b16 %v2145, %v2144
        %2162 = vmatprep.subr.bf16.mxu0 0
        %2163 = vmatpush1.bf16.msra.mxu0 %v2146
        %2164 = vmatprep.subr.bf16.mxu0 0
        %2165 = vmatpush1.bf16.msra.mxu0 %v2147
        %2166 = vmatprep.subr.bf16.mxu0 0
        %2167 = vmatpush1.bf16.msra.mxu0 %v2148
        %2168 = vmatprep.subr.bf16.mxu0 0
        %2169 = vmatpush1.bf16.msra.mxu0 %v2149
        %2170 = vmatprep.subr.bf16.mxu0 0
        %2171 = vmatpush1.bf16.msra.mxu0 %v2150
        %2172 = vmatprep.subr.bf16.mxu0 0
        %2173 = vmatpush1.bf16.msra.mxu0 %v2151
        %2174 = vmatprep.subr.bf16.mxu0 0
        %2175 = vmatpush1.bf16.msra.mxu0 %v2152
        %2176 = vmatprep.subr.bf16.mxu0 0
        %2177 = vmatpush1.bf16.msra.mxu0 %v2153
        %2178 = vmatprep.subr.bf16.mxu0 0
        %2179 = vmatpush1.bf16.msra.mxu0 0
        %2180 = vmatprep.subr.bf16.mxu0 0
        %2181 = vmatpush1.bf16.msra.mxu0 0
        %2182 = vmatprep.subr.bf16.mxu0 0
        %2183 = vmatpush1.bf16.msra.mxu0 0
        %2184 = vmatprep.subr.bf16.mxu0 0
        %2185 = vmatpush1.bf16.msra.mxu0 0
        %2186 = vmatprep.subr.bf16.mxu0 0
        %2187 = vmatpush1.bf16.msra.mxu0 0
        %2188 = vmatprep.subr.bf16.mxu0 0
        %2189 = vmatpush1.bf16.msra.mxu0 0
        %2190 = vmatprep.subr.bf16.mxu0 0
        %2191 = vmatpush1.bf16.msra.mxu0 0
        %2192 = vmatprep.subr.bf16.mxu0 0
        %2193 = vmatpush1.bf16.msra.mxu0 0
        %2194 = vmatprep.mubr.bf16.mxu0 0
        %2195 = vmatmul.mubr.bf16.gmra.mrb[0].mxu0 %v2112
        %v2196 = vpop.f32.mrb[0].mxu0
        %v2197 = vadd.f32 0.0, %v2196
        %v2198 = vpop.f32.mrb[0].mxu0
        %v2199 = vpop.f32.mrb[0].mxu0
        %v2200 = vpop.f32.mrb[0].mxu0
        %2201 = vdwg.mxu0
        %v2202 = vadd.f32 %v2084, %v2197
        %v2203 = vld [vmem:[%s1977] sm:$0xe]
        %s2204 = scalar_lea.vmem %s2, 512
        %v2205 = vld [vmem:[%s2204] sm:$0xf]
        %v2206 = vld [vmem:[%s2204 + $0x4] sm:$0xf]
        %v2207 = vld [vmem:[%s2204 + $0x8] sm:$0xf]
        %v2208 = vld [vmem:[%s2204 + $0xc] sm:$0xf]
        %v2209 = vld [vmem:[%s2204 + $0x10] sm:$0xf]
        %v2210 = vld [vmem:[%s2204 + $0x14] sm:$0xf]
        %v2211 = vld [vmem:[%s2204 + $0x18] sm:$0xf]
        %v2212 = vld [vmem:[%s2204 + $0x1c] sm:$0xf]
        %v2213 = vld [vmem:[%s2204 + $0x20] sm:$0xf]
        %v2214 = vld [vmem:[%s2204 + $0x24] sm:$0xf]
        %v2215 = vld [vmem:[%s2204 + $0x28] sm:$0xf]
        %v2216 = vld [vmem:[%s2204 + $0x2c] sm:$0xf]
        %v2217 = vld [vmem:[%s2204 + $0x30] sm:$0xf]
        %v2218 = vld [vmem:[%s2204 + $0x34] sm:$0xf]
        %v2219 = vld [vmem:[%s2204 + $0x38] sm:$0xf]
        %v2220 = vld [vmem:[%s2204 + $0x3c] sm:$0xf]
        %v2222 = vunpack.c.l.b16 %v2203
        %v2223 = vpack.c.b16 %v2222, %v2222
        %v2224 = vrot.slane %v2223, 1
        %v2242 = vunpack.c.l.b16 %v2205
        %v2243 = vunpack.c.l.b16 %v2206
        %v2244 = vunpack.c.l.b16 %v2207
        %v2245 = vunpack.c.l.b16 %v2208
        %v2246 = vunpack.c.l.b16 %v2209
        %v2247 = vunpack.c.l.b16 %v2210
        %v2248 = vunpack.c.l.b16 %v2211
        %v2249 = vunpack.c.l.b16 %v2212
        %v2250 = vunpack.c.l.b16 %v2213
        %v2251 = vunpack.c.l.b16 %v2214
        %v2252 = vunpack.c.l.b16 %v2215
        %v2253 = vunpack.c.l.b16 %v2216
        %v2254 = vunpack.c.l.b16 %v2217
        %v2255 = vunpack.c.l.b16 %v2218
        %v2256 = vunpack.c.l.b16 %v2219
        %v2257 = vunpack.c.l.b16 %v2220
        %v2258 = vpack.c.b16 %v2243, %v2242
        %v2259 = vpack.c.b16 %v2245, %v2244
        %v2260 = vpack.c.b16 %v2247, %v2246
        %v2261 = vpack.c.b16 %v2249, %v2248
        %v2262 = vpack.c.b16 %v2251, %v2250
        %v2263 = vpack.c.b16 %v2253, %v2252
        %v2264 = vpack.c.b16 %v2255, %v2254
        %v2265 = vpack.c.b16 %v2257, %v2256
        %2274 = vmatprep.subr.bf16.mxu0 0
        %2275 = vmatpush1.bf16.msra.mxu0 %v2258
        %2276 = vmatprep.subr.bf16.mxu0 0
        %2277 = vmatpush1.bf16.msra.mxu0 %v2259
        %2278 = vmatprep.subr.bf16.mxu0 0
        %2279 = vmatpush1.bf16.msra.mxu0 %v2260
        %2280 = vmatprep.subr.bf16.mxu0 0
        %2281 = vmatpush1.bf16.msra.mxu0 %v2261
        %2282 = vmatprep.subr.bf16.mxu0 0
        %2283 = vmatpush1.bf16.msra.mxu0 %v2262
        %2284 = vmatprep.subr.bf16.mxu0 0
        %2285 = vmatpush1.bf16.msra.mxu0 %v2263
        %2286 = vmatprep.subr.bf16.mxu0 0
        %2287 = vmatpush1.bf16.msra.mxu0 %v2264
        %2288 = vmatprep.subr.bf16.mxu0 0
        %2289 = vmatpush1.bf16.msra.mxu0 %v2265
        %2290 = vmatprep.subr.bf16.mxu0 0
        %2291 = vmatpush1.bf16.msra.mxu0 0
        %2292 = vmatprep.subr.bf16.mxu0 0
        %2293 = vmatpush1.bf16.msra.mxu0 0
        %2294 = vmatprep.subr.bf16.mxu0 0
        %2295 = vmatpush1.bf16.msra.mxu0 0
        %2296 = vmatprep.subr.bf16.mxu0 0
        %2297 = vmatpush1.bf16.msra.mxu0 0
        %2298 = vmatprep.subr.bf16.mxu0 0
        %2299 = vmatpush1.bf16.msra.mxu0 0
        %2300 = vmatprep.subr.bf16.mxu0 0
        %2301 = vmatpush1.bf16.msra.mxu0 0
        %2302 = vmatprep.subr.bf16.mxu0 0
        %2303 = vmatpush1.bf16.msra.mxu0 0
        %2304 = vmatprep.subr.bf16.mxu0 0
        %2305 = vmatpush1.bf16.msra.mxu0 0
        %2306 = vmatprep.mubr.bf16.mxu0 0
        %2307 = vmatmul.mubr.bf16.gmra.mrb[0].mxu0 %v2224
        %v2308 = vpop.f32.mrb[0].mxu0
        %v2309 = vadd.f32 0.0, %v2308
        %v2310 = vpop.f32.mrb[0].mxu0
        %v2311 = vpop.f32.mrb[0].mxu0
        %v2312 = vpop.f32.mrb[0].mxu0
        %2313 = vdwg.mxu0
        %v2314 = vadd.f32 %v2202, %v2309
        %v2315 = vld [vmem:[%s4] sm:$0x1]
        %v2317 = vlaneseq
        %v2318 = vshrl.u32 %v2317, 7
        %v2319 = vsub.s32 0, %v2318
        %v2320 = vrot.slane %v2315, %v2319
        %v2322 = vadd.f32 %v2314, %v2320
        %v2323 = vmax.f32 %v2322, 0.0
        %s2324 = smul.u32 %s1635, 8
        %s2325 = scalar_lea.vmem [#allocation2], %s2324
        %2326 = vst [vmem:[%s2325 + $0x1] sm:$0x3f] %v2323
        %2327 = vst [vmem:[%s2325 - $0x1] sm:$0x2] %v2323
        %2328 = vst [vmem:[%s2325 + $0x3] sm:$0x10] %v2323
      $region52: #{_lambda_.5} parent=39 // loop_footer
        %s1298 = sadd.s32 1, %s1294
      $region53: #{_lambda_.5} parent=39 // loop_footer_branch
        %1293 = sbr.rel target = $region49
      $region54: #{_lambda_.5} parent=39 // loop_exit
        _
      %v2329 = vld [vmem:[%s1262] sm:$0xff]
      %2330 = vst [vmem:[#allocation2] sm:$0xff] %v2329
      %v2331 = vld [vmem:[%s1265] sm:$0xff]
      %2332 = vst [vmem:[%s1267] sm:$0xff] %v2331
      %v2333 = vld [vmem:[#allocation2] sm:$0xff]
      %v2334 = vld [vmem:[#allocation2 + $0x8] sm:$0xff]
      %v2335 = vld [vmem:[#allocation2 + $0x10] sm:$0xff]
      %v2336 = vld [vmem:[#allocation2 + $0x18] sm:$0xff]
      %v2337 = vld [vmem:[#allocation2 + $0x20] sm:$0xff]
      %v2338 = vld [vmem:[#allocation2 + $0x28] sm:$0xff]
      %v2339 = vld [vmem:[#allocation2 + $0x30] sm:$0xff]
      %v2340 = vld [vmem:[#allocation2 + $0x38] sm:$0xff]
      %v2341 = vpack.c.bf16 %v2333, %v2333
      %v2342 = vpack.c.bf16 %v2334, %v2334
      %v2343 = vpack.c.bf16 %v2335, %v2335
      %v2344 = vpack.c.bf16 %v2336, %v2336
      %v2345 = vpack.c.bf16 %v2337, %v2337
      %v2346 = vpack.c.bf16 %v2338, %v2338
      %v2347 = vpack.c.bf16 %v2339, %v2339
      %v2348 = vpack.c.bf16 %v2340, %v2340
      %2349 = vst [vmem:[%s224] sm:$0xf] %v2341
      %2350 = vst [vmem:[%s224 + $0x4] sm:$0xf] %v2342
      %2351 = vst [vmem:[%s224 + $0x8] sm:$0xf] %v2343
      %2352 = vst [vmem:[%s224 + $0xc] sm:$0xf] %v2344
      %2353 = vst [vmem:[%s224 + $0x10] sm:$0xf] %v2345
      %2354 = vst [vmem:[%s224 + $0x14] sm:$0xf] %v2346
      %2355 = vst [vmem:[%s224 + $0x18] sm:$0xf] %v2347
      %2356 = vst [vmem:[%s224 + $0x1c] sm:$0xf] %v2348
      %p2357 = scmp.lt.s32.totalorder %s16, 1
      %s2358 = scalar_select %p2357, %s16, 1
      %s2359 = smul.addr %s2358, 8
      %s2360 = smul.addr %s2359, 4
      %s2361 = scalar_lea.vmem %s5, %s2360
      // Predicated region
      $region55: #{_lambda_.5} parent=39 // pred_check
        %p2362 = pneg %p144
      $region56: #{_lambda_.5} parent=39 // pred_check_branch
        %2364 = sbr.rel (%p2362) target = $region58
      $region57: #{_lambda_.5} parent=39 // pred_region
        _
      $region58: #{_lambda_.5} parent=39 // pred_fallthru
        _
    $region40: #{_lambda_.5} parent=5 // pred_fallthru
      _
    %p2365 = scmp.le.s32.totalorder 2, %s11
    // Predicated region
    $region59: #{_lambda_.5} parent=5 // pred_check
      %p2366 = pneg %p2365
    $region60: #{_lambda_.5} parent=5 // pred_check_branch
      %2368 = sbr.rel (%p2366) target = $region62
    $region61: #{_lambda_.5} parent=5 // pred_region
      %s2369 = ssub.s32 %s11, 2
      // Predicated region
      $region63: #{_lambda_.5} parent=61 // pred_check
        %p2370 = pneg %p150
      $region64: #{_lambda_.5} parent=61 // pred_check_branch
        %2372 = sbr.rel (%p2370) target = $region66
      $region65: #{_lambda_.5} parent=61 // pred_region
        %p2373 = scmp.lt.s32.totalorder %s17, 1
        %s2374 = scalar_select %p2373, %s17, 1
        %s2375 = smul.addr %s2374, 8
        %s2376 = smul.addr %s2375, 4
        %s2377 = scalar_lea.vmem %s5, %s2376
      $region66: #{_lambda_.5} parent=61 // pred_fallthru
        _
    $region62: #{_lambda_.5} parent=5 // pred_fallthru
      _
  $region6: #{_lambda_.5} parent=0 // loop_footer
    %s15 = sadd.s32 1, %s11
  $region7: #{_lambda_.5} parent=0 // loop_footer_branch
    %10 = sbr.rel target = $region3
  $region8: #{_lambda_.5} parent=0 // loop_exit
    _

// kernel: _lambda_.6
$region0: #{_lambda_.6}
  #allocation0 [shape = 'u32[]', space=smem, size = 0x4, offset = 0x4, fixed_abs, tag = 'smem constant byte address 0x4 - core index']
  #allocation1 [shape = 'u32[144,128]{1,0:T(1,128)}', space=vmem, size = 0x12000, scoped, tag = 'internal scratch']
  #allocation2 [shape = 'f32[16,16,128]{2,1,0:T(8,128)}', space=vmem, size = 0x20000, scoped, tag = 'scratch operand']
  #allocation3 [shape = 'bf16[16,16,128]{2,1,0:T(16,128)(2,1)}', space=vmem, size = 0x10000, scoped, tag = 'scratch operand']
  %s0 = inlined_call_operand.vmem [shape: bf16[2,16,16,128], index: 0, kind: input, shape index: {}]
  %s1 = inlined_call_operand.vmem [shape: bf16[2,16,16,128], index: 1, kind: input, shape index: {}]
  %s2 = inlined_call_operand.vmem [shape: bf16[9,128,128], index: 2, kind: input, shape index: {}]
  %s3 = inlined_call_operand.vmem [shape: bf16[9,128,128], index: 3, kind: input, shape index: {}]
  %s4 = inlined_call_operand.vmem [shape: bf16[9,128,128], index: 4, kind: input, shape index: {}]
  %s5 = inlined_call_operand.vmem [shape: f32[1,128], index: 5, kind: input, shape index: {}]
  %s6 = inlined_call_operand.vmem [shape: f32[1,128], index: 6, kind: input, shape index: {}]
  %s7 = inlined_call_operand.vmem [shape: bf16[2,16,16,128], index: 7, kind: output, shape index: {}]
  %s8 = sld [smem:[#allocation0]]
  $region75: #{_lambda_.6} parent=0
    _
  %s10 = ssub.s32 1, %s8
  %s11 = scalar_select 0, %s10, %s8
  loop: start=0, step=1, limit=4
  $region2: #{_lambda_.6} parent=0 // loop_pre_header
    _
  $region3: #{_lambda_.6} parent=0 // loop_header
    %s13 = sphi 0, %s17
    %p14 = scmp.ge.s32.totalorder %s13, 4
    %s23 = sphi 0, %s25
    %s26 = sphi 0, %s23
    %s27 = sphi 0, %s26
    %s43 = sphi 0, %s27
    %s49 = sphi 0, %s51
    %s52 = sphi 0, %s49
    %s53 = sphi 0, %s52
    %s69 = sphi 0, %s53
    %s73 = sphi 0, %s73
    %s75 = sphi 0, %s73
    %s76 = sphi 0, %s75
    %s90 = sphi 0, %s76
    %s94 = sphi 0, %s94
    %s96 = sphi 0, %s94
    %s97 = sphi 0, %s96
    %s111 = sphi 0, %s97
    %s115 = sphi 0, %s115
    %s117 = sphi 0, %s115
    %s118 = sphi 0, %s117
    %s132 = sphi 0, %s118
    %s136 = sphi 0, %s136
    %s138 = sphi 0, %s136
    %s139 = sphi 0, %s138
    %s153 = sphi 0, %s139
    %s157 = sphi 0, %s157
    %s159 = sphi 0, %s157
    %s160 = sphi 0, %s159
    %s174 = sphi 0, %s160
    %s180 = sphi 0, %s182
    %s183 = sphi 0, %s180
    %s184 = sphi 0, %s183
    %s200 = sphi 0, %s184
  $region4: #{_lambda_.6} parent=0 // loop_header_branch
    %16 = sbr.rel (%p14) target = $region8
  $region5: #{_lambda_.6} parent=0 // loop_body
    %s18 = ssub.s32 %s13, 1
    %s19 = ssub.s32 %s13, 2
    %s20 = sadd.s32 %s13, 1
    %s21 = ssub.s32 %s13, %s20
    %p22 = scmp.eq.s32.totalorder %s21, 0
    %s24 = sadd.s32 %s23, 1
    %s25 = scalar_select %p22, %s23, %s24
    %p28 = pneg %p22
    %p29 = scmp.eq.s32.totalorder %s13, 1
    %p30 = por %p28, %p29
    %p31 = scmp.ne.s32.totalorder %s23, %s26
    %p32 = scmp.eq.s32.totalorder %s13, 0
    %p33 = por %p31, %p32
    %p34 = scmp.ne.s32.totalorder %s23, %s26
    %p35 = scmp.eq.s32.totalorder %s18, 1
    %p36 = por %p34, %p35
    %p37 = scmp.ne.s32.totalorder %s26, %s27
    %p38 = scmp.eq.s32.totalorder %s18, 0
    %p39 = por %p37, %p38
    %p40 = scmp.ne.s32.totalorder %s26, %s27
    %p41 = scmp.eq.s32.totalorder %s19, 1
    %p42 = por %p40, %p41
    %p44 = scmp.ne.s32.totalorder %s27, %s43
    %p45 = scmp.eq.s32.totalorder %s19, 0
    %p46 = por %p44, %p45
    %s47 = ssub.s32 %s13, %s20
    %p48 = scmp.eq.s32.totalorder %s47, 0
    %s50 = sadd.s32 %s49, 1
    %s51 = scalar_select %p48, %s49, %s50
    %p54 = pneg %p48
    %p55 = scmp.eq.s32.totalorder %s13, 1
    %p56 = por %p54, %p55
    %p57 = scmp.ne.s32.totalorder %s49, %s52
    %p58 = scmp.eq.s32.totalorder %s13, 0
    %p59 = por %p57, %p58
    %p60 = scmp.ne.s32.totalorder %s49, %s52
    %p61 = scmp.eq.s32.totalorder %s18, 1
    %p62 = por %p60, %p61
    %p63 = scmp.ne.s32.totalorder %s52, %s53
    %p64 = scmp.eq.s32.totalorder %s18, 0
    %p65 = por %p63, %p64
    %p66 = scmp.ne.s32.totalorder %s52, %s53
    %p67 = scmp.eq.s32.totalorder %s19, 1
    %p68 = por %p66, %p67
    %p70 = scmp.ne.s32.totalorder %s53, %s69
    %p71 = scmp.eq.s32.totalorder %s19, 0
    %p72 = por %p70, %p71
    %s74 = sadd.s32 %s73, 1
    %p77 = scmp.eq.s32.totalorder %s13, 1
    %p78 = scmp.ne.s32.totalorder %s73, %s75
    %p79 = scmp.eq.s32.totalorder %s13, 0
    %p80 = por %p78, %p79
    %p81 = scmp.ne.s32.totalorder %s73, %s75
    %p82 = scmp.eq.s32.totalorder %s18, 1
    %p83 = por %p81, %p82
    %p84 = scmp.ne.s32.totalorder %s75, %s76
    %p85 = scmp.eq.s32.totalorder %s18, 0
    %p86 = por %p84, %p85
    %p87 = scmp.ne.s32.totalorder %s75, %s76
    %p88 = scmp.eq.s32.totalorder %s19, 1
    %p89 = por %p87, %p88
    %p91 = scmp.ne.s32.totalorder %s76, %s90
    %p92 = scmp.eq.s32.totalorder %s19, 0
    %p93 = por %p91, %p92
    %s95 = sadd.s32 %s94, 1
    %p98 = scmp.eq.s32.totalorder %s13, 1
    %p99 = scmp.ne.s32.totalorder %s94, %s96
    %p100 = scmp.eq.s32.totalorder %s13, 0
    %p101 = por %p99, %p100
    %p102 = scmp.ne.s32.totalorder %s94, %s96
    %p103 = scmp.eq.s32.totalorder %s18, 1
    %p104 = por %p102, %p103
    %p105 = scmp.ne.s32.totalorder %s96, %s97
    %p106 = scmp.eq.s32.totalorder %s18, 0
    %p107 = por %p105, %p106
    %p108 = scmp.ne.s32.totalorder %s96, %s97
    %p109 = scmp.eq.s32.totalorder %s19, 1
    %p110 = por %p108, %p109
    %p112 = scmp.ne.s32.totalorder %s97, %s111
    %p113 = scmp.eq.s32.totalorder %s19, 0
    %p114 = por %p112, %p113
    %s116 = sadd.s32 %s115, 1
    %p119 = scmp.eq.s32.totalorder %s13, 1
    %p120 = scmp.ne.s32.totalorder %s115, %s117
    %p121 = scmp.eq.s32.totalorder %s13, 0
    %p122 = por %p120, %p121
    %p123 = scmp.ne.s32.totalorder %s115, %s117
    %p124 = scmp.eq.s32.totalorder %s18, 1
    %p125 = por %p123, %p124
    %p126 = scmp.ne.s32.totalorder %s117, %s118
    %p127 = scmp.eq.s32.totalorder %s18, 0
    %p128 = por %p126, %p127
    %p129 = scmp.ne.s32.totalorder %s117, %s118
    %p130 = scmp.eq.s32.totalorder %s19, 1
    %p131 = por %p129, %p130
    %p133 = scmp.ne.s32.totalorder %s118, %s132
    %p134 = scmp.eq.s32.totalorder %s19, 0
    %p135 = por %p133, %p134
    %s137 = sadd.s32 %s136, 1
    %p140 = scmp.eq.s32.totalorder %s13, 1
    %p141 = scmp.ne.s32.totalorder %s136, %s138
    %p142 = scmp.eq.s32.totalorder %s13, 0
    %p143 = por %p141, %p142
    %p144 = scmp.ne.s32.totalorder %s136, %s138
    %p145 = scmp.eq.s32.totalorder %s18, 1
    %p146 = por %p144, %p145
    %p147 = scmp.ne.s32.totalorder %s138, %s139
    %p148 = scmp.eq.s32.totalorder %s18, 0
    %p149 = por %p147, %p148
    %p150 = scmp.ne.s32.totalorder %s138, %s139
    %p151 = scmp.eq.s32.totalorder %s19, 1
    %p152 = por %p150, %p151
    %p154 = scmp.ne.s32.totalorder %s139, %s153
    %p155 = scmp.eq.s32.totalorder %s19, 0
    %p156 = por %p154, %p155
    %s158 = sadd.s32 %s157, 1
    %p161 = scmp.eq.s32.totalorder %s13, 1
    %p162 = scmp.ne.s32.totalorder %s157, %s159
    %p163 = scmp.eq.s32.totalorder %s13, 0
    %p164 = por %p162, %p163
    %p165 = scmp.ne.s32.totalorder %s157, %s159
    %p166 = scmp.eq.s32.totalorder %s18, 1
    %p167 = por %p165, %p166
    %p168 = scmp.ne.s32.totalorder %s159, %s160
    %p169 = scmp.eq.s32.totalorder %s18, 0
    %p170 = por %p168, %p169
    %p171 = scmp.ne.s32.totalorder %s159, %s160
    %p172 = scmp.eq.s32.totalorder %s19, 1
    %p173 = por %p171, %p172
    %p175 = scmp.ne.s32.totalorder %s160, %s174
    %p176 = scmp.eq.s32.totalorder %s19, 0
    %p177 = por %p175, %p176
    %s178 = ssub.s32 %s13, %s20
    %p179 = scmp.eq.s32.totalorder %s178, 0
    %s181 = sadd.s32 %s180, 1
    %s182 = scalar_select %p179, %s180, %s181
    %p185 = pneg %p179
    %p186 = scmp.eq.s32.totalorder %s13, 1
    %p187 = por %p185, %p186
    %p188 = scmp.ne.s32.totalorder %s180, %s183
    %p189 = scmp.eq.s32.totalorder %s13, 0
    %p190 = por %p188, %p189
    %p191 = scmp.ne.s32.totalorder %s180, %s183
    %p192 = scmp.eq.s32.totalorder %s18, 1
    %p193 = por %p191, %p192
    %p194 = scmp.ne.s32.totalorder %s183, %s184
    %p195 = scmp.eq.s32.totalorder %s18, 0
    %p196 = por %p194, %p195
    %p197 = scmp.ne.s32.totalorder %s183, %s184
    %p198 = scmp.eq.s32.totalorder %s19, 1
    %p199 = por %p197, %p198
    %p201 = scmp.ne.s32.totalorder %s184, %s200
    %p202 = scmp.eq.s32.totalorder %s19, 0
    %p203 = por %p201, %p202
    %p204 = scmp.le.s32.totalorder 1, %s13
    %p205 = scmp.lt.s32.totalorder %s13, 3
    %p206 = pnand %p204, %p205
    %p207 = pneg %p206
    // Predicated region
    $region9: #{_lambda_.6} parent=5 // pred_check
      _
    $region10: #{_lambda_.6} parent=5 // pred_check_branch
      %209 = sbr.rel (%p206) target = $region12
    $region11: #{_lambda_.6} parent=5 // pred_region
      %s210 = ssub.s32 %s13, 1
      // Predicated region
      $region13: #{_lambda_.6} parent=11 // pred_check
        %p211 = pneg %p86
      $region14: #{_lambda_.6} parent=11 // pred_check_branch
        %213 = sbr.rel (%p211) target = $region16
      $region15: #{_lambda_.6} parent=11 // pred_region
        _
      $region16: #{_lambda_.6} parent=11 // pred_fallthru
        _
      // Predicated region
      $region17: #{_lambda_.6} parent=11 // pred_check
        %p214 = pneg %p107
      $region18: #{_lambda_.6} parent=11 // pred_check_branch
        %216 = sbr.rel (%p214) target = $region20
      $region19: #{_lambda_.6} parent=11 // pred_region
        _
      $region20: #{_lambda_.6} parent=11 // pred_fallthru
        _
      // Predicated region
      $region21: #{_lambda_.6} parent=11 // pred_check
        %p217 = pneg %p128
      $region22: #{_lambda_.6} parent=11 // pred_check_branch
        %219 = sbr.rel (%p217) target = $region24
      $region23: #{_lambda_.6} parent=11 // pred_region
        _
      $region24: #{_lambda_.6} parent=11 // pred_fallthru
        _
      // Predicated region
      $region25: #{_lambda_.6} parent=11 // pred_check
        %p220 = pneg %p149
      $region26: #{_lambda_.6} parent=11 // pred_check_branch
        %222 = sbr.rel (%p220) target = $region28
      $region27: #{_lambda_.6} parent=11 // pred_region
        _
      $region28: #{_lambda_.6} parent=11 // pred_fallthru
        _
      // Predicated region
      $region29: #{_lambda_.6} parent=11 // pred_check
        %p223 = pneg %p170
      $region30: #{_lambda_.6} parent=11 // pred_check_branch
        %225 = sbr.rel (%p223) target = $region32
      $region31: #{_lambda_.6} parent=11 // pred_region
        _
      $region32: #{_lambda_.6} parent=11 // pred_fallthru
        _
    $region12: #{_lambda_.6} parent=5 // pred_fallthru
      _
    %p226 = scmp.lt.s32.totalorder %s13, 2
    // Predicated region
    $region33: #{_lambda_.6} parent=5 // pred_check
      %p227 = pneg %p226
    $region34: #{_lambda_.6} parent=5 // pred_check_branch
      %229 = sbr.rel (%p227) target = $region36
    $region35: #{_lambda_.6} parent=5 // pred_region
      // Predicated region
      $region37: #{_lambda_.6} parent=35 // pred_check
        %p230 = pneg %p33
      $region38: #{_lambda_.6} parent=35 // pred_check_branch
        %232 = sbr.rel (%p230) target = $region40
      $region39: #{_lambda_.6} parent=35 // pred_region
        %p233 = scmp.lt.s32.totalorder %s13, 1
        %s234 = scalar_select %p233, %s13, 1
        %s235 = smul.addr %s234, 32
        %s236 = smul.addr %s235, 4
        %s237 = scalar_lea.vmem %s0, %s236
      $region40: #{_lambda_.6} parent=35 // pred_fallthru
        _
      // Predicated region
      $region41: #{_lambda_.6} parent=35 // pred_check
        %p238 = pneg %p59
      $region42: #{_lambda_.6} parent=35 // pred_check_branch
        %240 = sbr.rel (%p238) target = $region44
      $region43: #{_lambda_.6} parent=35 // pred_region
        %p241 = scmp.lt.s32.totalorder %s13, 1
        %s242 = scalar_select %p241, %s13, 1
        %s243 = smul.addr %s242, 32
        %s244 = smul.addr %s243, 4
        %s245 = scalar_lea.vmem %s1, %s244
      $region44: #{_lambda_.6} parent=35 // pred_fallthru
        _
    $region36: #{_lambda_.6} parent=5 // pred_fallthru
      _
    %p246 = scmp.le.s32.totalorder 1, %s13
    %p247 = scmp.lt.s32.totalorder %s13, 3
    %p248 = pnand %p246, %p247
    %p249 = pneg %p248
    // Predicated region
    $region45: #{_lambda_.6} parent=5 // pred_check
      _
    $region46: #{_lambda_.6} parent=5 // pred_check_branch
      %251 = sbr.rel (%p248) target = $region48
    $region47: #{_lambda_.6} parent=5 // pred_region
      %s252 = ssub.s32 %s13, 1
      %p253 = scmp.lt.s32.totalorder %s18, 1
      %s254 = scalar_select %p253, %s18, 1
      %s255 = smul.addr %s254, 32
      %s256 = smul.addr %s255, 4
      %s257 = scalar_lea.vmem %s0, %s256
      %p258 = pneg %p39
      %p259 = pneg %p36
      %p260 = scmp.lt.s32.totalorder %s18, 1
      %s261 = scalar_select %p260, %s18, 1
      %s262 = smul.addr %s261, 32
      %s263 = smul.addr %s262, 4
      %s264 = scalar_lea.vmem %s1, %s263
      %p265 = pneg %p65
      %p266 = pneg %p62
      %p267 = pneg %p86
      %p268 = pneg %p83
      %p269 = pneg %p107
      %p270 = pneg %p104
      %p271 = pneg %p128
      %p272 = pneg %p125
      %p273 = pneg %p149
      %p274 = pneg %p146
      %p275 = pneg %p170
      %p276 = pneg %p167
      %p277 = pneg %p196
      %p278 = pneg %p193
      %p279 = scmp.lt.s32.totalorder %s18, 1
      %s280 = scalar_select %p279, %s18, 1
      %s281 = smul.addr %s280, 32
      %s282 = smul.addr %s281, 4
      %s283 = scalar_lea.vmem %s7, %s282
      %p284 = scmp.lt.s32.totalorder %s18, 1
      %s285 = scalar_select %p284, %s18, 1
      %s286 = smul.addr %s285, 32
      %s287 = smul.addr %s286, 4
      %s288 = scalar_lea.vmem %s0, %s287
      %p289 = scmp.lt.s32.totalorder %s18, 1
      %s290 = scalar_select %p289, %s18, 1
      %s291 = smul.addr %s290, 32
      %s292 = smul.addr %s291, 4
      %s293 = scalar_lea.vmem %s1, %s292
      %p294 = scmp.lt.s32.totalorder %s18, 1
      %s295 = scalar_select %p294, %s18, 1
      %s296 = smul.addr %s295, 32
      %s297 = smul.addr %s296, 4
      %s298 = scalar_lea.vmem %s7, %s297
      loop: start=0, step=1, limit=14
      $region49: #{_lambda_.6} parent=47 // loop_pre_header
        _
      $region50: #{_lambda_.6} parent=47 // loop_header
        %s301 = sphi 0, %s305
        %p302 = scmp.ge.s32.totalorder %s301, 14
      $region51: #{_lambda_.6} parent=47 // loop_header_branch
        %304 = sbr.rel (%p302) target = $region55
      $region52: #{_lambda_.6} parent=47 // loop_body
        %s306 = smul.u32 %s301, 2
        %s307 = smul.addr %s306, 4
        %s308 = scalar_lea.vmem %s288, %s307
        %v309 = vld [vmem:[%s308] sm:$0xf]
        %v310 = vld [vmem:[%s308 + $0x4] sm:$0x7]
        %v311 = vld [vmem:[%s2] sm:$0xf]
        %v312 = vld [vmem:[%s2 + $0x4] sm:$0xf]
        %v313 = vld [vmem:[%s2 + $0x8] sm:$0xf]
        %v314 = vld [vmem:[%s2 + $0xc] sm:$0xf]
        %v315 = vld [vmem:[%s2 + $0x10] sm:$0xf]
        %v316 = vld [vmem:[%s2 + $0x14] sm:$0xf]
        %v317 = vld [vmem:[%s2 + $0x18] sm:$0xf]
        %v318 = vld [vmem:[%s2 + $0x1c] sm:$0xf]
        %v319 = vld [vmem:[%s2 + $0x20] sm:$0xf]
        %v320 = vld [vmem:[%s2 + $0x24] sm:$0xf]
        %v321 = vld [vmem:[%s2 + $0x28] sm:$0xf]
        %v322 = vld [vmem:[%s2 + $0x2c] sm:$0xf]
        %v323 = vld [vmem:[%s2 + $0x30] sm:$0xf]
        %v324 = vld [vmem:[%s2 + $0x34] sm:$0xf]
        %v325 = vld [vmem:[%s2 + $0x38] sm:$0xf]
        %v326 = vld [vmem:[%s2 + $0x3c] sm:$0xf]
        %s327 = smul.addr %s306, 4
        %s328 = scalar_lea.vmem %s293, %s327
        %v329 = vld [vmem:[%s328] sm:$0xf]
        %v330 = vld [vmem:[%s328 + $0x4] sm:$0x7]
        %v331 = vld [vmem:[%s3] sm:$0xf]
        %v332 = vld [vmem:[%s3 + $0x4] sm:$0xf]
        %v333 = vld [vmem:[%s3 + $0x8] sm:$0xf]
        %v334 = vld [vmem:[%s3 + $0xc] sm:$0xf]
        %v335 = vld [vmem:[%s3 + $0x10] sm:$0xf]
        %v336 = vld [vmem:[%s3 + $0x14] sm:$0xf]
        %v337 = vld [vmem:[%s3 + $0x18] sm:$0xf]
        %v338 = vld [vmem:[%s3 + $0x1c] sm:$0xf]
        %v339 = vld [vmem:[%s3 + $0x20] sm:$0xf]
        %v340 = vld [vmem:[%s3 + $0x24] sm:$0xf]
        %v341 = vld [vmem:[%s3 + $0x28] sm:$0xf]
        %v342 = vld [vmem:[%s3 + $0x2c] sm:$0xf]
        %v343 = vld [vmem:[%s3 + $0x30] sm:$0xf]
        %v344 = vld [vmem:[%s3 + $0x34] sm:$0xf]
        %v345 = vld [vmem:[%s3 + $0x38] sm:$0xf]
        %v346 = vld [vmem:[%s3 + $0x3c] sm:$0xf]
        %v349 = vunpack.c.l.b16 %v329
        %v350 = vunpack.c.l.b16 %v330
        %v351 = vpack.c.b16 %v350, %v349
        %v369 = vunpack.c.l.b16 %v331
        %v370 = vunpack.c.l.b16 %v332
        %v371 = vunpack.c.l.b16 %v333
        %v372 = vunpack.c.l.b16 %v334
        %v373 = vunpack.c.l.b16 %v335
        %v374 = vunpack.c.l.b16 %v336
        %v375 = vunpack.c.l.b16 %v337
        %v376 = vunpack.c.l.b16 %v338
        %v377 = vunpack.c.l.b16 %v339
        %v378 = vunpack.c.l.b16 %v340
        %v379 = vunpack.c.l.b16 %v341
        %v380 = vunpack.c.l.b16 %v342
        %v381 = vunpack.c.l.b16 %v343
        %v382 = vunpack.c.l.b16 %v344
        %v383 = vunpack.c.l.b16 %v345
        %v384 = vunpack.c.l.b16 %v346
        %v385 = vpack.c.b16 %v370, %v369
        %v386 = vpack.c.b16 %v372, %v371
        %v387 = vpack.c.b16 %v374, %v373
        %v388 = vpack.c.b16 %v376, %v375
        %v389 = vpack.c.b16 %v378, %v377
        %v390 = vpack.c.b16 %v380, %v379
        %v391 = vpack.c.b16 %v382, %v381
        %v392 = vpack.c.b16 %v384, %v383
        %401 = vmatprep.subr.bf16.mxu0 0
        %402 = vmatpush1.bf16.msra.mxu0 %v385
        %403 = vmatprep.subr.bf16.mxu0 0
        %404 = vmatpush1.bf16.msra.mxu0 %v386
        %405 = vmatprep.subr.bf16.mxu0 0
        %406 = vmatpush1.bf16.msra.mxu0 %v387
        %407 = vmatprep.subr.bf16.mxu0 0
        %408 = vmatpush1.bf16.msra.mxu0 %v388
        %409 = vmatprep.subr.bf16.mxu0 0
        %410 = vmatpush1.bf16.msra.mxu0 %v389
        %411 = vmatprep.subr.bf16.mxu0 0
        %412 = vmatpush1.bf16.msra.mxu0 %v390
        %413 = vmatprep.subr.bf16.mxu0 0
        %414 = vmatpush1.bf16.msra.mxu0 %v391
        %415 = vmatprep.subr.bf16.mxu0 0
        %416 = vmatpush1.bf16.msra.mxu0 %v392
        %417 = vmatprep.subr.bf16.mxu0 0
        %418 = vmatpush1.bf16.msra.mxu0 0
        %419 = vmatprep.subr.bf16.mxu0 0
        %420 = vmatpush1.bf16.msra.mxu0 0
        %421 = vmatprep.subr.bf16.mxu0 0
        %422 = vmatpush1.bf16.msra.mxu0 0
        %423 = vmatprep.subr.bf16.mxu0 0
        %424 = vmatpush1.bf16.msra.mxu0 0
        %425 = vmatprep.subr.bf16.mxu0 0
        %426 = vmatpush1.bf16.msra.mxu0 0
        %427 = vmatprep.subr.bf16.mxu0 0
        %428 = vmatpush1.bf16.msra.mxu0 0
        %429 = vmatprep.subr.bf16.mxu0 0
        %430 = vmatpush1.bf16.msra.mxu0 0
        %431 = vmatprep.subr.bf16.mxu0 0
        %432 = vmatpush1.bf16.msra.mxu0 0
        %433 = vmatprep.mubr.bf16.mxu0 0
        %434 = vmatmul.mubr.bf16.gmra.mrb[0].mxu0 %v351
        %v435 = vpop.f32.mrb[0].mxu0
        %v436 = vadd.f32 0.0, %v435
        %v437 = vpop.f32.mrb[0].mxu0
        %v438 = vpop.f32.mrb[0].mxu0
        %v439 = vadd.f32 0.0, %v438
        %v440 = vpop.f32.mrb[0].mxu0
        %441 = vdwg.mxu0
        %v444 = vunpack.c.l.b16 %v309
        %v445 = vunpack.c.l.b16 %v310
        %v446 = vpack.c.b16 %v445, %v444
        %v464 = vunpack.c.l.b16 %v311
        %v465 = vunpack.c.l.b16 %v312
        %v466 = vunpack.c.l.b16 %v313
        %v467 = vunpack.c.l.b16 %v314
        %v468 = vunpack.c.l.b16 %v315
        %v469 = vunpack.c.l.b16 %v316
        %v470 = vunpack.c.l.b16 %v317
        %v471 = vunpack.c.l.b16 %v318
        %v472 = vunpack.c.l.b16 %v319
        %v473 = vunpack.c.l.b16 %v320
        %v474 = vunpack.c.l.b16 %v321
        %v475 = vunpack.c.l.b16 %v322
        %v476 = vunpack.c.l.b16 %v323
        %v477 = vunpack.c.l.b16 %v324
        %v478 = vunpack.c.l.b16 %v325
        %v479 = vunpack.c.l.b16 %v326
        %v480 = vpack.c.b16 %v465, %v464
        %v481 = vpack.c.b16 %v467, %v466
        %v482 = vpack.c.b16 %v469, %v468
        %v483 = vpack.c.b16 %v471, %v470
        %v484 = vpack.c.b16 %v473, %v472
        %v485 = vpack.c.b16 %v475, %v474
        %v486 = vpack.c.b16 %v477, %v476
        %v487 = vpack.c.b16 %v479, %v478
        %496 = vmatprep.subr.bf16.mxu0 0
        %497 = vmatpush1.bf16.msra.mxu0 %v480
        %498 = vmatprep.subr.bf16.mxu0 0
        %499 = vmatpush1.bf16.msra.mxu0 %v481
        %500 = vmatprep.subr.bf16.mxu0 0
        %501 = vmatpush1.bf16.msra.mxu0 %v482
        %502 = vmatprep.subr.bf16.mxu0 0
        %503 = vmatpush1.bf16.msra.mxu0 %v483
        %504 = vmatprep.subr.bf16.mxu0 0
        %505 = vmatpush1.bf16.msra.mxu0 %v484
        %506 = vmatprep.subr.bf16.mxu0 0
        %507 = vmatpush1.bf16.msra.mxu0 %v485
        %508 = vmatprep.subr.bf16.mxu0 0
        %509 = vmatpush1.bf16.msra.mxu0 %v486
        %510 = vmatprep.subr.bf16.mxu0 0
        %511 = vmatpush1.bf16.msra.mxu0 %v487
        %512 = vmatprep.subr.bf16.mxu0 0
        %513 = vmatpush1.bf16.msra.mxu0 0
        %514 = vmatprep.subr.bf16.mxu0 0
        %515 = vmatpush1.bf16.msra.mxu0 0
        %516 = vmatprep.subr.bf16.mxu0 0
        %517 = vmatpush1.bf16.msra.mxu0 0
        %518 = vmatprep.subr.bf16.mxu0 0
        %519 = vmatpush1.bf16.msra.mxu0 0
        %520 = vmatprep.subr.bf16.mxu0 0
        %521 = vmatpush1.bf16.msra.mxu0 0
        %522 = vmatprep.subr.bf16.mxu0 0
        %523 = vmatpush1.bf16.msra.mxu0 0
        %524 = vmatprep.subr.bf16.mxu0 0
        %525 = vmatpush1.bf16.msra.mxu0 0
        %526 = vmatprep.subr.bf16.mxu0 0
        %527 = vmatpush1.bf16.msra.mxu0 0
        %528 = vmatprep.mubr.bf16.mxu0 0
        %529 = vmatmul.mubr.bf16.gmra.mrb[0].mxu0 %v446
        %v530 = vpop.f32.mrb[0].mxu0
        %v531 = vadd.f32 %v436, %v530
        %v532 = vpop.f32.mrb[0].mxu0
        %v533 = vpop.f32.mrb[0].mxu0
        %v534 = vadd.f32 %v439, %v533
        %v535 = vpop.f32.mrb[0].mxu0
        %536 = vdwg.mxu0
        %v537 = vld [vmem:[%s308 + $0x4] sm:$0xf]
        %s538 = scalar_lea.vmem %s2, 64
        %v539 = vld [vmem:[%s538] sm:$0xf]
        %v540 = vld [vmem:[%s538 + $0x4] sm:$0xf]
        %v541 = vld [vmem:[%s538 + $0x8] sm:$0xf]
        %v542 = vld [vmem:[%s538 + $0xc] sm:$0xf]
        %v543 = vld [vmem:[%s538 + $0x10] sm:$0xf]
        %v544 = vld [vmem:[%s538 + $0x14] sm:$0xf]
        %v545 = vld [vmem:[%s538 + $0x18] sm:$0xf]
        %v546 = vld [vmem:[%s538 + $0x1c] sm:$0xf]
        %v547 = vld [vmem:[%s538 + $0x20] sm:$0xf]
        %v548 = vld [vmem:[%s538 + $0x24] sm:$0xf]
        %v549 = vld [vmem:[%s538 + $0x28] sm:$0xf]
        %v550 = vld [vmem:[%s538 + $0x2c] sm:$0xf]
        %v551 = vld [vmem:[%s538 + $0x30] sm:$0xf]
        %v552 = vld [vmem:[%s538 + $0x34] sm:$0xf]
        %v553 = vld [vmem:[%s538 + $0x38] sm:$0xf]
        %v554 = vld [vmem:[%s538 + $0x3c] sm:$0xf]
        %v556 = vunpack.c.l.b16 %v537
        %v557 = vpack.c.b16 %v556, %v444
        %v559 = vshrl.u32 %v557, 16
        %v561 = vshll.u32 %v557, 16
        %v563 = vrot.slane %v561, 1
        %v564 = vor.u32 %v559, %v563
        %v582 = vunpack.c.l.b16 %v539
        %v583 = vunpack.c.l.b16 %v540
        %v584 = vunpack.c.l.b16 %v541
        %v585 = vunpack.c.l.b16 %v542
        %v586 = vunpack.c.l.b16 %v543
        %v587 = vunpack.c.l.b16 %v544
        %v588 = vunpack.c.l.b16 %v545
        %v589 = vunpack.c.l.b16 %v546
        %v590 = vunpack.c.l.b16 %v547
        %v591 = vunpack.c.l.b16 %v548
        %v592 = vunpack.c.l.b16 %v549
        %v593 = vunpack.c.l.b16 %v550
        %v594 = vunpack.c.l.b16 %v551
        %v595 = vunpack.c.l.b16 %v552
        %v596 = vunpack.c.l.b16 %v553
        %v597 = vunpack.c.l.b16 %v554
        %v598 = vpack.c.b16 %v583, %v582
        %v599 = vpack.c.b16 %v585, %v584
        %v600 = vpack.c.b16 %v587, %v586
        %v601 = vpack.c.b16 %v589, %v588
        %v602 = vpack.c.b16 %v591, %v590
        %v603 = vpack.c.b16 %v593, %v592
        %v604 = vpack.c.b16 %v595, %v594
        %v605 = vpack.c.b16 %v597, %v596
        %614 = vmatprep.subr.bf16.mxu0 0
        %615 = vmatpush1.bf16.msra.mxu0 %v598
        %616 = vmatprep.subr.bf16.mxu0 0
        %617 = vmatpush1.bf16.msra.mxu0 %v599
        %618 = vmatprep.subr.bf16.mxu0 0
        %619 = vmatpush1.bf16.msra.mxu0 %v600
        %620 = vmatprep.subr.bf16.mxu0 0
        %621 = vmatpush1.bf16.msra.mxu0 %v601
        %622 = vmatprep.subr.bf16.mxu0 0
        %623 = vmatpush1.bf16.msra.mxu0 %v602
        %624 = vmatprep.subr.bf16.mxu0 0
        %625 = vmatpush1.bf16.msra.mxu0 %v603
        %626 = vmatprep.subr.bf16.mxu0 0
        %627 = vmatpush1.bf16.msra.mxu0 %v604
        %628 = vmatprep.subr.bf16.mxu0 0
        %629 = vmatpush1.bf16.msra.mxu0 %v605
        %630 = vmatprep.subr.bf16.mxu0 0
        %631 = vmatpush1.bf16.msra.mxu0 0
        %632 = vmatprep.subr.bf16.mxu0 0
        %633 = vmatpush1.bf16.msra.mxu0 0
        %634 = vmatprep.subr.bf16.mxu0 0
        %635 = vmatpush1.bf16.msra.mxu0 0
        %636 = vmatprep.subr.bf16.mxu0 0
        %637 = vmatpush1.bf16.msra.mxu0 0
        %638 = vmatprep.subr.bf16.mxu0 0
        %639 = vmatpush1.bf16.msra.mxu0 0
        %640 = vmatprep.subr.bf16.mxu0 0
        %641 = vmatpush1.bf16.msra.mxu0 0
        %642 = vmatprep.subr.bf16.mxu0 0
        %643 = vmatpush1.bf16.msra.mxu0 0
        %644 = vmatprep.subr.bf16.mxu0 0
        %645 = vmatpush1.bf16.msra.mxu0 0
        %646 = vmatprep.mubr.bf16.mxu0 0
        %647 = vmatmul.mubr.bf16.gmra.mrb[0].mxu0 %v564
        %v648 = vpop.f32.mrb[0].mxu0
        %v649 = vadd.f32 0.0, %v648
        %v650 = vpop.f32.mrb[0].mxu0
        %v651 = vpop.f32.mrb[0].mxu0
        %v652 = vadd.f32 0.0, %v651
        %v653 = vpop.f32.mrb[0].mxu0
        %654 = vdwg.mxu0
        %v655 = vadd.f32 %v531, %v649
        %v656 = vadd.f32 %v534, %v652
        %v657 = vld [vmem:[%s328 + $0x4] sm:$0xf]
        %s658 = scalar_lea.vmem %s3, 64
        %v659 = vld [vmem:[%s658] sm:$0xf]
        %v660 = vld [vmem:[%s658 + $0x4] sm:$0xf]
        %v661 = vld [vmem:[%s658 + $0x8] sm:$0xf]
        %v662 = vld [vmem:[%s658 + $0xc] sm:$0xf]
        %v663 = vld [vmem:[%s658 + $0x10] sm:$0xf]
        %v664 = vld [vmem:[%s658 + $0x14] sm:$0xf]
        %v665 = vld [vmem:[%s658 + $0x18] sm:$0xf]
        %v666 = vld [vmem:[%s658 + $0x1c] sm:$0xf]
        %v667 = vld [vmem:[%s658 + $0x20] sm:$0xf]
        %v668 = vld [vmem:[%s658 + $0x24] sm:$0xf]
        %v669 = vld [vmem:[%s658 + $0x28] sm:$0xf]
        %v670 = vld [vmem:[%s658 + $0x2c] sm:$0xf]
        %v671 = vld [vmem:[%s658 + $0x30] sm:$0xf]
        %v672 = vld [vmem:[%s658 + $0x34] sm:$0xf]
        %v673 = vld [vmem:[%s658 + $0x38] sm:$0xf]
        %v674 = vld [vmem:[%s658 + $0x3c] sm:$0xf]
        %v676 = vunpack.c.l.b16 %v657
        %v677 = vpack.c.b16 %v676, %v349
        %v679 = vshrl.u32 %v677, 16
        %v681 = vshll.u32 %v677, 16
        %v683 = vrot.slane %v681, 1
        %v684 = vor.u32 %v679, %v683
        %v702 = vunpack.c.l.b16 %v659
        %v703 = vunpack.c.l.b16 %v660
        %v704 = vunpack.c.l.b16 %v661
        %v705 = vunpack.c.l.b16 %v662
        %v706 = vunpack.c.l.b16 %v663
        %v707 = vunpack.c.l.b16 %v664
        %v708 = vunpack.c.l.b16 %v665
        %v709 = vunpack.c.l.b16 %v666
        %v710 = vunpack.c.l.b16 %v667
        %v711 = vunpack.c.l.b16 %v668
        %v712 = vunpack.c.l.b16 %v669
        %v713 = vunpack.c.l.b16 %v670
        %v714 = vunpack.c.l.b16 %v671
        %v715 = vunpack.c.l.b16 %v672
        %v716 = vunpack.c.l.b16 %v673
        %v717 = vunpack.c.l.b16 %v674
        %v718 = vpack.c.b16 %v703, %v702
        %v719 = vpack.c.b16 %v705, %v704
        %v720 = vpack.c.b16 %v707, %v706
        %v721 = vpack.c.b16 %v709, %v708
        %v722 = vpack.c.b16 %v711, %v710
        %v723 = vpack.c.b16 %v713, %v712
        %v724 = vpack.c.b16 %v715, %v714
        %v725 = vpack.c.b16 %v717, %v716
        %734 = vmatprep.subr.bf16.mxu0 0
        %735 = vmatpush1.bf16.msra.mxu0 %v718
        %736 = vmatprep.subr.bf16.mxu0 0
        %737 = vmatpush1.bf16.msra.mxu0 %v719
        %738 = vmatprep.subr.bf16.mxu0 0
        %739 = vmatpush1.bf16.msra.mxu0 %v720
        %740 = vmatprep.subr.bf16.mxu0 0
        %741 = vmatpush1.bf16.msra.mxu0 %v721
        %742 = vmatprep.subr.bf16.mxu0 0
        %743 = vmatpush1.bf16.msra.mxu0 %v722
        %744 = vmatprep.subr.bf16.mxu0 0
        %745 = vmatpush1.bf16.msra.mxu0 %v723
        %746 = vmatprep.subr.bf16.mxu0 0
        %747 = vmatpush1.bf16.msra.mxu0 %v724
        %748 = vmatprep.subr.bf16.mxu0 0
        %749 = vmatpush1.bf16.msra.mxu0 %v725
        %750 = vmatprep.subr.bf16.mxu0 0
        %751 = vmatpush1.bf16.msra.mxu0 0
        %752 = vmatprep.subr.bf16.mxu0 0
        %753 = vmatpush1.bf16.msra.mxu0 0
        %754 = vmatprep.subr.bf16.mxu0 0
        %755 = vmatpush1.bf16.msra.mxu0 0
        %756 = vmatprep.subr.bf16.mxu0 0
        %757 = vmatpush1.bf16.msra.mxu0 0
        %758 = vmatprep.subr.bf16.mxu0 0
        %759 = vmatpush1.bf16.msra.mxu0 0
        %760 = vmatprep.subr.bf16.mxu0 0
        %761 = vmatpush1.bf16.msra.mxu0 0
        %762 = vmatprep.subr.bf16.mxu0 0
        %763 = vmatpush1.bf16.msra.mxu0 0
        %764 = vmatprep.subr.bf16.mxu0 0
        %765 = vmatpush1.bf16.msra.mxu0 0
        %766 = vmatprep.mubr.bf16.mxu0 0
        %767 = vmatmul.mubr.bf16.gmra.mrb[0].mxu0 %v684
        %v768 = vpop.f32.mrb[0].mxu0
        %v769 = vadd.f32 0.0, %v768
        %v770 = vpop.f32.mrb[0].mxu0
        %v771 = vpop.f32.mrb[0].mxu0
        %v772 = vadd.f32 0.0, %v771
        %v773 = vpop.f32.mrb[0].mxu0
        %774 = vdwg.mxu0
        %v775 = vadd.f32 %v655, %v769
        %v776 = vadd.f32 %v656, %v772
        %v777 = vld [vmem:[%s308] sm:$0xe]
        %s778 = scalar_lea.vmem %s2, 128
        %v779 = vld [vmem:[%s778] sm:$0xf]
        %v780 = vld [vmem:[%s778 + $0x4] sm:$0xf]
        %v781 = vld [vmem:[%s778 + $0x8] sm:$0xf]
        %v782 = vld [vmem:[%s778 + $0xc] sm:$0xf]
        %v783 = vld [vmem:[%s778 + $0x10] sm:$0xf]
        %v784 = vld [vmem:[%s778 + $0x14] sm:$0xf]
        %v785 = vld [vmem:[%s778 + $0x18] sm:$0xf]
        %v786 = vld [vmem:[%s778 + $0x1c] sm:$0xf]
        %v787 = vld [vmem:[%s778 + $0x20] sm:$0xf]
        %v788 = vld [vmem:[%s778 + $0x24] sm:$0xf]
        %v789 = vld [vmem:[%s778 + $0x28] sm:$0xf]
        %v790 = vld [vmem:[%s778 + $0x2c] sm:$0xf]
        %v791 = vld [vmem:[%s778 + $0x30] sm:$0xf]
        %v792 = vld [vmem:[%s778 + $0x34] sm:$0xf]
        %v793 = vld [vmem:[%s778 + $0x38] sm:$0xf]
        %v794 = vld [vmem:[%s778 + $0x3c] sm:$0xf]
        %v796 = vunpack.c.l.b16 %v777
        %v797 = vpack.c.b16 %v556, %v796
        %v798 = vrot.slane %v797, 1
        %v816 = vunpack.c.l.b16 %v779
        %v817 = vunpack.c.l.b16 %v780
        %v818 = vunpack.c.l.b16 %v781
        %v819 = vunpack.c.l.b16 %v782
        %v820 = vunpack.c.l.b16 %v783
        %v821 = vunpack.c.l.b16 %v784
        %v822 = vunpack.c.l.b16 %v785
        %v823 = vunpack.c.l.b16 %v786
        %v824 = vunpack.c.l.b16 %v787
        %v825 = vunpack.c.l.b16 %v788
        %v826 = vunpack.c.l.b16 %v789
        %v827 = vunpack.c.l.b16 %v790
        %v828 = vunpack.c.l.b16 %v791
        %v829 = vunpack.c.l.b16 %v792
        %v830 = vunpack.c.l.b16 %v793
        %v831 = vunpack.c.l.b16 %v794
        %v832 = vpack.c.b16 %v817, %v816
        %v833 = vpack.c.b16 %v819, %v818
        %v834 = vpack.c.b16 %v821, %v820
        %v835 = vpack.c.b16 %v823, %v822
        %v836 = vpack.c.b16 %v825, %v824
        %v837 = vpack.c.b16 %v827, %v826
        %v838 = vpack.c.b16 %v829, %v828
        %v839 = vpack.c.b16 %v831, %v830
        %848 = vmatprep.subr.bf16.mxu0 0
        %849 = vmatpush1.bf16.msra.mxu0 %v832
        %850 = vmatprep.subr.bf16.mxu0 0
        %851 = vmatpush1.bf16.msra.mxu0 %v833
        %852 = vmatprep.subr.bf16.mxu0 0
        %853 = vmatpush1.bf16.msra.mxu0 %v834
        %854 = vmatprep.subr.bf16.mxu0 0
        %855 = vmatpush1.bf16.msra.mxu0 %v835
        %856 = vmatprep.subr.bf16.mxu0 0
        %857 = vmatpush1.bf16.msra.mxu0 %v836
        %858 = vmatprep.subr.bf16.mxu0 0
        %859 = vmatpush1.bf16.msra.mxu0 %v837
        %860 = vmatprep.subr.bf16.mxu0 0
        %861 = vmatpush1.bf16.msra.mxu0 %v838
        %862 = vmatprep.subr.bf16.mxu0 0
        %863 = vmatpush1.bf16.msra.mxu0 %v839
        %864 = vmatprep.subr.bf16.mxu0 0
        %865 = vmatpush1.bf16.msra.mxu0 0
        %866 = vmatprep.subr.bf16.mxu0 0
        %867 = vmatpush1.bf16.msra.mxu0 0
        %868 = vmatprep.subr.bf16.mxu0 0
        %869 = vmatpush1.bf16.msra.mxu0 0
        %870 = vmatprep.subr.bf16.mxu0 0
        %871 = vmatpush1.bf16.msra.mxu0 0
        %872 = vmatprep.subr.bf16.mxu0 0
        %873 = vmatpush1.bf16.msra.mxu0 0
        %874 = vmatprep.subr.bf16.mxu0 0
        %875 = vmatpush1.bf16.msra.mxu0 0
        %876 = vmatprep.subr.bf16.mxu0 0
        %877 = vmatpush1.bf16.msra.mxu0 0
        %878 = vmatprep.subr.bf16.mxu0 0
        %879 = vmatpush1.bf16.msra.mxu0 0
        %880 = vmatprep.mubr.bf16.mxu0 0
        %881 = vmatmul.mubr.bf16.gmra.mrb[0].mxu0 %v798
        %v882 = vpop.f32.mrb[0].mxu0
        %v883 = vadd.f32 0.0, %v882
        %v884 = vpop.f32.mrb[0].mxu0
        %v885 = vpop.f32.mrb[0].mxu0
        %v886 = vadd.f32 0.0, %v885
        %v887 = vpop.f32.mrb[0].mxu0
        %888 = vdwg.mxu0
        %v889 = vadd.f32 %v775, %v883
        %v890 = vadd.f32 %v776, %v886
        %v891 = vld [vmem:[%s328] sm:$0xe]
        %s892 = scalar_lea.vmem %s3, 128
        %v893 = vld [vmem:[%s892] sm:$0xf]
        %v894 = vld [vmem:[%s892 + $0x4] sm:$0xf]
        %v895 = vld [vmem:[%s892 + $0x8] sm:$0xf]
        %v896 = vld [vmem:[%s892 + $0xc] sm:$0xf]
        %v897 = vld [vmem:[%s892 + $0x10] sm:$0xf]
        %v898 = vld [vmem:[%s892 + $0x14] sm:$0xf]
        %v899 = vld [vmem:[%s892 + $0x18] sm:$0xf]
        %v900 = vld [vmem:[%s892 + $0x1c] sm:$0xf]
        %v901 = vld [vmem:[%s892 + $0x20] sm:$0xf]
        %v902 = vld [vmem:[%s892 + $0x24] sm:$0xf]
        %v903 = vld [vmem:[%s892 + $0x28] sm:$0xf]
        %v904 = vld [vmem:[%s892 + $0x2c] sm:$0xf]
        %v905 = vld [vmem:[%s892 + $0x30] sm:$0xf]
        %v906 = vld [vmem:[%s892 + $0x34] sm:$0xf]
        %v907 = vld [vmem:[%s892 + $0x38] sm:$0xf]
        %v908 = vld [vmem:[%s892 + $0x3c] sm:$0xf]
        %v910 = vunpack.c.l.b16 %v891
        %v911 = vpack.c.b16 %v676, %v910
        %v912 = vrot.slane %v911, 1
        %v930 = vunpack.c.l.b16 %v893
        %v931 = vunpack.c.l.b16 %v894
        %v932 = vunpack.c.l.b16 %v895
        %v933 = vunpack.c.l.b16 %v896
        %v934 = vunpack.c.l.b16 %v897
        %v935 = vunpack.c.l.b16 %v898
        %v936 = vunpack.c.l.b16 %v899
        %v937 = vunpack.c.l.b16 %v900
        %v938 = vunpack.c.l.b16 %v901
        %v939 = vunpack.c.l.b16 %v902
        %v940 = vunpack.c.l.b16 %v903
        %v941 = vunpack.c.l.b16 %v904
        %v942 = vunpack.c.l.b16 %v905
        %v943 = vunpack.c.l.b16 %v906
        %v944 = vunpack.c.l.b16 %v907
        %v945 = vunpack.c.l.b16 %v908
        %v946 = vpack.c.b16 %v931, %v930
        %v947 = vpack.c.b16 %v933, %v932
        %v948 = vpack.c.b16 %v935, %v934
        %v949 = vpack.c.b16 %v937, %v936
        %v950 = vpack.c.b16 %v939, %v938
        %v951 = vpack.c.b16 %v941, %v940
        %v952 = vpack.c.b16 %v943, %v942
        %v953 = vpack.c.b16 %v945, %v944
        %962 = vmatprep.subr.bf16.mxu0 0
        %963 = vmatpush1.bf16.msra.mxu0 %v946
        %964 = vmatprep.subr.bf16.mxu0 0
        %965 = vmatpush1.bf16.msra.mxu0 %v947
        %966 = vmatprep.subr.bf16.mxu0 0
        %967 = vmatpush1.bf16.msra.mxu0 %v948
        %968 = vmatprep.subr.bf16.mxu0 0
        %969 = vmatpush1.bf16.msra.mxu0 %v949
        %970 = vmatprep.subr.bf16.mxu0 0
        %971 = vmatpush1.bf16.msra.mxu0 %v950
        %972 = vmatprep.subr.bf16.mxu0 0
        %973 = vmatpush1.bf16.msra.mxu0 %v951
        %974 = vmatprep.subr.bf16.mxu0 0
        %975 = vmatpush1.bf16.msra.mxu0 %v952
        %976 = vmatprep.subr.bf16.mxu0 0
        %977 = vmatpush1.bf16.msra.mxu0 %v953
        %978 = vmatprep.subr.bf16.mxu0 0
        %979 = vmatpush1.bf16.msra.mxu0 0
        %980 = vmatprep.subr.bf16.mxu0 0
        %981 = vmatpush1.bf16.msra.mxu0 0
        %982 = vmatprep.subr.bf16.mxu0 0
        %983 = vmatpush1.bf16.msra.mxu0 0
        %984 = vmatprep.subr.bf16.mxu0 0
        %985 = vmatpush1.bf16.msra.mxu0 0
        %986 = vmatprep.subr.bf16.mxu0 0
        %987 = vmatpush1.bf16.msra.mxu0 0
        %988 = vmatprep.subr.bf16.mxu0 0
        %989 = vmatpush1.bf16.msra.mxu0 0
        %990 = vmatprep.subr.bf16.mxu0 0
        %991 = vmatpush1.bf16.msra.mxu0 0
        %992 = vmatprep.subr.bf16.mxu0 0
        %993 = vmatpush1.bf16.msra.mxu0 0
        %994 = vmatprep.mubr.bf16.mxu0 0
        %995 = vmatmul.mubr.bf16.gmra.mrb[0].mxu0 %v912
        %v996 = vpop.f32.mrb[0].mxu0
        %v997 = vadd.f32 0.0, %v996
        %v998 = vpop.f32.mrb[0].mxu0
        %v999 = vpop.f32.mrb[0].mxu0
        %v1000 = vadd.f32 0.0, %v999
        %v1001 = vpop.f32.mrb[0].mxu0
        %1002 = vdwg.mxu0
        %v1003 = vadd.f32 %v889, %v997
        %v1004 = vadd.f32 %v890, %v1000
        %s1005 = sadd.s32 %s301, 1
        %s1006 = smul.u32 %s1005, 2
        %s1007 = smul.addr %s1006, 4
        %s1008 = scalar_lea.vmem %s288, %s1007
        %v1009 = vld [vmem:[%s1008] sm:$0xf]
        %v1010 = vld [vmem:[%s1008 + $0x4] sm:$0x7]
        %s1011 = scalar_lea.vmem %s2, 192
        %v1012 = vld [vmem:[%s1011] sm:$0xf]
        %v1013 = vld [vmem:[%s1011 + $0x4] sm:$0xf]
        %v1014 = vld [vmem:[%s1011 + $0x8] sm:$0xf]
        %v1015 = vld [vmem:[%s1011 + $0xc] sm:$0xf]
        %v1016 = vld [vmem:[%s1011 + $0x10] sm:$0xf]
        %v1017 = vld [vmem:[%s1011 + $0x14] sm:$0xf]
        %v1018 = vld [vmem:[%s1011 + $0x18] sm:$0xf]
        %v1019 = vld [vmem:[%s1011 + $0x1c] sm:$0xf]
        %v1020 = vld [vmem:[%s1011 + $0x20] sm:$0xf]
        %v1021 = vld [vmem:[%s1011 + $0x24] sm:$0xf]
        %v1022 = vld [vmem:[%s1011 + $0x28] sm:$0xf]
        %v1023 = vld [vmem:[%s1011 + $0x2c] sm:$0xf]
        %v1024 = vld [vmem:[%s1011 + $0x30] sm:$0xf]
        %v1025 = vld [vmem:[%s1011 + $0x34] sm:$0xf]
        %v1026 = vld [vmem:[%s1011 + $0x38] sm:$0xf]
        %v1027 = vld [vmem:[%s1011 + $0x3c] sm:$0xf]
        %v1030 = vunpack.c.l.b16 %v1009
        %v1031 = vunpack.c.l.b16 %v1010
        %v1032 = vpack.c.b16 %v1031, %v1030
        %v1050 = vunpack.c.l.b16 %v1012
        %v1051 = vunpack.c.l.b16 %v1013
        %v1052 = vunpack.c.l.b16 %v1014
        %v1053 = vunpack.c.l.b16 %v1015
        %v1054 = vunpack.c.l.b16 %v1016
        %v1055 = vunpack.c.l.b16 %v1017
        %v1056 = vunpack.c.l.b16 %v1018
        %v1057 = vunpack.c.l.b16 %v1019
        %v1058 = vunpack.c.l.b16 %v1020
        %v1059 = vunpack.c.l.b16 %v1021
        %v1060 = vunpack.c.l.b16 %v1022
        %v1061 = vunpack.c.l.b16 %v1023
        %v1062 = vunpack.c.l.b16 %v1024
        %v1063 = vunpack.c.l.b16 %v1025
        %v1064 = vunpack.c.l.b16 %v1026
        %v1065 = vunpack.c.l.b16 %v1027
        %v1066 = vpack.c.b16 %v1051, %v1050
        %v1067 = vpack.c.b16 %v1053, %v1052
        %v1068 = vpack.c.b16 %v1055, %v1054
        %v1069 = vpack.c.b16 %v1057, %v1056
        %v1070 = vpack.c.b16 %v1059, %v1058
        %v1071 = vpack.c.b16 %v1061, %v1060
        %v1072 = vpack.c.b16 %v1063, %v1062
        %v1073 = vpack.c.b16 %v1065, %v1064
        %1082 = vmatprep.subr.bf16.mxu0 0
        %1083 = vmatpush1.bf16.msra.mxu0 %v1066
        %1084 = vmatprep.subr.bf16.mxu0 0
        %1085 = vmatpush1.bf16.msra.mxu0 %v1067
        %1086 = vmatprep.subr.bf16.mxu0 0
        %1087 = vmatpush1.bf16.msra.mxu0 %v1068
        %1088 = vmatprep.subr.bf16.mxu0 0
        %1089 = vmatpush1.bf16.msra.mxu0 %v1069
        %1090 = vmatprep.subr.bf16.mxu0 0
        %1091 = vmatpush1.bf16.msra.mxu0 %v1070
        %1092 = vmatprep.subr.bf16.mxu0 0
        %1093 = vmatpush1.bf16.msra.mxu0 %v1071
        %1094 = vmatprep.subr.bf16.mxu0 0
        %1095 = vmatpush1.bf16.msra.mxu0 %v1072
        %1096 = vmatprep.subr.bf16.mxu0 0
        %1097 = vmatpush1.bf16.msra.mxu0 %v1073
        %1098 = vmatprep.subr.bf16.mxu0 0
        %1099 = vmatpush1.bf16.msra.mxu0 0
        %1100 = vmatprep.subr.bf16.mxu0 0
        %1101 = vmatpush1.bf16.msra.mxu0 0
        %1102 = vmatprep.subr.bf16.mxu0 0
        %1103 = vmatpush1.bf16.msra.mxu0 0
        %1104 = vmatprep.subr.bf16.mxu0 0
        %1105 = vmatpush1.bf16.msra.mxu0 0
        %1106 = vmatprep.subr.bf16.mxu0 0
        %1107 = vmatpush1.bf16.msra.mxu0 0
        %1108 = vmatprep.subr.bf16.mxu0 0
        %1109 = vmatpush1.bf16.msra.mxu0 0
        %1110 = vmatprep.subr.bf16.mxu0 0
        %1111 = vmatpush1.bf16.msra.mxu0 0
        %1112 = vmatprep.subr.bf16.mxu0 0
        %1113 = vmatpush1.bf16.msra.mxu0 0
        %1114 = vmatprep.mubr.bf16.mxu0 0
        %1115 = vmatmul.mubr.bf16.gmra.mrb[0].mxu0 %v1032
        %v1116 = vpop.f32.mrb[0].mxu0
        %v1117 = vadd.f32 0.0, %v1116
        %v1118 = vpop.f32.mrb[0].mxu0
        %v1119 = vpop.f32.mrb[0].mxu0
        %v1120 = vadd.f32 0.0, %v1119
        %v1121 = vpop.f32.mrb[0].mxu0
        %1122 = vdwg.mxu0
        %v1123 = vadd.f32 %v1003, %v1117
        %v1124 = vadd.f32 %v1004, %v1120
        %s1125 = smul.addr %s1006, 4
        %s1126 = scalar_lea.vmem %s293, %s1125
        %v1127 = vld [vmem:[%s1126] sm:$0xf]
        %v1128 = vld [vmem:[%s1126 + $0x4] sm:$0x7]
        %s1129 = scalar_lea.vmem %s3, 192
        %v1130 = vld [vmem:[%s1129] sm:$0xf]
        %v1131 = vld [vmem:[%s1129 + $0x4] sm:$0xf]
        %v1132 = vld [vmem:[%s1129 + $0x8] sm:$0xf]
        %v1133 = vld [vmem:[%s1129 + $0xc] sm:$0xf]
        %v1134 = vld [vmem:[%s1129 + $0x10] sm:$0xf]
        %v1135 = vld [vmem:[%s1129 + $0x14] sm:$0xf]
        %v1136 = vld [vmem:[%s1129 + $0x18] sm:$0xf]
        %v1137 = vld [vmem:[%s1129 + $0x1c] sm:$0xf]
        %v1138 = vld [vmem:[%s1129 + $0x20] sm:$0xf]
        %v1139 = vld [vmem:[%s1129 + $0x24] sm:$0xf]
        %v1140 = vld [vmem:[%s1129 + $0x28] sm:$0xf]
        %v1141 = vld [vmem:[%s1129 + $0x2c] sm:$0xf]
        %v1142 = vld [vmem:[%s1129 + $0x30] sm:$0xf]
        %v1143 = vld [vmem:[%s1129 + $0x34] sm:$0xf]
        %v1144 = vld [vmem:[%s1129 + $0x38] sm:$0xf]
        %v1145 = vld [vmem:[%s1129 + $0x3c] sm:$0xf]
        %v1148 = vunpack.c.l.b16 %v1127
        %v1149 = vunpack.c.l.b16 %v1128
        %v1150 = vpack.c.b16 %v1149, %v1148
        %v1168 = vunpack.c.l.b16 %v1130
        %v1169 = vunpack.c.l.b16 %v1131
        %v1170 = vunpack.c.l.b16 %v1132
        %v1171 = vunpack.c.l.b16 %v1133
        %v1172 = vunpack.c.l.b16 %v1134
        %v1173 = vunpack.c.l.b16 %v1135
        %v1174 = vunpack.c.l.b16 %v1136
        %v1175 = vunpack.c.l.b16 %v1137
        %v1176 = vunpack.c.l.b16 %v1138
        %v1177 = vunpack.c.l.b16 %v1139
        %v1178 = vunpack.c.l.b16 %v1140
        %v1179 = vunpack.c.l.b16 %v1141
        %v1180 = vunpack.c.l.b16 %v1142
        %v1181 = vunpack.c.l.b16 %v1143
        %v1182 = vunpack.c.l.b16 %v1144
        %v1183 = vunpack.c.l.b16 %v1145
        %v1184 = vpack.c.b16 %v1169, %v1168
        %v1185 = vpack.c.b16 %v1171, %v1170
        %v1186 = vpack.c.b16 %v1173, %v1172
        %v1187 = vpack.c.b16 %v1175, %v1174
        %v1188 = vpack.c.b16 %v1177, %v1176
        %v1189 = vpack.c.b16 %v1179, %v1178
        %v1190 = vpack.c.b16 %v1181, %v1180
        %v1191 = vpack.c.b16 %v1183, %v1182
        %1200 = vmatprep.subr.bf16.mxu0 0
        %1201 = vmatpush1.bf16.msra.mxu0 %v1184
        %1202 = vmatprep.subr.bf16.mxu0 0
        %1203 = vmatpush1.bf16.msra.mxu0 %v1185
        %1204 = vmatprep.subr.bf16.mxu0 0
        %1205 = vmatpush1.bf16.msra.mxu0 %v1186
        %1206 = vmatprep.subr.bf16.mxu0 0
        %1207 = vmatpush1.bf16.msra.mxu0 %v1187
        %1208 = vmatprep.subr.bf16.mxu0 0
        %1209 = vmatpush1.bf16.msra.mxu0 %v1188
        %1210 = vmatprep.subr.bf16.mxu0 0
        %1211 = vmatpush1.bf16.msra.mxu0 %v1189
        %1212 = vmatprep.subr.bf16.mxu0 0
        %1213 = vmatpush1.bf16.msra.mxu0 %v1190
        %1214 = vmatprep.subr.bf16.mxu0 0
        %1215 = vmatpush1.bf16.msra.mxu0 %v1191
        %1216 = vmatprep.subr.bf16.mxu0 0
        %1217 = vmatpush1.bf16.msra.mxu0 0
        %1218 = vmatprep.subr.bf16.mxu0 0
        %1219 = vmatpush1.bf16.msra.mxu0 0
        %1220 = vmatprep.subr.bf16.mxu0 0
        %1221 = vmatpush1.bf16.msra.mxu0 0
        %1222 = vmatprep.subr.bf16.mxu0 0
        %1223 = vmatpush1.bf16.msra.mxu0 0
        %1224 = vmatprep.subr.bf16.mxu0 0
        %1225 = vmatpush1.bf16.msra.mxu0 0
        %1226 = vmatprep.subr.bf16.mxu0 0
        %1227 = vmatpush1.bf16.msra.mxu0 0
        %1228 = vmatprep.subr.bf16.mxu0 0
        %1229 = vmatpush1.bf16.msra.mxu0 0
        %1230 = vmatprep.subr.bf16.mxu0 0
        %1231 = vmatpush1.bf16.msra.mxu0 0
        %1232 = vmatprep.mubr.bf16.mxu0 0
        %1233 = vmatmul.mubr.bf16.gmra.mrb[0].mxu0 %v1150
        %v1234 = vpop.f32.mrb[0].mxu0
        %v1235 = vadd.f32 0.0, %v1234
        %v1236 = vpop.f32.mrb[0].mxu0
        %v1237 = vpop.f32.mrb[0].mxu0
        %v1238 = vadd.f32 0.0, %v1237
        %v1239 = vpop.f32.mrb[0].mxu0
        %1240 = vdwg.mxu0
        %v1241 = vadd.f32 %v1123, %v1235
        %v1242 = vadd.f32 %v1124, %v1238
        %v1243 = vld [vmem:[%s1008 + $0x4] sm:$0xf]
        %s1244 = scalar_lea.vmem %s2, 256
        %v1245 = vld [vmem:[%s1244] sm:$0xf]
        %v1246 = vld [vmem:[%s1244 + $0x4] sm:$0xf]
        %v1247 = vld [vmem:[%s1244 + $0x8] sm:$0xf]
        %v1248 = vld [vmem:[%s1244 + $0xc] sm:$0xf]
        %v1249 = vld [vmem:[%s1244 + $0x10] sm:$0xf]
        %v1250 = vld [vmem:[%s1244 + $0x14] sm:$0xf]
        %v1251 = vld [vmem:[%s1244 + $0x18] sm:$0xf]
        %v1252 = vld [vmem:[%s1244 + $0x1c] sm:$0xf]
        %v1253 = vld [vmem:[%s1244 + $0x20] sm:$0xf]
        %v1254 = vld [vmem:[%s1244 + $0x24] sm:$0xf]
        %v1255 = vld [vmem:[%s1244 + $0x28] sm:$0xf]
        %v1256 = vld [vmem:[%s1244 + $0x2c] sm:$0xf]
        %v1257 = vld [vmem:[%s1244 + $0x30] sm:$0xf]
        %v1258 = vld [vmem:[%s1244 + $0x34] sm:$0xf]
        %v1259 = vld [vmem:[%s1244 + $0x38] sm:$0xf]
        %v1260 = vld [vmem:[%s1244 + $0x3c] sm:$0xf]
        %v1262 = vunpack.c.l.b16 %v1243
        %v1263 = vpack.c.b16 %v1262, %v1030
        %v1265 = vshrl.u32 %v1263, 16
        %v1267 = vshll.u32 %v1263, 16
        %v1269 = vrot.slane %v1267, 1
        %v1270 = vor.u32 %v1265, %v1269
        %v1288 = vunpack.c.l.b16 %v1245
        %v1289 = vunpack.c.l.b16 %v1246
        %v1290 = vunpack.c.l.b16 %v1247
        %v1291 = vunpack.c.l.b16 %v1248
        %v1292 = vunpack.c.l.b16 %v1249
        %v1293 = vunpack.c.l.b16 %v1250
        %v1294 = vunpack.c.l.b16 %v1251
        %v1295 = vunpack.c.l.b16 %v1252
        %v1296 = vunpack.c.l.b16 %v1253
        %v1297 = vunpack.c.l.b16 %v1254
        %v1298 = vunpack.c.l.b16 %v1255
        %v1299 = vunpack.c.l.b16 %v1256
        %v1300 = vunpack.c.l.b16 %v1257
        %v1301 = vunpack.c.l.b16 %v1258
        %v1302 = vunpack.c.l.b16 %v1259
        %v1303 = vunpack.c.l.b16 %v1260
        %v1304 = vpack.c.b16 %v1289, %v1288
        %v1305 = vpack.c.b16 %v1291, %v1290
        %v1306 = vpack.c.b16 %v1293, %v1292
        %v1307 = vpack.c.b16 %v1295, %v1294
        %v1308 = vpack.c.b16 %v1297, %v1296
        %v1309 = vpack.c.b16 %v1299, %v1298
        %v1310 = vpack.c.b16 %v1301, %v1300
        %v1311 = vpack.c.b16 %v1303, %v1302
        %1320 = vmatprep.subr.bf16.mxu0 0
        %1321 = vmatpush1.bf16.msra.mxu0 %v1304
        %1322 = vmatprep.subr.bf16.mxu0 0
        %1323 = vmatpush1.bf16.msra.mxu0 %v1305
        %1324 = vmatprep.subr.bf16.mxu0 0
        %1325 = vmatpush1.bf16.msra.mxu0 %v1306
        %1326 = vmatprep.subr.bf16.mxu0 0
        %1327 = vmatpush1.bf16.msra.mxu0 %v1307
        %1328 = vmatprep.subr.bf16.mxu0 0
        %1329 = vmatpush1.bf16.msra.mxu0 %v1308
        %1330 = vmatprep.subr.bf16.mxu0 0
        %1331 = vmatpush1.bf16.msra.mxu0 %v1309
        %1332 = vmatprep.subr.bf16.mxu0 0
        %1333 = vmatpush1.bf16.msra.mxu0 %v1310
        %1334 = vmatprep.subr.bf16.mxu0 0
        %1335 = vmatpush1.bf16.msra.mxu0 %v1311
        %1336 = vmatprep.subr.bf16.mxu0 0
        %1337 = vmatpush1.bf16.msra.mxu0 0
        %1338 = vmatprep.subr.bf16.mxu0 0
        %1339 = vmatpush1.bf16.msra.mxu0 0
        %1340 = vmatprep.subr.bf16.mxu0 0
        %1341 = vmatpush1.bf16.msra.mxu0 0
        %1342 = vmatprep.subr.bf16.mxu0 0
        %1343 = vmatpush1.bf16.msra.mxu0 0
        %1344 = vmatprep.subr.bf16.mxu0 0
        %1345 = vmatpush1.bf16.msra.mxu0 0
        %1346 = vmatprep.subr.bf16.mxu0 0
        %1347 = vmatpush1.bf16.msra.mxu0 0
        %1348 = vmatprep.subr.bf16.mxu0 0
        %1349 = vmatpush1.bf16.msra.mxu0 0
        %1350 = vmatprep.subr.bf16.mxu0 0
        %1351 = vmatpush1.bf16.msra.mxu0 0
        %1352 = vmatprep.mubr.bf16.mxu0 0
        %1353 = vmatmul.mubr.bf16.gmra.mrb[0].mxu0 %v1270
        %v1354 = vpop.f32.mrb[0].mxu0
        %v1355 = vadd.f32 0.0, %v1354
        %v1356 = vpop.f32.mrb[0].mxu0
        %v1357 = vpop.f32.mrb[0].mxu0
        %v1358 = vadd.f32 0.0, %v1357
        %v1359 = vpop.f32.mrb[0].mxu0
        %1360 = vdwg.mxu0
        %v1361 = vadd.f32 %v1241, %v1355
        %v1362 = vadd.f32 %v1242, %v1358
        %v1363 = vld [vmem:[%s1126 + $0x4] sm:$0xf]
        %s1364 = scalar_lea.vmem %s3, 256
        %v1365 = vld [vmem:[%s1364] sm:$0xf]
        %v1366 = vld [vmem:[%s1364 + $0x4] sm:$0xf]
        %v1367 = vld [vmem:[%s1364 + $0x8] sm:$0xf]
        %v1368 = vld [vmem:[%s1364 + $0xc] sm:$0xf]
        %v1369 = vld [vmem:[%s1364 + $0x10] sm:$0xf]
        %v1370 = vld [vmem:[%s1364 + $0x14] sm:$0xf]
        %v1371 = vld [vmem:[%s1364 + $0x18] sm:$0xf]
        %v1372 = vld [vmem:[%s1364 + $0x1c] sm:$0xf]
        %v1373 = vld [vmem:[%s1364 + $0x20] sm:$0xf]
        %v1374 = vld [vmem:[%s1364 + $0x24] sm:$0xf]
        %v1375 = vld [vmem:[%s1364 + $0x28] sm:$0xf]
        %v1376 = vld [vmem:[%s1364 + $0x2c] sm:$0xf]
        %v1377 = vld [vmem:[%s1364 + $0x30] sm:$0xf]
        %v1378 = vld [vmem:[%s1364 + $0x34] sm:$0xf]
        %v1379 = vld [vmem:[%s1364 + $0x38] sm:$0xf]
        %v1380 = vld [vmem:[%s1364 + $0x3c] sm:$0xf]
        %v1382 = vunpack.c.l.b16 %v1363
        %v1383 = vpack.c.b16 %v1382, %v1148
        %v1385 = vshrl.u32 %v1383, 16
        %v1387 = vshll.u32 %v1383, 16
        %v1389 = vrot.slane %v1387, 1
        %v1390 = vor.u32 %v1385, %v1389
        %v1408 = vunpack.c.l.b16 %v1365
        %v1409 = vunpack.c.l.b16 %v1366
        %v1410 = vunpack.c.l.b16 %v1367
        %v1411 = vunpack.c.l.b16 %v1368
        %v1412 = vunpack.c.l.b16 %v1369
        %v1413 = vunpack.c.l.b16 %v1370
        %v1414 = vunpack.c.l.b16 %v1371
        %v1415 = vunpack.c.l.b16 %v1372
        %v1416 = vunpack.c.l.b16 %v1373
        %v1417 = vunpack.c.l.b16 %v1374
        %v1418 = vunpack.c.l.b16 %v1375
        %v1419 = vunpack.c.l.b16 %v1376
        %v1420 = vunpack.c.l.b16 %v1377
        %v1421 = vunpack.c.l.b16 %v1378
        %v1422 = vunpack.c.l.b16 %v1379
        %v1423 = vunpack.c.l.b16 %v1380
        %v1424 = vpack.c.b16 %v1409, %v1408
        %v1425 = vpack.c.b16 %v1411, %v1410
        %v1426 = vpack.c.b16 %v1413, %v1412
        %v1427 = vpack.c.b16 %v1415, %v1414
        %v1428 = vpack.c.b16 %v1417, %v1416
        %v1429 = vpack.c.b16 %v1419, %v1418
        %v1430 = vpack.c.b16 %v1421, %v1420
        %v1431 = vpack.c.b16 %v1423, %v1422
        %1440 = vmatprep.subr.bf16.mxu0 0
        %1441 = vmatpush1.bf16.msra.mxu0 %v1424
        %1442 = vmatprep.subr.bf16.mxu0 0
        %1443 = vmatpush1.bf16.msra.mxu0 %v1425
        %1444 = vmatprep.subr.bf16.mxu0 0
        %1445 = vmatpush1.bf16.msra.mxu0 %v1426
        %1446 = vmatprep.subr.bf16.mxu0 0
        %1447 = vmatpush1.bf16.msra.mxu0 %v1427
        %1448 = vmatprep.subr.bf16.mxu0 0
        %1449 = vmatpush1.bf16.msra.mxu0 %v1428
        %1450 = vmatprep.subr.bf16.mxu0 0
        %1451 = vmatpush1.bf16.msra.mxu0 %v1429
        %1452 = vmatprep.subr.bf16.mxu0 0
        %1453 = vmatpush1.bf16.msra.mxu0 %v1430
        %1454 = vmatprep.subr.bf16.mxu0 0
        %1455 = vmatpush1.bf16.msra.mxu0 %v1431
        %1456 = vmatprep.subr.bf16.mxu0 0
        %1457 = vmatpush1.bf16.msra.mxu0 0
        %1458 = vmatprep.subr.bf16.mxu0 0
        %1459 = vmatpush1.bf16.msra.mxu0 0
        %1460 = vmatprep.subr.bf16.mxu0 0
        %1461 = vmatpush1.bf16.msra.mxu0 0
        %1462 = vmatprep.subr.bf16.mxu0 0
        %1463 = vmatpush1.bf16.msra.mxu0 0
        %1464 = vmatprep.subr.bf16.mxu0 0
        %1465 = vmatpush1.bf16.msra.mxu0 0
        %1466 = vmatprep.subr.bf16.mxu0 0
        %1467 = vmatpush1.bf16.msra.mxu0 0
        %1468 = vmatprep.subr.bf16.mxu0 0
        %1469 = vmatpush1.bf16.msra.mxu0 0
        %1470 = vmatprep.subr.bf16.mxu0 0
        %1471 = vmatpush1.bf16.msra.mxu0 0
        %1472 = vmatprep.mubr.bf16.mxu0 0
        %1473 = vmatmul.mubr.bf16.gmra.mrb[0].mxu0 %v1390
        %v1474 = vpop.f32.mrb[0].mxu0
        %v1475 = vadd.f32 0.0, %v1474
        %v1476 = vpop.f32.mrb[0].mxu0
        %v1477 = vpop.f32.mrb[0].mxu0
        %v1478 = vadd.f32 0.0, %v1477
        %v1479 = vpop.f32.mrb[0].mxu0
        %1480 = vdwg.mxu0
        %v1481 = vadd.f32 %v1361, %v1475
        %v1482 = vadd.f32 %v1362, %v1478
        %v1483 = vld [vmem:[%s1008] sm:$0xe]
        %s1484 = scalar_lea.vmem %s2, 320
        %v1485 = vld [vmem:[%s1484] sm:$0xf]
        %v1486 = vld [vmem:[%s1484 + $0x4] sm:$0xf]
        %v1487 = vld [vmem:[%s1484 + $0x8] sm:$0xf]
        %v1488 = vld [vmem:[%s1484 + $0xc] sm:$0xf]
        %v1489 = vld [vmem:[%s1484 + $0x10] sm:$0xf]
        %v1490 = vld [vmem:[%s1484 + $0x14] sm:$0xf]
        %v1491 = vld [vmem:[%s1484 + $0x18] sm:$0xf]
        %v1492 = vld [vmem:[%s1484 + $0x1c] sm:$0xf]
        %v1493 = vld [vmem:[%s1484 + $0x20] sm:$0xf]
        %v1494 = vld [vmem:[%s1484 + $0x24] sm:$0xf]
        %v1495 = vld [vmem:[%s1484 + $0x28] sm:$0xf]
        %v1496 = vld [vmem:[%s1484 + $0x2c] sm:$0xf]
        %v1497 = vld [vmem:[%s1484 + $0x30] sm:$0xf]
        %v1498 = vld [vmem:[%s1484 + $0x34] sm:$0xf]
        %v1499 = vld [vmem:[%s1484 + $0x38] sm:$0xf]
        %v1500 = vld [vmem:[%s1484 + $0x3c] sm:$0xf]
        %v1502 = vunpack.c.l.b16 %v1483
        %v1503 = vpack.c.b16 %v1262, %v1502
        %v1504 = vrot.slane %v1503, 1
        %v1522 = vunpack.c.l.b16 %v1485
        %v1523 = vunpack.c.l.b16 %v1486
        %v1524 = vunpack.c.l.b16 %v1487
        %v1525 = vunpack.c.l.b16 %v1488
        %v1526 = vunpack.c.l.b16 %v1489
        %v1527 = vunpack.c.l.b16 %v1490
        %v1528 = vunpack.c.l.b16 %v1491
        %v1529 = vunpack.c.l.b16 %v1492
        %v1530 = vunpack.c.l.b16 %v1493
        %v1531 = vunpack.c.l.b16 %v1494
        %v1532 = vunpack.c.l.b16 %v1495
        %v1533 = vunpack.c.l.b16 %v1496
        %v1534 = vunpack.c.l.b16 %v1497
        %v1535 = vunpack.c.l.b16 %v1498
        %v1536 = vunpack.c.l.b16 %v1499
        %v1537 = vunpack.c.l.b16 %v1500
        %v1538 = vpack.c.b16 %v1523, %v1522
        %v1539 = vpack.c.b16 %v1525, %v1524
        %v1540 = vpack.c.b16 %v1527, %v1526
        %v1541 = vpack.c.b16 %v1529, %v1528
        %v1542 = vpack.c.b16 %v1531, %v1530
        %v1543 = vpack.c.b16 %v1533, %v1532
        %v1544 = vpack.c.b16 %v1535, %v1534
        %v1545 = vpack.c.b16 %v1537, %v1536
        %1554 = vmatprep.subr.bf16.mxu0 0
        %1555 = vmatpush1.bf16.msra.mxu0 %v1538
        %1556 = vmatprep.subr.bf16.mxu0 0
        %1557 = vmatpush1.bf16.msra.mxu0 %v1539
        %1558 = vmatprep.subr.bf16.mxu0 0
        %1559 = vmatpush1.bf16.msra.mxu0 %v1540
        %1560 = vmatprep.subr.bf16.mxu0 0
        %1561 = vmatpush1.bf16.msra.mxu0 %v1541
        %1562 = vmatprep.subr.bf16.mxu0 0
        %1563 = vmatpush1.bf16.msra.mxu0 %v1542
        %1564 = vmatprep.subr.bf16.mxu0 0
        %1565 = vmatpush1.bf16.msra.mxu0 %v1543
        %1566 = vmatprep.subr.bf16.mxu0 0
        %1567 = vmatpush1.bf16.msra.mxu0 %v1544
        %1568 = vmatprep.subr.bf16.mxu0 0
        %1569 = vmatpush1.bf16.msra.mxu0 %v1545
        %1570 = vmatprep.subr.bf16.mxu0 0
        %1571 = vmatpush1.bf16.msra.mxu0 0
        %1572 = vmatprep.subr.bf16.mxu0 0
        %1573 = vmatpush1.bf16.msra.mxu0 0
        %1574 = vmatprep.subr.bf16.mxu0 0
        %1575 = vmatpush1.bf16.msra.mxu0 0
        %1576 = vmatprep.subr.bf16.mxu0 0
        %1577 = vmatpush1.bf16.msra.mxu0 0
        %1578 = vmatprep.subr.bf16.mxu0 0
        %1579 = vmatpush1.bf16.msra.mxu0 0
        %1580 = vmatprep.subr.bf16.mxu0 0
        %1581 = vmatpush1.bf16.msra.mxu0 0
        %1582 = vmatprep.subr.bf16.mxu0 0
        %1583 = vmatpush1.bf16.msra.mxu0 0
        %1584 = vmatprep.subr.bf16.mxu0 0
        %1585 = vmatpush1.bf16.msra.mxu0 0
        %1586 = vmatprep.mubr.bf16.mxu0 0
        %1587 = vmatmul.mubr.bf16.gmra.mrb[0].mxu0 %v1504
        %v1588 = vpop.f32.mrb[0].mxu0
        %v1589 = vadd.f32 0.0, %v1588
        %v1590 = vpop.f32.mrb[0].mxu0
        %v1591 = vpop.f32.mrb[0].mxu0
        %v1592 = vadd.f32 0.0, %v1591
        %v1593 = vpop.f32.mrb[0].mxu0
        %1594 = vdwg.mxu0
        %v1595 = vadd.f32 %v1481, %v1589
        %v1596 = vadd.f32 %v1482, %v1592
        %v1597 = vld [vmem:[%s1126] sm:$0xe]
        %s1598 = scalar_lea.vmem %s3, 320
        %v1599 = vld [vmem:[%s1598] sm:$0xf]
        %v1600 = vld [vmem:[%s1598 + $0x4] sm:$0xf]
        %v1601 = vld [vmem:[%s1598 + $0x8] sm:$0xf]
        %v1602 = vld [vmem:[%s1598 + $0xc] sm:$0xf]
        %v1603 = vld [vmem:[%s1598 + $0x10] sm:$0xf]
        %v1604 = vld [vmem:[%s1598 + $0x14] sm:$0xf]
        %v1605 = vld [vmem:[%s1598 + $0x18] sm:$0xf]
        %v1606 = vld [vmem:[%s1598 + $0x1c] sm:$0xf]
        %v1607 = vld [vmem:[%s1598 + $0x20] sm:$0xf]
        %v1608 = vld [vmem:[%s1598 + $0x24] sm:$0xf]
        %v1609 = vld [vmem:[%s1598 + $0x28] sm:$0xf]
        %v1610 = vld [vmem:[%s1598 + $0x2c] sm:$0xf]
        %v1611 = vld [vmem:[%s1598 + $0x30] sm:$0xf]
        %v1612 = vld [vmem:[%s1598 + $0x34] sm:$0xf]
        %v1613 = vld [vmem:[%s1598 + $0x38] sm:$0xf]
        %v1614 = vld [vmem:[%s1598 + $0x3c] sm:$0xf]
        %v1616 = vunpack.c.l.b16 %v1597
        %v1617 = vpack.c.b16 %v1382, %v1616
        %v1618 = vrot.slane %v1617, 1
        %v1636 = vunpack.c.l.b16 %v1599
        %v1637 = vunpack.c.l.b16 %v1600
        %v1638 = vunpack.c.l.b16 %v1601
        %v1639 = vunpack.c.l.b16 %v1602
        %v1640 = vunpack.c.l.b16 %v1603
        %v1641 = vunpack.c.l.b16 %v1604
        %v1642 = vunpack.c.l.b16 %v1605
        %v1643 = vunpack.c.l.b16 %v1606
        %v1644 = vunpack.c.l.b16 %v1607
        %v1645 = vunpack.c.l.b16 %v1608
        %v1646 = vunpack.c.l.b16 %v1609
        %v1647 = vunpack.c.l.b16 %v1610
        %v1648 = vunpack.c.l.b16 %v1611
        %v1649 = vunpack.c.l.b16 %v1612
        %v1650 = vunpack.c.l.b16 %v1613
        %v1651 = vunpack.c.l.b16 %v1614
        %v1652 = vpack.c.b16 %v1637, %v1636
        %v1653 = vpack.c.b16 %v1639, %v1638
        %v1654 = vpack.c.b16 %v1641, %v1640
        %v1655 = vpack.c.b16 %v1643, %v1642
        %v1656 = vpack.c.b16 %v1645, %v1644
        %v1657 = vpack.c.b16 %v1647, %v1646
        %v1658 = vpack.c.b16 %v1649, %v1648
        %v1659 = vpack.c.b16 %v1651, %v1650
        %1668 = vmatprep.subr.bf16.mxu0 0
        %1669 = vmatpush1.bf16.msra.mxu0 %v1652
        %1670 = vmatprep.subr.bf16.mxu0 0
        %1671 = vmatpush1.bf16.msra.mxu0 %v1653
        %1672 = vmatprep.subr.bf16.mxu0 0
        %1673 = vmatpush1.bf16.msra.mxu0 %v1654
        %1674 = vmatprep.subr.bf16.mxu0 0
        %1675 = vmatpush1.bf16.msra.mxu0 %v1655
        %1676 = vmatprep.subr.bf16.mxu0 0
        %1677 = vmatpush1.bf16.msra.mxu0 %v1656
        %1678 = vmatprep.subr.bf16.mxu0 0
        %1679 = vmatpush1.bf16.msra.mxu0 %v1657
        %1680 = vmatprep.subr.bf16.mxu0 0
        %1681 = vmatpush1.bf16.msra.mxu0 %v1658
        %1682 = vmatprep.subr.bf16.mxu0 0
        %1683 = vmatpush1.bf16.msra.mxu0 %v1659
        %1684 = vmatprep.subr.bf16.mxu0 0
        %1685 = vmatpush1.bf16.msra.mxu0 0
        %1686 = vmatprep.subr.bf16.mxu0 0
        %1687 = vmatpush1.bf16.msra.mxu0 0
        %1688 = vmatprep.subr.bf16.mxu0 0
        %1689 = vmatpush1.bf16.msra.mxu0 0
        %1690 = vmatprep.subr.bf16.mxu0 0
        %1691 = vmatpush1.bf16.msra.mxu0 0
        %1692 = vmatprep.subr.bf16.mxu0 0
        %1693 = vmatpush1.bf16.msra.mxu0 0
        %1694 = vmatprep.subr.bf16.mxu0 0
        %1695 = vmatpush1.bf16.msra.mxu0 0
        %1696 = vmatprep.subr.bf16.mxu0 0
        %1697 = vmatpush1.bf16.msra.mxu0 0
        %1698 = vmatprep.subr.bf16.mxu0 0
        %1699 = vmatpush1.bf16.msra.mxu0 0
        %1700 = vmatprep.mubr.bf16.mxu0 0
        %1701 = vmatmul.mubr.bf16.gmra.mrb[0].mxu0 %v1618
        %v1702 = vpop.f32.mrb[0].mxu0
        %v1703 = vadd.f32 0.0, %v1702
        %v1704 = vpop.f32.mrb[0].mxu0
        %v1705 = vpop.f32.mrb[0].mxu0
        %v1706 = vadd.f32 0.0, %v1705
        %v1707 = vpop.f32.mrb[0].mxu0
        %1708 = vdwg.mxu0
        %v1709 = vadd.f32 %v1595, %v1703
        %v1710 = vadd.f32 %v1596, %v1706
        %s1711 = sadd.s32 %s301, 2
        %s1712 = smul.u32 %s1711, 2
        %s1713 = smul.addr %s1712, 4
        %s1714 = scalar_lea.vmem %s288, %s1713
        %v1715 = vld [vmem:[%s1714] sm:$0xf]
        %v1716 = vld [vmem:[%s1714 + $0x4] sm:$0x7]
        %s1717 = scalar_lea.vmem %s2, 384
        %v1718 = vld [vmem:[%s1717] sm:$0xf]
        %v1719 = vld [vmem:[%s1717 + $0x4] sm:$0xf]
        %v1720 = vld [vmem:[%s1717 + $0x8] sm:$0xf]
        %v1721 = vld [vmem:[%s1717 + $0xc] sm:$0xf]
        %v1722 = vld [vmem:[%s1717 + $0x10] sm:$0xf]
        %v1723 = vld [vmem:[%s1717 + $0x14] sm:$0xf]
        %v1724 = vld [vmem:[%s1717 + $0x18] sm:$0xf]
        %v1725 = vld [vmem:[%s1717 + $0x1c] sm:$0xf]
        %v1726 = vld [vmem:[%s1717 + $0x20] sm:$0xf]
        %v1727 = vld [vmem:[%s1717 + $0x24] sm:$0xf]
        %v1728 = vld [vmem:[%s1717 + $0x28] sm:$0xf]
        %v1729 = vld [vmem:[%s1717 + $0x2c] sm:$0xf]
        %v1730 = vld [vmem:[%s1717 + $0x30] sm:$0xf]
        %v1731 = vld [vmem:[%s1717 + $0x34] sm:$0xf]
        %v1732 = vld [vmem:[%s1717 + $0x38] sm:$0xf]
        %v1733 = vld [vmem:[%s1717 + $0x3c] sm:$0xf]
        %v1736 = vunpack.c.l.b16 %v1715
        %v1737 = vunpack.c.l.b16 %v1716
        %v1738 = vpack.c.b16 %v1737, %v1736
        %v1756 = vunpack.c.l.b16 %v1718
        %v1757 = vunpack.c.l.b16 %v1719
        %v1758 = vunpack.c.l.b16 %v1720
        %v1759 = vunpack.c.l.b16 %v1721
        %v1760 = vunpack.c.l.b16 %v1722
        %v1761 = vunpack.c.l.b16 %v1723
        %v1762 = vunpack.c.l.b16 %v1724
        %v1763 = vunpack.c.l.b16 %v1725
        %v1764 = vunpack.c.l.b16 %v1726
        %v1765 = vunpack.c.l.b16 %v1727
        %v1766 = vunpack.c.l.b16 %v1728
        %v1767 = vunpack.c.l.b16 %v1729
        %v1768 = vunpack.c.l.b16 %v1730
        %v1769 = vunpack.c.l.b16 %v1731
        %v1770 = vunpack.c.l.b16 %v1732
        %v1771 = vunpack.c.l.b16 %v1733
        %v1772 = vpack.c.b16 %v1757, %v1756
        %v1773 = vpack.c.b16 %v1759, %v1758
        %v1774 = vpack.c.b16 %v1761, %v1760
        %v1775 = vpack.c.b16 %v1763, %v1762
        %v1776 = vpack.c.b16 %v1765, %v1764
        %v1777 = vpack.c.b16 %v1767, %v1766
        %v1778 = vpack.c.b16 %v1769, %v1768
        %v1779 = vpack.c.b16 %v1771, %v1770
        %1788 = vmatprep.subr.bf16.mxu0 0
        %1789 = vmatpush1.bf16.msra.mxu0 %v1772
        %1790 = vmatprep.subr.bf16.mxu0 0
        %1791 = vmatpush1.bf16.msra.mxu0 %v1773
        %1792 = vmatprep.subr.bf16.mxu0 0
        %1793 = vmatpush1.bf16.msra.mxu0 %v1774
        %1794 = vmatprep.subr.bf16.mxu0 0
        %1795 = vmatpush1.bf16.msra.mxu0 %v1775
        %1796 = vmatprep.subr.bf16.mxu0 0
        %1797 = vmatpush1.bf16.msra.mxu0 %v1776
        %1798 = vmatprep.subr.bf16.mxu0 0
        %1799 = vmatpush1.bf16.msra.mxu0 %v1777
        %1800 = vmatprep.subr.bf16.mxu0 0
        %1801 = vmatpush1.bf16.msra.mxu0 %v1778
        %1802 = vmatprep.subr.bf16.mxu0 0
        %1803 = vmatpush1.bf16.msra.mxu0 %v1779
        %1804 = vmatprep.subr.bf16.mxu0 0
        %1805 = vmatpush1.bf16.msra.mxu0 0
        %1806 = vmatprep.subr.bf16.mxu0 0
        %1807 = vmatpush1.bf16.msra.mxu0 0
        %1808 = vmatprep.subr.bf16.mxu0 0
        %1809 = vmatpush1.bf16.msra.mxu0 0
        %1810 = vmatprep.subr.bf16.mxu0 0
        %1811 = vmatpush1.bf16.msra.mxu0 0
        %1812 = vmatprep.subr.bf16.mxu0 0
        %1813 = vmatpush1.bf16.msra.mxu0 0
        %1814 = vmatprep.subr.bf16.mxu0 0
        %1815 = vmatpush1.bf16.msra.mxu0 0
        %1816 = vmatprep.subr.bf16.mxu0 0
        %1817 = vmatpush1.bf16.msra.mxu0 0
        %1818 = vmatprep.subr.bf16.mxu0 0
        %1819 = vmatpush1.bf16.msra.mxu0 0
        %1820 = vmatprep.mubr.bf16.mxu0 0
        %1821 = vmatmul.mubr.bf16.gmra.mrb[0].mxu0 %v1738
        %v1822 = vpop.f32.mrb[0].mxu0
        %v1823 = vadd.f32 0.0, %v1822
        %v1824 = vpop.f32.mrb[0].mxu0
        %v1825 = vpop.f32.mrb[0].mxu0
        %v1826 = vadd.f32 0.0, %v1825
        %v1827 = vpop.f32.mrb[0].mxu0
        %1828 = vdwg.mxu0
        %v1829 = vadd.f32 %v1709, %v1823
        %v1830 = vadd.f32 %v1710, %v1826
        %s1831 = smul.addr %s1712, 4
        %s1832 = scalar_lea.vmem %s293, %s1831
        %v1833 = vld [vmem:[%s1832] sm:$0xf]
        %v1834 = vld [vmem:[%s1832 + $0x4] sm:$0x7]
        %s1835 = scalar_lea.vmem %s3, 384
        %v1836 = vld [vmem:[%s1835] sm:$0xf]
        %v1837 = vld [vmem:[%s1835 + $0x4] sm:$0xf]
        %v1838 = vld [vmem:[%s1835 + $0x8] sm:$0xf]
        %v1839 = vld [vmem:[%s1835 + $0xc] sm:$0xf]
        %v1840 = vld [vmem:[%s1835 + $0x10] sm:$0xf]
        %v1841 = vld [vmem:[%s1835 + $0x14] sm:$0xf]
        %v1842 = vld [vmem:[%s1835 + $0x18] sm:$0xf]
        %v1843 = vld [vmem:[%s1835 + $0x1c] sm:$0xf]
        %v1844 = vld [vmem:[%s1835 + $0x20] sm:$0xf]
        %v1845 = vld [vmem:[%s1835 + $0x24] sm:$0xf]
        %v1846 = vld [vmem:[%s1835 + $0x28] sm:$0xf]
        %v1847 = vld [vmem:[%s1835 + $0x2c] sm:$0xf]
        %v1848 = vld [vmem:[%s1835 + $0x30] sm:$0xf]
        %v1849 = vld [vmem:[%s1835 + $0x34] sm:$0xf]
        %v1850 = vld [vmem:[%s1835 + $0x38] sm:$0xf]
        %v1851 = vld [vmem:[%s1835 + $0x3c] sm:$0xf]
        %v1854 = vunpack.c.l.b16 %v1833
        %v1855 = vunpack.c.l.b16 %v1834
        %v1856 = vpack.c.b16 %v1855, %v1854
        %v1874 = vunpack.c.l.b16 %v1836
        %v1875 = vunpack.c.l.b16 %v1837
        %v1876 = vunpack.c.l.b16 %v1838
        %v1877 = vunpack.c.l.b16 %v1839
        %v1878 = vunpack.c.l.b16 %v1840
        %v1879 = vunpack.c.l.b16 %v1841
        %v1880 = vunpack.c.l.b16 %v1842
        %v1881 = vunpack.c.l.b16 %v1843
        %v1882 = vunpack.c.l.b16 %v1844
        %v1883 = vunpack.c.l.b16 %v1845
        %v1884 = vunpack.c.l.b16 %v1846
        %v1885 = vunpack.c.l.b16 %v1847
        %v1886 = vunpack.c.l.b16 %v1848
        %v1887 = vunpack.c.l.b16 %v1849
        %v1888 = vunpack.c.l.b16 %v1850
        %v1889 = vunpack.c.l.b16 %v1851
        %v1890 = vpack.c.b16 %v1875, %v1874
        %v1891 = vpack.c.b16 %v1877, %v1876
        %v1892 = vpack.c.b16 %v1879, %v1878
        %v1893 = vpack.c.b16 %v1881, %v1880
        %v1894 = vpack.c.b16 %v1883, %v1882
        %v1895 = vpack.c.b16 %v1885, %v1884
        %v1896 = vpack.c.b16 %v1887, %v1886
        %v1897 = vpack.c.b16 %v1889, %v1888
        %1906 = vmatprep.subr.bf16.mxu0 0
        %1907 = vmatpush1.bf16.msra.mxu0 %v1890
        %1908 = vmatprep.subr.bf16.mxu0 0
        %1909 = vmatpush1.bf16.msra.mxu0 %v1891
        %1910 = vmatprep.subr.bf16.mxu0 0
        %1911 = vmatpush1.bf16.msra.mxu0 %v1892
        %1912 = vmatprep.subr.bf16.mxu0 0
        %1913 = vmatpush1.bf16.msra.mxu0 %v1893
        %1914 = vmatprep.subr.bf16.mxu0 0
        %1915 = vmatpush1.bf16.msra.mxu0 %v1894
        %1916 = vmatprep.subr.bf16.mxu0 0
        %1917 = vmatpush1.bf16.msra.mxu0 %v1895
        %1918 = vmatprep.subr.bf16.mxu0 0
        %1919 = vmatpush1.bf16.msra.mxu0 %v1896
        %1920 = vmatprep.subr.bf16.mxu0 0
        %1921 = vmatpush1.bf16.msra.mxu0 %v1897
        %1922 = vmatprep.subr.bf16.mxu0 0
        %1923 = vmatpush1.bf16.msra.mxu0 0
        %1924 = vmatprep.subr.bf16.mxu0 0
        %1925 = vmatpush1.bf16.msra.mxu0 0
        %1926 = vmatprep.subr.bf16.mxu0 0
        %1927 = vmatpush1.bf16.msra.mxu0 0
        %1928 = vmatprep.subr.bf16.mxu0 0
        %1929 = vmatpush1.bf16.msra.mxu0 0
        %1930 = vmatprep.subr.bf16.mxu0 0
        %1931 = vmatpush1.bf16.msra.mxu0 0
        %1932 = vmatprep.subr.bf16.mxu0 0
        %1933 = vmatpush1.bf16.msra.mxu0 0
        %1934 = vmatprep.subr.bf16.mxu0 0
        %1935 = vmatpush1.bf16.msra.mxu0 0
        %1936 = vmatprep.subr.bf16.mxu0 0
        %1937 = vmatpush1.bf16.msra.mxu0 0
        %1938 = vmatprep.mubr.bf16.mxu0 0
        %1939 = vmatmul.mubr.bf16.gmra.mrb[0].mxu0 %v1856
        %v1940 = vpop.f32.mrb[0].mxu0
        %v1941 = vadd.f32 0.0, %v1940
        %v1942 = vpop.f32.mrb[0].mxu0
        %v1943 = vpop.f32.mrb[0].mxu0
        %v1944 = vadd.f32 0.0, %v1943
        %v1945 = vpop.f32.mrb[0].mxu0
        %1946 = vdwg.mxu0
        %v1947 = vadd.f32 %v1829, %v1941
        %v1948 = vadd.f32 %v1830, %v1944
        %v1949 = vld [vmem:[%s1714 + $0x4] sm:$0xf]
        %s1950 = scalar_lea.vmem %s2, 448
        %v1951 = vld [vmem:[%s1950] sm:$0xf]
        %v1952 = vld [vmem:[%s1950 + $0x4] sm:$0xf]
        %v1953 = vld [vmem:[%s1950 + $0x8] sm:$0xf]
        %v1954 = vld [vmem:[%s1950 + $0xc] sm:$0xf]
        %v1955 = vld [vmem:[%s1950 + $0x10] sm:$0xf]
        %v1956 = vld [vmem:[%s1950 + $0x14] sm:$0xf]
        %v1957 = vld [vmem:[%s1950 + $0x18] sm:$0xf]
        %v1958 = vld [vmem:[%s1950 + $0x1c] sm:$0xf]
        %v1959 = vld [vmem:[%s1950 + $0x20] sm:$0xf]
        %v1960 = vld [vmem:[%s1950 + $0x24] sm:$0xf]
        %v1961 = vld [vmem:[%s1950 + $0x28] sm:$0xf]
        %v1962 = vld [vmem:[%s1950 + $0x2c] sm:$0xf]
        %v1963 = vld [vmem:[%s1950 + $0x30] sm:$0xf]
        %v1964 = vld [vmem:[%s1950 + $0x34] sm:$0xf]
        %v1965 = vld [vmem:[%s1950 + $0x38] sm:$0xf]
        %v1966 = vld [vmem:[%s1950 + $0x3c] sm:$0xf]
        %v1968 = vunpack.c.l.b16 %v1949
        %v1969 = vpack.c.b16 %v1968, %v1736
        %v1971 = vshrl.u32 %v1969, 16
        %v1973 = vshll.u32 %v1969, 16
        %v1975 = vrot.slane %v1973, 1
        %v1976 = vor.u32 %v1971, %v1975
        %v1994 = vunpack.c.l.b16 %v1951
        %v1995 = vunpack.c.l.b16 %v1952
        %v1996 = vunpack.c.l.b16 %v1953
        %v1997 = vunpack.c.l.b16 %v1954
        %v1998 = vunpack.c.l.b16 %v1955
        %v1999 = vunpack.c.l.b16 %v1956
        %v2000 = vunpack.c.l.b16 %v1957
        %v2001 = vunpack.c.l.b16 %v1958
        %v2002 = vunpack.c.l.b16 %v1959
        %v2003 = vunpack.c.l.b16 %v1960
        %v2004 = vunpack.c.l.b16 %v1961
        %v2005 = vunpack.c.l.b16 %v1962
        %v2006 = vunpack.c.l.b16 %v1963
        %v2007 = vunpack.c.l.b16 %v1964
        %v2008 = vunpack.c.l.b16 %v1965
        %v2009 = vunpack.c.l.b16 %v1966
        %v2010 = vpack.c.b16 %v1995, %v1994
        %v2011 = vpack.c.b16 %v1997, %v1996
        %v2012 = vpack.c.b16 %v1999, %v1998
        %v2013 = vpack.c.b16 %v2001, %v2000
        %v2014 = vpack.c.b16 %v2003, %v2002
        %v2015 = vpack.c.b16 %v2005, %v2004
        %v2016 = vpack.c.b16 %v2007, %v2006
        %v2017 = vpack.c.b16 %v2009, %v2008
        %2026 = vmatprep.subr.bf16.mxu0 0
        %2027 = vmatpush1.bf16.msra.mxu0 %v2010
        %2028 = vmatprep.subr.bf16.mxu0 0
        %2029 = vmatpush1.bf16.msra.mxu0 %v2011
        %2030 = vmatprep.subr.bf16.mxu0 0
        %2031 = vmatpush1.bf16.msra.mxu0 %v2012
        %2032 = vmatprep.subr.bf16.mxu0 0
        %2033 = vmatpush1.bf16.msra.mxu0 %v2013
        %2034 = vmatprep.subr.bf16.mxu0 0
        %2035 = vmatpush1.bf16.msra.mxu0 %v2014
        %2036 = vmatprep.subr.bf16.mxu0 0
        %2037 = vmatpush1.bf16.msra.mxu0 %v2015
        %2038 = vmatprep.subr.bf16.mxu0 0
        %2039 = vmatpush1.bf16.msra.mxu0 %v2016
        %2040 = vmatprep.subr.bf16.mxu0 0
        %2041 = vmatpush1.bf16.msra.mxu0 %v2017
        %2042 = vmatprep.subr.bf16.mxu0 0
        %2043 = vmatpush1.bf16.msra.mxu0 0
        %2044 = vmatprep.subr.bf16.mxu0 0
        %2045 = vmatpush1.bf16.msra.mxu0 0
        %2046 = vmatprep.subr.bf16.mxu0 0
        %2047 = vmatpush1.bf16.msra.mxu0 0
        %2048 = vmatprep.subr.bf16.mxu0 0
        %2049 = vmatpush1.bf16.msra.mxu0 0
        %2050 = vmatprep.subr.bf16.mxu0 0
        %2051 = vmatpush1.bf16.msra.mxu0 0
        %2052 = vmatprep.subr.bf16.mxu0 0
        %2053 = vmatpush1.bf16.msra.mxu0 0
        %2054 = vmatprep.subr.bf16.mxu0 0
        %2055 = vmatpush1.bf16.msra.mxu0 0
        %2056 = vmatprep.subr.bf16.mxu0 0
        %2057 = vmatpush1.bf16.msra.mxu0 0
        %2058 = vmatprep.mubr.bf16.mxu0 0
        %2059 = vmatmul.mubr.bf16.gmra.mrb[0].mxu0 %v1976
        %v2060 = vpop.f32.mrb[0].mxu0
        %v2061 = vadd.f32 0.0, %v2060
        %v2062 = vpop.f32.mrb[0].mxu0
        %v2063 = vpop.f32.mrb[0].mxu0
        %v2064 = vadd.f32 0.0, %v2063
        %v2065 = vpop.f32.mrb[0].mxu0
        %2066 = vdwg.mxu0
        %v2067 = vadd.f32 %v1947, %v2061
        %v2068 = vadd.f32 %v1948, %v2064
        %v2069 = vld [vmem:[%s1832 + $0x4] sm:$0xf]
        %s2070 = scalar_lea.vmem %s3, 448
        %v2071 = vld [vmem:[%s2070] sm:$0xf]
        %v2072 = vld [vmem:[%s2070 + $0x4] sm:$0xf]
        %v2073 = vld [vmem:[%s2070 + $0x8] sm:$0xf]
        %v2074 = vld [vmem:[%s2070 + $0xc] sm:$0xf]
        %v2075 = vld [vmem:[%s2070 + $0x10] sm:$0xf]
        %v2076 = vld [vmem:[%s2070 + $0x14] sm:$0xf]
        %v2077 = vld [vmem:[%s2070 + $0x18] sm:$0xf]
        %v2078 = vld [vmem:[%s2070 + $0x1c] sm:$0xf]
        %v2079 = vld [vmem:[%s2070 + $0x20] sm:$0xf]
        %v2080 = vld [vmem:[%s2070 + $0x24] sm:$0xf]
        %v2081 = vld [vmem:[%s2070 + $0x28] sm:$0xf]
        %v2082 = vld [vmem:[%s2070 + $0x2c] sm:$0xf]
        %v2083 = vld [vmem:[%s2070 + $0x30] sm:$0xf]
        %v2084 = vld [vmem:[%s2070 + $0x34] sm:$0xf]
        %v2085 = vld [vmem:[%s2070 + $0x38] sm:$0xf]
        %v2086 = vld [vmem:[%s2070 + $0x3c] sm:$0xf]
        %v2088 = vunpack.c.l.b16 %v2069
        %v2089 = vpack.c.b16 %v2088, %v1854
        %v2091 = vshrl.u32 %v2089, 16
        %v2093 = vshll.u32 %v2089, 16
        %v2095 = vrot.slane %v2093, 1
        %v2096 = vor.u32 %v2091, %v2095
        %v2114 = vunpack.c.l.b16 %v2071
        %v2115 = vunpack.c.l.b16 %v2072
        %v2116 = vunpack.c.l.b16 %v2073
        %v2117 = vunpack.c.l.b16 %v2074
        %v2118 = vunpack.c.l.b16 %v2075
        %v2119 = vunpack.c.l.b16 %v2076
        %v2120 = vunpack.c.l.b16 %v2077
        %v2121 = vunpack.c.l.b16 %v2078
        %v2122 = vunpack.c.l.b16 %v2079
        %v2123 = vunpack.c.l.b16 %v2080
        %v2124 = vunpack.c.l.b16 %v2081
        %v2125 = vunpack.c.l.b16 %v2082
        %v2126 = vunpack.c.l.b16 %v2083
        %v2127 = vunpack.c.l.b16 %v2084
        %v2128 = vunpack.c.l.b16 %v2085
        %v2129 = vunpack.c.l.b16 %v2086
        %v2130 = vpack.c.b16 %v2115, %v2114
        %v2131 = vpack.c.b16 %v2117, %v2116
        %v2132 = vpack.c.b16 %v2119, %v2118
        %v2133 = vpack.c.b16 %v2121, %v2120
        %v2134 = vpack.c.b16 %v2123, %v2122
        %v2135 = vpack.c.b16 %v2125, %v2124
        %v2136 = vpack.c.b16 %v2127, %v2126
        %v2137 = vpack.c.b16 %v2129, %v2128
        %2146 = vmatprep.subr.bf16.mxu0 0
        %2147 = vmatpush1.bf16.msra.mxu0 %v2130
        %2148 = vmatprep.subr.bf16.mxu0 0
        %2149 = vmatpush1.bf16.msra.mxu0 %v2131
        %2150 = vmatprep.subr.bf16.mxu0 0
        %2151 = vmatpush1.bf16.msra.mxu0 %v2132
        %2152 = vmatprep.subr.bf16.mxu0 0
        %2153 = vmatpush1.bf16.msra.mxu0 %v2133
        %2154 = vmatprep.subr.bf16.mxu0 0
        %2155 = vmatpush1.bf16.msra.mxu0 %v2134
        %2156 = vmatprep.subr.bf16.mxu0 0
        %2157 = vmatpush1.bf16.msra.mxu0 %v2135
        %2158 = vmatprep.subr.bf16.mxu0 0
        %2159 = vmatpush1.bf16.msra.mxu0 %v2136
        %2160 = vmatprep.subr.bf16.mxu0 0
        %2161 = vmatpush1.bf16.msra.mxu0 %v2137
        %2162 = vmatprep.subr.bf16.mxu0 0
        %2163 = vmatpush1.bf16.msra.mxu0 0
        %2164 = vmatprep.subr.bf16.mxu0 0
        %2165 = vmatpush1.bf16.msra.mxu0 0
        %2166 = vmatprep.subr.bf16.mxu0 0
        %2167 = vmatpush1.bf16.msra.mxu0 0
        %2168 = vmatprep.subr.bf16.mxu0 0
        %2169 = vmatpush1.bf16.msra.mxu0 0
        %2170 = vmatprep.subr.bf16.mxu0 0
        %2171 = vmatpush1.bf16.msra.mxu0 0
        %2172 = vmatprep.subr.bf16.mxu0 0
        %2173 = vmatpush1.bf16.msra.mxu0 0
        %2174 = vmatprep.subr.bf16.mxu0 0
        %2175 = vmatpush1.bf16.msra.mxu0 0
        %2176 = vmatprep.subr.bf16.mxu0 0
        %2177 = vmatpush1.bf16.msra.mxu0 0
        %2178 = vmatprep.mubr.bf16.mxu0 0
        %2179 = vmatmul.mubr.bf16.gmra.mrb[0].mxu0 %v2096
        %v2180 = vpop.f32.mrb[0].mxu0
        %v2181 = vadd.f32 0.0, %v2180
        %v2182 = vpop.f32.mrb[0].mxu0
        %v2183 = vpop.f32.mrb[0].mxu0
        %v2184 = vadd.f32 0.0, %v2183
        %v2185 = vpop.f32.mrb[0].mxu0
        %2186 = vdwg.mxu0
        %v2187 = vadd.f32 %v2067, %v2181
        %v2188 = vadd.f32 %v2068, %v2184
        %v2189 = vld [vmem:[%s1714] sm:$0xe]
        %s2190 = scalar_lea.vmem %s2, 512
        %v2191 = vld [vmem:[%s2190] sm:$0xf]
        %v2192 = vld [vmem:[%s2190 + $0x4] sm:$0xf]
        %v2193 = vld [vmem:[%s2190 + $0x8] sm:$0xf]
        %v2194 = vld [vmem:[%s2190 + $0xc] sm:$0xf]
        %v2195 = vld [vmem:[%s2190 + $0x10] sm:$0xf]
        %v2196 = vld [vmem:[%s2190 + $0x14] sm:$0xf]
        %v2197 = vld [vmem:[%s2190 + $0x18] sm:$0xf]
        %v2198 = vld [vmem:[%s2190 + $0x1c] sm:$0xf]
        %v2199 = vld [vmem:[%s2190 + $0x20] sm:$0xf]
        %v2200 = vld [vmem:[%s2190 + $0x24] sm:$0xf]
        %v2201 = vld [vmem:[%s2190 + $0x28] sm:$0xf]
        %v2202 = vld [vmem:[%s2190 + $0x2c] sm:$0xf]
        %v2203 = vld [vmem:[%s2190 + $0x30] sm:$0xf]
        %v2204 = vld [vmem:[%s2190 + $0x34] sm:$0xf]
        %v2205 = vld [vmem:[%s2190 + $0x38] sm:$0xf]
        %v2206 = vld [vmem:[%s2190 + $0x3c] sm:$0xf]
        %v2208 = vunpack.c.l.b16 %v2189
        %v2209 = vpack.c.b16 %v1968, %v2208
        %v2210 = vrot.slane %v2209, 1
        %v2228 = vunpack.c.l.b16 %v2191
        %v2229 = vunpack.c.l.b16 %v2192
        %v2230 = vunpack.c.l.b16 %v2193
        %v2231 = vunpack.c.l.b16 %v2194
        %v2232 = vunpack.c.l.b16 %v2195
        %v2233 = vunpack.c.l.b16 %v2196
        %v2234 = vunpack.c.l.b16 %v2197
        %v2235 = vunpack.c.l.b16 %v2198
        %v2236 = vunpack.c.l.b16 %v2199
        %v2237 = vunpack.c.l.b16 %v2200
        %v2238 = vunpack.c.l.b16 %v2201
        %v2239 = vunpack.c.l.b16 %v2202
        %v2240 = vunpack.c.l.b16 %v2203
        %v2241 = vunpack.c.l.b16 %v2204
        %v2242 = vunpack.c.l.b16 %v2205
        %v2243 = vunpack.c.l.b16 %v2206
        %v2244 = vpack.c.b16 %v2229, %v2228
        %v2245 = vpack.c.b16 %v2231, %v2230
        %v2246 = vpack.c.b16 %v2233, %v2232
        %v2247 = vpack.c.b16 %v2235, %v2234
        %v2248 = vpack.c.b16 %v2237, %v2236
        %v2249 = vpack.c.b16 %v2239, %v2238
        %v2250 = vpack.c.b16 %v2241, %v2240
        %v2251 = vpack.c.b16 %v2243, %v2242
        %2260 = vmatprep.subr.bf16.mxu0 0
        %2261 = vmatpush1.bf16.msra.mxu0 %v2244
        %2262 = vmatprep.subr.bf16.mxu0 0
        %2263 = vmatpush1.bf16.msra.mxu0 %v2245
        %2264 = vmatprep.subr.bf16.mxu0 0
        %2265 = vmatpush1.bf16.msra.mxu0 %v2246
        %2266 = vmatprep.subr.bf16.mxu0 0
        %2267 = vmatpush1.bf16.msra.mxu0 %v2247
        %2268 = vmatprep.subr.bf16.mxu0 0
        %2269 = vmatpush1.bf16.msra.mxu0 %v2248
        %2270 = vmatprep.subr.bf16.mxu0 0
        %2271 = vmatpush1.bf16.msra.mxu0 %v2249
        %2272 = vmatprep.subr.bf16.mxu0 0
        %2273 = vmatpush1.bf16.msra.mxu0 %v2250
        %2274 = vmatprep.subr.bf16.mxu0 0
        %2275 = vmatpush1.bf16.msra.mxu0 %v2251
        %2276 = vmatprep.subr.bf16.mxu0 0
        %2277 = vmatpush1.bf16.msra.mxu0 0
        %2278 = vmatprep.subr.bf16.mxu0 0
        %2279 = vmatpush1.bf16.msra.mxu0 0
        %2280 = vmatprep.subr.bf16.mxu0 0
        %2281 = vmatpush1.bf16.msra.mxu0 0
        %2282 = vmatprep.subr.bf16.mxu0 0
        %2283 = vmatpush1.bf16.msra.mxu0 0
        %2284 = vmatprep.subr.bf16.mxu0 0
        %2285 = vmatpush1.bf16.msra.mxu0 0
        %2286 = vmatprep.subr.bf16.mxu0 0
        %2287 = vmatpush1.bf16.msra.mxu0 0
        %2288 = vmatprep.subr.bf16.mxu0 0
        %2289 = vmatpush1.bf16.msra.mxu0 0
        %2290 = vmatprep.subr.bf16.mxu0 0
        %2291 = vmatpush1.bf16.msra.mxu0 0
        %2292 = vmatprep.mubr.bf16.mxu0 0
        %2293 = vmatmul.mubr.bf16.gmra.mrb[0].mxu0 %v2210
        %v2294 = vpop.f32.mrb[0].mxu0
        %v2295 = vadd.f32 0.0, %v2294
        %v2296 = vpop.f32.mrb[0].mxu0
        %v2297 = vpop.f32.mrb[0].mxu0
        %v2298 = vadd.f32 0.0, %v2297
        %v2299 = vpop.f32.mrb[0].mxu0
        %2300 = vdwg.mxu0
        %v2301 = vadd.f32 %v2187, %v2295
        %v2302 = vadd.f32 %v2188, %v2298
        %v2303 = vld [vmem:[%s1832] sm:$0xe]
        %s2304 = scalar_lea.vmem %s3, 512
        %v2305 = vld [vmem:[%s2304] sm:$0xf]
        %v2306 = vld [vmem:[%s2304 + $0x4] sm:$0xf]
        %v2307 = vld [vmem:[%s2304 + $0x8] sm:$0xf]
        %v2308 = vld [vmem:[%s2304 + $0xc] sm:$0xf]
        %v2309 = vld [vmem:[%s2304 + $0x10] sm:$0xf]
        %v2310 = vld [vmem:[%s2304 + $0x14] sm:$0xf]
        %v2311 = vld [vmem:[%s2304 + $0x18] sm:$0xf]
        %v2312 = vld [vmem:[%s2304 + $0x1c] sm:$0xf]
        %v2313 = vld [vmem:[%s2304 + $0x20] sm:$0xf]
        %v2314 = vld [vmem:[%s2304 + $0x24] sm:$0xf]
        %v2315 = vld [vmem:[%s2304 + $0x28] sm:$0xf]
        %v2316 = vld [vmem:[%s2304 + $0x2c] sm:$0xf]
        %v2317 = vld [vmem:[%s2304 + $0x30] sm:$0xf]
        %v2318 = vld [vmem:[%s2304 + $0x34] sm:$0xf]
        %v2319 = vld [vmem:[%s2304 + $0x38] sm:$0xf]
        %v2320 = vld [vmem:[%s2304 + $0x3c] sm:$0xf]
        %v2322 = vunpack.c.l.b16 %v2303
        %v2323 = vpack.c.b16 %v2088, %v2322
        %v2324 = vrot.slane %v2323, 1
        %v2342 = vunpack.c.l.b16 %v2305
        %v2343 = vunpack.c.l.b16 %v2306
        %v2344 = vunpack.c.l.b16 %v2307
        %v2345 = vunpack.c.l.b16 %v2308
        %v2346 = vunpack.c.l.b16 %v2309
        %v2347 = vunpack.c.l.b16 %v2310
        %v2348 = vunpack.c.l.b16 %v2311
        %v2349 = vunpack.c.l.b16 %v2312
        %v2350 = vunpack.c.l.b16 %v2313
        %v2351 = vunpack.c.l.b16 %v2314
        %v2352 = vunpack.c.l.b16 %v2315
        %v2353 = vunpack.c.l.b16 %v2316
        %v2354 = vunpack.c.l.b16 %v2317
        %v2355 = vunpack.c.l.b16 %v2318
        %v2356 = vunpack.c.l.b16 %v2319
        %v2357 = vunpack.c.l.b16 %v2320
        %v2358 = vpack.c.b16 %v2343, %v2342
        %v2359 = vpack.c.b16 %v2345, %v2344
        %v2360 = vpack.c.b16 %v2347, %v2346
        %v2361 = vpack.c.b16 %v2349, %v2348
        %v2362 = vpack.c.b16 %v2351, %v2350
        %v2363 = vpack.c.b16 %v2353, %v2352
        %v2364 = vpack.c.b16 %v2355, %v2354
        %v2365 = vpack.c.b16 %v2357, %v2356
        %2374 = vmatprep.subr.bf16.mxu0 0
        %2375 = vmatpush1.bf16.msra.mxu0 %v2358
        %2376 = vmatprep.subr.bf16.mxu0 0
        %2377 = vmatpush1.bf16.msra.mxu0 %v2359
        %2378 = vmatprep.subr.bf16.mxu0 0
        %2379 = vmatpush1.bf16.msra.mxu0 %v2360
        %2380 = vmatprep.subr.bf16.mxu0 0
        %2381 = vmatpush1.bf16.msra.mxu0 %v2361
        %2382 = vmatprep.subr.bf16.mxu0 0
        %2383 = vmatpush1.bf16.msra.mxu0 %v2362
        %2384 = vmatprep.subr.bf16.mxu0 0
        %2385 = vmatpush1.bf16.msra.mxu0 %v2363
        %2386 = vmatprep.subr.bf16.mxu0 0
        %2387 = vmatpush1.bf16.msra.mxu0 %v2364
        %2388 = vmatprep.subr.bf16.mxu0 0
        %2389 = vmatpush1.bf16.msra.mxu0 %v2365
        %2390 = vmatprep.subr.bf16.mxu0 0
        %2391 = vmatpush1.bf16.msra.mxu0 0
        %2392 = vmatprep.subr.bf16.mxu0 0
        %2393 = vmatpush1.bf16.msra.mxu0 0
        %2394 = vmatprep.subr.bf16.mxu0 0
        %2395 = vmatpush1.bf16.msra.mxu0 0
        %2396 = vmatprep.subr.bf16.mxu0 0
        %2397 = vmatpush1.bf16.msra.mxu0 0
        %2398 = vmatprep.subr.bf16.mxu0 0
        %2399 = vmatpush1.bf16.msra.mxu0 0
        %2400 = vmatprep.subr.bf16.mxu0 0
        %2401 = vmatpush1.bf16.msra.mxu0 0
        %2402 = vmatprep.subr.bf16.mxu0 0
        %2403 = vmatpush1.bf16.msra.mxu0 0
        %2404 = vmatprep.subr.bf16.mxu0 0
        %2405 = vmatpush1.bf16.msra.mxu0 0
        %2406 = vmatprep.mubr.bf16.mxu0 0
        %2407 = vmatmul.mubr.bf16.gmra.mrb[0].mxu0 %v2324
        %v2408 = vpop.f32.mrb[0].mxu0
        %v2409 = vadd.f32 0.0, %v2408
        %v2410 = vpop.f32.mrb[0].mxu0
        %v2411 = vpop.f32.mrb[0].mxu0
        %v2412 = vadd.f32 0.0, %v2411
        %v2413 = vpop.f32.mrb[0].mxu0
        %2414 = vdwg.mxu0
        %v2415 = vadd.f32 %v2301, %v2409
        %v2416 = vadd.f32 %v2302, %v2412
        %v2417 = vld [vmem:[%s5] sm:$0x1]
        %v2419 = vlaneseq
        %v2420 = vshrl.u32 %v2419, 7
        %v2421 = vsub.s32 0, %v2420
        %v2422 = vrot.slane %v2417, %v2421
        %v2424 = vadd.f32 %v2415, %v2422
        %v2425 = vadd.f32 %v2416, %v2422
        %v2426 = vmax.f32 %v2424, 0.0
        %v2427 = vmax.f32 %v2425, 0.0
        %s2428 = smul.u32 %s1005, 16
        %s2429 = scalar_lea.vmem [#allocation2], %s2428
        %2430 = vst [vmem:[%s2429 + $0x1] sm:$0xff] %v2426
        %2431 = vst [vmem:[%s2429 + $0x9] sm:$0x3f] %v2427
        %2432 = vst [vmem:[%s2429 - $0x1] sm:$0x2] %v2426
        %2433 = vst [vmem:[%s2429 + $0xb] sm:$0x10] %v2427
      $region53: #{_lambda_.6} parent=47 // loop_footer
        %s305 = sadd.s32 1, %s301
      $region54: #{_lambda_.6} parent=47 // loop_footer_branch
        %300 = sbr.rel target = $region50
      $region55: #{_lambda_.6} parent=47 // loop_exit
        _
      %s2434 = scalar_lea.vmem [#allocation2], 32
      %v2435 = vld [vmem:[%s2434] sm:$0xff]
      %v2436 = vld [vmem:[%s2434 + $0x8] sm:$0xff]
      %2437 = vst [vmem:[#allocation2] sm:$0xff] %v2435
      %2438 = vst [vmem:[#allocation2 + $0x8] sm:$0xff] %v2436
      %s2439 = scalar_lea.vmem [#allocation2], 208
      %v2440 = vld [vmem:[%s2439] sm:$0xff]
      %v2441 = vld [vmem:[%s2439 + $0x8] sm:$0xff]
      %s2442 = scalar_lea.vmem [#allocation2], 240
      %2443 = vst [vmem:[%s2442] sm:$0xff] %v2440
      %2444 = vst [vmem:[%s2442 + $0x8] sm:$0xff] %v2441
      %v2445 = vld [vmem:[#allocation2] sm:$0xff]
      %v2446 = vld [vmem:[#allocation2 + $0x8] sm:$0xff]
      %v2447 = vld [vmem:[#allocation2 + $0x10] sm:$0xff]
      %v2448 = vld [vmem:[#allocation2 + $0x18] sm:$0xff]
      %v2449 = vld [vmem:[#allocation2 + $0x20] sm:$0xff]
      %v2450 = vld [vmem:[#allocation2 + $0x28] sm:$0xff]
      %v2451 = vld [vmem:[#allocation2 + $0x30] sm:$0xff]
      %v2452 = vld [vmem:[#allocation2 + $0x38] sm:$0xff]
      %v2453 = vld [vmem:[#allocation2 + $0x40] sm:$0xff]
      %v2454 = vld [vmem:[#allocation2 + $0x48] sm:$0xff]
      %v2455 = vld [vmem:[#allocation2 + $0x50] sm:$0xff]
      %v2456 = vld [vmem:[#allocation2 + $0x58] sm:$0xff]
      %v2457 = vld [vmem:[#allocation2 + $0x60] sm:$0xff]
      %v2458 = vld [vmem:[#allocation2 + $0x68] sm:$0xff]
      %v2459 = vld [vmem:[#allocation2 + $0x70] sm:$0xff]
      %v2460 = vld [vmem:[#allocation2 + $0x78] sm:$0xff]
      %v2461 = vld [vmem:[#allocation2 + $0x80] sm:$0xff]
      %v2462 = vld [vmem:[#allocation2 + $0x88] sm:$0xff]
      %v2463 = vld [vmem:[#allocation2 + $0x90] sm:$0xff]
      %v2464 = vld [vmem:[#allocation2 + $0x98] sm:$0xff]
      %v2465 = vld [vmem:[#allocation2 + $0xa0] sm:$0xff]
      %v2466 = vld [vmem:[#allocation2 + $0xa8] sm:$0xff]
      %v2467 = vld [vmem:[#allocation2 + $0xb0] sm:$0xff]
      %v2468 = vld [vmem:[#allocation2 + $0xb8] sm:$0xff]
      %v2469 = vld [vmem:[#allocation2 + $0xc0] sm:$0xff]
      %v2470 = vld [vmem:[#allocation2 + $0xc8] sm:$0xff]
      %v2471 = vld [vmem:[#allocation2 + $0xd0] sm:$0xff]
      %v2472 = vld [vmem:[#allocation2 + $0xd8] sm:$0xff]
      %v2473 = vld [vmem:[#allocation2 + $0xe0] sm:$0xff]
      %v2474 = vld [vmem:[#allocation2 + $0xe8] sm:$0xff]
      %v2475 = vld [vmem:[#allocation2 + $0xf0] sm:$0xff]
      %v2476 = vld [vmem:[#allocation2 + $0xf8] sm:$0xff]
      %v2477 = vpack.c.bf16 %v2446, %v2445
      %v2478 = vpack.c.bf16 %v2448, %v2447
      %v2479 = vpack.c.bf16 %v2450, %v2449
      %v2480 = vpack.c.bf16 %v2452, %v2451
      %v2481 = vpack.c.bf16 %v2454, %v2453
      %v2482 = vpack.c.bf16 %v2456, %v2455
      %v2483 = vpack.c.bf16 %v2458, %v2457
      %v2484 = vpack.c.bf16 %v2460, %v2459
      %v2485 = vpack.c.bf16 %v2462, %v2461
      %v2486 = vpack.c.bf16 %v2464, %v2463
      %v2487 = vpack.c.bf16 %v2466, %v2465
      %v2488 = vpack.c.bf16 %v2468, %v2467
      %v2489 = vpack.c.bf16 %v2470, %v2469
      %v2490 = vpack.c.bf16 %v2472, %v2471
      %v2491 = vpack.c.bf16 %v2474, %v2473
      %v2492 = vpack.c.bf16 %v2476, %v2475
      %2493 = vst [vmem:[#allocation3] sm:$0xff] %v2477
      %2494 = vst [vmem:[#allocation3 + $0x8] sm:$0xff] %v2478
      %2495 = vst [vmem:[#allocation3 + $0x10] sm:$0xff] %v2479
      %2496 = vst [vmem:[#allocation3 + $0x18] sm:$0xff] %v2480
      %2497 = vst [vmem:[#allocation3 + $0x20] sm:$0xff] %v2481
      %2498 = vst [vmem:[#allocation3 + $0x28] sm:$0xff] %v2482
      %2499 = vst [vmem:[#allocation3 + $0x30] sm:$0xff] %v2483
      %2500 = vst [vmem:[#allocation3 + $0x38] sm:$0xff] %v2484
      %2501 = vst [vmem:[#allocation3 + $0x40] sm:$0xff] %v2485
      %2502 = vst [vmem:[#allocation3 + $0x48] sm:$0xff] %v2486
      %2503 = vst [vmem:[#allocation3 + $0x50] sm:$0xff] %v2487
      %2504 = vst [vmem:[#allocation3 + $0x58] sm:$0xff] %v2488
      %2505 = vst [vmem:[#allocation3 + $0x60] sm:$0xff] %v2489
      %2506 = vst [vmem:[#allocation3 + $0x68] sm:$0xff] %v2490
      %2507 = vst [vmem:[#allocation3 + $0x70] sm:$0xff] %v2491
      %2508 = vst [vmem:[#allocation3 + $0x78] sm:$0xff] %v2492
      loop: start=0, step=1, limit=14
      $region56: #{_lambda_.6} parent=47 // loop_pre_header
        _
      $region57: #{_lambda_.6} parent=47 // loop_header
        %s2510 = sphi 0, %s2514
        %p2511 = scmp.ge.s32.totalorder %s2510, 14
      $region58: #{_lambda_.6} parent=47 // loop_header_branch
        %2513 = sbr.rel (%p2511) target = $region62
      $region59: #{_lambda_.6} parent=47 // loop_body
        %s2515 = smul.addr %s2510, 8
        %s2516 = scalar_lea.vmem [#allocation3], %s2515
        %v2517 = vld [vmem:[%s2516] sm:$0x7f]
        %v2518 = vld [vmem:[%s4] sm:$0xf]
        %v2519 = vld [vmem:[%s4 + $0x4] sm:$0xf]
        %v2520 = vld [vmem:[%s4 + $0x8] sm:$0xf]
        %v2521 = vld [vmem:[%s4 + $0xc] sm:$0xf]
        %v2522 = vld [vmem:[%s4 + $0x10] sm:$0xf]
        %v2523 = vld [vmem:[%s4 + $0x14] sm:$0xf]
        %v2524 = vld [vmem:[%s4 + $0x18] sm:$0xf]
        %v2525 = vld [vmem:[%s4 + $0x1c] sm:$0xf]
        %v2526 = vld [vmem:[%s4 + $0x20] sm:$0xf]
        %v2527 = vld [vmem:[%s4 + $0x24] sm:$0xf]
        %v2528 = vld [vmem:[%s4 + $0x28] sm:$0xf]
        %v2529 = vld [vmem:[%s4 + $0x2c] sm:$0xf]
        %v2530 = vld [vmem:[%s4 + $0x30] sm:$0xf]
        %v2531 = vld [vmem:[%s4 + $0x34] sm:$0xf]
        %v2532 = vld [vmem:[%s4 + $0x38] sm:$0xf]
        %v2533 = vld [vmem:[%s4 + $0x3c] sm:$0xf]
        %v2534 = vld [vmem:[%s2516] sm:$0xff]
        %s2535 = scalar_lea.vmem %s4, 64
        %v2536 = vld [vmem:[%s2535] sm:$0xf]
        %v2537 = vld [vmem:[%s2535 + $0x4] sm:$0xf]
        %v2538 = vld [vmem:[%s2535 + $0x8] sm:$0xf]
        %v2539 = vld [vmem:[%s2535 + $0xc] sm:$0xf]
        %v2540 = vld [vmem:[%s2535 + $0x10] sm:$0xf]
        %v2541 = vld [vmem:[%s2535 + $0x14] sm:$0xf]
        %v2542 = vld [vmem:[%s2535 + $0x18] sm:$0xf]
        %v2543 = vld [vmem:[%s2535 + $0x1c] sm:$0xf]
        %v2544 = vld [vmem:[%s2535 + $0x20] sm:$0xf]
        %v2545 = vld [vmem:[%s2535 + $0x24] sm:$0xf]
        %v2546 = vld [vmem:[%s2535 + $0x28] sm:$0xf]
        %v2547 = vld [vmem:[%s2535 + $0x2c] sm:$0xf]
        %v2548 = vld [vmem:[%s2535 + $0x30] sm:$0xf]
        %v2549 = vld [vmem:[%s2535 + $0x34] sm:$0xf]
        %v2550 = vld [vmem:[%s2535 + $0x38] sm:$0xf]
        %v2551 = vld [vmem:[%s2535 + $0x3c] sm:$0xf]
        %v2553 = vshrl.u32 %v2534, 16
        %v2555 = vshll.u32 %v2534, 16
        %v2557 = vrot.slane %v2555, 1
        %v2558 = vor.u32 %v2553, %v2557
        %v2576 = vunpack.c.l.b16 %v2536
        %v2577 = vunpack.c.l.b16 %v2537
        %v2578 = vunpack.c.l.b16 %v2538
        %v2579 = vunpack.c.l.b16 %v2539
        %v2580 = vunpack.c.l.b16 %v2540
        %v2581 = vunpack.c.l.b16 %v2541
        %v2582 = vunpack.c.l.b16 %v2542
        %v2583 = vunpack.c.l.b16 %v2543
        %v2584 = vunpack.c.l.b16 %v2544
        %v2585 = vunpack.c.l.b16 %v2545
        %v2586 = vunpack.c.l.b16 %v2546
        %v2587 = vunpack.c.l.b16 %v2547
        %v2588 = vunpack.c.l.b16 %v2548
        %v2589 = vunpack.c.l.b16 %v2549
        %v2590 = vunpack.c.l.b16 %v2550
        %v2591 = vunpack.c.l.b16 %v2551
        %v2592 = vpack.c.b16 %v2577, %v2576
        %v2593 = vpack.c.b16 %v2579, %v2578
        %v2594 = vpack.c.b16 %v2581, %v2580
        %v2595 = vpack.c.b16 %v2583, %v2582
        %v2596 = vpack.c.b16 %v2585, %v2584
        %v2597 = vpack.c.b16 %v2587, %v2586
        %v2598 = vpack.c.b16 %v2589, %v2588
        %v2599 = vpack.c.b16 %v2591, %v2590
        %2608 = vmatprep.subr.bf16.mxu0 0
        %2609 = vmatpush1.bf16.msra.mxu0 %v2592
        %2610 = vmatprep.subr.bf16.mxu0 0
        %2611 = vmatpush1.bf16.msra.mxu0 %v2593
        %2612 = vmatprep.subr.bf16.mxu0 0
        %2613 = vmatpush1.bf16.msra.mxu0 %v2594
        %2614 = vmatprep.subr.bf16.mxu0 0
        %2615 = vmatpush1.bf16.msra.mxu0 %v2595
        %2616 = vmatprep.subr.bf16.mxu0 0
        %2617 = vmatpush1.bf16.msra.mxu0 %v2596
        %2618 = vmatprep.subr.bf16.mxu0 0
        %2619 = vmatpush1.bf16.msra.mxu0 %v2597
        %2620 = vmatprep.subr.bf16.mxu0 0
        %2621 = vmatpush1.bf16.msra.mxu0 %v2598
        %2622 = vmatprep.subr.bf16.mxu0 0
        %2623 = vmatpush1.bf16.msra.mxu0 %v2599
        %2624 = vmatprep.subr.bf16.mxu0 0
        %2625 = vmatpush1.bf16.msra.mxu0 0
        %2626 = vmatprep.subr.bf16.mxu0 0
        %2627 = vmatpush1.bf16.msra.mxu0 0
        %2628 = vmatprep.subr.bf16.mxu0 0
        %2629 = vmatpush1.bf16.msra.mxu0 0
        %2630 = vmatprep.subr.bf16.mxu0 0
        %2631 = vmatpush1.bf16.msra.mxu0 0
        %2632 = vmatprep.subr.bf16.mxu0 0
        %2633 = vmatpush1.bf16.msra.mxu0 0
        %2634 = vmatprep.subr.bf16.mxu0 0
        %2635 = vmatpush1.bf16.msra.mxu0 0
        %2636 = vmatprep.subr.bf16.mxu0 0
        %2637 = vmatpush1.bf16.msra.mxu0 0
        %2638 = vmatprep.subr.bf16.mxu0 0
        %2639 = vmatpush1.bf16.msra.mxu0 0
        %2640 = vmatprep.mubr.bf16.mxu0 0
        %2641 = vmatmul.mubr.bf16.gmra.mrb[0].mxu0 %v2558
        %v2642 = vpop.f32.mrb[0].mxu0
        %v2643 = vadd.f32 0.0, %v2642
        %v2644 = vpop.f32.mrb[0].mxu0
        %v2645 = vpop.f32.mrb[0].mxu0
        %v2646 = vadd.f32 0.0, %v2645
        %v2647 = vpop.f32.mrb[0].mxu0
        %2648 = vdwg.mxu0
        %v2665 = vunpack.c.l.b16 %v2518
        %v2666 = vunpack.c.l.b16 %v2519
        %v2667 = vunpack.c.l.b16 %v2520
        %v2668 = vunpack.c.l.b16 %v2521
        %v2669 = vunpack.c.l.b16 %v2522
        %v2670 = vunpack.c.l.b16 %v2523
        %v2671 = vunpack.c.l.b16 %v2524
        %v2672 = vunpack.c.l.b16 %v2525
        %v2673 = vunpack.c.l.b16 %v2526
        %v2674 = vunpack.c.l.b16 %v2527
        %v2675 = vunpack.c.l.b16 %v2528
        %v2676 = vunpack.c.l.b16 %v2529
        %v2677 = vunpack.c.l.b16 %v2530
        %v2678 = vunpack.c.l.b16 %v2531
        %v2679 = vunpack.c.l.b16 %v2532
        %v2680 = vunpack.c.l.b16 %v2533
        %v2681 = vpack.c.b16 %v2666, %v2665
        %v2682 = vpack.c.b16 %v2668, %v2667
        %v2683 = vpack.c.b16 %v2670, %v2669
        %v2684 = vpack.c.b16 %v2672, %v2671
        %v2685 = vpack.c.b16 %v2674, %v2673
        %v2686 = vpack.c.b16 %v2676, %v2675
        %v2687 = vpack.c.b16 %v2678, %v2677
        %v2688 = vpack.c.b16 %v2680, %v2679
        %2697 = vmatprep.subr.bf16.mxu0 0
        %2698 = vmatpush1.bf16.msra.mxu0 %v2681
        %2699 = vmatprep.subr.bf16.mxu0 0
        %2700 = vmatpush1.bf16.msra.mxu0 %v2682
        %2701 = vmatprep.subr.bf16.mxu0 0
        %2702 = vmatpush1.bf16.msra.mxu0 %v2683
        %2703 = vmatprep.subr.bf16.mxu0 0
        %2704 = vmatpush1.bf16.msra.mxu0 %v2684
        %2705 = vmatprep.subr.bf16.mxu0 0
        %2706 = vmatpush1.bf16.msra.mxu0 %v2685
        %2707 = vmatprep.subr.bf16.mxu0 0
        %2708 = vmatpush1.bf16.msra.mxu0 %v2686
        %2709 = vmatprep.subr.bf16.mxu0 0
        %2710 = vmatpush1.bf16.msra.mxu0 %v2687
        %2711 = vmatprep.subr.bf16.mxu0 0
        %2712 = vmatpush1.bf16.msra.mxu0 %v2688
        %2713 = vmatprep.subr.bf16.mxu0 0
        %2714 = vmatpush1.bf16.msra.mxu0 0
        %2715 = vmatprep.subr.bf16.mxu0 0
        %2716 = vmatpush1.bf16.msra.mxu0 0
        %2717 = vmatprep.subr.bf16.mxu0 0
        %2718 = vmatpush1.bf16.msra.mxu0 0
        %2719 = vmatprep.subr.bf16.mxu0 0
        %2720 = vmatpush1.bf16.msra.mxu0 0
        %2721 = vmatprep.subr.bf16.mxu0 0
        %2722 = vmatpush1.bf16.msra.mxu0 0
        %2723 = vmatprep.subr.bf16.mxu0 0
        %2724 = vmatpush1.bf16.msra.mxu0 0
        %2725 = vmatprep.subr.bf16.mxu0 0
        %2726 = vmatpush1.bf16.msra.mxu0 0
        %2727 = vmatprep.subr.bf16.mxu0 0
        %2728 = vmatpush1.bf16.msra.mxu0 0
        %2729 = vmatprep.mubr.bf16.mxu0 0
        %2730 = vmatmul.mubr.bf16.gmra.mrb[0].mxu0 %v2517
        %v2731 = vpop.f32.mrb[0].mxu0
        %v2732 = vadd.f32 %v2643, %v2731
        %v2733 = vpop.f32.mrb[0].mxu0
        %v2734 = vpop.f32.mrb[0].mxu0
        %v2735 = vadd.f32 %v2646, %v2734
        %v2736 = vpop.f32.mrb[0].mxu0
        %2737 = vdwg.mxu0
        %v2738 = vld [vmem:[%s2516] sm:$0xfe]
        %s2739 = scalar_lea.vmem %s4, 128
        %v2740 = vld [vmem:[%s2739] sm:$0xf]
        %v2741 = vld [vmem:[%s2739 + $0x4] sm:$0xf]
        %v2742 = vld [vmem:[%s2739 + $0x8] sm:$0xf]
        %v2743 = vld [vmem:[%s2739 + $0xc] sm:$0xf]
        %v2744 = vld [vmem:[%s2739 + $0x10] sm:$0xf]
        %v2745 = vld [vmem:[%s2739 + $0x14] sm:$0xf]
        %v2746 = vld [vmem:[%s2739 + $0x18] sm:$0xf]
        %v2747 = vld [vmem:[%s2739 + $0x1c] sm:$0xf]
        %v2748 = vld [vmem:[%s2739 + $0x20] sm:$0xf]
        %v2749 = vld [vmem:[%s2739 + $0x24] sm:$0xf]
        %v2750 = vld [vmem:[%s2739 + $0x28] sm:$0xf]
        %v2751 = vld [vmem:[%s2739 + $0x2c] sm:$0xf]
        %v2752 = vld [vmem:[%s2739 + $0x30] sm:$0xf]
        %v2753 = vld [vmem:[%s2739 + $0x34] sm:$0xf]
        %v2754 = vld [vmem:[%s2739 + $0x38] sm:$0xf]
        %v2755 = vld [vmem:[%s2739 + $0x3c] sm:$0xf]
        %v2757 = vrot.slane %v2738, 1
        %v2775 = vunpack.c.l.b16 %v2740
        %v2776 = vunpack.c.l.b16 %v2741
        %v2777 = vunpack.c.l.b16 %v2742
        %v2778 = vunpack.c.l.b16 %v2743
        %v2779 = vunpack.c.l.b16 %v2744
        %v2780 = vunpack.c.l.b16 %v2745
        %v2781 = vunpack.c.l.b16 %v2746
        %v2782 = vunpack.c.l.b16 %v2747
        %v2783 = vunpack.c.l.b16 %v2748
        %v2784 = vunpack.c.l.b16 %v2749
        %v2785 = vunpack.c.l.b16 %v2750
        %v2786 = vunpack.c.l.b16 %v2751
        %v2787 = vunpack.c.l.b16 %v2752
        %v2788 = vunpack.c.l.b16 %v2753
        %v2789 = vunpack.c.l.b16 %v2754
        %v2790 = vunpack.c.l.b16 %v2755
        %v2791 = vpack.c.b16 %v2776, %v2775
        %v2792 = vpack.c.b16 %v2778, %v2777
        %v2793 = vpack.c.b16 %v2780, %v2779
        %v2794 = vpack.c.b16 %v2782, %v2781
        %v2795 = vpack.c.b16 %v2784, %v2783
        %v2796 = vpack.c.b16 %v2786, %v2785
        %v2797 = vpack.c.b16 %v2788, %v2787
        %v2798 = vpack.c.b16 %v2790, %v2789
        %2807 = vmatprep.subr.bf16.mxu0 0
        %2808 = vmatpush1.bf16.msra.mxu0 %v2791
        %2809 = vmatprep.subr.bf16.mxu0 0
        %2810 = vmatpush1.bf16.msra.mxu0 %v2792
        %2811 = vmatprep.subr.bf16.mxu0 0
        %2812 = vmatpush1.bf16.msra.mxu0 %v2793
        %2813 = vmatprep.subr.bf16.mxu0 0
        %2814 = vmatpush1.bf16.msra.mxu0 %v2794
        %2815 = vmatprep.subr.bf16.mxu0 0
        %2816 = vmatpush1.bf16.msra.mxu0 %v2795
        %2817 = vmatprep.subr.bf16.mxu0 0
        %2818 = vmatpush1.bf16.msra.mxu0 %v2796
        %2819 = vmatprep.subr.bf16.mxu0 0
        %2820 = vmatpush1.bf16.msra.mxu0 %v2797
        %2821 = vmatprep.subr.bf16.mxu0 0
        %2822 = vmatpush1.bf16.msra.mxu0 %v2798
        %2823 = vmatprep.subr.bf16.mxu0 0
        %2824 = vmatpush1.bf16.msra.mxu0 0
        %2825 = vmatprep.subr.bf16.mxu0 0
        %2826 = vmatpush1.bf16.msra.mxu0 0
        %2827 = vmatprep.subr.bf16.mxu0 0
        %2828 = vmatpush1.bf16.msra.mxu0 0
        %2829 = vmatprep.subr.bf16.mxu0 0
        %2830 = vmatpush1.bf16.msra.mxu0 0
        %2831 = vmatprep.subr.bf16.mxu0 0
        %2832 = vmatpush1.bf16.msra.mxu0 0
        %2833 = vmatprep.subr.bf16.mxu0 0
        %2834 = vmatpush1.bf16.msra.mxu0 0
        %2835 = vmatprep.subr.bf16.mxu0 0
        %2836 = vmatpush1.bf16.msra.mxu0 0
        %2837 = vmatprep.subr.bf16.mxu0 0
        %2838 = vmatpush1.bf16.msra.mxu0 0
        %2839 = vmatprep.mubr.bf16.mxu0 0
        %2840 = vmatmul.mubr.bf16.gmra.mrb[0].mxu0 %v2757
        %v2841 = vpop.f32.mrb[0].mxu0
        %v2842 = vadd.f32 0.0, %v2841
        %v2843 = vpop.f32.mrb[0].mxu0
        %v2844 = vpop.f32.mrb[0].mxu0
        %v2845 = vadd.f32 0.0, %v2844
        %v2846 = vpop.f32.mrb[0].mxu0
        %2847 = vdwg.mxu0
        %v2848 = vadd.f32 %v2732, %v2842
        %v2849 = vadd.f32 %v2735, %v2845
        %s2850 = sadd.s32 %s2510, 1
        %s2851 = smul.addr %s2850, 8
        %s2852 = scalar_lea.vmem [#allocation3], %s2851
        %v2853 = vld [vmem:[%s2852] sm:$0x7f]
        %s2854 = scalar_lea.vmem %s4, 192
        %v2855 = vld [vmem:[%s2854] sm:$0xf]
        %v2856 = vld [vmem:[%s2854 + $0x4] sm:$0xf]
        %v2857 = vld [vmem:[%s2854 + $0x8] sm:$0xf]
        %v2858 = vld [vmem:[%s2854 + $0xc] sm:$0xf]
        %v2859 = vld [vmem:[%s2854 + $0x10] sm:$0xf]
        %v2860 = vld [vmem:[%s2854 + $0x14] sm:$0xf]
        %v2861 = vld [vmem:[%s2854 + $0x18] sm:$0xf]
        %v2862 = vld [vmem:[%s2854 + $0x1c] sm:$0xf]
        %v2863 = vld [vmem:[%s2854 + $0x20] sm:$0xf]
        %v2864 = vld [vmem:[%s2854 + $0x24] sm:$0xf]
        %v2865 = vld [vmem:[%s2854 + $0x28] sm:$0xf]
        %v2866 = vld [vmem:[%s2854 + $0x2c] sm:$0xf]
        %v2867 = vld [vmem:[%s2854 + $0x30] sm:$0xf]
        %v2868 = vld [vmem:[%s2854 + $0x34] sm:$0xf]
        %v2869 = vld [vmem:[%s2854 + $0x38] sm:$0xf]
        %v2870 = vld [vmem:[%s2854 + $0x3c] sm:$0xf]
        %v2887 = vunpack.c.l.b16 %v2855
        %v2888 = vunpack.c.l.b16 %v2856
        %v2889 = vunpack.c.l.b16 %v2857
        %v2890 = vunpack.c.l.b16 %v2858
        %v2891 = vunpack.c.l.b16 %v2859
        %v2892 = vunpack.c.l.b16 %v2860
        %v2893 = vunpack.c.l.b16 %v2861
        %v2894 = vunpack.c.l.b16 %v2862
        %v2895 = vunpack.c.l.b16 %v2863
        %v2896 = vunpack.c.l.b16 %v2864
        %v2897 = vunpack.c.l.b16 %v2865
        %v2898 = vunpack.c.l.b16 %v2866
        %v2899 = vunpack.c.l.b16 %v2867
        %v2900 = vunpack.c.l.b16 %v2868
        %v2901 = vunpack.c.l.b16 %v2869
        %v2902 = vunpack.c.l.b16 %v2870
        %v2903 = vpack.c.b16 %v2888, %v2887
        %v2904 = vpack.c.b16 %v2890, %v2889
        %v2905 = vpack.c.b16 %v2892, %v2891
        %v2906 = vpack.c.b16 %v2894, %v2893
        %v2907 = vpack.c.b16 %v2896, %v2895
        %v2908 = vpack.c.b16 %v2898, %v2897
        %v2909 = vpack.c.b16 %v2900, %v2899
        %v2910 = vpack.c.b16 %v2902, %v2901
        %2919 = vmatprep.subr.bf16.mxu0 0
        %2920 = vmatpush1.bf16.msra.mxu0 %v2903
        %2921 = vmatprep.subr.bf16.mxu0 0
        %2922 = vmatpush1.bf16.msra.mxu0 %v2904
        %2923 = vmatprep.subr.bf16.mxu0 0
        %2924 = vmatpush1.bf16.msra.mxu0 %v2905
        %2925 = vmatprep.subr.bf16.mxu0 0
        %2926 = vmatpush1.bf16.msra.mxu0 %v2906
        %2927 = vmatprep.subr.bf16.mxu0 0
        %2928 = vmatpush1.bf16.msra.mxu0 %v2907
        %2929 = vmatprep.subr.bf16.mxu0 0
        %2930 = vmatpush1.bf16.msra.mxu0 %v2908
        %2931 = vmatprep.subr.bf16.mxu0 0
        %2932 = vmatpush1.bf16.msra.mxu0 %v2909
        %2933 = vmatprep.subr.bf16.mxu0 0
        %2934 = vmatpush1.bf16.msra.mxu0 %v2910
        %2935 = vmatprep.subr.bf16.mxu0 0
        %2936 = vmatpush1.bf16.msra.mxu0 0
        %2937 = vmatprep.subr.bf16.mxu0 0
        %2938 = vmatpush1.bf16.msra.mxu0 0
        %2939 = vmatprep.subr.bf16.mxu0 0
        %2940 = vmatpush1.bf16.msra.mxu0 0
        %2941 = vmatprep.subr.bf16.mxu0 0
        %2942 = vmatpush1.bf16.msra.mxu0 0
        %2943 = vmatprep.subr.bf16.mxu0 0
        %2944 = vmatpush1.bf16.msra.mxu0 0
        %2945 = vmatprep.subr.bf16.mxu0 0
        %2946 = vmatpush1.bf16.msra.mxu0 0
        %2947 = vmatprep.subr.bf16.mxu0 0
        %2948 = vmatpush1.bf16.msra.mxu0 0
        %2949 = vmatprep.subr.bf16.mxu0 0
        %2950 = vmatpush1.bf16.msra.mxu0 0
        %2951 = vmatprep.mubr.bf16.mxu0 0
        %2952 = vmatmul.mubr.bf16.gmra.mrb[0].mxu0 %v2853
        %v2953 = vpop.f32.mrb[0].mxu0
        %v2954 = vadd.f32 0.0, %v2953
        %v2955 = vpop.f32.mrb[0].mxu0
        %v2956 = vpop.f32.mrb[0].mxu0
        %v2957 = vadd.f32 0.0, %v2956
        %v2958 = vpop.f32.mrb[0].mxu0
        %2959 = vdwg.mxu0
        %v2960 = vadd.f32 %v2848, %v2954
        %v2961 = vadd.f32 %v2849, %v2957
        %v2962 = vld [vmem:[%s2852] sm:$0xff]
        %s2963 = scalar_lea.vmem %s4, 256
        %v2964 = vld [vmem:[%s2963] sm:$0xf]
        %v2965 = vld [vmem:[%s2963 + $0x4] sm:$0xf]
        %v2966 = vld [vmem:[%s2963 + $0x8] sm:$0xf]
        %v2967 = vld [vmem:[%s2963 + $0xc] sm:$0xf]
        %v2968 = vld [vmem:[%s2963 + $0x10] sm:$0xf]
        %v2969 = vld [vmem:[%s2963 + $0x14] sm:$0xf]
        %v2970 = vld [vmem:[%s2963 + $0x18] sm:$0xf]
        %v2971 = vld [vmem:[%s2963 + $0x1c] sm:$0xf]
        %v2972 = vld [vmem:[%s2963 + $0x20] sm:$0xf]
        %v2973 = vld [vmem:[%s2963 + $0x24] sm:$0xf]
        %v2974 = vld [vmem:[%s2963 + $0x28] sm:$0xf]
        %v2975 = vld [vmem:[%s2963 + $0x2c] sm:$0xf]
        %v2976 = vld [vmem:[%s2963 + $0x30] sm:$0xf]
        %v2977 = vld [vmem:[%s2963 + $0x34] sm:$0xf]
        %v2978 = vld [vmem:[%s2963 + $0x38] sm:$0xf]
        %v2979 = vld [vmem:[%s2963 + $0x3c] sm:$0xf]
        %v2981 = vshrl.u32 %v2962, 16
        %v2983 = vshll.u32 %v2962, 16
        %v2985 = vrot.slane %v2983, 1
        %v2986 = vor.u32 %v2981, %v2985
        %v3004 = vunpack.c.l.b16 %v2964
        %v3005 = vunpack.c.l.b16 %v2965
        %v3006 = vunpack.c.l.b16 %v2966
        %v3007 = vunpack.c.l.b16 %v2967
        %v3008 = vunpack.c.l.b16 %v2968
        %v3009 = vunpack.c.l.b16 %v2969
        %v3010 = vunpack.c.l.b16 %v2970
        %v3011 = vunpack.c.l.b16 %v2971
        %v3012 = vunpack.c.l.b16 %v2972
        %v3013 = vunpack.c.l.b16 %v2973
        %v3014 = vunpack.c.l.b16 %v2974
        %v3015 = vunpack.c.l.b16 %v2975
        %v3016 = vunpack.c.l.b16 %v2976
        %v3017 = vunpack.c.l.b16 %v2977
        %v3018 = vunpack.c.l.b16 %v2978
        %v3019 = vunpack.c.l.b16 %v2979
        %v3020 = vpack.c.b16 %v3005, %v3004
        %v3021 = vpack.c.b16 %v3007, %v3006
        %v3022 = vpack.c.b16 %v3009, %v3008
        %v3023 = vpack.c.b16 %v3011, %v3010
        %v3024 = vpack.c.b16 %v3013, %v3012
        %v3025 = vpack.c.b16 %v3015, %v3014
        %v3026 = vpack.c.b16 %v3017, %v3016
        %v3027 = vpack.c.b16 %v3019, %v3018
        %3036 = vmatprep.subr.bf16.mxu0 0
        %3037 = vmatpush1.bf16.msra.mxu0 %v3020
        %3038 = vmatprep.subr.bf16.mxu0 0
        %3039 = vmatpush1.bf16.msra.mxu0 %v3021
        %3040 = vmatprep.subr.bf16.mxu0 0
        %3041 = vmatpush1.bf16.msra.mxu0 %v3022
        %3042 = vmatprep.subr.bf16.mxu0 0
        %3043 = vmatpush1.bf16.msra.mxu0 %v3023
        %3044 = vmatprep.subr.bf16.mxu0 0
        %3045 = vmatpush1.bf16.msra.mxu0 %v3024
        %3046 = vmatprep.subr.bf16.mxu0 0
        %3047 = vmatpush1.bf16.msra.mxu0 %v3025
        %3048 = vmatprep.subr.bf16.mxu0 0
        %3049 = vmatpush1.bf16.msra.mxu0 %v3026
        %3050 = vmatprep.subr.bf16.mxu0 0
        %3051 = vmatpush1.bf16.msra.mxu0 %v3027
        %3052 = vmatprep.subr.bf16.mxu0 0
        %3053 = vmatpush1.bf16.msra.mxu0 0
        %3054 = vmatprep.subr.bf16.mxu0 0
        %3055 = vmatpush1.bf16.msra.mxu0 0
        %3056 = vmatprep.subr.bf16.mxu0 0
        %3057 = vmatpush1.bf16.msra.mxu0 0
        %3058 = vmatprep.subr.bf16.mxu0 0
        %3059 = vmatpush1.bf16.msra.mxu0 0
        %3060 = vmatprep.subr.bf16.mxu0 0
        %3061 = vmatpush1.bf16.msra.mxu0 0
        %3062 = vmatprep.subr.bf16.mxu0 0
        %3063 = vmatpush1.bf16.msra.mxu0 0
        %3064 = vmatprep.subr.bf16.mxu0 0
        %3065 = vmatpush1.bf16.msra.mxu0 0
        %3066 = vmatprep.subr.bf16.mxu0 0
        %3067 = vmatpush1.bf16.msra.mxu0 0
        %3068 = vmatprep.mubr.bf16.mxu0 0
        %3069 = vmatmul.mubr.bf16.gmra.mrb[0].mxu0 %v2986
        %v3070 = vpop.f32.mrb[0].mxu0
        %v3071 = vadd.f32 0.0, %v3070
        %v3072 = vpop.f32.mrb[0].mxu0
        %v3073 = vpop.f32.mrb[0].mxu0
        %v3074 = vadd.f32 0.0, %v3073
        %v3075 = vpop.f32.mrb[0].mxu0
        %3076 = vdwg.mxu0
        %v3077 = vadd.f32 %v2960, %v3071
        %v3078 = vadd.f32 %v2961, %v3074
        %v3079 = vld [vmem:[%s2852] sm:$0xfe]
        %s3080 = scalar_lea.vmem %s4, 320
        %v3081 = vld [vmem:[%s3080] sm:$0xf]
        %v3082 = vld [vmem:[%s3080 + $0x4] sm:$0xf]
        %v3083 = vld [vmem:[%s3080 + $0x8] sm:$0xf]
        %v3084 = vld [vmem:[%s3080 + $0xc] sm:$0xf]
        %v3085 = vld [vmem:[%s3080 + $0x10] sm:$0xf]
        %v3086 = vld [vmem:[%s3080 + $0x14] sm:$0xf]
        %v3087 = vld [vmem:[%s3080 + $0x18] sm:$0xf]
        %v3088 = vld [vmem:[%s3080 + $0x1c] sm:$0xf]
        %v3089 = vld [vmem:[%s3080 + $0x20] sm:$0xf]
        %v3090 = vld [vmem:[%s3080 + $0x24] sm:$0xf]
        %v3091 = vld [vmem:[%s3080 + $0x28] sm:$0xf]
        %v3092 = vld [vmem:[%s3080 + $0x2c] sm:$0xf]
        %v3093 = vld [vmem:[%s3080 + $0x30] sm:$0xf]
        %v3094 = vld [vmem:[%s3080 + $0x34] sm:$0xf]
        %v3095 = vld [vmem:[%s3080 + $0x38] sm:$0xf]
        %v3096 = vld [vmem:[%s3080 + $0x3c] sm:$0xf]
        %v3098 = vrot.slane %v3079, 1
        %v3116 = vunpack.c.l.b16 %v3081
        %v3117 = vunpack.c.l.b16 %v3082
        %v3118 = vunpack.c.l.b16 %v3083
        %v3119 = vunpack.c.l.b16 %v3084
        %v3120 = vunpack.c.l.b16 %v3085
        %v3121 = vunpack.c.l.b16 %v3086
        %v3122 = vunpack.c.l.b16 %v3087
        %v3123 = vunpack.c.l.b16 %v3088
        %v3124 = vunpack.c.l.b16 %v3089
        %v3125 = vunpack.c.l.b16 %v3090
        %v3126 = vunpack.c.l.b16 %v3091
        %v3127 = vunpack.c.l.b16 %v3092
        %v3128 = vunpack.c.l.b16 %v3093
        %v3129 = vunpack.c.l.b16 %v3094
        %v3130 = vunpack.c.l.b16 %v3095
        %v3131 = vunpack.c.l.b16 %v3096
        %v3132 = vpack.c.b16 %v3117, %v3116
        %v3133 = vpack.c.b16 %v3119, %v3118
        %v3134 = vpack.c.b16 %v3121, %v3120
        %v3135 = vpack.c.b16 %v3123, %v3122
        %v3136 = vpack.c.b16 %v3125, %v3124
        %v3137 = vpack.c.b16 %v3127, %v3126
        %v3138 = vpack.c.b16 %v3129, %v3128
        %v3139 = vpack.c.b16 %v3131, %v3130
        %3148 = vmatprep.subr.bf16.mxu0 0
        %3149 = vmatpush1.bf16.msra.mxu0 %v3132
        %3150 = vmatprep.subr.bf16.mxu0 0
        %3151 = vmatpush1.bf16.msra.mxu0 %v3133
        %3152 = vmatprep.subr.bf16.mxu0 0
        %3153 = vmatpush1.bf16.msra.mxu0 %v3134
        %3154 = vmatprep.subr.bf16.mxu0 0
        %3155 = vmatpush1.bf16.msra.mxu0 %v3135
        %3156 = vmatprep.subr.bf16.mxu0 0
        %3157 = vmatpush1.bf16.msra.mxu0 %v3136
        %3158 = vmatprep.subr.bf16.mxu0 0
        %3159 = vmatpush1.bf16.msra.mxu0 %v3137
        %3160 = vmatprep.subr.bf16.mxu0 0
        %3161 = vmatpush1.bf16.msra.mxu0 %v3138
        %3162 = vmatprep.subr.bf16.mxu0 0
        %3163 = vmatpush1.bf16.msra.mxu0 %v3139
        %3164 = vmatprep.subr.bf16.mxu0 0
        %3165 = vmatpush1.bf16.msra.mxu0 0
        %3166 = vmatprep.subr.bf16.mxu0 0
        %3167 = vmatpush1.bf16.msra.mxu0 0
        %3168 = vmatprep.subr.bf16.mxu0 0
        %3169 = vmatpush1.bf16.msra.mxu0 0
        %3170 = vmatprep.subr.bf16.mxu0 0
        %3171 = vmatpush1.bf16.msra.mxu0 0
        %3172 = vmatprep.subr.bf16.mxu0 0
        %3173 = vmatpush1.bf16.msra.mxu0 0
        %3174 = vmatprep.subr.bf16.mxu0 0
        %3175 = vmatpush1.bf16.msra.mxu0 0
        %3176 = vmatprep.subr.bf16.mxu0 0
        %3177 = vmatpush1.bf16.msra.mxu0 0
        %3178 = vmatprep.subr.bf16.mxu0 0
        %3179 = vmatpush1.bf16.msra.mxu0 0
        %3180 = vmatprep.mubr.bf16.mxu0 0
        %3181 = vmatmul.mubr.bf16.gmra.mrb[0].mxu0 %v3098
        %v3182 = vpop.f32.mrb[0].mxu0
        %v3183 = vadd.f32 0.0, %v3182
        %v3184 = vpop.f32.mrb[0].mxu0
        %v3185 = vpop.f32.mrb[0].mxu0
        %v3186 = vadd.f32 0.0, %v3185
        %v3187 = vpop.f32.mrb[0].mxu0
        %3188 = vdwg.mxu0
        %v3189 = vadd.f32 %v3077, %v3183
        %v3190 = vadd.f32 %v3078, %v3186
        %s3191 = sadd.s32 %s2510, 2
        %s3192 = smul.addr %s3191, 8
        %s3193 = scalar_lea.vmem [#allocation3], %s3192
        %v3194 = vld [vmem:[%s3193] sm:$0x7f]
        %s3195 = scalar_lea.vmem %s4, 384
        %v3196 = vld [vmem:[%s3195] sm:$0xf]
        %v3197 = vld [vmem:[%s3195 + $0x4] sm:$0xf]
        %v3198 = vld [vmem:[%s3195 + $0x8] sm:$0xf]
        %v3199 = vld [vmem:[%s3195 + $0xc] sm:$0xf]
        %v3200 = vld [vmem:[%s3195 + $0x10] sm:$0xf]
        %v3201 = vld [vmem:[%s3195 + $0x14] sm:$0xf]
        %v3202 = vld [vmem:[%s3195 + $0x18] sm:$0xf]
        %v3203 = vld [vmem:[%s3195 + $0x1c] sm:$0xf]
        %v3204 = vld [vmem:[%s3195 + $0x20] sm:$0xf]
        %v3205 = vld [vmem:[%s3195 + $0x24] sm:$0xf]
        %v3206 = vld [vmem:[%s3195 + $0x28] sm:$0xf]
        %v3207 = vld [vmem:[%s3195 + $0x2c] sm:$0xf]
        %v3208 = vld [vmem:[%s3195 + $0x30] sm:$0xf]
        %v3209 = vld [vmem:[%s3195 + $0x34] sm:$0xf]
        %v3210 = vld [vmem:[%s3195 + $0x38] sm:$0xf]
        %v3211 = vld [vmem:[%s3195 + $0x3c] sm:$0xf]
        %v3228 = vunpack.c.l.b16 %v3196
        %v3229 = vunpack.c.l.b16 %v3197
        %v3230 = vunpack.c.l.b16 %v3198
        %v3231 = vunpack.c.l.b16 %v3199
        %v3232 = vunpack.c.l.b16 %v3200
        %v3233 = vunpack.c.l.b16 %v3201
        %v3234 = vunpack.c.l.b16 %v3202
        %v3235 = vunpack.c.l.b16 %v3203
        %v3236 = vunpack.c.l.b16 %v3204
        %v3237 = vunpack.c.l.b16 %v3205
        %v3238 = vunpack.c.l.b16 %v3206
        %v3239 = vunpack.c.l.b16 %v3207
        %v3240 = vunpack.c.l.b16 %v3208
        %v3241 = vunpack.c.l.b16 %v3209
        %v3242 = vunpack.c.l.b16 %v3210
        %v3243 = vunpack.c.l.b16 %v3211
        %v3244 = vpack.c.b16 %v3229, %v3228
        %v3245 = vpack.c.b16 %v3231, %v3230
        %v3246 = vpack.c.b16 %v3233, %v3232
        %v3247 = vpack.c.b16 %v3235, %v3234
        %v3248 = vpack.c.b16 %v3237, %v3236
        %v3249 = vpack.c.b16 %v3239, %v3238
        %v3250 = vpack.c.b16 %v3241, %v3240
        %v3251 = vpack.c.b16 %v3243, %v3242
        %3260 = vmatprep.subr.bf16.mxu0 0
        %3261 = vmatpush1.bf16.msra.mxu0 %v3244
        %3262 = vmatprep.subr.bf16.mxu0 0
        %3263 = vmatpush1.bf16.msra.mxu0 %v3245
        %3264 = vmatprep.subr.bf16.mxu0 0
        %3265 = vmatpush1.bf16.msra.mxu0 %v3246
        %3266 = vmatprep.subr.bf16.mxu0 0
        %3267 = vmatpush1.bf16.msra.mxu0 %v3247
        %3268 = vmatprep.subr.bf16.mxu0 0
        %3269 = vmatpush1.bf16.msra.mxu0 %v3248
        %3270 = vmatprep.subr.bf16.mxu0 0
        %3271 = vmatpush1.bf16.msra.mxu0 %v3249
        %3272 = vmatprep.subr.bf16.mxu0 0
        %3273 = vmatpush1.bf16.msra.mxu0 %v3250
        %3274 = vmatprep.subr.bf16.mxu0 0
        %3275 = vmatpush1.bf16.msra.mxu0 %v3251
        %3276 = vmatprep.subr.bf16.mxu0 0
        %3277 = vmatpush1.bf16.msra.mxu0 0
        %3278 = vmatprep.subr.bf16.mxu0 0
        %3279 = vmatpush1.bf16.msra.mxu0 0
        %3280 = vmatprep.subr.bf16.mxu0 0
        %3281 = vmatpush1.bf16.msra.mxu0 0
        %3282 = vmatprep.subr.bf16.mxu0 0
        %3283 = vmatpush1.bf16.msra.mxu0 0
        %3284 = vmatprep.subr.bf16.mxu0 0
        %3285 = vmatpush1.bf16.msra.mxu0 0
        %3286 = vmatprep.subr.bf16.mxu0 0
        %3287 = vmatpush1.bf16.msra.mxu0 0
        %3288 = vmatprep.subr.bf16.mxu0 0
        %3289 = vmatpush1.bf16.msra.mxu0 0
        %3290 = vmatprep.subr.bf16.mxu0 0
        %3291 = vmatpush1.bf16.msra.mxu0 0
        %3292 = vmatprep.mubr.bf16.mxu0 0
        %3293 = vmatmul.mubr.bf16.gmra.mrb[0].mxu0 %v3194
        %v3294 = vpop.f32.mrb[0].mxu0
        %v3295 = vadd.f32 0.0, %v3294
        %v3296 = vpop.f32.mrb[0].mxu0
        %v3297 = vpop.f32.mrb[0].mxu0
        %v3298 = vadd.f32 0.0, %v3297
        %v3299 = vpop.f32.mrb[0].mxu0
        %3300 = vdwg.mxu0
        %v3301 = vadd.f32 %v3189, %v3295
        %v3302 = vadd.f32 %v3190, %v3298
        %v3303 = vld [vmem:[%s3193] sm:$0xff]
        %s3304 = scalar_lea.vmem %s4, 448
        %v3305 = vld [vmem:[%s3304] sm:$0xf]
        %v3306 = vld [vmem:[%s3304 + $0x4] sm:$0xf]
        %v3307 = vld [vmem:[%s3304 + $0x8] sm:$0xf]
        %v3308 = vld [vmem:[%s3304 + $0xc] sm:$0xf]
        %v3309 = vld [vmem:[%s3304 + $0x10] sm:$0xf]
        %v3310 = vld [vmem:[%s3304 + $0x14] sm:$0xf]
        %v3311 = vld [vmem:[%s3304 + $0x18] sm:$0xf]
        %v3312 = vld [vmem:[%s3304 + $0x1c] sm:$0xf]
        %v3313 = vld [vmem:[%s3304 + $0x20] sm:$0xf]
        %v3314 = vld [vmem:[%s3304 + $0x24] sm:$0xf]
        %v3315 = vld [vmem:[%s3304 + $0x28] sm:$0xf]
        %v3316 = vld [vmem:[%s3304 + $0x2c] sm:$0xf]
        %v3317 = vld [vmem:[%s3304 + $0x30] sm:$0xf]
        %v3318 = vld [vmem:[%s3304 + $0x34] sm:$0xf]
        %v3319 = vld [vmem:[%s3304 + $0x38] sm:$0xf]
        %v3320 = vld [vmem:[%s3304 + $0x3c] sm:$0xf]
        %v3322 = vshrl.u32 %v3303, 16
        %v3324 = vshll.u32 %v3303, 16
        %v3326 = vrot.slane %v3324, 1
        %v3327 = vor.u32 %v3322, %v3326
        %v3345 = vunpack.c.l.b16 %v3305
        %v3346 = vunpack.c.l.b16 %v3306
        %v3347 = vunpack.c.l.b16 %v3307
        %v3348 = vunpack.c.l.b16 %v3308
        %v3349 = vunpack.c.l.b16 %v3309
        %v3350 = vunpack.c.l.b16 %v3310
        %v3351 = vunpack.c.l.b16 %v3311
        %v3352 = vunpack.c.l.b16 %v3312
        %v3353 = vunpack.c.l.b16 %v3313
        %v3354 = vunpack.c.l.b16 %v3314
        %v3355 = vunpack.c.l.b16 %v3315
        %v3356 = vunpack.c.l.b16 %v3316
        %v3357 = vunpack.c.l.b16 %v3317
        %v3358 = vunpack.c.l.b16 %v3318
        %v3359 = vunpack.c.l.b16 %v3319
        %v3360 = vunpack.c.l.b16 %v3320
        %v3361 = vpack.c.b16 %v3346, %v3345
        %v3362 = vpack.c.b16 %v3348, %v3347
        %v3363 = vpack.c.b16 %v3350, %v3349
        %v3364 = vpack.c.b16 %v3352, %v3351
        %v3365 = vpack.c.b16 %v3354, %v3353
        %v3366 = vpack.c.b16 %v3356, %v3355
        %v3367 = vpack.c.b16 %v3358, %v3357
        %v3368 = vpack.c.b16 %v3360, %v3359
        %3377 = vmatprep.subr.bf16.mxu0 0
        %3378 = vmatpush1.bf16.msra.mxu0 %v3361
        %3379 = vmatprep.subr.bf16.mxu0 0
        %3380 = vmatpush1.bf16.msra.mxu0 %v3362
        %3381 = vmatprep.subr.bf16.mxu0 0
        %3382 = vmatpush1.bf16.msra.mxu0 %v3363
        %3383 = vmatprep.subr.bf16.mxu0 0
        %3384 = vmatpush1.bf16.msra.mxu0 %v3364
        %3385 = vmatprep.subr.bf16.mxu0 0
        %3386 = vmatpush1.bf16.msra.mxu0 %v3365
        %3387 = vmatprep.subr.bf16.mxu0 0
        %3388 = vmatpush1.bf16.msra.mxu0 %v3366
        %3389 = vmatprep.subr.bf16.mxu0 0
        %3390 = vmatpush1.bf16.msra.mxu0 %v3367
        %3391 = vmatprep.subr.bf16.mxu0 0
        %3392 = vmatpush1.bf16.msra.mxu0 %v3368
        %3393 = vmatprep.subr.bf16.mxu0 0
        %3394 = vmatpush1.bf16.msra.mxu0 0
        %3395 = vmatprep.subr.bf16.mxu0 0
        %3396 = vmatpush1.bf16.msra.mxu0 0
        %3397 = vmatprep.subr.bf16.mxu0 0
        %3398 = vmatpush1.bf16.msra.mxu0 0
        %3399 = vmatprep.subr.bf16.mxu0 0
        %3400 = vmatpush1.bf16.msra.mxu0 0
        %3401 = vmatprep.subr.bf16.mxu0 0
        %3402 = vmatpush1.bf16.msra.mxu0 0
        %3403 = vmatprep.subr.bf16.mxu0 0
        %3404 = vmatpush1.bf16.msra.mxu0 0
        %3405 = vmatprep.subr.bf16.mxu0 0
        %3406 = vmatpush1.bf16.msra.mxu0 0
        %3407 = vmatprep.subr.bf16.mxu0 0
        %3408 = vmatpush1.bf16.msra.mxu0 0
        %3409 = vmatprep.mubr.bf16.mxu0 0
        %3410 = vmatmul.mubr.bf16.gmra.mrb[0].mxu0 %v3327
        %v3411 = vpop.f32.mrb[0].mxu0
        %v3412 = vadd.f32 0.0, %v3411
        %v3413 = vpop.f32.mrb[0].mxu0
        %v3414 = vpop.f32.mrb[0].mxu0
        %v3415 = vadd.f32 0.0, %v3414
        %v3416 = vpop.f32.mrb[0].mxu0
        %3417 = vdwg.mxu0
        %v3418 = vadd.f32 %v3301, %v3412
        %v3419 = vadd.f32 %v3302, %v3415
        %v3420 = vld [vmem:[%s3193] sm:$0xfe]
        %s3421 = scalar_lea.vmem %s4, 512
        %v3422 = vld [vmem:[%s3421] sm:$0xf]
        %v3423 = vld [vmem:[%s3421 + $0x4] sm:$0xf]
        %v3424 = vld [vmem:[%s3421 + $0x8] sm:$0xf]
        %v3425 = vld [vmem:[%s3421 + $0xc] sm:$0xf]
        %v3426 = vld [vmem:[%s3421 + $0x10] sm:$0xf]
        %v3427 = vld [vmem:[%s3421 + $0x14] sm:$0xf]
        %v3428 = vld [vmem:[%s3421 + $0x18] sm:$0xf]
        %v3429 = vld [vmem:[%s3421 + $0x1c] sm:$0xf]
        %v3430 = vld [vmem:[%s3421 + $0x20] sm:$0xf]
        %v3431 = vld [vmem:[%s3421 + $0x24] sm:$0xf]
        %v3432 = vld [vmem:[%s3421 + $0x28] sm:$0xf]
        %v3433 = vld [vmem:[%s3421 + $0x2c] sm:$0xf]
        %v3434 = vld [vmem:[%s3421 + $0x30] sm:$0xf]
        %v3435 = vld [vmem:[%s3421 + $0x34] sm:$0xf]
        %v3436 = vld [vmem:[%s3421 + $0x38] sm:$0xf]
        %v3437 = vld [vmem:[%s3421 + $0x3c] sm:$0xf]
        %v3439 = vrot.slane %v3420, 1
        %v3457 = vunpack.c.l.b16 %v3422
        %v3458 = vunpack.c.l.b16 %v3423
        %v3459 = vunpack.c.l.b16 %v3424
        %v3460 = vunpack.c.l.b16 %v3425
        %v3461 = vunpack.c.l.b16 %v3426
        %v3462 = vunpack.c.l.b16 %v3427
        %v3463 = vunpack.c.l.b16 %v3428
        %v3464 = vunpack.c.l.b16 %v3429
        %v3465 = vunpack.c.l.b16 %v3430
        %v3466 = vunpack.c.l.b16 %v3431
        %v3467 = vunpack.c.l.b16 %v3432
        %v3468 = vunpack.c.l.b16 %v3433
        %v3469 = vunpack.c.l.b16 %v3434
        %v3470 = vunpack.c.l.b16 %v3435
        %v3471 = vunpack.c.l.b16 %v3436
        %v3472 = vunpack.c.l.b16 %v3437
        %v3473 = vpack.c.b16 %v3458, %v3457
        %v3474 = vpack.c.b16 %v3460, %v3459
        %v3475 = vpack.c.b16 %v3462, %v3461
        %v3476 = vpack.c.b16 %v3464, %v3463
        %v3477 = vpack.c.b16 %v3466, %v3465
        %v3478 = vpack.c.b16 %v3468, %v3467
        %v3479 = vpack.c.b16 %v3470, %v3469
        %v3480 = vpack.c.b16 %v3472, %v3471
        %3489 = vmatprep.subr.bf16.mxu0 0
        %3490 = vmatpush1.bf16.msra.mxu0 %v3473
        %3491 = vmatprep.subr.bf16.mxu0 0
        %3492 = vmatpush1.bf16.msra.mxu0 %v3474
        %3493 = vmatprep.subr.bf16.mxu0 0
        %3494 = vmatpush1.bf16.msra.mxu0 %v3475
        %3495 = vmatprep.subr.bf16.mxu0 0
        %3496 = vmatpush1.bf16.msra.mxu0 %v3476
        %3497 = vmatprep.subr.bf16.mxu0 0
        %3498 = vmatpush1.bf16.msra.mxu0 %v3477
        %3499 = vmatprep.subr.bf16.mxu0 0
        %3500 = vmatpush1.bf16.msra.mxu0 %v3478
        %3501 = vmatprep.subr.bf16.mxu0 0
        %3502 = vmatpush1.bf16.msra.mxu0 %v3479
        %3503 = vmatprep.subr.bf16.mxu0 0
        %3504 = vmatpush1.bf16.msra.mxu0 %v3480
        %3505 = vmatprep.subr.bf16.mxu0 0
        %3506 = vmatpush1.bf16.msra.mxu0 0
        %3507 = vmatprep.subr.bf16.mxu0 0
        %3508 = vmatpush1.bf16.msra.mxu0 0
        %3509 = vmatprep.subr.bf16.mxu0 0
        %3510 = vmatpush1.bf16.msra.mxu0 0
        %3511 = vmatprep.subr.bf16.mxu0 0
        %3512 = vmatpush1.bf16.msra.mxu0 0
        %3513 = vmatprep.subr.bf16.mxu0 0
        %3514 = vmatpush1.bf16.msra.mxu0 0
        %3515 = vmatprep.subr.bf16.mxu0 0
        %3516 = vmatpush1.bf16.msra.mxu0 0
        %3517 = vmatprep.subr.bf16.mxu0 0
        %3518 = vmatpush1.bf16.msra.mxu0 0
        %3519 = vmatprep.subr.bf16.mxu0 0
        %3520 = vmatpush1.bf16.msra.mxu0 0
        %3521 = vmatprep.mubr.bf16.mxu0 0
        %3522 = vmatmul.mubr.bf16.gmra.mrb[0].mxu0 %v3439
        %v3523 = vpop.f32.mrb[0].mxu0
        %v3524 = vadd.f32 0.0, %v3523
        %v3525 = vpop.f32.mrb[0].mxu0
        %v3526 = vpop.f32.mrb[0].mxu0
        %v3527 = vadd.f32 0.0, %v3526
        %v3528 = vpop.f32.mrb[0].mxu0
        %3529 = vdwg.mxu0
        %v3530 = vadd.f32 %v3418, %v3524
        %v3531 = vadd.f32 %v3419, %v3527
        %v3532 = vld [vmem:[%s6] sm:$0x1]
        %v3534 = vlaneseq
        %v3535 = vshrl.u32 %v3534, 7
        %v3536 = vsub.s32 0, %v3535
        %v3537 = vrot.slane %v3532, %v3536
        %v3539 = vadd.f32 %v3530, %v3537
        %v3540 = vadd.f32 %v3531, %v3537
        %v3541 = vmax.f32 %v3539, 0.0
        %v3542 = vmax.f32 %v3540, 0.0
        %s3543 = smul.u32 %s2850, 16
        %s3544 = scalar_lea.vmem [#allocation2], %s3543
        %3545 = vst [vmem:[%s3544 + $0x1] sm:$0xff] %v3541
        %3546 = vst [vmem:[%s3544 + $0x9] sm:$0x3f] %v3542
        %3547 = vst [vmem:[%s3544 - $0x1] sm:$0x2] %v3541
        %3548 = vst [vmem:[%s3544 + $0xb] sm:$0x10] %v3542
      $region60: #{_lambda_.6} parent=47 // loop_footer
        %s2514 = sadd.s32 1, %s2510
      $region61: #{_lambda_.6} parent=47 // loop_footer_branch
        %2509 = sbr.rel target = $region57
      $region62: #{_lambda_.6} parent=47 // loop_exit
        _
      %v3549 = vld [vmem:[%s2434] sm:$0xff]
      %v3550 = vld [vmem:[%s2434 + $0x8] sm:$0xff]
      %3551 = vst [vmem:[#allocation2] sm:$0xff] %v3549
      %3552 = vst [vmem:[#allocation2 + $0x8] sm:$0xff] %v3550
      %v3553 = vld [vmem:[%s2439] sm:$0xff]
      %v3554 = vld [vmem:[%s2439 + $0x8] sm:$0xff]
      %3555 = vst [vmem:[%s2442] sm:$0xff] %v3553
      %3556 = vst [vmem:[%s2442 + $0x8] sm:$0xff] %v3554
      %v3557 = vld [vmem:[#allocation2] sm:$0xff]
      %v3558 = vld [vmem:[#allocation2 + $0x8] sm:$0xff]
      %v3559 = vld [vmem:[#allocation2 + $0x10] sm:$0xff]
      %v3560 = vld [vmem:[#allocation2 + $0x18] sm:$0xff]
      %v3561 = vld [vmem:[#allocation2 + $0x20] sm:$0xff]
      %v3562 = vld [vmem:[#allocation2 + $0x28] sm:$0xff]
      %v3563 = vld [vmem:[#allocation2 + $0x30] sm:$0xff]
      %v3564 = vld [vmem:[#allocation2 + $0x38] sm:$0xff]
      %v3565 = vld [vmem:[#allocation2 + $0x40] sm:$0xff]
      %v3566 = vld [vmem:[#allocation2 + $0x48] sm:$0xff]
      %v3567 = vld [vmem:[#allocation2 + $0x50] sm:$0xff]
      %v3568 = vld [vmem:[#allocation2 + $0x58] sm:$0xff]
      %v3569 = vld [vmem:[#allocation2 + $0x60] sm:$0xff]
      %v3570 = vld [vmem:[#allocation2 + $0x68] sm:$0xff]
      %v3571 = vld [vmem:[#allocation2 + $0x70] sm:$0xff]
      %v3572 = vld [vmem:[#allocation2 + $0x78] sm:$0xff]
      %v3573 = vld [vmem:[#allocation2 + $0x80] sm:$0xff]
      %v3574 = vld [vmem:[#allocation2 + $0x88] sm:$0xff]
      %v3575 = vld [vmem:[#allocation2 + $0x90] sm:$0xff]
      %v3576 = vld [vmem:[#allocation2 + $0x98] sm:$0xff]
      %v3577 = vld [vmem:[#allocation2 + $0xa0] sm:$0xff]
      %v3578 = vld [vmem:[#allocation2 + $0xa8] sm:$0xff]
      %v3579 = vld [vmem:[#allocation2 + $0xb0] sm:$0xff]
      %v3580 = vld [vmem:[#allocation2 + $0xb8] sm:$0xff]
      %v3581 = vld [vmem:[#allocation2 + $0xc0] sm:$0xff]
      %v3582 = vld [vmem:[#allocation2 + $0xc8] sm:$0xff]
      %v3583 = vld [vmem:[#allocation2 + $0xd0] sm:$0xff]
      %v3584 = vld [vmem:[#allocation2 + $0xd8] sm:$0xff]
      %v3585 = vld [vmem:[#allocation2 + $0xe0] sm:$0xff]
      %v3586 = vld [vmem:[#allocation2 + $0xe8] sm:$0xff]
      %v3587 = vld [vmem:[#allocation2 + $0xf0] sm:$0xff]
      %v3588 = vld [vmem:[#allocation2 + $0xf8] sm:$0xff]
      %v3589 = vpack.c.bf16 %v3558, %v3557
      %v3590 = vpack.c.bf16 %v3560, %v3559
      %v3591 = vpack.c.bf16 %v3562, %v3561
      %v3592 = vpack.c.bf16 %v3564, %v3563
      %v3593 = vpack.c.bf16 %v3566, %v3565
      %v3594 = vpack.c.bf16 %v3568, %v3567
      %v3595 = vpack.c.bf16 %v3570, %v3569
      %v3596 = vpack.c.bf16 %v3572, %v3571
      %v3597 = vpack.c.bf16 %v3574, %v3573
      %v3598 = vpack.c.bf16 %v3576, %v3575
      %v3599 = vpack.c.bf16 %v3578, %v3577
      %v3600 = vpack.c.bf16 %v3580, %v3579
      %v3601 = vpack.c.bf16 %v3582, %v3581
      %v3602 = vpack.c.bf16 %v3584, %v3583
      %v3603 = vpack.c.bf16 %v3586, %v3585
      %v3604 = vpack.c.bf16 %v3588, %v3587
      %v3621 = vunpack.c.l.b16 %v3589
      %v3622 = vunpack.c.h.b16 %v3589
      %v3623 = vunpack.c.l.b16 %v3590
      %v3624 = vunpack.c.h.b16 %v3590
      %v3625 = vunpack.c.l.b16 %v3591
      %v3626 = vunpack.c.h.b16 %v3591
      %v3627 = vunpack.c.l.b16 %v3592
      %v3628 = vunpack.c.h.b16 %v3592
      %v3629 = vunpack.c.l.b16 %v3593
      %v3630 = vunpack.c.h.b16 %v3593
      %v3631 = vunpack.c.l.b16 %v3594
      %v3632 = vunpack.c.h.b16 %v3594
      %v3633 = vunpack.c.l.b16 %v3595
      %v3634 = vunpack.c.h.b16 %v3595
      %v3635 = vunpack.c.l.b16 %v3596
      %v3636 = vunpack.c.h.b16 %v3596
      %v3637 = vunpack.c.l.b16 %v3597
      %v3638 = vunpack.c.h.b16 %v3597
      %v3639 = vunpack.c.l.b16 %v3598
      %v3640 = vunpack.c.h.b16 %v3598
      %v3641 = vunpack.c.l.b16 %v3599
      %v3642 = vunpack.c.h.b16 %v3599
      %v3643 = vunpack.c.l.b16 %v3600
      %v3644 = vunpack.c.h.b16 %v3600
      %v3645 = vunpack.c.l.b16 %v3601
      %v3646 = vunpack.c.h.b16 %v3601
      %v3647 = vunpack.c.l.b16 %v3602
      %v3648 = vunpack.c.h.b16 %v3602
      %v3649 = vunpack.c.l.b16 %v3603
      %v3650 = vunpack.c.h.b16 %v3603
      %v3651 = vunpack.c.l.b16 %v3604
      %v3652 = vunpack.c.h.b16 %v3604
      %v3653 = vpack.c.b16 %v3621, %v3621
      %v3654 = vpack.c.b16 %v3622, %v3622
      %v3655 = vpack.c.b16 %v3623, %v3623
      %v3656 = vpack.c.b16 %v3624, %v3624
      %v3657 = vpack.c.b16 %v3625, %v3625
      %v3658 = vpack.c.b16 %v3626, %v3626
      %v3659 = vpack.c.b16 %v3627, %v3627
      %v3660 = vpack.c.b16 %v3628, %v3628
      %v3661 = vpack.c.b16 %v3629, %v3629
      %v3662 = vpack.c.b16 %v3630, %v3630
      %v3663 = vpack.c.b16 %v3631, %v3631
      %v3664 = vpack.c.b16 %v3632, %v3632
      %v3665 = vpack.c.b16 %v3633, %v3633
      %v3666 = vpack.c.b16 %v3634, %v3634
      %v3667 = vpack.c.b16 %v3635, %v3635
      %v3668 = vpack.c.b16 %v3636, %v3636
      %v3669 = vpack.c.b16 %v3637, %v3637
      %v3670 = vpack.c.b16 %v3638, %v3638
      %v3671 = vpack.c.b16 %v3639, %v3639
      %v3672 = vpack.c.b16 %v3640, %v3640
      %v3673 = vpack.c.b16 %v3641, %v3641
      %v3674 = vpack.c.b16 %v3642, %v3642
      %v3675 = vpack.c.b16 %v3643, %v3643
      %v3676 = vpack.c.b16 %v3644, %v3644
      %v3677 = vpack.c.b16 %v3645, %v3645
      %v3678 = vpack.c.b16 %v3646, %v3646
      %v3679 = vpack.c.b16 %v3647, %v3647
      %v3680 = vpack.c.b16 %v3648, %v3648
      %v3681 = vpack.c.b16 %v3649, %v3649
      %v3682 = vpack.c.b16 %v3650, %v3650
      %v3683 = vpack.c.b16 %v3651, %v3651
      %v3684 = vpack.c.b16 %v3652, %v3652
      %3717 = vst [vmem:[%s298] sm:$0xf] %v3653
      %3718 = vst [vmem:[%s298 + $0x4] sm:$0xf] %v3654
      %3719 = vst [vmem:[%s298 + $0x8] sm:$0xf] %v3655
      %3720 = vst [vmem:[%s298 + $0xc] sm:$0xf] %v3656
      %3721 = vst [vmem:[%s298 + $0x10] sm:$0xf] %v3657
      %3722 = vst [vmem:[%s298 + $0x14] sm:$0xf] %v3658
      %3723 = vst [vmem:[%s298 + $0x18] sm:$0xf] %v3659
      %3724 = vst [vmem:[%s298 + $0x1c] sm:$0xf] %v3660
      %3725 = vst [vmem:[%s298 + $0x20] sm:$0xf] %v3661
      %3726 = vst [vmem:[%s298 + $0x24] sm:$0xf] %v3662
      %3727 = vst [vmem:[%s298 + $0x28] sm:$0xf] %v3663
      %3728 = vst [vmem:[%s298 + $0x2c] sm:$0xf] %v3664
      %3729 = vst [vmem:[%s298 + $0x30] sm:$0xf] %v3665
      %3730 = vst [vmem:[%s298 + $0x34] sm:$0xf] %v3666
      %3731 = vst [vmem:[%s298 + $0x38] sm:$0xf] %v3667
      %3732 = vst [vmem:[%s298 + $0x3c] sm:$0xf] %v3668
      %3733 = vst [vmem:[%s298 + $0x40] sm:$0xf] %v3669
      %3734 = vst [vmem:[%s298 + $0x44] sm:$0xf] %v3670
      %3735 = vst [vmem:[%s298 + $0x48] sm:$0xf] %v3671
      %3736 = vst [vmem:[%s298 + $0x4c] sm:$0xf] %v3672
      %3737 = vst [vmem:[%s298 + $0x50] sm:$0xf] %v3673
      %3738 = vst [vmem:[%s298 + $0x54] sm:$0xf] %v3674
      %3739 = vst [vmem:[%s298 + $0x58] sm:$0xf] %v3675
      %3740 = vst [vmem:[%s298 + $0x5c] sm:$0xf] %v3676
      %3741 = vst [vmem:[%s298 + $0x60] sm:$0xf] %v3677
      %3742 = vst [vmem:[%s298 + $0x64] sm:$0xf] %v3678
      %3743 = vst [vmem:[%s298 + $0x68] sm:$0xf] %v3679
      %3744 = vst [vmem:[%s298 + $0x6c] sm:$0xf] %v3680
      %3745 = vst [vmem:[%s298 + $0x70] sm:$0xf] %v3681
      %3746 = vst [vmem:[%s298 + $0x74] sm:$0xf] %v3682
      %3747 = vst [vmem:[%s298 + $0x78] sm:$0xf] %v3683
      %3748 = vst [vmem:[%s298 + $0x7c] sm:$0xf] %v3684
      %p3749 = scmp.lt.s32.totalorder %s18, 1
      %s3750 = scalar_select %p3749, %s18, 1
      %s3751 = smul.addr %s3750, 32
      %s3752 = smul.addr %s3751, 4
      %s3753 = scalar_lea.vmem %s7, %s3752
      // Predicated region
      $region63: #{_lambda_.6} parent=47 // pred_check
        %p3754 = pneg %p193
      $region64: #{_lambda_.6} parent=47 // pred_check_branch
        %3756 = sbr.rel (%p3754) target = $region66
      $region65: #{_lambda_.6} parent=47 // pred_region
        _
      $region66: #{_lambda_.6} parent=47 // pred_fallthru
        _
    $region48: #{_lambda_.6} parent=5 // pred_fallthru
      _
    %p3757 = scmp.le.s32.totalorder 2, %s13
    // Predicated region
    $region67: #{_lambda_.6} parent=5 // pred_check
      %p3758 = pneg %p3757
    $region68: #{_lambda_.6} parent=5 // pred_check_branch
      %3760 = sbr.rel (%p3758) target = $region70
    $region69: #{_lambda_.6} parent=5 // pred_region
      %s3761 = ssub.s32 %s13, 2
      // Predicated region
      $region71: #{_lambda_.6} parent=69 // pred_check
        %p3762 = pneg %p199
      $region72: #{_lambda_.6} parent=69 // pred_check_branch
        %3764 = sbr.rel (%p3762) target = $region74
      $region73: #{_lambda_.6} parent=69 // pred_region
        %p3765 = scmp.lt.s32.totalorder %s19, 1
        %s3766 = scalar_select %p3765, %s19, 1
        %s3767 = smul.addr %s3766, 32
        %s3768 = smul.addr %s3767, 4
        %s3769 = scalar_lea.vmem %s7, %s3768
      $region74: #{_lambda_.6} parent=69 // pred_fallthru
        _
    $region70: #{_lambda_.6} parent=5 // pred_fallthru
      _
  $region6: #{_lambda_.6} parent=0 // loop_footer
    %s17 = sadd.s32 1, %s13
  $region7: #{_lambda_.6} parent=0 // loop_footer_branch
    %12 = sbr.rel target = $region3
  $region8: #{_lambda_.6} parent=0 // loop_exit
    _

</llo_original>
